<compile_context>
chip_gen: v7x
topology: tpu7x:2x2x1
jax: 0.10.0
libtpu: 0.0.40
codegen_flags: <defaults>
</compile_context>

<pallas_src>
import jax
import jax.numpy as jnp
from jax import lax
from jax.experimental import pallas as pl
from jax.experimental.pallas import tpu as pltpu

KH = KW = 3
TAPS = KH * KW  # 9


def basic_block_kernel(x_ref, w1_ref, s1_ref, b1_ref, w2_ref, s2_ref, b2_ref,
                       out_ref, xpad_ref, col1_ref, mid_ref, col2_ref):
    # x_ref   : (NB, H, W, C)      f32  unpadded NHWC images (also residual)
    # w1_ref  : (9*C, P)           bf16 conv1 weights, tap-major / chan-minor
    # s1/b1   : (1, P)             f32  folded BN1 scale / bias
    # w2_ref  : (9*P, P)           bf16 conv2 weights
    # s2/b2   : (1, P)             f32  folded BN2 scale / bias
    # out_ref : (NB, H*W, P)       f32  lane-dense (P multiple of 128)
    # xpad_ref: (NB, H+2, W+2, C)  f32  zero-haloed copy of the input
    # col1_ref: (NB*H*W, 9*C)      bf16 im2col operand for conv1
    # mid_ref : (NB, H+2, W+2, P)  f32  zero-haloed conv1 activation
    # col2_ref: (NB*H*W, 9*P)      bf16 im2col operand for conv2
    NB, H, W, C = x_ref.shape
    P = out_ref.shape[2]
    M = NB * H * W

    # Zero only the 1-pixel halos (interiors are fully overwritten below).
    # Re-done every step so it stays correct when the "parallel" grid axis is
    # sharded across TensorCores (scratch is per-core and persists).
    zrow = jnp.zeros((NB, 1, W + 2, C), jnp.float32)
    zcol = jnp.zeros((NB, H, 1, C), jnp.float32)
    for ref in (xpad_ref, mid_ref):            # C == P (downsample is None)
        ref[:, 0:1, :, :] = zrow
        ref[:, H + 1:H + 2, :, :] = zrow
        ref[:, 1:H + 1, 0:1, :] = zcol
        ref[:, 1:H + 1, W + 1:W + 2, :] = zcol

    # Stage the unpadded input into the haloed scratch (replaces wrapper pad).
    xpad_ref[:, 1:H + 1, 1:W + 1, :] = x_ref[...]

    # ---- conv1 as ONE im2col MXU matmul (K = 9*C), bf16 operands / f32 acc.
    for kh in range(KH):
        for kw in range(KW):
            t = kh * KW + kw
            col1_ref[:, t * C:(t + 1) * C] = (
                xpad_ref[:, kh:kh + H, kw:kw + W, :]
                .astype(jnp.bfloat16).reshape(M, C))
    acc1 = jnp.dot(col1_ref[...], w1_ref[...],
                   preferred_element_type=jnp.float32)           # (M, P) f32
    h1 = jnp.maximum(acc1 * s1_ref[...] + b1_ref[...], 0.0)      # BN1 + ReLU

    # Stash into the zero-haloed scratch so conv2's edge taps see zeros.
    mid_ref[:, 1:H + 1, 1:W + 1, :] = h1.reshape(NB, H, W, P)

    # ---- conv2 as ONE im2col MXU matmul (K = 9*P) + BN2.
    for kh in range(KH):
        for kw in range(KW):
            t = kh * KW + kw
            col2_ref[:, t * P:(t + 1) * P] = (
                mid_ref[:, kh:kh + H, kw:kw + W, :]
                .astype(jnp.bfloat16).reshape(M, P))
    acc2 = jnp.dot(col2_ref[...], w2_ref[...],
                   preferred_element_type=jnp.float32)           # (M, P) f32
    h2 = acc2 * s2_ref[...] + b2_ref[...]

    # ---- residual add (downsample=None => residual = x) + ReLU, dense store.
    out = jnp.maximum(h2 + x_ref[...].reshape(M, C), 0.0)
    out_ref[...] = out.reshape(NB, H * W, P)


def _fold_bn(gamma, beta, mean, var, eps):
    inv = gamma / jnp.sqrt(var + eps)
    return inv.reshape(1, -1), (beta - mean * inv).reshape(1, -1)


def basic_block_forward(x_nchw, params, eps=1e-5, nb=None):
    """x_nchw: (N, C, H, W) float32.  Returns (N, C, H, W)."""
    (w1, g1, be1, m1, v1, w2, g2, be2, m2, v2) = params
    N, Cin, H, W = x_nchw.shape
    P = w1.shape[0]
    assert Cin == P, "downsample=None requires inplanes == planes, stride=1"

    if nb is None:
        nb = 2 if N % 2 == 0 else 1   # even parallel grid -> both v7x TCs busy
    assert N % nb == 0

    # --- glue: layout transforms & BN folding (plain JAX) ---
    # TODO(synk): hoist the NCHW<->NHWC transposes out of the per-block wrapper
    #             when the surrounding model can stay NHWC end-to-end.
    x_nhwc = jnp.transpose(x_nchw, (0, 2, 3, 1)).astype(jnp.float32)

    # (O, I, kh, kw) -> (kh, kw, I, O) -> (9*I, O); bf16 for the MXU.
    w1_t = jnp.transpose(w1, (2, 3, 1, 0)).reshape(TAPS * Cin, P)
    w1_t = w1_t.astype(jnp.bfloat16)
    w2_t = jnp.transpose(w2, (2, 3, 1, 0)).reshape(TAPS * P, P)
    w2_t = w2_t.astype(jnp.bfloat16)
    s1, b1 = _fold_bn(g1, be1, m1, v1, eps)
    s2, b2 = _fold_bn(g2, be2, m2, v2, eps)

    # --- explicit VMEM budget (v7x has only 64 MiB per TensorCore) ---
    db = 2  # double-buffered pipeline blocks
    block_bytes = (
        db * nb * H * W * Cin * 4                    # input block
        + db * nb * H * W * P * 4                    # output block
        + db * (TAPS * Cin * P + TAPS * P * P) * 2   # bf16 weights
        + db * 4 * P * 4)                            # BN scale / bias
    scratch_bytes = (
        nb * (H + 2) * (W + 2) * (Cin + P) * 4       # xpad + mid (f32)
        + nb * H * W * TAPS * (Cin + P) * 2)         # col1 + col2 (bf16)
    vmem_limit = min(max(int(1.5 * (block_bytes + scratch_bytes)) + (8 << 20),
                         24 << 20),
                     64 << 20)

    flops = 2 * N * H * W * TAPS * (Cin * P + P * P)
    bytes_accessed = (N * H * W * Cin * 4                       # input
                      + (TAPS * Cin * P + TAPS * P * P) * 2     # bf16 weights
                      + 4 * P * 4                               # BN params
                      + N * H * W * P * 4)                      # output
    cost = pl.CostEstimate(flops=flops, transcendentals=0,
                           bytes_accessed=bytes_accessed)

    out_flat = pl.pallas_call(
        basic_block_kernel,
        out_shape=jax.ShapeDtypeStruct((N, H * W, P), jnp.float32),
        grid_spec=pltpu.PrefetchScalarGridSpec(
            num_scalar_prefetch=0,
            grid=(N // nb,),
            in_specs=[
                pl.BlockSpec((nb, H, W, Cin), lambda n: (n, 0, 0, 0)),
                pl.BlockSpec((TAPS * Cin, P), lambda n: (0, 0)),
                pl.BlockSpec((1, P), lambda n: (0, 0)),
                pl.BlockSpec((1, P), lambda n: (0, 0)),
                pl.BlockSpec((TAPS * P, P), lambda n: (0, 0)),
                pl.BlockSpec((1, P), lambda n: (0, 0)),
                pl.BlockSpec((1, P), lambda n: (0, 0)),
            ],
            out_specs=pl.BlockSpec((nb, H * W, P), lambda n: (n, 0, 0)),
            scratch_shapes=[
                pltpu.VMEM((nb, H + 2, W + 2, Cin), jnp.float32),    # xpad
                pltpu.VMEM((nb * H * W, TAPS * Cin), jnp.bfloat16),  # col1
                pltpu.VMEM((nb, H + 2, W + 2, P), jnp.float32),      # mid
                pltpu.VMEM((nb * H * W, TAPS * P), jnp.bfloat16),    # col2
            ],
        ),
        compiler_params=pltpu.CompilerParams(
            dimension_semantics=("parallel",),
            vmem_limit_bytes=vmem_limit),
        cost_estimate=cost,
    )(x_nhwc, w1_t, s1, b1, w2_t, s2, b2)

    out_nhwc = out_flat.reshape(N, H, W, P)
    return jnp.transpose(out_nhwc, (0, 3, 1, 2))


def reference_forward(x, params, eps=1e-5):
    """Pure-JAX NCHW reference matching PyTorch BasicBlock (eval-mode BN)."""
    (w1, g1, be1, m1, v1, w2, g2, be2, m2, v2) = params

    def conv(y, w):
        return lax.conv_general_dilated(
            y, w, window_strides=(1, 1), padding="SAME",
            dimension_numbers=("NCHW", "OIHW", "NCHW"))

    def bn(y, g, b, m, v):
        g, b, m, v = (a[None, :, None, None] for a in (g, b, m, v))
        return g * (y - m) / jnp.sqrt(v + eps) + b

    out = jax.nn.relu(bn(conv(x, w1), g1, be1, m1, v1))
    out = bn(conv(out, w2), g2, be2, m2, v2)
    return jax.nn.relu(out + x)


if __name__ == "__main__":
    # inplanes = planes = 128 (review: P >= 128 keeps stores / MXU lane-dense),
    # stride = 1, downsample = None.  Still small: input is 0.5 MiB total.
    N, C, H, W = 4, 128, 16, 16
    key = jax.random.PRNGKey(0)
    ks = jax.random.split(key, 11)

    x = jax.random.normal(ks[0], (N, C, H, W), jnp.float32)

    w1 = jax.random.normal(ks[1], (C, C, 3, 3), jnp.float32) * 0.05
    g1 = 1.0 + 0.1 * jax.random.normal(ks[2], (C,), jnp.float32)
    be1 = 0.1 * jax.random.normal(ks[3], (C,), jnp.float32)
    m1 = 0.1 * jax.random.normal(ks[4], (C,), jnp.float32)
    v1 = jnp.abs(jax.random.normal(ks[5], (C,), jnp.float32)) + 0.5

    w2 = jax.random.normal(ks[6], (C, C, 3, 3), jnp.float32) * 0.05
    g2 = 1.0 + 0.1 * jax.random.normal(ks[7], (C,), jnp.float32)
    be2 = 0.1 * jax.random.normal(ks[8], (C,), jnp.float32)
    m2 = 0.1 * jax.random.normal(ks[9], (C,), jnp.float32)
    v2 = jnp.abs(jax.random.normal(ks[10], (C,), jnp.float32)) + 0.5

    params = (w1, g1, be1, m1, v1, w2, g2, be2, m2, v2)

    out = basic_block_forward(x, params)
    out = jax.block_until_ready(out)

    ref = reference_forward(x, params)
    assert out.shape == (N, C, H, W)
    # bf16 MXU operands (f32 accumulate / epilogue) over K = 9*128 -> relaxed
    # tolerance vs. the all-f32 reference.
    err = float(jnp.max(jnp.abs(out - ref)))
    assert jnp.allclose(out, ref, atol=5e-2, rtol=5e-2), f"max abs err {err}"

    print("KERNEL_OK")
</pallas_src>

<mosaic_0001>
module attributes {stable_mosaic.version = 11 : i64} {
  func.func @basic_block_kernel(%arg0: i32, %arg1: memref<2x16x16x128xf32, #tpu.memory_space<vmem>>, %arg2: memref<1152x128xbf16, #tpu.memory_space<vmem>>, %arg3: memref<1x128xf32, #tpu.memory_space<vmem>>, %arg4: memref<1x128xf32, #tpu.memory_space<vmem>>, %arg5: memref<1152x128xbf16, #tpu.memory_space<vmem>>, %arg6: memref<1x128xf32, #tpu.memory_space<vmem>>, %arg7: memref<1x128xf32, #tpu.memory_space<vmem>>, %arg8: memref<2x256x128xf32, #tpu.memory_space<vmem>>, %arg9: memref<2x18x18x128xf32, #tpu.memory_space<vmem>>, %arg10: memref<512x1152xbf16, #tpu.memory_space<vmem>>, %arg11: memref<2x18x18x128xf32, #tpu.memory_space<vmem>>, %arg12: memref<512x1152xbf16, #tpu.memory_space<vmem>>) attributes {dimension_semantics = [#tpu.dimension_semantics<parallel>], iteration_bounds = array<i64: 2>, scalar_prefetch = 0 : i64, scratch_operands = 4 : i64, tpu.core_type = #tpu.core_type<tc>, window_params = [{transform_indices = @transform_0, window_bounds = array<i64: 2, 16, 16, 128>}, {pipeline_mode = #tpu.pipeline_mode<synchronous>, transform_indices = @transform_1, window_bounds = array<i64: 1152, 128>}, {pipeline_mode = #tpu.pipeline_mode<synchronous>, transform_indices = @transform_2, window_bounds = array<i64: 1, 128>}, {pipeline_mode = #tpu.pipeline_mode<synchronous>, transform_indices = @transform_3, window_bounds = array<i64: 1, 128>}, {pipeline_mode = #tpu.pipeline_mode<synchronous>, transform_indices = @transform_4, window_bounds = array<i64: 1152, 128>}, {pipeline_mode = #tpu.pipeline_mode<synchronous>, transform_indices = @transform_5, window_bounds = array<i64: 1, 128>}, {pipeline_mode = #tpu.pipeline_mode<synchronous>, transform_indices = @transform_6, window_bounds = array<i64: 1, 128>}, {transform_indices = @transform_7, window_bounds = array<i64: 2, 256, 128>}]} {
    %cst = arith.constant 0.000000e+00 : f32
    %0 = vector.broadcast %cst : f32 to vector<2x1x18x128xf32>
    %cst_0 = arith.constant 0.000000e+00 : f32
    %1 = vector.broadcast %cst_0 : f32 to vector<2x16x1x128xf32>
    %c0 = arith.constant 0 : index
    %c0_1 = arith.constant 0 : index
    %c0_2 = arith.constant 0 : index
    %c0_3 = arith.constant 0 : index
    %2 = vector.load %arg9[%c0, %c0_1, %c0_2, %c0_3] : memref<2x18x18x128xf32, #tpu.memory_space<vmem>>, vector<2x1x18x128xf32>
    tpu.vector_store %arg9[%c0, %c0_1, %c0_2, %c0_3], %0 {strides = array<i32>} : memref<2x18x18x128xf32, #tpu.memory_space<vmem>>, vector<2x1x18x128xf32>,
    %c0_4 = arith.constant 0 : index
    %c17 = arith.constant 17 : index
    %c0_5 = arith.constant 0 : index
    %c0_6 = arith.constant 0 : index
    %3 = vector.load %arg9[%c0_4, %c17, %c0_5, %c0_6] : memref<2x18x18x128xf32, #tpu.memory_space<vmem>>, vector<2x1x18x128xf32>
    tpu.vector_store %arg9[%c0_4, %c17, %c0_5, %c0_6], %0 {strides = array<i32>} : memref<2x18x18x128xf32, #tpu.memory_space<vmem>>, vector<2x1x18x128xf32>,
    %c0_7 = arith.constant 0 : index
    %c1 = arith.constant 1 : index
    %c0_8 = arith.constant 0 : index
    %c0_9 = arith.constant 0 : index
    %4 = vector.load %arg9[%c0_7, %c1, %c0_8, %c0_9] : memref<2x18x18x128xf32, #tpu.memory_space<vmem>>, vector<2x16x1x128xf32>
    tpu.vector_store %arg9[%c0_7, %c1, %c0_8, %c0_9], %1 {strides = array<i32>} : memref<2x18x18x128xf32, #tpu.memory_space<vmem>>, vector<2x16x1x128xf32>,
    %c0_10 = arith.constant 0 : index
    %c1_11 = arith.constant 1 : index
    %c17_12 = arith.constant 17 : index
    %c0_13 = arith.constant 0 : index
    %5 = vector.load %arg9[%c0_10, %c1_11, %c17_12, %c0_13] : memref<2x18x18x128xf32, #tpu.memory_space<vmem>>, vector<2x16x1x128xf32>
    tpu.vector_store %arg9[%c0_10, %c1_11, %c17_12, %c0_13], %1 {strides = array<i32>} : memref<2x18x18x128xf32, #tpu.memory_space<vmem>>, vector<2x16x1x128xf32>,
    %c0_14 = arith.constant 0 : index
    %c0_15 = arith.constant 0 : index
    %c0_16 = arith.constant 0 : index
    %c0_17 = arith.constant 0 : index
    %6 = vector.load %arg11[%c0_14, %c0_15, %c0_16, %c0_17] : memref<2x18x18x128xf32, #tpu.memory_space<vmem>>, vector<2x1x18x128xf32>
    tpu.vector_store %arg11[%c0_14, %c0_15, %c0_16, %c0_17], %0 {strides = array<i32>} : memref<2x18x18x128xf32, #tpu.memory_space<vmem>>, vector<2x1x18x128xf32>,
    %c0_18 = arith.constant 0 : index
    %c17_19 = arith.constant 17 : index
    %c0_20 = arith.constant 0 : index
    %c0_21 = arith.constant 0 : index
    %7 = vector.load %arg11[%c0_18, %c17_19, %c0_20, %c0_21] : memref<2x18x18x128xf32, #tpu.memory_space<vmem>>, vector<2x1x18x128xf32>
    tpu.vector_store %arg11[%c0_18, %c17_19, %c0_20, %c0_21], %0 {strides = array<i32>} : memref<2x18x18x128xf32, #tpu.memory_space<vmem>>, vector<2x1x18x128xf32>,
    %c0_22 = arith.constant 0 : index
    %c1_23 = arith.constant 1 : index
    %c0_24 = arith.constant 0 : index
    %c0_25 = arith.constant 0 : index
    %8 = vector.load %arg11[%c0_22, %c1_23, %c0_24, %c0_25] : memref<2x18x18x128xf32, #tpu.memory_space<vmem>>, vector<2x16x1x128xf32>
    tpu.vector_store %arg11[%c0_22, %c1_23, %c0_24, %c0_25], %1 {strides = array<i32>} : memref<2x18x18x128xf32, #tpu.memory_space<vmem>>, vector<2x16x1x128xf32>,
    %c0_26 = arith.constant 0 : index
    %c1_27 = arith.constant 1 : index
    %c17_28 = arith.constant 17 : index
    %c0_29 = arith.constant 0 : index
    %9 = vector.load %arg11[%c0_26, %c1_27, %c17_28, %c0_29] : memref<2x18x18x128xf32, #tpu.memory_space<vmem>>, vector<2x16x1x128xf32>
    tpu.vector_store %arg11[%c0_26, %c1_27, %c17_28, %c0_29], %1 {strides = array<i32>} : memref<2x18x18x128xf32, #tpu.memory_space<vmem>>, vector<2x16x1x128xf32>,
    %c0_30 = arith.constant 0 : index
    %c0_31 = arith.constant 0 : index
    %c0_32 = arith.constant 0 : index
    %c0_33 = arith.constant 0 : index
    %10 = vector.load %arg1[%c0_30, %c0_31, %c0_32, %c0_33] : memref<2x16x16x128xf32, #tpu.memory_space<vmem>>, vector<2x16x16x128xf32>
    %c0_34 = arith.constant 0 : index
    %c1_35 = arith.constant 1 : index
    %c1_36 = arith.constant 1 : index
    %c0_37 = arith.constant 0 : index
    %11 = vector.load %arg9[%c0_34, %c1_35, %c1_36, %c0_37] : memref<2x18x18x128xf32, #tpu.memory_space<vmem>>, vector<2x16x16x128xf32>
    tpu.vector_store %arg9[%c0_34, %c1_35, %c1_36, %c0_37], %10 {strides = array<i32>} : memref<2x18x18x128xf32, #tpu.memory_space<vmem>>, vector<2x16x16x128xf32>,
    %c0_38 = arith.constant 0 : index
    %c0_39 = arith.constant 0 : index
    %c0_40 = arith.constant 0 : index
    %c0_41 = arith.constant 0 : index
    %12 = vector.load %arg9[%c0_38, %c0_39, %c0_40, %c0_41] : memref<2x18x18x128xf32, #tpu.memory_space<vmem>>, vector<2x16x16x128xf32>
    %13 = arith.truncf %12 : vector<2x16x16x128xf32> to vector<2x16x16x128xbf16>
    %14 = vector.shape_cast %13 : vector<2x16x16x128xbf16> to vector<512x128xbf16>
    %c0_42 = arith.constant 0 : index
    %c0_43 = arith.constant 0 : index
    %15 = vector.load %arg10[%c0_42, %c0_43] : memref<512x1152xbf16, #tpu.memory_space<vmem>>, vector<512x128xbf16>
    tpu.vector_store %arg10[%c0_42, %c0_43], %14 {strides = array<i32>} : memref<512x1152xbf16, #tpu.memory_space<vmem>>, vector<512x128xbf16>,
    %c0_44 = arith.constant 0 : index
    %c0_45 = arith.constant 0 : index
    %c1_46 = arith.constant 1 : index
    %c0_47 = arith.constant 0 : index
    %16 = vector.load %arg9[%c0_44, %c0_45, %c1_46, %c0_47] : memref<2x18x18x128xf32, #tpu.memory_space<vmem>>, vector<2x16x16x128xf32>
    %17 = arith.truncf %16 : vector<2x16x16x128xf32> to vector<2x16x16x128xbf16>
    %18 = vector.shape_cast %17 : vector<2x16x16x128xbf16> to vector<512x128xbf16>
    %c0_48 = arith.constant 0 : index
    %c128 = arith.constant 128 : index
    %19 = vector.load %arg10[%c0_48, %c128] : memref<512x1152xbf16, #tpu.memory_space<vmem>>, vector<512x128xbf16>
    tpu.vector_store %arg10[%c0_48, %c128], %18 {strides = array<i32>} : memref<512x1152xbf16, #tpu.memory_space<vmem>>, vector<512x128xbf16>,
    %c0_49 = arith.constant 0 : index
    %c0_50 = arith.constant 0 : index
    %c2 = arith.constant 2 : index
    %c0_51 = arith.constant 0 : index
    %20 = vector.load %arg9[%c0_49, %c0_50, %c2, %c0_51] : memref<2x18x18x128xf32, #tpu.memory_space<vmem>>, vector<2x16x16x128xf32>
    %21 = arith.truncf %20 : vector<2x16x16x128xf32> to vector<2x16x16x128xbf16>
    %22 = vector.shape_cast %21 : vector<2x16x16x128xbf16> to vector<512x128xbf16>
    %c0_52 = arith.constant 0 : index
    %c256 = arith.constant 256 : index
    %23 = vector.load %arg10[%c0_52, %c256] : memref<512x1152xbf16, #tpu.memory_space<vmem>>, vector<512x128xbf16>
    tpu.vector_store %arg10[%c0_52, %c256], %22 {strides = array<i32>} : memref<512x1152xbf16, #tpu.memory_space<vmem>>, vector<512x128xbf16>,
    %c0_53 = arith.constant 0 : index
    %c1_54 = arith.constant 1 : index
    %c0_55 = arith.constant 0 : index
    %c0_56 = arith.constant 0 : index
    %24 = vector.load %arg9[%c0_53, %c1_54, %c0_55, %c0_56] : memref<2x18x18x128xf32, #tpu.memory_space<vmem>>, vector<2x16x16x128xf32>
    %25 = arith.truncf %24 : vector<2x16x16x128xf32> to vector<2x16x16x128xbf16>
    %26 = vector.shape_cast %25 : vector<2x16x16x128xbf16> to vector<512x128xbf16>
    %c0_57 = arith.constant 0 : index
    %c384 = arith.constant 384 : index
    %27 = vector.load %arg10[%c0_57, %c384] : memref<512x1152xbf16, #tpu.memory_space<vmem>>, vector<512x128xbf16>
    tpu.vector_store %arg10[%c0_57, %c384], %26 {strides = array<i32>} : memref<512x1152xbf16, #tpu.memory_space<vmem>>, vector<512x128xbf16>,
    %c0_58 = arith.constant 0 : index
    %c1_59 = arith.constant 1 : index
    %c1_60 = arith.constant 1 : index
    %c0_61 = arith.constant 0 : index
    %28 = vector.load %arg9[%c0_58, %c1_59, %c1_60, %c0_61] : memref<2x18x18x128xf32, #tpu.memory_space<vmem>>, vector<2x16x16x128xf32>
    %29 = arith.truncf %28 : vector<2x16x16x128xf32> to vector<2x16x16x128xbf16>
    %30 = vector.shape_cast %29 : vector<2x16x16x128xbf16> to vector<512x128xbf16>
    %c0_62 = arith.constant 0 : index
    %c512 = arith.constant 512 : index
    %31 = vector.load %arg10[%c0_62, %c512] : memref<512x1152xbf16, #tpu.memory_space<vmem>>, vector<512x128xbf16>
    tpu.vector_store %arg10[%c0_62, %c512], %30 {strides = array<i32>} : memref<512x1152xbf16, #tpu.memory_space<vmem>>, vector<512x128xbf16>,
    %c0_63 = arith.constant 0 : index
    %c1_64 = arith.constant 1 : index
    %c2_65 = arith.constant 2 : index
    %c0_66 = arith.constant 0 : index
    %32 = vector.load %arg9[%c0_63, %c1_64, %c2_65, %c0_66] : memref<2x18x18x128xf32, #tpu.memory_space<vmem>>, vector<2x16x16x128xf32>
    %33 = arith.truncf %32 : vector<2x16x16x128xf32> to vector<2x16x16x128xbf16>
    %34 = vector.shape_cast %33 : vector<2x16x16x128xbf16> to vector<512x128xbf16>
    %c0_67 = arith.constant 0 : index
    %c640 = arith.constant 640 : index
    %35 = vector.load %arg10[%c0_67, %c640] : memref<512x1152xbf16, #tpu.memory_space<vmem>>, vector<512x128xbf16>
    tpu.vector_store %arg10[%c0_67, %c640], %34 {strides = array<i32>} : memref<512x1152xbf16, #tpu.memory_space<vmem>>, vector<512x128xbf16>,
    %c0_68 = arith.constant 0 : index
    %c2_69 = arith.constant 2 : index
    %c0_70 = arith.constant 0 : index
    %c0_71 = arith.constant 0 : index
    %36 = vector.load %arg9[%c0_68, %c2_69, %c0_70, %c0_71] : memref<2x18x18x128xf32, #tpu.memory_space<vmem>>, vector<2x16x16x128xf32>
    %37 = arith.truncf %36 : vector<2x16x16x128xf32> to vector<2x16x16x128xbf16>
    %38 = vector.shape_cast %37 : vector<2x16x16x128xbf16> to vector<512x128xbf16>
    %c0_72 = arith.constant 0 : index
    %c768 = arith.constant 768 : index
    %39 = vector.load %arg10[%c0_72, %c768] : memref<512x1152xbf16, #tpu.memory_space<vmem>>, vector<512x128xbf16>
    tpu.vector_store %arg10[%c0_72, %c768], %38 {strides = array<i32>} : memref<512x1152xbf16, #tpu.memory_space<vmem>>, vector<512x128xbf16>,
    %c0_73 = arith.constant 0 : index
    %c2_74 = arith.constant 2 : index
    %c1_75 = arith.constant 1 : index
    %c0_76 = arith.constant 0 : index
    %40 = vector.load %arg9[%c0_73, %c2_74, %c1_75, %c0_76] : memref<2x18x18x128xf32, #tpu.memory_space<vmem>>, vector<2x16x16x128xf32>
    %41 = arith.truncf %40 : vector<2x16x16x128xf32> to vector<2x16x16x128xbf16>
    %42 = vector.shape_cast %41 : vector<2x16x16x128xbf16> to vector<512x128xbf16>
    %c0_77 = arith.constant 0 : index
    %c896 = arith.constant 896 : index
    %43 = vector.load %arg10[%c0_77, %c896] : memref<512x1152xbf16, #tpu.memory_space<vmem>>, vector<512x128xbf16>
    tpu.vector_store %arg10[%c0_77, %c896], %42 {strides = array<i32>} : memref<512x1152xbf16, #tpu.memory_space<vmem>>, vector<512x128xbf16>,
    %c0_78 = arith.constant 0 : index
    %c2_79 = arith.constant 2 : index
    %c2_80 = arith.constant 2 : index
    %c0_81 = arith.constant 0 : index
    %44 = vector.load %arg9[%c0_78, %c2_79, %c2_80, %c0_81] : memref<2x18x18x128xf32, #tpu.memory_space<vmem>>, vector<2x16x16x128xf32>
    %45 = arith.truncf %44 : vector<2x16x16x128xf32> to vector<2x16x16x128xbf16>
    %46 = vector.shape_cast %45 : vector<2x16x16x128xbf16> to vector<512x128xbf16>
    %c0_82 = arith.constant 0 : index
    %c1024 = arith.constant 1024 : index
    %47 = vector.load %arg10[%c0_82, %c1024] : memref<512x1152xbf16, #tpu.memory_space<vmem>>, vector<512x128xbf16>
    tpu.vector_store %arg10[%c0_82, %c1024], %46 {strides = array<i32>} : memref<512x1152xbf16, #tpu.memory_space<vmem>>, vector<512x128xbf16>,
    %c0_83 = arith.constant 0 : index
    %c0_84 = arith.constant 0 : index
    %48 = vector.load %arg10[%c0_83, %c0_84] : memref<512x1152xbf16, #tpu.memory_space<vmem>>, vector<512x1152xbf16>
    %c0_85 = arith.constant 0 : index
    %c0_86 = arith.constant 0 : index
    %49 = vector.load %arg2[%c0_85, %c0_86] : memref<1152x128xbf16, #tpu.memory_space<vmem>>, vector<1152x128xbf16>
    %cst_87 = arith.constant dense<0.000000e+00> : vector<512x128xf32>
    %50 = tpu.matmul %48, %49, %cst_87 {dimension_numbers = #tpu.dot_dimension_numbers<[1], [0], [0], [1], [0, 0, 1, 1], [], []>} : vector<512x1152xbf16>, vector<1152x128xbf16>, vector<512x128xf32> -> vector<512x128xf32>
    %c0_88 = arith.constant 0 : index
    %c0_89 = arith.constant 0 : index
    %51 = vector.load %arg3[%c0_88, %c0_89] : memref<1x128xf32, #tpu.memory_space<vmem>>, vector<1x128xf32>
    %52 = vector.broadcast %51 : vector<1x128xf32> to vector<512x128xf32>
    %53 = arith.mulf %50, %52 : vector<512x128xf32>
    %c0_90 = arith.constant 0 : index
    %c0_91 = arith.constant 0 : index
    %54 = vector.load %arg4[%c0_90, %c0_91] : memref<1x128xf32, #tpu.memory_space<vmem>>, vector<1x128xf32>
    %55 = vector.broadcast %54 : vector<1x128xf32> to vector<512x128xf32>
    %56 = arith.addf %53, %55 : vector<512x128xf32>
    %cst_92 = arith.constant 0.000000e+00 : f32
    %57 = vector.broadcast %cst_92 : f32 to vector<512x128xf32>
    %58 = arith.maximumf %56, %57 : vector<512x128xf32>
    %59 = vector.shape_cast %58 : vector<512x128xf32> to vector<2x16x16x128xf32>
    %c0_93 = arith.constant 0 : index
    %c1_94 = arith.constant 1 : index
    %c1_95 = arith.constant 1 : index
    %c0_96 = arith.constant 0 : index
    %60 = vector.load %arg11[%c0_93, %c1_94, %c1_95, %c0_96] : memref<2x18x18x128xf32, #tpu.memory_space<vmem>>, vector<2x16x16x128xf32>
    tpu.vector_store %arg11[%c0_93, %c1_94, %c1_95, %c0_96], %59 {strides = array<i32>} : memref<2x18x18x128xf32, #tpu.memory_space<vmem>>, vector<2x16x16x128xf32>,
    %c0_97 = arith.constant 0 : index
    %c0_98 = arith.constant 0 : index
    %c0_99 = arith.constant 0 : index
    %c0_100 = arith.constant 0 : index
    %61 = vector.load %arg11[%c0_97, %c0_98, %c0_99, %c0_100] : memref<2x18x18x128xf32, #tpu.memory_space<vmem>>, vector<2x16x16x128xf32>
    %62 = arith.truncf %61 : vector<2x16x16x128xf32> to vector<2x16x16x128xbf16>
    %63 = vector.shape_cast %62 : vector<2x16x16x128xbf16> to vector<512x128xbf16>
    %c0_101 = arith.constant 0 : index
    %c0_102 = arith.constant 0 : index
    %64 = vector.load %arg12[%c0_101, %c0_102] : memref<512x1152xbf16, #tpu.memory_space<vmem>>, vector<512x128xbf16>
    tpu.vector_store %arg12[%c0_101, %c0_102], %63 {strides = array<i32>} : memref<512x1152xbf16, #tpu.memory_space<vmem>>, vector<512x128xbf16>,
    %c0_103 = arith.constant 0 : index
    %c0_104 = arith.constant 0 : index
    %c1_105 = arith.constant 1 : index
    %c0_106 = arith.constant 0 : index
    %65 = vector.load %arg11[%c0_103, %c0_104, %c1_105, %c0_106] : memref<2x18x18x128xf32, #tpu.memory_space<vmem>>, vector<2x16x16x128xf32>
    %66 = arith.truncf %65 : vector<2x16x16x128xf32> to vector<2x16x16x128xbf16>
    %67 = vector.shape_cast %66 : vector<2x16x16x128xbf16> to vector<512x128xbf16>
    %c0_107 = arith.constant 0 : index
    %c128_108 = arith.constant 128 : index
    %68 = vector.load %arg12[%c0_107, %c128_108] : memref<512x1152xbf16, #tpu.memory_space<vmem>>, vector<512x128xbf16>
    tpu.vector_store %arg12[%c0_107, %c128_108], %67 {strides = array<i32>} : memref<512x1152xbf16, #tpu.memory_space<vmem>>, vector<512x128xbf16>,
    %c0_109 = arith.constant 0 : index
    %c0_110 = arith.constant 0 : index
    %c2_111 = arith.constant 2 : index
    %c0_112 = arith.constant 0 : index
    %69 = vector.load %arg11[%c0_109, %c0_110, %c2_111, %c0_112] : memref<2x18x18x128xf32, #tpu.memory_space<vmem>>, vector<2x16x16x128xf32>
    %70 = arith.truncf %69 : vector<2x16x16x128xf32> to vector<2x16x16x128xbf16>
    %71 = vector.shape_cast %70 : vector<2x16x16x128xbf16> to vector<512x128xbf16>
    %c0_113 = arith.constant 0 : index
    %c256_114 = arith.constant 256 : index
    %72 = vector.load %arg12[%c0_113, %c256_114] : memref<512x1152xbf16, #tpu.memory_space<vmem>>, vector<512x128xbf16>
    tpu.vector_store %arg12[%c0_113, %c256_114], %71 {strides = array<i32>} : memref<512x1152xbf16, #tpu.memory_space<vmem>>, vector<512x128xbf16>,
    %c0_115 = arith.constant 0 : index
    %c1_116 = arith.constant 1 : index
    %c0_117 = arith.constant 0 : index
    %c0_118 = arith.constant 0 : index
    %73 = vector.load %arg11[%c0_115, %c1_116, %c0_117, %c0_118] : memref<2x18x18x128xf32, #tpu.memory_space<vmem>>, vector<2x16x16x128xf32>
    %74 = arith.truncf %73 : vector<2x16x16x128xf32> to vector<2x16x16x128xbf16>
    %75 = vector.shape_cast %74 : vector<2x16x16x128xbf16> to vector<512x128xbf16>
    %c0_119 = arith.constant 0 : index
    %c384_120 = arith.constant 384 : index
    %76 = vector.load %arg12[%c0_119, %c384_120] : memref<512x1152xbf16, #tpu.memory_space<vmem>>, vector<512x128xbf16>
    tpu.vector_store %arg12[%c0_119, %c384_120], %75 {strides = array<i32>} : memref<512x1152xbf16, #tpu.memory_space<vmem>>, vector<512x128xbf16>,
    %c0_121 = arith.constant 0 : index
    %c1_122 = arith.constant 1 : index
    %c1_123 = arith.constant 1 : index
    %c0_124 = arith.constant 0 : index
    %77 = vector.load %arg11[%c0_121, %c1_122, %c1_123, %c0_124] : memref<2x18x18x128xf32, #tpu.memory_space<vmem>>, vector<2x16x16x128xf32>
    %78 = arith.truncf %77 : vector<2x16x16x128xf32> to vector<2x16x16x128xbf16>
    %79 = vector.shape_cast %78 : vector<2x16x16x128xbf16> to vector<512x128xbf16>
    %c0_125 = arith.constant 0 : index
    %c512_126 = arith.constant 512 : index
    %80 = vector.load %arg12[%c0_125, %c512_126] : memref<512x1152xbf16, #tpu.memory_space<vmem>>, vector<512x128xbf16>
    tpu.vector_store %arg12[%c0_125, %c512_126], %79 {strides = array<i32>} : memref<512x1152xbf16, #tpu.memory_space<vmem>>, vector<512x128xbf16>,
    %c0_127 = arith.constant 0 : index
    %c1_128 = arith.constant 1 : index
    %c2_129 = arith.constant 2 : index
    %c0_130 = arith.constant 0 : index
    %81 = vector.load %arg11[%c0_127, %c1_128, %c2_129, %c0_130] : memref<2x18x18x128xf32, #tpu.memory_space<vmem>>, vector<2x16x16x128xf32>
    %82 = arith.truncf %81 : vector<2x16x16x128xf32> to vector<2x16x16x128xbf16>
    %83 = vector.shape_cast %82 : vector<2x16x16x128xbf16> to vector<512x128xbf16>
    %c0_131 = arith.constant 0 : index
    %c640_132 = arith.constant 640 : index
    %84 = vector.load %arg12[%c0_131, %c640_132] : memref<512x1152xbf16, #tpu.memory_space<vmem>>, vector<512x128xbf16>
    tpu.vector_store %arg12[%c0_131, %c640_132], %83 {strides = array<i32>} : memref<512x1152xbf16, #tpu.memory_space<vmem>>, vector<512x128xbf16>,
    %c0_133 = arith.constant 0 : index
    %c2_134 = arith.constant 2 : index
    %c0_135 = arith.constant 0 : index
    %c0_136 = arith.constant 0 : index
    %85 = vector.load %arg11[%c0_133, %c2_134, %c0_135, %c0_136] : memref<2x18x18x128xf32, #tpu.memory_space<vmem>>, vector<2x16x16x128xf32>
    %86 = arith.truncf %85 : vector<2x16x16x128xf32> to vector<2x16x16x128xbf16>
    %87 = vector.shape_cast %86 : vector<2x16x16x128xbf16> to vector<512x128xbf16>
    %c0_137 = arith.constant 0 : index
    %c768_138 = arith.constant 768 : index
    %88 = vector.load %arg12[%c0_137, %c768_138] : memref<512x1152xbf16, #tpu.memory_space<vmem>>, vector<512x128xbf16>
    tpu.vector_store %arg12[%c0_137, %c768_138], %87 {strides = array<i32>} : memref<512x1152xbf16, #tpu.memory_space<vmem>>, vector<512x128xbf16>,
    %c0_139 = arith.constant 0 : index
    %c2_140 = arith.constant 2 : index
    %c1_141 = arith.constant 1 : index
    %c0_142 = arith.constant 0 : index
    %89 = vector.load %arg11[%c0_139, %c2_140, %c1_141, %c0_142] : memref<2x18x18x128xf32, #tpu.memory_space<vmem>>, vector<2x16x16x128xf32>
    %90 = arith.truncf %89 : vector<2x16x16x128xf32> to vector<2x16x16x128xbf16>
    %91 = vector.shape_cast %90 : vector<2x16x16x128xbf16> to vector<512x128xbf16>
    %c0_143 = arith.constant 0 : index
    %c896_144 = arith.constant 896 : index
    %92 = vector.load %arg12[%c0_143, %c896_144] : memref<512x1152xbf16, #tpu.memory_space<vmem>>, vector<512x128xbf16>
    tpu.vector_store %arg12[%c0_143, %c896_144], %91 {strides = array<i32>} : memref<512x1152xbf16, #tpu.memory_space<vmem>>, vector<512x128xbf16>,
    %c0_145 = arith.constant 0 : index
    %c2_146 = arith.constant 2 : index
    %c2_147 = arith.constant 2 : index
    %c0_148 = arith.constant 0 : index
    %93 = vector.load %arg11[%c0_145, %c2_146, %c2_147, %c0_148] : memref<2x18x18x128xf32, #tpu.memory_space<vmem>>, vector<2x16x16x128xf32>
    %94 = arith.truncf %93 : vector<2x16x16x128xf32> to vector<2x16x16x128xbf16>
    %95 = vector.shape_cast %94 : vector<2x16x16x128xbf16> to vector<512x128xbf16>
    %c0_149 = arith.constant 0 : index
    %c1024_150 = arith.constant 1024 : index
    %96 = vector.load %arg12[%c0_149, %c1024_150] : memref<512x1152xbf16, #tpu.memory_space<vmem>>, vector<512x128xbf16>
    tpu.vector_store %arg12[%c0_149, %c1024_150], %95 {strides = array<i32>} : memref<512x1152xbf16, #tpu.memory_space<vmem>>, vector<512x128xbf16>,
    %c0_151 = arith.constant 0 : index
    %c0_152 = arith.constant 0 : index
    %97 = vector.load %arg12[%c0_151, %c0_152] : memref<512x1152xbf16, #tpu.memory_space<vmem>>, vector<512x1152xbf16>
    %c0_153 = arith.constant 0 : index
    %c0_154 = arith.constant 0 : index
    %98 = vector.load %arg5[%c0_153, %c0_154] : memref<1152x128xbf16, #tpu.memory_space<vmem>>, vector<1152x128xbf16>
    %cst_155 = arith.constant dense<0.000000e+00> : vector<512x128xf32>
    %99 = tpu.matmul %97, %98, %cst_155 {dimension_numbers = #tpu.dot_dimension_numbers<[1], [0], [0], [1], [0, 0, 1, 1], [], []>} : vector<512x1152xbf16>, vector<1152x128xbf16>, vector<512x128xf32> -> vector<512x128xf32>
    %c0_156 = arith.constant 0 : index
    %c0_157 = arith.constant 0 : index
    %100 = vector.load %arg6[%c0_156, %c0_157] : memref<1x128xf32, #tpu.memory_space<vmem>>, vector<1x128xf32>
    %101 = vector.broadcast %100 : vector<1x128xf32> to vector<512x128xf32>
    %102 = arith.mulf %99, %101 : vector<512x128xf32>
    %c0_158 = arith.constant 0 : index
    %c0_159 = arith.constant 0 : index
    %103 = vector.load %arg7[%c0_158, %c0_159] : memref<1x128xf32, #tpu.memory_space<vmem>>, vector<1x128xf32>
    %104 = vector.broadcast %103 : vector<1x128xf32> to vector<512x128xf32>
    %105 = arith.addf %102, %104 : vector<512x128xf32>
    %c0_160 = arith.constant 0 : index
    %c0_161 = arith.constant 0 : index
    %c0_162 = arith.constant 0 : index
    %c0_163 = arith.constant 0 : index
    %106 = vector.load %arg1[%c0_160, %c0_161, %c0_162, %c0_163] : memref<2x16x16x128xf32, #tpu.memory_space<vmem>>, vector<2x16x16x128xf32>
    %107 = vector.shape_cast %106 : vector<2x16x16x128xf32> to vector<512x128xf32>
    %108 = arith.addf %105, %107 : vector<512x128xf32>
    %cst_164 = arith.constant 0.000000e+00 : f32
    %109 = vector.broadcast %cst_164 : f32 to vector<512x128xf32>
    %110 = arith.maximumf %108, %109 : vector<512x128xf32>
    %111 = vector.shape_cast %110 : vector<512x128xf32> to vector<2x256x128xf32>
    %c0_165 = arith.constant 0 : index
    %c0_166 = arith.constant 0 : index
    %c0_167 = arith.constant 0 : index
    %112 = vector.load %arg8[%c0_165, %c0_166, %c0_167] : memref<2x256x128xf32, #tpu.memory_space<vmem>>, vector<2x256x128xf32>
    tpu.vector_store %arg8[%c0_165, %c0_166, %c0_167], %111 {strides = array<i32>} : memref<2x256x128xf32, #tpu.memory_space<vmem>>, vector<2x256x128xf32>,
    return
  }
  func.func @transform_0(%arg0: i32) -> (i32, i32, i32, i32) {
    %c0_i32 = arith.constant 0 : i32
    %c0_i32_0 = arith.constant 0 : i32
    %c0_i32_1 = arith.constant 0 : i32
    %c0_i32_2 = arith.constant 0 : i32
    return %arg0, %c0_i32, %c0_i32_0, %c0_i32_1 : i32, i32, i32, i32
  }
  func.func @transform_1(%arg0: i32) -> (i32, i32) {
    %c0_i32 = arith.constant 0 : i32
    %c0_i32_0 = arith.constant 0 : i32
    %c0_i32_1 = arith.constant 0 : i32
    return %c0_i32, %c0_i32_0 : i32, i32
  }
  func.func @transform_2(%arg0: i32) -> (i32, i32) {
    %c0_i32 = arith.constant 0 : i32
    %c0_i32_0 = arith.constant 0 : i32
    %c0_i32_1 = arith.constant 0 : i32
    return %c0_i32, %c0_i32_0 : i32, i32
  }
  func.func @transform_3(%arg0: i32) -> (i32, i32) {
    %c0_i32 = arith.constant 0 : i32
    %c0_i32_0 = arith.constant 0 : i32
    %c0_i32_1 = arith.constant 0 : i32
    return %c0_i32, %c0_i32_0 : i32, i32
  }
  func.func @transform_4(%arg0: i32) -> (i32, i32) {
    %c0_i32 = arith.constant 0 : i32
    %c0_i32_0 = arith.constant 0 : i32
    %c0_i32_1 = arith.constant 0 : i32
    return %c0_i32, %c0_i32_0 : i32, i32
  }
  func.func @transform_5(%arg0: i32) -> (i32, i32) {
    %c0_i32 = arith.constant 0 : i32
    %c0_i32_0 = arith.constant 0 : i32
    %c0_i32_1 = arith.constant 0 : i32
    return %c0_i32, %c0_i32_0 : i32, i32
  }
  func.func @transform_6(%arg0: i32) -> (i32, i32) {
    %c0_i32 = arith.constant 0 : i32
    %c0_i32_0 = arith.constant 0 : i32
    %c0_i32_1 = arith.constant 0 : i32
    return %c0_i32, %c0_i32_0 : i32, i32
  }
  func.func @transform_7(%arg0: i32) -> (i32, i32, i32) {
    %c0_i32 = arith.constant 0 : i32
    %c0_i32_0 = arith.constant 0 : i32
    %c0_i32_1 = arith.constant 0 : i32
    return %arg0, %c0_i32, %c0_i32_0 : i32, i32, i32
  }
}

</mosaic_0001>

<llo_original>
// kernel: tpu_custom_call.1
$region0: #{tpu_custom_call.1}
  #allocation0 [shape = 'u32[]', space=smem, size = 0x4, offset = 0x4, fixed_abs, tag = 'smem constant byte address 0x4 - core index']
  #allocation1 [shape = 'u32[144,128]{1,0:T(1,128)}', space=vmem, size = 0x12000, scoped, tag = 'internal scratch']
  #allocation2 [shape = 'f32[2,18,18,128]{3,2,1,0:T(8,128)}', space=vmem, size = 0x6c000, scoped, tag = 'scratch operand']
  #allocation3 [shape = 'bf16[512,1152]{1,0:T(16,128)(2,1)}', space=vmem, size = 0x120000, scoped, tag = 'scratch operand']
  #allocation4 [shape = 'f32[2,18,18,128]{3,2,1,0:T(8,128)}', space=vmem, size = 0x6c000, scoped, tag = 'scratch operand']
  #allocation5 [shape = 'bf16[512,1152]{1,0:T(16,128)(2,1)}', space=vmem, size = 0x120000, scoped, tag = 'scratch operand']
  %s0 = inlined_call_operand.hbm [shape: f32[4,16,16,128], index: 0, kind: input, shape index: {}]
  %s1 = inlined_call_operand.hbm [shape: bf16[1152,128], index: 1, kind: input, shape index: {}]
  %s2 = inlined_call_operand.vmem [shape: f32[1,128], index: 2, kind: input, shape index: {}]
  %s3 = inlined_call_operand.vmem [shape: f32[1,128], index: 3, kind: input, shape index: {}]
  %s4 = inlined_call_operand.hbm [shape: bf16[1152,128], index: 4, kind: input, shape index: {}]
  %s5 = inlined_call_operand.vmem [shape: f32[1,128], index: 5, kind: input, shape index: {}]
  %s6 = inlined_call_operand.vmem [shape: f32[1,128], index: 6, kind: input, shape index: {}]
  %s7 = inlined_call_operand.hbm [shape: f32[4,256,128], index: 7, kind: output, shape index: {}]
  %s8 = sld [smem:[#allocation0]]
  $region73: #{tpu_custom_call.1} parent=0
    _
  %s10 = ssub.s32 1, %s8
  %s11 = scalar_select 0, %s10, %s8
  $region1: #{tpu_custom_call.1} parent=0
    #allocation6 [shape = 'u8[524288]{0}', space=vmem, size = 0x80000, scoped, tag = 'input window, operand 0']
    #allocation7 [shape = 's32[2]{0}', space=sflag, size = 0x8, scoped, tag = 'scoped memory for tpu_custom_call.1']
    #allocation8 [shape = 's32[2]{0}', space=sflag, size = 0x8, scoped, tag = 'scoped memory for tpu_custom_call.1']
    #allocation9 [shape = 'u8[294912]{0}', space=vmem, size = 0x48000, scoped, tag = 'input window, operand 1, single buffered']
    #allocation10 [shape = 's32[1]{0}', space=sflag, size = 0x4, scoped, tag = 'scoped memory for tpu_custom_call.1']
    #allocation11 [shape = 'u8[294912]{0}', space=vmem, size = 0x48000, scoped, tag = 'input window, operand 4, single buffered']
    #allocation12 [shape = 'u8[524288]{0}', space=vmem, size = 0x80000, scoped, tag = 'output window, operand 0']
    %12 = vsyncpa [#allocation7], 0
    %s13 = scalar_lea.sflag [#allocation7], 1
    %14 = vsyncpa %s13, 0
    %15 = vsyncpa [#allocation10], 0
    %16 = vsyncpa [#allocation8], 0
    %s17 = scalar_lea.sflag [#allocation8], 1
    %18 = vsyncpa %s17, 0
    loop: start=0, step=1, limit=4
    $region2: #{tpu_custom_call.1} parent=1 // loop_pre_header
      _
    $region3: #{tpu_custom_call.1} parent=1 // loop_header
      %s20 = sphi 0, %s24
      %p21 = scmp.ge.s32.totalorder %s20, 4
      %s30 = sphi 0, %s32
      %s33 = sphi 0, %s30
      %s34 = sphi 0, %s33
      %s50 = sphi 0, %s34
      %s54 = sphi 0, %s54
      %s56 = sphi 0, %s54
      %s57 = sphi 0, %s56
      %s71 = sphi 0, %s57
      %s75 = sphi 0, %s75
      %s77 = sphi 0, %s75
      %s78 = sphi 0, %s77
      %s92 = sphi 0, %s78
      %s96 = sphi 0, %s96
      %s98 = sphi 0, %s96
      %s99 = sphi 0, %s98
      %s113 = sphi 0, %s99
      %s117 = sphi 0, %s117
      %s119 = sphi 0, %s117
      %s120 = sphi 0, %s119
      %s134 = sphi 0, %s120
      %s138 = sphi 0, %s138
      %s140 = sphi 0, %s138
      %s141 = sphi 0, %s140
      %s155 = sphi 0, %s141
      %s159 = sphi 0, %s159
      %s161 = sphi 0, %s159
      %s162 = sphi 0, %s161
      %s176 = sphi 0, %s162
      %s182 = sphi 0, %s184
      %s185 = sphi 0, %s182
      %s186 = sphi 0, %s185
      %s202 = sphi 0, %s186
    $region4: #{tpu_custom_call.1} parent=1 // loop_header_branch
      %23 = sbr.rel (%p21) target = $region8
    $region5: #{tpu_custom_call.1} parent=1 // loop_body
      %s25 = ssub.s32 %s20, 1
      %s26 = ssub.s32 %s20, 2
      %s27 = sadd.s32 %s20, 1
      %s28 = ssub.s32 %s20, %s27
      %p29 = scmp.eq.s32.totalorder %s28, 0
      %s31 = sadd.s32 %s30, 1
      %s32 = scalar_select %p29, %s30, %s31
      %p35 = pneg %p29
      %p36 = scmp.eq.s32.totalorder %s20, 1
      %p37 = por %p35, %p36
      %p38 = scmp.ne.s32.totalorder %s30, %s33
      %p39 = scmp.eq.s32.totalorder %s20, 0
      %p40 = por %p38, %p39
      %p41 = scmp.ne.s32.totalorder %s30, %s33
      %p42 = scmp.eq.s32.totalorder %s25, 1
      %p43 = por %p41, %p42
      %p44 = scmp.ne.s32.totalorder %s33, %s34
      %p45 = scmp.eq.s32.totalorder %s25, 0
      %p46 = por %p44, %p45
      %p47 = scmp.ne.s32.totalorder %s33, %s34
      %p48 = scmp.eq.s32.totalorder %s26, 1
      %p49 = por %p47, %p48
      %p51 = scmp.ne.s32.totalorder %s34, %s50
      %p52 = scmp.eq.s32.totalorder %s26, 0
      %p53 = por %p51, %p52
      %s55 = sadd.s32 %s54, 1
      %p58 = scmp.eq.s32.totalorder %s20, 1
      %p59 = scmp.ne.s32.totalorder %s54, %s56
      %p60 = scmp.eq.s32.totalorder %s20, 0
      %p61 = por %p59, %p60
      %p62 = scmp.ne.s32.totalorder %s54, %s56
      %p63 = scmp.eq.s32.totalorder %s25, 1
      %p64 = por %p62, %p63
      %p65 = scmp.ne.s32.totalorder %s56, %s57
      %p66 = scmp.eq.s32.totalorder %s25, 0
      %p67 = por %p65, %p66
      %p68 = scmp.ne.s32.totalorder %s56, %s57
      %p69 = scmp.eq.s32.totalorder %s26, 1
      %p70 = por %p68, %p69
      %p72 = scmp.ne.s32.totalorder %s57, %s71
      %p73 = scmp.eq.s32.totalorder %s26, 0
      %p74 = por %p72, %p73
      %s76 = sadd.s32 %s75, 1
      %p79 = scmp.eq.s32.totalorder %s20, 1
      %p80 = scmp.ne.s32.totalorder %s75, %s77
      %p81 = scmp.eq.s32.totalorder %s20, 0
      %p82 = por %p80, %p81
      %p83 = scmp.ne.s32.totalorder %s75, %s77
      %p84 = scmp.eq.s32.totalorder %s25, 1
      %p85 = por %p83, %p84
      %p86 = scmp.ne.s32.totalorder %s77, %s78
      %p87 = scmp.eq.s32.totalorder %s25, 0
      %p88 = por %p86, %p87
      %p89 = scmp.ne.s32.totalorder %s77, %s78
      %p90 = scmp.eq.s32.totalorder %s26, 1
      %p91 = por %p89, %p90
      %p93 = scmp.ne.s32.totalorder %s78, %s92
      %p94 = scmp.eq.s32.totalorder %s26, 0
      %p95 = por %p93, %p94
      %s97 = sadd.s32 %s96, 1
      %p100 = scmp.eq.s32.totalorder %s20, 1
      %p101 = scmp.ne.s32.totalorder %s96, %s98
      %p102 = scmp.eq.s32.totalorder %s20, 0
      %p103 = por %p101, %p102
      %p104 = scmp.ne.s32.totalorder %s96, %s98
      %p105 = scmp.eq.s32.totalorder %s25, 1
      %p106 = por %p104, %p105
      %p107 = scmp.ne.s32.totalorder %s98, %s99
      %p108 = scmp.eq.s32.totalorder %s25, 0
      %p109 = por %p107, %p108
      %p110 = scmp.ne.s32.totalorder %s98, %s99
      %p111 = scmp.eq.s32.totalorder %s26, 1
      %p112 = por %p110, %p111
      %p114 = scmp.ne.s32.totalorder %s99, %s113
      %p115 = scmp.eq.s32.totalorder %s26, 0
      %p116 = por %p114, %p115
      %s118 = sadd.s32 %s117, 1
      %p121 = scmp.eq.s32.totalorder %s20, 1
      %p122 = scmp.ne.s32.totalorder %s117, %s119
      %p123 = scmp.eq.s32.totalorder %s20, 0
      %p124 = por %p122, %p123
      %p125 = scmp.ne.s32.totalorder %s117, %s119
      %p126 = scmp.eq.s32.totalorder %s25, 1
      %p127 = por %p125, %p126
      %p128 = scmp.ne.s32.totalorder %s119, %s120
      %p129 = scmp.eq.s32.totalorder %s25, 0
      %p130 = por %p128, %p129
      %p131 = scmp.ne.s32.totalorder %s119, %s120
      %p132 = scmp.eq.s32.totalorder %s26, 1
      %p133 = por %p131, %p132
      %p135 = scmp.ne.s32.totalorder %s120, %s134
      %p136 = scmp.eq.s32.totalorder %s26, 0
      %p137 = por %p135, %p136
      %s139 = sadd.s32 %s138, 1
      %p142 = scmp.eq.s32.totalorder %s20, 1
      %p143 = scmp.ne.s32.totalorder %s138, %s140
      %p144 = scmp.eq.s32.totalorder %s20, 0
      %p145 = por %p143, %p144
      %p146 = scmp.ne.s32.totalorder %s138, %s140
      %p147 = scmp.eq.s32.totalorder %s25, 1
      %p148 = por %p146, %p147
      %p149 = scmp.ne.s32.totalorder %s140, %s141
      %p150 = scmp.eq.s32.totalorder %s25, 0
      %p151 = por %p149, %p150
      %p152 = scmp.ne.s32.totalorder %s140, %s141
      %p153 = scmp.eq.s32.totalorder %s26, 1
      %p154 = por %p152, %p153
      %p156 = scmp.ne.s32.totalorder %s141, %s155
      %p157 = scmp.eq.s32.totalorder %s26, 0
      %p158 = por %p156, %p157
      %s160 = sadd.s32 %s159, 1
      %p163 = scmp.eq.s32.totalorder %s20, 1
      %p164 = scmp.ne.s32.totalorder %s159, %s161
      %p165 = scmp.eq.s32.totalorder %s20, 0
      %p166 = por %p164, %p165
      %p167 = scmp.ne.s32.totalorder %s159, %s161
      %p168 = scmp.eq.s32.totalorder %s25, 1
      %p169 = por %p167, %p168
      %p170 = scmp.ne.s32.totalorder %s161, %s162
      %p171 = scmp.eq.s32.totalorder %s25, 0
      %p172 = por %p170, %p171
      %p173 = scmp.ne.s32.totalorder %s161, %s162
      %p174 = scmp.eq.s32.totalorder %s26, 1
      %p175 = por %p173, %p174
      %p177 = scmp.ne.s32.totalorder %s162, %s176
      %p178 = scmp.eq.s32.totalorder %s26, 0
      %p179 = por %p177, %p178
      %s180 = ssub.s32 %s20, %s27
      %p181 = scmp.eq.s32.totalorder %s180, 0
      %s183 = sadd.s32 %s182, 1
      %s184 = scalar_select %p181, %s182, %s183
      %p187 = pneg %p181
      %p188 = scmp.eq.s32.totalorder %s20, 1
      %p189 = por %p187, %p188
      %p190 = scmp.ne.s32.totalorder %s182, %s185
      %p191 = scmp.eq.s32.totalorder %s20, 0
      %p192 = por %p190, %p191
      %p193 = scmp.ne.s32.totalorder %s182, %s185
      %p194 = scmp.eq.s32.totalorder %s25, 1
      %p195 = por %p193, %p194
      %p196 = scmp.ne.s32.totalorder %s185, %s186
      %p197 = scmp.eq.s32.totalorder %s25, 0
      %p198 = por %p196, %p197
      %p199 = scmp.ne.s32.totalorder %s185, %s186
      %p200 = scmp.eq.s32.totalorder %s26, 1
      %p201 = por %p199, %p200
      %p203 = scmp.ne.s32.totalorder %s186, %s202
      %p204 = scmp.eq.s32.totalorder %s26, 0
      %p205 = por %p203, %p204
      %p206 = scmp.le.s32.totalorder 1, %s20
      %p207 = scmp.lt.s32.totalorder %s20, 3
      %p208 = pnand %p206, %p207
      %p209 = pneg %p208
      // Predicated region
      $region9: #{tpu_custom_call.1} parent=5 // pred_check
        _
      $region10: #{tpu_custom_call.1} parent=5 // pred_check_branch
        %211 = sbr.rel (%p208) target = $region12
      $region11: #{tpu_custom_call.1} parent=5 // pred_region
        %s212 = ssub.s32 %s20, 1
        // Predicated region
        $region13: #{tpu_custom_call.1} parent=11 // pred_check
          %p213 = pneg %p67
        $region14: #{tpu_custom_call.1} parent=11 // pred_check_branch
          %215 = sbr.rel (%p213) target = $region16
        $region15: #{tpu_custom_call.1} parent=11 // pred_region
          %s217 = ssub.s32 9216, 9216
          %218 = vsyncadd [#allocation10], %s217
          %s219 = sshll.u32 [#allocation9], 4
          %s220 = int_to_ptr.vmem [resolvable:$true] %s219
          %225 = dma.hbm_to_vmem [thread:$0]  %s1, 9216, %s220, [#allocation10], 64, 64, 4
        $region16: #{tpu_custom_call.1} parent=11 // pred_fallthru
          _
        // Predicated region
        $region17: #{tpu_custom_call.1} parent=11 // pred_check
          %p226 = pneg %p88
        $region18: #{tpu_custom_call.1} parent=11 // pred_check_branch
          %228 = sbr.rel (%p226) target = $region20
        $region19: #{tpu_custom_call.1} parent=11 // pred_region
          _
        $region20: #{tpu_custom_call.1} parent=11 // pred_fallthru
          _
        // Predicated region
        $region21: #{tpu_custom_call.1} parent=11 // pred_check
          %p229 = pneg %p109
        $region22: #{tpu_custom_call.1} parent=11 // pred_check_branch
          %231 = sbr.rel (%p229) target = $region24
        $region23: #{tpu_custom_call.1} parent=11 // pred_region
          _
        $region24: #{tpu_custom_call.1} parent=11 // pred_fallthru
          _
        // Predicated region
        $region25: #{tpu_custom_call.1} parent=11 // pred_check
          %p232 = pneg %p130
        $region26: #{tpu_custom_call.1} parent=11 // pred_check_branch
          %234 = sbr.rel (%p232) target = $region28
        $region27: #{tpu_custom_call.1} parent=11 // pred_region
          %s236 = ssub.s32 9216, 9216
          %237 = vsyncadd [#allocation10], %s236
          %s238 = sshll.u32 [#allocation11], 4
          %s239 = int_to_ptr.vmem [resolvable:$true] %s238
          %244 = dma.hbm_to_vmem [thread:$0]  %s4, 9216, %s239, [#allocation10], 64, 64, 4
        $region28: #{tpu_custom_call.1} parent=11 // pred_fallthru
          _
        // Predicated region
        $region29: #{tpu_custom_call.1} parent=11 // pred_check
          %p245 = pneg %p151
        $region30: #{tpu_custom_call.1} parent=11 // pred_check_branch
          %247 = sbr.rel (%p245) target = $region32
        $region31: #{tpu_custom_call.1} parent=11 // pred_region
          _
        $region32: #{tpu_custom_call.1} parent=11 // pred_fallthru
          _
        // Predicated region
        $region33: #{tpu_custom_call.1} parent=11 // pred_check
          %p248 = pneg %p172
        $region34: #{tpu_custom_call.1} parent=11 // pred_check_branch
          %250 = sbr.rel (%p248) target = $region36
        $region35: #{tpu_custom_call.1} parent=11 // pred_region
          _
        $region36: #{tpu_custom_call.1} parent=11 // pred_fallthru
          _
      $region12: #{tpu_custom_call.1} parent=5 // pred_fallthru
        _
      %p251 = scmp.lt.s32.totalorder %s20, 2
      // Predicated region
      $region37: #{tpu_custom_call.1} parent=5 // pred_check
        %p252 = pneg %p251
      $region38: #{tpu_custom_call.1} parent=5 // pred_check_branch
        %254 = sbr.rel (%p252) target = $region40
      $region39: #{tpu_custom_call.1} parent=5 // pred_region
        // Predicated region
        $region41: #{tpu_custom_call.1} parent=39 // pred_check
          %p255 = pneg %p40
        $region42: #{tpu_custom_call.1} parent=39 // pred_check_branch
          %257 = sbr.rel (%p255) target = $region44
        $region43: #{tpu_custom_call.1} parent=39 // pred_region
          %s258 = sand.u32 %s30, 1
          %s259 = scalar_lea.sflag [#allocation7], %s258
          %s260 = sand.u32 %s30, 1
          %s261 = smul.addr %s260, 512
          %s262 = scalar_lea.vmem [#allocation6], %s261
          %s263 = smul.u32 2, %s20
          %s265 = ssub.s32 8192, 8192
          %266 = vsyncadd %s259, %s265
          %s267 = smul.addr %s263, 32
          %s268 = smul.addr %s267, 128
          %s269 = scalar_lea.hbm %s0, %s268
          %s270 = sshll.u32 %s262, 4
          %s271 = int_to_ptr.vmem [resolvable:$true] %s270
          %276 = dma.hbm_to_vmem [thread:$0]  %s269, 8192, %s271, %s259, 128, 128, 8
        $region44: #{tpu_custom_call.1} parent=39 // pred_fallthru
          _
      $region40: #{tpu_custom_call.1} parent=5 // pred_fallthru
        _
      %p277 = scmp.le.s32.totalorder 1, %s20
      %p278 = scmp.lt.s32.totalorder %s20, 3
      %p279 = pnand %p277, %p278
      %p280 = pneg %p279
      // Predicated region
      $region45: #{tpu_custom_call.1} parent=5 // pred_check
        _
      $region46: #{tpu_custom_call.1} parent=5 // pred_check_branch
        %282 = sbr.rel (%p279) target = $region48
      $region47: #{tpu_custom_call.1} parent=5 // pred_region
        %s283 = ssub.s32 %s20, 1
        %s284 = sand.u32 %s33, 1
        %s285 = scalar_lea.sflag [#allocation7], %s284
        %s286 = sand.u32 %s33, 1
        %s287 = smul.addr %s286, 512
        %s288 = scalar_lea.vmem [#allocation6], %s287
        // Predicated region
        $region49: #{tpu_custom_call.1} parent=47 // pred_check
          %p289 = pneg %p46
        $region50: #{tpu_custom_call.1} parent=47 // pred_check_branch
          %291 = sbr.rel (%p289) target = $region52
        $region51: #{tpu_custom_call.1} parent=47 // pred_region
          %292 = dma.done %s285, 8192
        $region52: #{tpu_custom_call.1} parent=47 // pred_fallthru
          _
        // Predicated region
        $region53: #{tpu_custom_call.1} parent=47 // pred_check
          %p293 = pneg %p67
        $region54: #{tpu_custom_call.1} parent=47 // pred_check_branch
          %295 = sbr.rel (%p293) target = $region56
        $region55: #{tpu_custom_call.1} parent=47 // pred_region
          %296 = dma.done [#allocation10], 9216
        $region56: #{tpu_custom_call.1} parent=47 // pred_fallthru
          _
        // Predicated region
        $region57: #{tpu_custom_call.1} parent=47 // pred_check
          %p297 = pneg %p130
        $region58: #{tpu_custom_call.1} parent=47 // pred_check_branch
          %299 = sbr.rel (%p297) target = $region60
        $region59: #{tpu_custom_call.1} parent=47 // pred_region
          %300 = dma.done [#allocation10], 9216
        $region60: #{tpu_custom_call.1} parent=47 // pred_fallthru
          _
        %s301 = sand.u32 %s33, 1
        %s302 = scalar_lea.sflag [#allocation7], %s301
        %s303 = sand.u32 %s33, 1
        %s304 = smul.addr %s303, 512
        %s305 = scalar_lea.vmem [#allocation6], %s304
        %p306 = pneg %p46
        %p307 = pneg %p43
        %p308 = pneg %p67
        %p309 = pneg %p64
        %p310 = pneg %p88
        %p311 = pneg %p85
        %p312 = pneg %p109
        %p313 = pneg %p106
        %p314 = pneg %p130
        %p315 = pneg %p127
        %p316 = pneg %p151
        %p317 = pneg %p148
        %p318 = pneg %p172
        %p319 = pneg %p169
        %p320 = pneg %p198
        %p321 = pneg %p195
        %s322 = sand.u32 %s185, 1
        %s323 = scalar_lea.sflag [#allocation8], %s322
        %s324 = sand.u32 %s185, 1
        %s325 = smul.addr %s324, 512
        %s326 = scalar_lea.vmem [#allocation12], %s325
        %s327 = smul.u32 2, %s25
        %s328 = smul.u32 2, %s25
        %330 = vst [vmem:[#allocation2] sm:$0xff] 0.0
        %331 = vst [vmem:[#allocation2 + $0x8] sm:$0xff] 0.0
        %332 = vst [vmem:[#allocation2 + $0x10] sm:$0x3] 0.0
        %333 = vst [vmem:[#allocation2 + $0x1b0] sm:$0xff] 0.0
        %334 = vst [vmem:[#allocation2 + $0x1b8] sm:$0xff] 0.0
        %335 = vst [vmem:[#allocation2 + $0x1c0] sm:$0x3] 0.0
        %s336 = scalar_lea.vmem [#allocation2], 408
        %337 = vst [vmem:[%s336] sm:$0xff] 0.0
        %338 = vst [vmem:[%s336 + $0x8] sm:$0xff] 0.0
        %339 = vst [vmem:[%s336 + $0x10] sm:$0x3] 0.0
        %340 = vst [vmem:[%s336 + $0x1b0] sm:$0xff] 0.0
        %341 = vst [vmem:[%s336 + $0x1b8] sm:$0xff] 0.0
        %342 = vst [vmem:[%s336 + $0x1c0] sm:$0x3] 0.0
        %s343 = scalar_lea.vmem [#allocation2], 24
        %344 = vst [vmem:[%s343] sm:$0x1] 0.0
        %345 = vst [vmem:[%s343 + $0x18] sm:$0x1] 0.0
        %346 = vst [vmem:[%s343 + $0x30] sm:$0x1] 0.0
        %347 = vst [vmem:[%s343 + $0x48] sm:$0x1] 0.0
        %348 = vst [vmem:[%s343 + $0x60] sm:$0x1] 0.0
        %349 = vst [vmem:[%s343 + $0x78] sm:$0x1] 0.0
        %350 = vst [vmem:[%s343 + $0x90] sm:$0x1] 0.0
        %351 = vst [vmem:[%s343 + $0xa8] sm:$0x1] 0.0
        %352 = vst [vmem:[%s343 + $0xc0] sm:$0x1] 0.0
        %353 = vst [vmem:[%s343 + $0xd8] sm:$0x1] 0.0
        %354 = vst [vmem:[%s343 + $0xf0] sm:$0x1] 0.0
        %355 = vst [vmem:[%s343 + $0x108] sm:$0x1] 0.0
        %356 = vst [vmem:[%s343 + $0x120] sm:$0x1] 0.0
        %357 = vst [vmem:[%s343 + $0x138] sm:$0x1] 0.0
        %358 = vst [vmem:[%s343 + $0x150] sm:$0x1] 0.0
        %359 = vst [vmem:[%s343 + $0x168] sm:$0x1] 0.0
        %360 = vst [vmem:[%s343 + $0x1b0] sm:$0x1] 0.0
        %361 = vst [vmem:[%s343 + $0x1c8] sm:$0x1] 0.0
        %362 = vst [vmem:[%s343 + $0x1e0] sm:$0x1] 0.0
        %363 = vst [vmem:[%s343 + $0x1f8] sm:$0x1] 0.0
        %364 = vst [vmem:[%s343 + $0x210] sm:$0x1] 0.0
        %365 = vst [vmem:[%s343 + $0x228] sm:$0x1] 0.0
        %366 = vst [vmem:[%s343 + $0x240] sm:$0x1] 0.0
        %367 = vst [vmem:[%s343 + $0x258] sm:$0x1] 0.0
        %368 = vst [vmem:[%s343 + $0x270] sm:$0x1] 0.0
        %369 = vst [vmem:[%s343 + $0x288] sm:$0x1] 0.0
        %370 = vst [vmem:[%s343 + $0x2a0] sm:$0x1] 0.0
        %371 = vst [vmem:[%s343 + $0x2b8] sm:$0x1] 0.0
        %372 = vst [vmem:[%s343 + $0x2d0] sm:$0x1] 0.0
        %373 = vst [vmem:[%s343 + $0x2e8] sm:$0x1] 0.0
        %374 = vst [vmem:[%s343 + $0x300] sm:$0x1] 0.0
        %375 = vst [vmem:[%s343 + $0x318] sm:$0x1] 0.0
        %376 = vst [vmem:[%s343 + $0x11] sm:$0x1] 0.0
        %377 = vst [vmem:[%s343 + $0x29] sm:$0x1] 0.0
        %378 = vst [vmem:[%s343 + $0x41] sm:$0x1] 0.0
        %379 = vst [vmem:[%s343 + $0x59] sm:$0x1] 0.0
        %380 = vst [vmem:[%s343 + $0x71] sm:$0x1] 0.0
        %381 = vst [vmem:[%s343 + $0x89] sm:$0x1] 0.0
        %382 = vst [vmem:[%s343 + $0xa1] sm:$0x1] 0.0
        %383 = vst [vmem:[%s343 + $0xb9] sm:$0x1] 0.0
        %384 = vst [vmem:[%s343 + $0xd1] sm:$0x1] 0.0
        %385 = vst [vmem:[%s343 + $0xe9] sm:$0x1] 0.0
        %386 = vst [vmem:[%s343 + $0x101] sm:$0x1] 0.0
        %387 = vst [vmem:[%s343 + $0x119] sm:$0x1] 0.0
        %388 = vst [vmem:[%s343 + $0x131] sm:$0x1] 0.0
        %389 = vst [vmem:[%s343 + $0x149] sm:$0x1] 0.0
        %390 = vst [vmem:[%s343 + $0x161] sm:$0x1] 0.0
        %391 = vst [vmem:[%s343 + $0x179] sm:$0x1] 0.0
        %392 = vst [vmem:[%s343 + $0x1c1] sm:$0x1] 0.0
        %393 = vst [vmem:[%s343 + $0x1d9] sm:$0x1] 0.0
        %394 = vst [vmem:[%s343 + $0x1f1] sm:$0x1] 0.0
        %395 = vst [vmem:[%s343 + $0x209] sm:$0x1] 0.0
        %396 = vst [vmem:[%s343 + $0x221] sm:$0x1] 0.0
        %397 = vst [vmem:[%s343 + $0x239] sm:$0x1] 0.0
        %398 = vst [vmem:[%s343 + $0x251] sm:$0x1] 0.0
        %399 = vst [vmem:[%s343 + $0x269] sm:$0x1] 0.0
        %400 = vst [vmem:[%s343 + $0x281] sm:$0x1] 0.0
        %401 = vst [vmem:[%s343 + $0x299] sm:$0x1] 0.0
        %402 = vst [vmem:[%s343 + $0x2b1] sm:$0x1] 0.0
        %403 = vst [vmem:[%s343 + $0x2c9] sm:$0x1] 0.0
        %404 = vst [vmem:[%s343 + $0x2e1] sm:$0x1] 0.0
        %405 = vst [vmem:[%s343 + $0x2f9] sm:$0x1] 0.0
        %406 = vst [vmem:[%s343 + $0x311] sm:$0x1] 0.0
        %407 = vst [vmem:[%s343 + $0x329] sm:$0x1] 0.0
        %408 = vst [vmem:[#allocation4] sm:$0xff] 0.0
        %409 = vst [vmem:[#allocation4 + $0x8] sm:$0xff] 0.0
        %410 = vst [vmem:[#allocation4 + $0x10] sm:$0x3] 0.0
        %411 = vst [vmem:[#allocation4 + $0x1b0] sm:$0xff] 0.0
        %412 = vst [vmem:[#allocation4 + $0x1b8] sm:$0xff] 0.0
        %413 = vst [vmem:[#allocation4 + $0x1c0] sm:$0x3] 0.0
        %s414 = scalar_lea.vmem [#allocation4], 408
        %415 = vst [vmem:[%s414] sm:$0xff] 0.0
        %416 = vst [vmem:[%s414 + $0x8] sm:$0xff] 0.0
        %417 = vst [vmem:[%s414 + $0x10] sm:$0x3] 0.0
        %418 = vst [vmem:[%s414 + $0x1b0] sm:$0xff] 0.0
        %419 = vst [vmem:[%s414 + $0x1b8] sm:$0xff] 0.0
        %420 = vst [vmem:[%s414 + $0x1c0] sm:$0x3] 0.0
        %s421 = scalar_lea.vmem [#allocation4], 24
        %422 = vst [vmem:[%s421] sm:$0x1] 0.0
        %423 = vst [vmem:[%s421 + $0x18] sm:$0x1] 0.0
        %424 = vst [vmem:[%s421 + $0x30] sm:$0x1] 0.0
        %425 = vst [vmem:[%s421 + $0x48] sm:$0x1] 0.0
        %426 = vst [vmem:[%s421 + $0x60] sm:$0x1] 0.0
        %427 = vst [vmem:[%s421 + $0x78] sm:$0x1] 0.0
        %428 = vst [vmem:[%s421 + $0x90] sm:$0x1] 0.0
        %429 = vst [vmem:[%s421 + $0xa8] sm:$0x1] 0.0
        %430 = vst [vmem:[%s421 + $0xc0] sm:$0x1] 0.0
        %431 = vst [vmem:[%s421 + $0xd8] sm:$0x1] 0.0
        %432 = vst [vmem:[%s421 + $0xf0] sm:$0x1] 0.0
        %433 = vst [vmem:[%s421 + $0x108] sm:$0x1] 0.0
        %434 = vst [vmem:[%s421 + $0x120] sm:$0x1] 0.0
        %435 = vst [vmem:[%s421 + $0x138] sm:$0x1] 0.0
        %436 = vst [vmem:[%s421 + $0x150] sm:$0x1] 0.0
        %437 = vst [vmem:[%s421 + $0x168] sm:$0x1] 0.0
        %438 = vst [vmem:[%s421 + $0x1b0] sm:$0x1] 0.0
        %439 = vst [vmem:[%s421 + $0x1c8] sm:$0x1] 0.0
        %440 = vst [vmem:[%s421 + $0x1e0] sm:$0x1] 0.0
        %441 = vst [vmem:[%s421 + $0x1f8] sm:$0x1] 0.0
        %442 = vst [vmem:[%s421 + $0x210] sm:$0x1] 0.0
        %443 = vst [vmem:[%s421 + $0x228] sm:$0x1] 0.0
        %444 = vst [vmem:[%s421 + $0x240] sm:$0x1] 0.0
        %445 = vst [vmem:[%s421 + $0x258] sm:$0x1] 0.0
        %446 = vst [vmem:[%s421 + $0x270] sm:$0x1] 0.0
        %447 = vst [vmem:[%s421 + $0x288] sm:$0x1] 0.0
        %448 = vst [vmem:[%s421 + $0x2a0] sm:$0x1] 0.0
        %449 = vst [vmem:[%s421 + $0x2b8] sm:$0x1] 0.0
        %450 = vst [vmem:[%s421 + $0x2d0] sm:$0x1] 0.0
        %451 = vst [vmem:[%s421 + $0x2e8] sm:$0x1] 0.0
        %452 = vst [vmem:[%s421 + $0x300] sm:$0x1] 0.0
        %453 = vst [vmem:[%s421 + $0x318] sm:$0x1] 0.0
        %454 = vst [vmem:[%s421 + $0x11] sm:$0x1] 0.0
        %455 = vst [vmem:[%s421 + $0x29] sm:$0x1] 0.0
        %456 = vst [vmem:[%s421 + $0x41] sm:$0x1] 0.0
        %457 = vst [vmem:[%s421 + $0x59] sm:$0x1] 0.0
        %458 = vst [vmem:[%s421 + $0x71] sm:$0x1] 0.0
        %459 = vst [vmem:[%s421 + $0x89] sm:$0x1] 0.0
        %460 = vst [vmem:[%s421 + $0xa1] sm:$0x1] 0.0
        %461 = vst [vmem:[%s421 + $0xb9] sm:$0x1] 0.0
        %462 = vst [vmem:[%s421 + $0xd1] sm:$0x1] 0.0
        %463 = vst [vmem:[%s421 + $0xe9] sm:$0x1] 0.0
        %464 = vst [vmem:[%s421 + $0x101] sm:$0x1] 0.0
        %465 = vst [vmem:[%s421 + $0x119] sm:$0x1] 0.0
        %466 = vst [vmem:[%s421 + $0x131] sm:$0x1] 0.0
        %467 = vst [vmem:[%s421 + $0x149] sm:$0x1] 0.0
        %468 = vst [vmem:[%s421 + $0x161] sm:$0x1] 0.0
        %469 = vst [vmem:[%s421 + $0x179] sm:$0x1] 0.0
        %470 = vst [vmem:[%s421 + $0x1c1] sm:$0x1] 0.0
        %471 = vst [vmem:[%s421 + $0x1d9] sm:$0x1] 0.0
        %472 = vst [vmem:[%s421 + $0x1f1] sm:$0x1] 0.0
        %473 = vst [vmem:[%s421 + $0x209] sm:$0x1] 0.0
        %474 = vst [vmem:[%s421 + $0x221] sm:$0x1] 0.0
        %475 = vst [vmem:[%s421 + $0x239] sm:$0x1] 0.0
        %476 = vst [vmem:[%s421 + $0x251] sm:$0x1] 0.0
        %477 = vst [vmem:[%s421 + $0x269] sm:$0x1] 0.0
        %478 = vst [vmem:[%s421 + $0x281] sm:$0x1] 0.0
        %479 = vst [vmem:[%s421 + $0x299] sm:$0x1] 0.0
        %480 = vst [vmem:[%s421 + $0x2b1] sm:$0x1] 0.0
        %481 = vst [vmem:[%s421 + $0x2c9] sm:$0x1] 0.0
        %482 = vst [vmem:[%s421 + $0x2e1] sm:$0x1] 0.0
        %483 = vst [vmem:[%s421 + $0x2f9] sm:$0x1] 0.0
        %484 = vst [vmem:[%s421 + $0x311] sm:$0x1] 0.0
        %485 = vst [vmem:[%s421 + $0x329] sm:$0x1] 0.0
        %v486 = vld [vmem:[%s288] sm:$0xff]
        %v487 = vld [vmem:[%s288 + $0x8] sm:$0xff]
        %v488 = vld [vmem:[%s288 + $0x10] sm:$0xff]
        %v489 = vld [vmem:[%s288 + $0x18] sm:$0xff]
        %v490 = vld [vmem:[%s288 + $0x20] sm:$0xff]
        %v491 = vld [vmem:[%s288 + $0x28] sm:$0xff]
        %v492 = vld [vmem:[%s288 + $0x30] sm:$0xff]
        %v493 = vld [vmem:[%s288 + $0x38] sm:$0xff]
        %v494 = vld [vmem:[%s288 + $0x40] sm:$0xff]
        %v495 = vld [vmem:[%s288 + $0x48] sm:$0xff]
        %v496 = vld [vmem:[%s288 + $0x50] sm:$0xff]
        %v497 = vld [vmem:[%s288 + $0x58] sm:$0xff]
        %v498 = vld [vmem:[%s288 + $0x60] sm:$0xff]
        %v499 = vld [vmem:[%s288 + $0x68] sm:$0xff]
        %v500 = vld [vmem:[%s288 + $0x70] sm:$0xff]
        %v501 = vld [vmem:[%s288 + $0x78] sm:$0xff]
        %v502 = vld [vmem:[%s288 + $0x80] sm:$0xff]
        %v503 = vld [vmem:[%s288 + $0x88] sm:$0xff]
        %v504 = vld [vmem:[%s288 + $0x90] sm:$0xff]
        %v505 = vld [vmem:[%s288 + $0x98] sm:$0xff]
        %v506 = vld [vmem:[%s288 + $0xa0] sm:$0xff]
        %v507 = vld [vmem:[%s288 + $0xa8] sm:$0xff]
        %v508 = vld [vmem:[%s288 + $0xb0] sm:$0xff]
        %v509 = vld [vmem:[%s288 + $0xb8] sm:$0xff]
        %v510 = vld [vmem:[%s288 + $0xc0] sm:$0xff]
        %v511 = vld [vmem:[%s288 + $0xc8] sm:$0xff]
        %v512 = vld [vmem:[%s288 + $0xd0] sm:$0xff]
        %v513 = vld [vmem:[%s288 + $0xd8] sm:$0xff]
        %v514 = vld [vmem:[%s288 + $0xe0] sm:$0xff]
        %v515 = vld [vmem:[%s288 + $0xe8] sm:$0xff]
        %v516 = vld [vmem:[%s288 + $0xf0] sm:$0xff]
        %v517 = vld [vmem:[%s288 + $0xf8] sm:$0xff]
        %v518 = vld [vmem:[%s288 + $0x100] sm:$0xff]
        %v519 = vld [vmem:[%s288 + $0x108] sm:$0xff]
        %v520 = vld [vmem:[%s288 + $0x110] sm:$0xff]
        %v521 = vld [vmem:[%s288 + $0x118] sm:$0xff]
        %v522 = vld [vmem:[%s288 + $0x120] sm:$0xff]
        %v523 = vld [vmem:[%s288 + $0x128] sm:$0xff]
        %v524 = vld [vmem:[%s288 + $0x130] sm:$0xff]
        %v525 = vld [vmem:[%s288 + $0x138] sm:$0xff]
        %v526 = vld [vmem:[%s288 + $0x140] sm:$0xff]
        %v527 = vld [vmem:[%s288 + $0x148] sm:$0xff]
        %v528 = vld [vmem:[%s288 + $0x150] sm:$0xff]
        %v529 = vld [vmem:[%s288 + $0x158] sm:$0xff]
        %v530 = vld [vmem:[%s288 + $0x160] sm:$0xff]
        %v531 = vld [vmem:[%s288 + $0x168] sm:$0xff]
        %v532 = vld [vmem:[%s288 + $0x170] sm:$0xff]
        %v533 = vld [vmem:[%s288 + $0x178] sm:$0xff]
        %v534 = vld [vmem:[%s288 + $0x180] sm:$0xff]
        %v535 = vld [vmem:[%s288 + $0x188] sm:$0xff]
        %v536 = vld [vmem:[%s288 + $0x190] sm:$0xff]
        %v537 = vld [vmem:[%s288 + $0x198] sm:$0xff]
        %v538 = vld [vmem:[%s288 + $0x1a0] sm:$0xff]
        %v539 = vld [vmem:[%s288 + $0x1a8] sm:$0xff]
        %v540 = vld [vmem:[%s288 + $0x1b0] sm:$0xff]
        %v541 = vld [vmem:[%s288 + $0x1b8] sm:$0xff]
        %v542 = vld [vmem:[%s288 + $0x1c0] sm:$0xff]
        %v543 = vld [vmem:[%s288 + $0x1c8] sm:$0xff]
        %v544 = vld [vmem:[%s288 + $0x1d0] sm:$0xff]
        %v545 = vld [vmem:[%s288 + $0x1d8] sm:$0xff]
        %v546 = vld [vmem:[%s288 + $0x1e0] sm:$0xff]
        %v547 = vld [vmem:[%s288 + $0x1e8] sm:$0xff]
        %v548 = vld [vmem:[%s288 + $0x1f0] sm:$0xff]
        %v549 = vld [vmem:[%s288 + $0x1f8] sm:$0xff]
        %550 = vst [vmem:[%s343 + $0x1] sm:$0xff] %v486
        %551 = vst [vmem:[%s343 + $0x9] sm:$0xff] %v487
        %552 = vst [vmem:[%s343 + $0x19] sm:$0xff] %v488
        %553 = vst [vmem:[%s343 + $0x21] sm:$0xff] %v489
        %554 = vst [vmem:[%s343 + $0x31] sm:$0xff] %v490
        %555 = vst [vmem:[%s343 + $0x39] sm:$0xff] %v491
        %556 = vst [vmem:[%s343 + $0x49] sm:$0xff] %v492
        %557 = vst [vmem:[%s343 + $0x51] sm:$0xff] %v493
        %558 = vst [vmem:[%s343 + $0x61] sm:$0xff] %v494
        %559 = vst [vmem:[%s343 + $0x69] sm:$0xff] %v495
        %560 = vst [vmem:[%s343 + $0x79] sm:$0xff] %v496
        %561 = vst [vmem:[%s343 + $0x81] sm:$0xff] %v497
        %562 = vst [vmem:[%s343 + $0x91] sm:$0xff] %v498
        %563 = vst [vmem:[%s343 + $0x99] sm:$0xff] %v499
        %564 = vst [vmem:[%s343 + $0xa9] sm:$0xff] %v500
        %565 = vst [vmem:[%s343 + $0xb1] sm:$0xff] %v501
        %566 = vst [vmem:[%s343 + $0xc1] sm:$0xff] %v502
        %567 = vst [vmem:[%s343 + $0xc9] sm:$0xff] %v503
        %568 = vst [vmem:[%s343 + $0xd9] sm:$0xff] %v504
        %569 = vst [vmem:[%s343 + $0xe1] sm:$0xff] %v505
        %570 = vst [vmem:[%s343 + $0xf1] sm:$0xff] %v506
        %571 = vst [vmem:[%s343 + $0xf9] sm:$0xff] %v507
        %572 = vst [vmem:[%s343 + $0x109] sm:$0xff] %v508
        %573 = vst [vmem:[%s343 + $0x111] sm:$0xff] %v509
        %574 = vst [vmem:[%s343 + $0x121] sm:$0xff] %v510
        %575 = vst [vmem:[%s343 + $0x129] sm:$0xff] %v511
        %576 = vst [vmem:[%s343 + $0x139] sm:$0xff] %v512
        %577 = vst [vmem:[%s343 + $0x141] sm:$0xff] %v513
        %578 = vst [vmem:[%s343 + $0x151] sm:$0xff] %v514
        %579 = vst [vmem:[%s343 + $0x159] sm:$0xff] %v515
        %580 = vst [vmem:[%s343 + $0x169] sm:$0xff] %v516
        %581 = vst [vmem:[%s343 + $0x171] sm:$0xff] %v517
        %582 = vst [vmem:[%s343 + $0x1b1] sm:$0xff] %v518
        %583 = vst [vmem:[%s343 + $0x1b9] sm:$0xff] %v519
        %584 = vst [vmem:[%s343 + $0x1c9] sm:$0xff] %v520
        %585 = vst [vmem:[%s343 + $0x1d1] sm:$0xff] %v521
        %586 = vst [vmem:[%s343 + $0x1e1] sm:$0xff] %v522
        %587 = vst [vmem:[%s343 + $0x1e9] sm:$0xff] %v523
        %588 = vst [vmem:[%s343 + $0x1f9] sm:$0xff] %v524
        %589 = vst [vmem:[%s343 + $0x201] sm:$0xff] %v525
        %590 = vst [vmem:[%s343 + $0x211] sm:$0xff] %v526
        %591 = vst [vmem:[%s343 + $0x219] sm:$0xff] %v527
        %592 = vst [vmem:[%s343 + $0x229] sm:$0xff] %v528
        %593 = vst [vmem:[%s343 + $0x231] sm:$0xff] %v529
        %594 = vst [vmem:[%s343 + $0x241] sm:$0xff] %v530
        %595 = vst [vmem:[%s343 + $0x249] sm:$0xff] %v531
        %596 = vst [vmem:[%s343 + $0x259] sm:$0xff] %v532
        %597 = vst [vmem:[%s343 + $0x261] sm:$0xff] %v533
        %598 = vst [vmem:[%s343 + $0x271] sm:$0xff] %v534
        %599 = vst [vmem:[%s343 + $0x279] sm:$0xff] %v535
        %600 = vst [vmem:[%s343 + $0x289] sm:$0xff] %v536
        %601 = vst [vmem:[%s343 + $0x291] sm:$0xff] %v537
        %602 = vst [vmem:[%s343 + $0x2a1] sm:$0xff] %v538
        %603 = vst [vmem:[%s343 + $0x2a9] sm:$0xff] %v539
        %604 = vst [vmem:[%s343 + $0x2b9] sm:$0xff] %v540
        %605 = vst [vmem:[%s343 + $0x2c1] sm:$0xff] %v541
        %606 = vst [vmem:[%s343 + $0x2d1] sm:$0xff] %v542
        %607 = vst [vmem:[%s343 + $0x2d9] sm:$0xff] %v543
        %608 = vst [vmem:[%s343 + $0x2e9] sm:$0xff] %v544
        %609 = vst [vmem:[%s343 + $0x2f1] sm:$0xff] %v545
        %610 = vst [vmem:[%s343 + $0x301] sm:$0xff] %v546
        %611 = vst [vmem:[%s343 + $0x309] sm:$0xff] %v547
        %612 = vst [vmem:[%s343 + $0x319] sm:$0xff] %v548
        %613 = vst [vmem:[%s343 + $0x321] sm:$0xff] %v549
        %v614 = vld [vmem:[#allocation2] sm:$0xff]
        %v615 = vld [vmem:[#allocation2 + $0x8] sm:$0xff]
        %v616 = vld [vmem:[#allocation2 + $0x18] sm:$0xff]
        %v617 = vld [vmem:[#allocation2 + $0x20] sm:$0xff]
        %v618 = vld [vmem:[#allocation2 + $0x30] sm:$0xff]
        %v619 = vld [vmem:[#allocation2 + $0x38] sm:$0xff]
        %v620 = vld [vmem:[#allocation2 + $0x48] sm:$0xff]
        %v621 = vld [vmem:[#allocation2 + $0x50] sm:$0xff]
        %v622 = vld [vmem:[#allocation2 + $0x60] sm:$0xff]
        %v623 = vld [vmem:[#allocation2 + $0x68] sm:$0xff]
        %v624 = vld [vmem:[#allocation2 + $0x78] sm:$0xff]
        %v625 = vld [vmem:[#allocation2 + $0x80] sm:$0xff]
        %v626 = vld [vmem:[#allocation2 + $0x90] sm:$0xff]
        %v627 = vld [vmem:[#allocation2 + $0x98] sm:$0xff]
        %v628 = vld [vmem:[#allocation2 + $0xa8] sm:$0xff]
        %v629 = vld [vmem:[#allocation2 + $0xb0] sm:$0xff]
        %v630 = vld [vmem:[#allocation2 + $0xc0] sm:$0xff]
        %v631 = vld [vmem:[#allocation2 + $0xc8] sm:$0xff]
        %v632 = vld [vmem:[#allocation2 + $0xd8] sm:$0xff]
        %v633 = vld [vmem:[#allocation2 + $0xe0] sm:$0xff]
        %v634 = vld [vmem:[#allocation2 + $0xf0] sm:$0xff]
        %v635 = vld [vmem:[#allocation2 + $0xf8] sm:$0xff]
        %v636 = vld [vmem:[#allocation2 + $0x108] sm:$0xff]
        %v637 = vld [vmem:[#allocation2 + $0x110] sm:$0xff]
        %v638 = vld [vmem:[#allocation2 + $0x120] sm:$0xff]
        %v639 = vld [vmem:[#allocation2 + $0x128] sm:$0xff]
        %v640 = vld [vmem:[#allocation2 + $0x138] sm:$0xff]
        %v641 = vld [vmem:[#allocation2 + $0x140] sm:$0xff]
        %v642 = vld [vmem:[#allocation2 + $0x150] sm:$0xff]
        %v643 = vld [vmem:[#allocation2 + $0x158] sm:$0xff]
        %v644 = vld [vmem:[#allocation2 + $0x168] sm:$0xff]
        %v645 = vld [vmem:[#allocation2 + $0x170] sm:$0xff]
        %v646 = vld [vmem:[#allocation2 + $0x1b0] sm:$0xff]
        %v647 = vld [vmem:[#allocation2 + $0x1b8] sm:$0xff]
        %v648 = vld [vmem:[#allocation2 + $0x1c8] sm:$0xff]
        %v649 = vld [vmem:[#allocation2 + $0x1d0] sm:$0xff]
        %v650 = vld [vmem:[#allocation2 + $0x1e0] sm:$0xff]
        %v651 = vld [vmem:[#allocation2 + $0x1e8] sm:$0xff]
        %v652 = vld [vmem:[#allocation2 + $0x1f8] sm:$0xff]
        %v653 = vld [vmem:[#allocation2 + $0x200] sm:$0xff]
        %v654 = vld [vmem:[#allocation2 + $0x210] sm:$0xff]
        %v655 = vld [vmem:[#allocation2 + $0x218] sm:$0xff]
        %v656 = vld [vmem:[#allocation2 + $0x228] sm:$0xff]
        %v657 = vld [vmem:[#allocation2 + $0x230] sm:$0xff]
        %v658 = vld [vmem:[#allocation2 + $0x240] sm:$0xff]
        %v659 = vld [vmem:[#allocation2 + $0x248] sm:$0xff]
        %v660 = vld [vmem:[#allocation2 + $0x258] sm:$0xff]
        %v661 = vld [vmem:[#allocation2 + $0x260] sm:$0xff]
        %v662 = vld [vmem:[#allocation2 + $0x270] sm:$0xff]
        %v663 = vld [vmem:[#allocation2 + $0x278] sm:$0xff]
        %v664 = vld [vmem:[#allocation2 + $0x288] sm:$0xff]
        %v665 = vld [vmem:[#allocation2 + $0x290] sm:$0xff]
        %v666 = vld [vmem:[#allocation2 + $0x2a0] sm:$0xff]
        %v667 = vld [vmem:[#allocation2 + $0x2a8] sm:$0xff]
        %v668 = vld [vmem:[#allocation2 + $0x2b8] sm:$0xff]
        %v669 = vld [vmem:[#allocation2 + $0x2c0] sm:$0xff]
        %v670 = vld [vmem:[#allocation2 + $0x2d0] sm:$0xff]
        %v671 = vld [vmem:[#allocation2 + $0x2d8] sm:$0xff]
        %v672 = vld [vmem:[#allocation2 + $0x2e8] sm:$0xff]
        %v673 = vld [vmem:[#allocation2 + $0x2f0] sm:$0xff]
        %v674 = vld [vmem:[#allocation2 + $0x300] sm:$0xff]
        %v675 = vld [vmem:[#allocation2 + $0x308] sm:$0xff]
        %v676 = vld [vmem:[#allocation2 + $0x318] sm:$0xff]
        %v677 = vld [vmem:[#allocation2 + $0x320] sm:$0xff]
        %v678 = vpack.c.bf16 %v615, %v614
        %v679 = vpack.c.bf16 %v617, %v616
        %v680 = vpack.c.bf16 %v619, %v618
        %v681 = vpack.c.bf16 %v621, %v620
        %v682 = vpack.c.bf16 %v623, %v622
        %v683 = vpack.c.bf16 %v625, %v624
        %v684 = vpack.c.bf16 %v627, %v626
        %v685 = vpack.c.bf16 %v629, %v628
        %v686 = vpack.c.bf16 %v631, %v630
        %v687 = vpack.c.bf16 %v633, %v632
        %v688 = vpack.c.bf16 %v635, %v634
        %v689 = vpack.c.bf16 %v637, %v636
        %v690 = vpack.c.bf16 %v639, %v638
        %v691 = vpack.c.bf16 %v641, %v640
        %v692 = vpack.c.bf16 %v643, %v642
        %v693 = vpack.c.bf16 %v645, %v644
        %v694 = vpack.c.bf16 %v647, %v646
        %v695 = vpack.c.bf16 %v649, %v648
        %v696 = vpack.c.bf16 %v651, %v650
        %v697 = vpack.c.bf16 %v653, %v652
        %v698 = vpack.c.bf16 %v655, %v654
        %v699 = vpack.c.bf16 %v657, %v656
        %v700 = vpack.c.bf16 %v659, %v658
        %v701 = vpack.c.bf16 %v661, %v660
        %v702 = vpack.c.bf16 %v663, %v662
        %v703 = vpack.c.bf16 %v665, %v664
        %v704 = vpack.c.bf16 %v667, %v666
        %v705 = vpack.c.bf16 %v669, %v668
        %v706 = vpack.c.bf16 %v671, %v670
        %v707 = vpack.c.bf16 %v673, %v672
        %v708 = vpack.c.bf16 %v675, %v674
        %v709 = vpack.c.bf16 %v677, %v676
        %710 = vst [vmem:[#allocation3] sm:$0xff] %v678
        %711 = vst [vmem:[#allocation3 + $0x48] sm:$0xff] %v679
        %712 = vst [vmem:[#allocation3 + $0x90] sm:$0xff] %v680
        %713 = vst [vmem:[#allocation3 + $0xd8] sm:$0xff] %v681
        %714 = vst [vmem:[#allocation3 + $0x120] sm:$0xff] %v682
        %715 = vst [vmem:[#allocation3 + $0x168] sm:$0xff] %v683
        %716 = vst [vmem:[#allocation3 + $0x1b0] sm:$0xff] %v684
        %717 = vst [vmem:[#allocation3 + $0x1f8] sm:$0xff] %v685
        %718 = vst [vmem:[#allocation3 + $0x240] sm:$0xff] %v686
        %719 = vst [vmem:[#allocation3 + $0x288] sm:$0xff] %v687
        %720 = vst [vmem:[#allocation3 + $0x2d0] sm:$0xff] %v688
        %721 = vst [vmem:[#allocation3 + $0x318] sm:$0xff] %v689
        %722 = vst [vmem:[#allocation3 + $0x360] sm:$0xff] %v690
        %723 = vst [vmem:[#allocation3 + $0x3a8] sm:$0xff] %v691
        %724 = vst [vmem:[#allocation3 + $0x3f0] sm:$0xff] %v692
        %725 = vst [vmem:[#allocation3 + $0x438] sm:$0xff] %v693
        %726 = vst [vmem:[#allocation3 + $0x480] sm:$0xff] %v694
        %727 = vst [vmem:[#allocation3 + $0x4c8] sm:$0xff] %v695
        %728 = vst [vmem:[#allocation3 + $0x510] sm:$0xff] %v696
        %729 = vst [vmem:[#allocation3 + $0x558] sm:$0xff] %v697
        %730 = vst [vmem:[#allocation3 + $0x5a0] sm:$0xff] %v698
        %731 = vst [vmem:[#allocation3 + $0x5e8] sm:$0xff] %v699
        %732 = vst [vmem:[#allocation3 + $0x630] sm:$0xff] %v700
        %733 = vst [vmem:[#allocation3 + $0x678] sm:$0xff] %v701
        %734 = vst [vmem:[#allocation3 + $0x6c0] sm:$0xff] %v702
        %735 = vst [vmem:[#allocation3 + $0x708] sm:$0xff] %v703
        %736 = vst [vmem:[#allocation3 + $0x750] sm:$0xff] %v704
        %737 = vst [vmem:[#allocation3 + $0x798] sm:$0xff] %v705
        %738 = vst [vmem:[#allocation3 + $0x7e0] sm:$0xff] %v706
        %739 = vst [vmem:[#allocation3 + $0x828] sm:$0xff] %v707
        %740 = vst [vmem:[#allocation3 + $0x870] sm:$0xff] %v708
        %741 = vst [vmem:[#allocation3 + $0x8b8] sm:$0xff] %v709
        %v742 = vld [vmem:[#allocation2 + $0x1] sm:$0xff]
        %v743 = vld [vmem:[#allocation2 + $0x9] sm:$0xff]
        %v744 = vld [vmem:[#allocation2 + $0x19] sm:$0xff]
        %v745 = vld [vmem:[#allocation2 + $0x21] sm:$0xff]
        %v746 = vld [vmem:[#allocation2 + $0x31] sm:$0xff]
        %v747 = vld [vmem:[#allocation2 + $0x39] sm:$0xff]
        %v748 = vld [vmem:[#allocation2 + $0x49] sm:$0xff]
        %v749 = vld [vmem:[#allocation2 + $0x51] sm:$0xff]
        %v750 = vld [vmem:[#allocation2 + $0x61] sm:$0xff]
        %v751 = vld [vmem:[#allocation2 + $0x69] sm:$0xff]
        %v752 = vld [vmem:[#allocation2 + $0x79] sm:$0xff]
        %v753 = vld [vmem:[#allocation2 + $0x81] sm:$0xff]
        %v754 = vld [vmem:[#allocation2 + $0x91] sm:$0xff]
        %v755 = vld [vmem:[#allocation2 + $0x99] sm:$0xff]
        %v756 = vld [vmem:[#allocation2 + $0xa9] sm:$0xff]
        %v757 = vld [vmem:[#allocation2 + $0xb1] sm:$0xff]
        %v758 = vld [vmem:[#allocation2 + $0xc1] sm:$0xff]
        %v759 = vld [vmem:[#allocation2 + $0xc9] sm:$0xff]
        %v760 = vld [vmem:[#allocation2 + $0xd9] sm:$0xff]
        %v761 = vld [vmem:[#allocation2 + $0xe1] sm:$0xff]
        %v762 = vld [vmem:[#allocation2 + $0xf1] sm:$0xff]
        %v763 = vld [vmem:[#allocation2 + $0xf9] sm:$0xff]
        %v764 = vld [vmem:[#allocation2 + $0x109] sm:$0xff]
        %v765 = vld [vmem:[#allocation2 + $0x111] sm:$0xff]
        %v766 = vld [vmem:[#allocation2 + $0x121] sm:$0xff]
        %v767 = vld [vmem:[#allocation2 + $0x129] sm:$0xff]
        %v768 = vld [vmem:[#allocation2 + $0x139] sm:$0xff]
        %v769 = vld [vmem:[#allocation2 + $0x141] sm:$0xff]
        %v770 = vld [vmem:[#allocation2 + $0x151] sm:$0xff]
        %v771 = vld [vmem:[#allocation2 + $0x159] sm:$0xff]
        %v772 = vld [vmem:[#allocation2 + $0x169] sm:$0xff]
        %v773 = vld [vmem:[#allocation2 + $0x171] sm:$0xff]
        %v774 = vld [vmem:[#allocation2 + $0x1b1] sm:$0xff]
        %v775 = vld [vmem:[#allocation2 + $0x1b9] sm:$0xff]
        %v776 = vld [vmem:[#allocation2 + $0x1c9] sm:$0xff]
        %v777 = vld [vmem:[#allocation2 + $0x1d1] sm:$0xff]
        %v778 = vld [vmem:[#allocation2 + $0x1e1] sm:$0xff]
        %v779 = vld [vmem:[#allocation2 + $0x1e9] sm:$0xff]
        %v780 = vld [vmem:[#allocation2 + $0x1f9] sm:$0xff]
        %v781 = vld [vmem:[#allocation2 + $0x201] sm:$0xff]
        %v782 = vld [vmem:[#allocation2 + $0x211] sm:$0xff]
        %v783 = vld [vmem:[#allocation2 + $0x219] sm:$0xff]
        %v784 = vld [vmem:[#allocation2 + $0x229] sm:$0xff]
        %v785 = vld [vmem:[#allocation2 + $0x231] sm:$0xff]
        %v786 = vld [vmem:[#allocation2 + $0x241] sm:$0xff]
        %v787 = vld [vmem:[#allocation2 + $0x249] sm:$0xff]
        %v788 = vld [vmem:[#allocation2 + $0x259] sm:$0xff]
        %v789 = vld [vmem:[#allocation2 + $0x261] sm:$0xff]
        %v790 = vld [vmem:[#allocation2 + $0x271] sm:$0xff]
        %v791 = vld [vmem:[#allocation2 + $0x279] sm:$0xff]
        %v792 = vld [vmem:[#allocation2 + $0x289] sm:$0xff]
        %v793 = vld [vmem:[#allocation2 + $0x291] sm:$0xff]
        %v794 = vld [vmem:[#allocation2 + $0x2a1] sm:$0xff]
        %v795 = vld [vmem:[#allocation2 + $0x2a9] sm:$0xff]
        %v796 = vld [vmem:[#allocation2 + $0x2b9] sm:$0xff]
        %v797 = vld [vmem:[#allocation2 + $0x2c1] sm:$0xff]
        %v798 = vld [vmem:[#allocation2 + $0x2d1] sm:$0xff]
        %v799 = vld [vmem:[#allocation2 + $0x2d9] sm:$0xff]
        %v800 = vld [vmem:[#allocation2 + $0x2e9] sm:$0xff]
        %v801 = vld [vmem:[#allocation2 + $0x2f1] sm:$0xff]
        %v802 = vld [vmem:[#allocation2 + $0x301] sm:$0xff]
        %v803 = vld [vmem:[#allocation2 + $0x309] sm:$0xff]
        %v804 = vld [vmem:[#allocation2 + $0x319] sm:$0xff]
        %v805 = vld [vmem:[#allocation2 + $0x321] sm:$0xff]
        %v806 = vpack.c.bf16 %v743, %v742
        %v807 = vpack.c.bf16 %v745, %v744
        %v808 = vpack.c.bf16 %v747, %v746
        %v809 = vpack.c.bf16 %v749, %v748
        %v810 = vpack.c.bf16 %v751, %v750
        %v811 = vpack.c.bf16 %v753, %v752
        %v812 = vpack.c.bf16 %v755, %v754
        %v813 = vpack.c.bf16 %v757, %v756
        %v814 = vpack.c.bf16 %v759, %v758
        %v815 = vpack.c.bf16 %v761, %v760
        %v816 = vpack.c.bf16 %v763, %v762
        %v817 = vpack.c.bf16 %v765, %v764
        %v818 = vpack.c.bf16 %v767, %v766
        %v819 = vpack.c.bf16 %v769, %v768
        %v820 = vpack.c.bf16 %v771, %v770
        %v821 = vpack.c.bf16 %v773, %v772
        %v822 = vpack.c.bf16 %v775, %v774
        %v823 = vpack.c.bf16 %v777, %v776
        %v824 = vpack.c.bf16 %v779, %v778
        %v825 = vpack.c.bf16 %v781, %v780
        %v826 = vpack.c.bf16 %v783, %v782
        %v827 = vpack.c.bf16 %v785, %v784
        %v828 = vpack.c.bf16 %v787, %v786
        %v829 = vpack.c.bf16 %v789, %v788
        %v830 = vpack.c.bf16 %v791, %v790
        %v831 = vpack.c.bf16 %v793, %v792
        %v832 = vpack.c.bf16 %v795, %v794
        %v833 = vpack.c.bf16 %v797, %v796
        %v834 = vpack.c.bf16 %v799, %v798
        %v835 = vpack.c.bf16 %v801, %v800
        %v836 = vpack.c.bf16 %v803, %v802
        %v837 = vpack.c.bf16 %v805, %v804
        %838 = vst [vmem:[#allocation3 + $0x8] sm:$0xff] %v806
        %839 = vst [vmem:[#allocation3 + $0x50] sm:$0xff] %v807
        %840 = vst [vmem:[#allocation3 + $0x98] sm:$0xff] %v808
        %841 = vst [vmem:[#allocation3 + $0xe0] sm:$0xff] %v809
        %842 = vst [vmem:[#allocation3 + $0x128] sm:$0xff] %v810
        %843 = vst [vmem:[#allocation3 + $0x170] sm:$0xff] %v811
        %844 = vst [vmem:[#allocation3 + $0x1b8] sm:$0xff] %v812
        %845 = vst [vmem:[#allocation3 + $0x200] sm:$0xff] %v813
        %846 = vst [vmem:[#allocation3 + $0x248] sm:$0xff] %v814
        %847 = vst [vmem:[#allocation3 + $0x290] sm:$0xff] %v815
        %848 = vst [vmem:[#allocation3 + $0x2d8] sm:$0xff] %v816
        %849 = vst [vmem:[#allocation3 + $0x320] sm:$0xff] %v817
        %850 = vst [vmem:[#allocation3 + $0x368] sm:$0xff] %v818
        %851 = vst [vmem:[#allocation3 + $0x3b0] sm:$0xff] %v819
        %852 = vst [vmem:[#allocation3 + $0x3f8] sm:$0xff] %v820
        %853 = vst [vmem:[#allocation3 + $0x440] sm:$0xff] %v821
        %854 = vst [vmem:[#allocation3 + $0x488] sm:$0xff] %v822
        %855 = vst [vmem:[#allocation3 + $0x4d0] sm:$0xff] %v823
        %856 = vst [vmem:[#allocation3 + $0x518] sm:$0xff] %v824
        %857 = vst [vmem:[#allocation3 + $0x560] sm:$0xff] %v825
        %858 = vst [vmem:[#allocation3 + $0x5a8] sm:$0xff] %v826
        %859 = vst [vmem:[#allocation3 + $0x5f0] sm:$0xff] %v827
        %860 = vst [vmem:[#allocation3 + $0x638] sm:$0xff] %v828
        %861 = vst [vmem:[#allocation3 + $0x680] sm:$0xff] %v829
        %862 = vst [vmem:[#allocation3 + $0x6c8] sm:$0xff] %v830
        %863 = vst [vmem:[#allocation3 + $0x710] sm:$0xff] %v831
        %864 = vst [vmem:[#allocation3 + $0x758] sm:$0xff] %v832
        %865 = vst [vmem:[#allocation3 + $0x7a0] sm:$0xff] %v833
        %866 = vst [vmem:[#allocation3 + $0x7e8] sm:$0xff] %v834
        %867 = vst [vmem:[#allocation3 + $0x830] sm:$0xff] %v835
        %868 = vst [vmem:[#allocation3 + $0x878] sm:$0xff] %v836
        %869 = vst [vmem:[#allocation3 + $0x8c0] sm:$0xff] %v837
        %v870 = vld [vmem:[#allocation2 + $0x2] sm:$0xff]
        %v871 = vld [vmem:[#allocation2 + $0xa] sm:$0xff]
        %v872 = vld [vmem:[#allocation2 + $0x1a] sm:$0xff]
        %v873 = vld [vmem:[#allocation2 + $0x22] sm:$0xff]
        %v874 = vld [vmem:[#allocation2 + $0x32] sm:$0xff]
        %v875 = vld [vmem:[#allocation2 + $0x3a] sm:$0xff]
        %v876 = vld [vmem:[#allocation2 + $0x4a] sm:$0xff]
        %v877 = vld [vmem:[#allocation2 + $0x52] sm:$0xff]
        %v878 = vld [vmem:[#allocation2 + $0x62] sm:$0xff]
        %v879 = vld [vmem:[#allocation2 + $0x6a] sm:$0xff]
        %v880 = vld [vmem:[#allocation2 + $0x7a] sm:$0xff]
        %v881 = vld [vmem:[#allocation2 + $0x82] sm:$0xff]
        %v882 = vld [vmem:[#allocation2 + $0x92] sm:$0xff]
        %v883 = vld [vmem:[#allocation2 + $0x9a] sm:$0xff]
        %v884 = vld [vmem:[#allocation2 + $0xaa] sm:$0xff]
        %v885 = vld [vmem:[#allocation2 + $0xb2] sm:$0xff]
        %v886 = vld [vmem:[#allocation2 + $0xc2] sm:$0xff]
        %v887 = vld [vmem:[#allocation2 + $0xca] sm:$0xff]
        %v888 = vld [vmem:[#allocation2 + $0xda] sm:$0xff]
        %v889 = vld [vmem:[#allocation2 + $0xe2] sm:$0xff]
        %v890 = vld [vmem:[#allocation2 + $0xf2] sm:$0xff]
        %v891 = vld [vmem:[#allocation2 + $0xfa] sm:$0xff]
        %v892 = vld [vmem:[#allocation2 + $0x10a] sm:$0xff]
        %v893 = vld [vmem:[#allocation2 + $0x112] sm:$0xff]
        %v894 = vld [vmem:[#allocation2 + $0x122] sm:$0xff]
        %v895 = vld [vmem:[#allocation2 + $0x12a] sm:$0xff]
        %v896 = vld [vmem:[#allocation2 + $0x13a] sm:$0xff]
        %v897 = vld [vmem:[#allocation2 + $0x142] sm:$0xff]
        %v898 = vld [vmem:[#allocation2 + $0x152] sm:$0xff]
        %v899 = vld [vmem:[#allocation2 + $0x15a] sm:$0xff]
        %v900 = vld [vmem:[#allocation2 + $0x16a] sm:$0xff]
        %v901 = vld [vmem:[#allocation2 + $0x172] sm:$0xff]
        %v902 = vld [vmem:[#allocation2 + $0x1b2] sm:$0xff]
        %v903 = vld [vmem:[#allocation2 + $0x1ba] sm:$0xff]
        %v904 = vld [vmem:[#allocation2 + $0x1ca] sm:$0xff]
        %v905 = vld [vmem:[#allocation2 + $0x1d2] sm:$0xff]
        %v906 = vld [vmem:[#allocation2 + $0x1e2] sm:$0xff]
        %v907 = vld [vmem:[#allocation2 + $0x1ea] sm:$0xff]
        %v908 = vld [vmem:[#allocation2 + $0x1fa] sm:$0xff]
        %v909 = vld [vmem:[#allocation2 + $0x202] sm:$0xff]
        %v910 = vld [vmem:[#allocation2 + $0x212] sm:$0xff]
        %v911 = vld [vmem:[#allocation2 + $0x21a] sm:$0xff]
        %v912 = vld [vmem:[#allocation2 + $0x22a] sm:$0xff]
        %v913 = vld [vmem:[#allocation2 + $0x232] sm:$0xff]
        %v914 = vld [vmem:[#allocation2 + $0x242] sm:$0xff]
        %v915 = vld [vmem:[#allocation2 + $0x24a] sm:$0xff]
        %v916 = vld [vmem:[#allocation2 + $0x25a] sm:$0xff]
        %v917 = vld [vmem:[#allocation2 + $0x262] sm:$0xff]
        %v918 = vld [vmem:[#allocation2 + $0x272] sm:$0xff]
        %v919 = vld [vmem:[#allocation2 + $0x27a] sm:$0xff]
        %v920 = vld [vmem:[#allocation2 + $0x28a] sm:$0xff]
        %v921 = vld [vmem:[#allocation2 + $0x292] sm:$0xff]
        %v922 = vld [vmem:[#allocation2 + $0x2a2] sm:$0xff]
        %v923 = vld [vmem:[#allocation2 + $0x2aa] sm:$0xff]
        %v924 = vld [vmem:[#allocation2 + $0x2ba] sm:$0xff]
        %v925 = vld [vmem:[#allocation2 + $0x2c2] sm:$0xff]
        %v926 = vld [vmem:[#allocation2 + $0x2d2] sm:$0xff]
        %v927 = vld [vmem:[#allocation2 + $0x2da] sm:$0xff]
        %v928 = vld [vmem:[#allocation2 + $0x2ea] sm:$0xff]
        %v929 = vld [vmem:[#allocation2 + $0x2f2] sm:$0xff]
        %v930 = vld [vmem:[#allocation2 + $0x302] sm:$0xff]
        %v931 = vld [vmem:[#allocation2 + $0x30a] sm:$0xff]
        %v932 = vld [vmem:[#allocation2 + $0x31a] sm:$0xff]
        %v933 = vld [vmem:[#allocation2 + $0x322] sm:$0xff]
        %v934 = vpack.c.bf16 %v871, %v870
        %v935 = vpack.c.bf16 %v873, %v872
        %v936 = vpack.c.bf16 %v875, %v874
        %v937 = vpack.c.bf16 %v877, %v876
        %v938 = vpack.c.bf16 %v879, %v878
        %v939 = vpack.c.bf16 %v881, %v880
        %v940 = vpack.c.bf16 %v883, %v882
        %v941 = vpack.c.bf16 %v885, %v884
        %v942 = vpack.c.bf16 %v887, %v886
        %v943 = vpack.c.bf16 %v889, %v888
        %v944 = vpack.c.bf16 %v891, %v890
        %v945 = vpack.c.bf16 %v893, %v892
        %v946 = vpack.c.bf16 %v895, %v894
        %v947 = vpack.c.bf16 %v897, %v896
        %v948 = vpack.c.bf16 %v899, %v898
        %v949 = vpack.c.bf16 %v901, %v900
        %v950 = vpack.c.bf16 %v903, %v902
        %v951 = vpack.c.bf16 %v905, %v904
        %v952 = vpack.c.bf16 %v907, %v906
        %v953 = vpack.c.bf16 %v909, %v908
        %v954 = vpack.c.bf16 %v911, %v910
        %v955 = vpack.c.bf16 %v913, %v912
        %v956 = vpack.c.bf16 %v915, %v914
        %v957 = vpack.c.bf16 %v917, %v916
        %v958 = vpack.c.bf16 %v919, %v918
        %v959 = vpack.c.bf16 %v921, %v920
        %v960 = vpack.c.bf16 %v923, %v922
        %v961 = vpack.c.bf16 %v925, %v924
        %v962 = vpack.c.bf16 %v927, %v926
        %v963 = vpack.c.bf16 %v929, %v928
        %v964 = vpack.c.bf16 %v931, %v930
        %v965 = vpack.c.bf16 %v933, %v932
        %966 = vst [vmem:[#allocation3 + $0x10] sm:$0xff] %v934
        %967 = vst [vmem:[#allocation3 + $0x58] sm:$0xff] %v935
        %968 = vst [vmem:[#allocation3 + $0xa0] sm:$0xff] %v936
        %969 = vst [vmem:[#allocation3 + $0xe8] sm:$0xff] %v937
        %970 = vst [vmem:[#allocation3 + $0x130] sm:$0xff] %v938
        %971 = vst [vmem:[#allocation3 + $0x178] sm:$0xff] %v939
        %972 = vst [vmem:[#allocation3 + $0x1c0] sm:$0xff] %v940
        %973 = vst [vmem:[#allocation3 + $0x208] sm:$0xff] %v941
        %974 = vst [vmem:[#allocation3 + $0x250] sm:$0xff] %v942
        %975 = vst [vmem:[#allocation3 + $0x298] sm:$0xff] %v943
        %976 = vst [vmem:[#allocation3 + $0x2e0] sm:$0xff] %v944
        %977 = vst [vmem:[#allocation3 + $0x328] sm:$0xff] %v945
        %978 = vst [vmem:[#allocation3 + $0x370] sm:$0xff] %v946
        %979 = vst [vmem:[#allocation3 + $0x3b8] sm:$0xff] %v947
        %980 = vst [vmem:[#allocation3 + $0x400] sm:$0xff] %v948
        %981 = vst [vmem:[#allocation3 + $0x448] sm:$0xff] %v949
        %982 = vst [vmem:[#allocation3 + $0x490] sm:$0xff] %v950
        %983 = vst [vmem:[#allocation3 + $0x4d8] sm:$0xff] %v951
        %984 = vst [vmem:[#allocation3 + $0x520] sm:$0xff] %v952
        %985 = vst [vmem:[#allocation3 + $0x568] sm:$0xff] %v953
        %986 = vst [vmem:[#allocation3 + $0x5b0] sm:$0xff] %v954
        %987 = vst [vmem:[#allocation3 + $0x5f8] sm:$0xff] %v955
        %988 = vst [vmem:[#allocation3 + $0x640] sm:$0xff] %v956
        %989 = vst [vmem:[#allocation3 + $0x688] sm:$0xff] %v957
        %990 = vst [vmem:[#allocation3 + $0x6d0] sm:$0xff] %v958
        %991 = vst [vmem:[#allocation3 + $0x718] sm:$0xff] %v959
        %992 = vst [vmem:[#allocation3 + $0x760] sm:$0xff] %v960
        %993 = vst [vmem:[#allocation3 + $0x7a8] sm:$0xff] %v961
        %994 = vst [vmem:[#allocation3 + $0x7f0] sm:$0xff] %v962
        %995 = vst [vmem:[#allocation3 + $0x838] sm:$0xff] %v963
        %996 = vst [vmem:[#allocation3 + $0x880] sm:$0xff] %v964
        %997 = vst [vmem:[#allocation3 + $0x8c8] sm:$0xff] %v965
        %v998 = vld [vmem:[%s343] sm:$0xff]
        %v999 = vld [vmem:[%s343 + $0x8] sm:$0xff]
        %v1000 = vld [vmem:[%s343 + $0x18] sm:$0xff]
        %v1001 = vld [vmem:[%s343 + $0x20] sm:$0xff]
        %v1002 = vld [vmem:[%s343 + $0x30] sm:$0xff]
        %v1003 = vld [vmem:[%s343 + $0x38] sm:$0xff]
        %v1004 = vld [vmem:[%s343 + $0x48] sm:$0xff]
        %v1005 = vld [vmem:[%s343 + $0x50] sm:$0xff]
        %v1006 = vld [vmem:[%s343 + $0x60] sm:$0xff]
        %v1007 = vld [vmem:[%s343 + $0x68] sm:$0xff]
        %v1008 = vld [vmem:[%s343 + $0x78] sm:$0xff]
        %v1009 = vld [vmem:[%s343 + $0x80] sm:$0xff]
        %v1010 = vld [vmem:[%s343 + $0x90] sm:$0xff]
        %v1011 = vld [vmem:[%s343 + $0x98] sm:$0xff]
        %v1012 = vld [vmem:[%s343 + $0xa8] sm:$0xff]
        %v1013 = vld [vmem:[%s343 + $0xb0] sm:$0xff]
        %v1014 = vld [vmem:[%s343 + $0xc0] sm:$0xff]
        %v1015 = vld [vmem:[%s343 + $0xc8] sm:$0xff]
        %v1016 = vld [vmem:[%s343 + $0xd8] sm:$0xff]
        %v1017 = vld [vmem:[%s343 + $0xe0] sm:$0xff]
        %v1018 = vld [vmem:[%s343 + $0xf0] sm:$0xff]
        %v1019 = vld [vmem:[%s343 + $0xf8] sm:$0xff]
        %v1020 = vld [vmem:[%s343 + $0x108] sm:$0xff]
        %v1021 = vld [vmem:[%s343 + $0x110] sm:$0xff]
        %v1022 = vld [vmem:[%s343 + $0x120] sm:$0xff]
        %v1023 = vld [vmem:[%s343 + $0x128] sm:$0xff]
        %v1024 = vld [vmem:[%s343 + $0x138] sm:$0xff]
        %v1025 = vld [vmem:[%s343 + $0x140] sm:$0xff]
        %v1026 = vld [vmem:[%s343 + $0x150] sm:$0xff]
        %v1027 = vld [vmem:[%s343 + $0x158] sm:$0xff]
        %v1028 = vld [vmem:[%s343 + $0x168] sm:$0xff]
        %v1029 = vld [vmem:[%s343 + $0x170] sm:$0xff]
        %v1030 = vld [vmem:[%s343 + $0x1b0] sm:$0xff]
        %v1031 = vld [vmem:[%s343 + $0x1b8] sm:$0xff]
        %v1032 = vld [vmem:[%s343 + $0x1c8] sm:$0xff]
        %v1033 = vld [vmem:[%s343 + $0x1d0] sm:$0xff]
        %v1034 = vld [vmem:[%s343 + $0x1e0] sm:$0xff]
        %v1035 = vld [vmem:[%s343 + $0x1e8] sm:$0xff]
        %v1036 = vld [vmem:[%s343 + $0x1f8] sm:$0xff]
        %v1037 = vld [vmem:[%s343 + $0x200] sm:$0xff]
        %v1038 = vld [vmem:[%s343 + $0x210] sm:$0xff]
        %v1039 = vld [vmem:[%s343 + $0x218] sm:$0xff]
        %v1040 = vld [vmem:[%s343 + $0x228] sm:$0xff]
        %v1041 = vld [vmem:[%s343 + $0x230] sm:$0xff]
        %v1042 = vld [vmem:[%s343 + $0x240] sm:$0xff]
        %v1043 = vld [vmem:[%s343 + $0x248] sm:$0xff]
        %v1044 = vld [vmem:[%s343 + $0x258] sm:$0xff]
        %v1045 = vld [vmem:[%s343 + $0x260] sm:$0xff]
        %v1046 = vld [vmem:[%s343 + $0x270] sm:$0xff]
        %v1047 = vld [vmem:[%s343 + $0x278] sm:$0xff]
        %v1048 = vld [vmem:[%s343 + $0x288] sm:$0xff]
        %v1049 = vld [vmem:[%s343 + $0x290] sm:$0xff]
        %v1050 = vld [vmem:[%s343 + $0x2a0] sm:$0xff]
        %v1051 = vld [vmem:[%s343 + $0x2a8] sm:$0xff]
        %v1052 = vld [vmem:[%s343 + $0x2b8] sm:$0xff]
        %v1053 = vld [vmem:[%s343 + $0x2c0] sm:$0xff]
        %v1054 = vld [vmem:[%s343 + $0x2d0] sm:$0xff]
        %v1055 = vld [vmem:[%s343 + $0x2d8] sm:$0xff]
        %v1056 = vld [vmem:[%s343 + $0x2e8] sm:$0xff]
        %v1057 = vld [vmem:[%s343 + $0x2f0] sm:$0xff]
        %v1058 = vld [vmem:[%s343 + $0x300] sm:$0xff]
        %v1059 = vld [vmem:[%s343 + $0x308] sm:$0xff]
        %v1060 = vld [vmem:[%s343 + $0x318] sm:$0xff]
        %v1061 = vld [vmem:[%s343 + $0x320] sm:$0xff]
        %v1062 = vpack.c.bf16 %v999, %v998
        %v1063 = vpack.c.bf16 %v1001, %v1000
        %v1064 = vpack.c.bf16 %v1003, %v1002
        %v1065 = vpack.c.bf16 %v1005, %v1004
        %v1066 = vpack.c.bf16 %v1007, %v1006
        %v1067 = vpack.c.bf16 %v1009, %v1008
        %v1068 = vpack.c.bf16 %v1011, %v1010
        %v1069 = vpack.c.bf16 %v1013, %v1012
        %v1070 = vpack.c.bf16 %v1015, %v1014
        %v1071 = vpack.c.bf16 %v1017, %v1016
        %v1072 = vpack.c.bf16 %v1019, %v1018
        %v1073 = vpack.c.bf16 %v1021, %v1020
        %v1074 = vpack.c.bf16 %v1023, %v1022
        %v1075 = vpack.c.bf16 %v1025, %v1024
        %v1076 = vpack.c.bf16 %v1027, %v1026
        %v1077 = vpack.c.bf16 %v1029, %v1028
        %v1078 = vpack.c.bf16 %v1031, %v1030
        %v1079 = vpack.c.bf16 %v1033, %v1032
        %v1080 = vpack.c.bf16 %v1035, %v1034
        %v1081 = vpack.c.bf16 %v1037, %v1036
        %v1082 = vpack.c.bf16 %v1039, %v1038
        %v1083 = vpack.c.bf16 %v1041, %v1040
        %v1084 = vpack.c.bf16 %v1043, %v1042
        %v1085 = vpack.c.bf16 %v1045, %v1044
        %v1086 = vpack.c.bf16 %v1047, %v1046
        %v1087 = vpack.c.bf16 %v1049, %v1048
        %v1088 = vpack.c.bf16 %v1051, %v1050
        %v1089 = vpack.c.bf16 %v1053, %v1052
        %v1090 = vpack.c.bf16 %v1055, %v1054
        %v1091 = vpack.c.bf16 %v1057, %v1056
        %v1092 = vpack.c.bf16 %v1059, %v1058
        %v1093 = vpack.c.bf16 %v1061, %v1060
        %1094 = vst [vmem:[#allocation3 + $0x18] sm:$0xff] %v1062
        %1095 = vst [vmem:[#allocation3 + $0x60] sm:$0xff] %v1063
        %1096 = vst [vmem:[#allocation3 + $0xa8] sm:$0xff] %v1064
        %1097 = vst [vmem:[#allocation3 + $0xf0] sm:$0xff] %v1065
        %1098 = vst [vmem:[#allocation3 + $0x138] sm:$0xff] %v1066
        %1099 = vst [vmem:[#allocation3 + $0x180] sm:$0xff] %v1067
        %1100 = vst [vmem:[#allocation3 + $0x1c8] sm:$0xff] %v1068
        %1101 = vst [vmem:[#allocation3 + $0x210] sm:$0xff] %v1069
        %1102 = vst [vmem:[#allocation3 + $0x258] sm:$0xff] %v1070
        %1103 = vst [vmem:[#allocation3 + $0x2a0] sm:$0xff] %v1071
        %1104 = vst [vmem:[#allocation3 + $0x2e8] sm:$0xff] %v1072
        %1105 = vst [vmem:[#allocation3 + $0x330] sm:$0xff] %v1073
        %1106 = vst [vmem:[#allocation3 + $0x378] sm:$0xff] %v1074
        %1107 = vst [vmem:[#allocation3 + $0x3c0] sm:$0xff] %v1075
        %1108 = vst [vmem:[#allocation3 + $0x408] sm:$0xff] %v1076
        %1109 = vst [vmem:[#allocation3 + $0x450] sm:$0xff] %v1077
        %1110 = vst [vmem:[#allocation3 + $0x498] sm:$0xff] %v1078
        %1111 = vst [vmem:[#allocation3 + $0x4e0] sm:$0xff] %v1079
        %1112 = vst [vmem:[#allocation3 + $0x528] sm:$0xff] %v1080
        %1113 = vst [vmem:[#allocation3 + $0x570] sm:$0xff] %v1081
        %1114 = vst [vmem:[#allocation3 + $0x5b8] sm:$0xff] %v1082
        %1115 = vst [vmem:[#allocation3 + $0x600] sm:$0xff] %v1083
        %1116 = vst [vmem:[#allocation3 + $0x648] sm:$0xff] %v1084
        %1117 = vst [vmem:[#allocation3 + $0x690] sm:$0xff] %v1085
        %1118 = vst [vmem:[#allocation3 + $0x6d8] sm:$0xff] %v1086
        %1119 = vst [vmem:[#allocation3 + $0x720] sm:$0xff] %v1087
        %1120 = vst [vmem:[#allocation3 + $0x768] sm:$0xff] %v1088
        %1121 = vst [vmem:[#allocation3 + $0x7b0] sm:$0xff] %v1089
        %1122 = vst [vmem:[#allocation3 + $0x7f8] sm:$0xff] %v1090
        %1123 = vst [vmem:[#allocation3 + $0x840] sm:$0xff] %v1091
        %1124 = vst [vmem:[#allocation3 + $0x888] sm:$0xff] %v1092
        %1125 = vst [vmem:[#allocation3 + $0x8d0] sm:$0xff] %v1093
        %v1126 = vld [vmem:[%s343 + $0x1] sm:$0xff]
        %v1127 = vld [vmem:[%s343 + $0x9] sm:$0xff]
        %v1128 = vld [vmem:[%s343 + $0x19] sm:$0xff]
        %v1129 = vld [vmem:[%s343 + $0x21] sm:$0xff]
        %v1130 = vld [vmem:[%s343 + $0x31] sm:$0xff]
        %v1131 = vld [vmem:[%s343 + $0x39] sm:$0xff]
        %v1132 = vld [vmem:[%s343 + $0x49] sm:$0xff]
        %v1133 = vld [vmem:[%s343 + $0x51] sm:$0xff]
        %v1134 = vld [vmem:[%s343 + $0x61] sm:$0xff]
        %v1135 = vld [vmem:[%s343 + $0x69] sm:$0xff]
        %v1136 = vld [vmem:[%s343 + $0x79] sm:$0xff]
        %v1137 = vld [vmem:[%s343 + $0x81] sm:$0xff]
        %v1138 = vld [vmem:[%s343 + $0x91] sm:$0xff]
        %v1139 = vld [vmem:[%s343 + $0x99] sm:$0xff]
        %v1140 = vld [vmem:[%s343 + $0xa9] sm:$0xff]
        %v1141 = vld [vmem:[%s343 + $0xb1] sm:$0xff]
        %v1142 = vld [vmem:[%s343 + $0xc1] sm:$0xff]
        %v1143 = vld [vmem:[%s343 + $0xc9] sm:$0xff]
        %v1144 = vld [vmem:[%s343 + $0xd9] sm:$0xff]
        %v1145 = vld [vmem:[%s343 + $0xe1] sm:$0xff]
        %v1146 = vld [vmem:[%s343 + $0xf1] sm:$0xff]
        %v1147 = vld [vmem:[%s343 + $0xf9] sm:$0xff]
        %v1148 = vld [vmem:[%s343 + $0x109] sm:$0xff]
        %v1149 = vld [vmem:[%s343 + $0x111] sm:$0xff]
        %v1150 = vld [vmem:[%s343 + $0x121] sm:$0xff]
        %v1151 = vld [vmem:[%s343 + $0x129] sm:$0xff]
        %v1152 = vld [vmem:[%s343 + $0x139] sm:$0xff]
        %v1153 = vld [vmem:[%s343 + $0x141] sm:$0xff]
        %v1154 = vld [vmem:[%s343 + $0x151] sm:$0xff]
        %v1155 = vld [vmem:[%s343 + $0x159] sm:$0xff]
        %v1156 = vld [vmem:[%s343 + $0x169] sm:$0xff]
        %v1157 = vld [vmem:[%s343 + $0x171] sm:$0xff]
        %v1158 = vld [vmem:[%s343 + $0x1b1] sm:$0xff]
        %v1159 = vld [vmem:[%s343 + $0x1b9] sm:$0xff]
        %v1160 = vld [vmem:[%s343 + $0x1c9] sm:$0xff]
        %v1161 = vld [vmem:[%s343 + $0x1d1] sm:$0xff]
        %v1162 = vld [vmem:[%s343 + $0x1e1] sm:$0xff]
        %v1163 = vld [vmem:[%s343 + $0x1e9] sm:$0xff]
        %v1164 = vld [vmem:[%s343 + $0x1f9] sm:$0xff]
        %v1165 = vld [vmem:[%s343 + $0x201] sm:$0xff]
        %v1166 = vld [vmem:[%s343 + $0x211] sm:$0xff]
        %v1167 = vld [vmem:[%s343 + $0x219] sm:$0xff]
        %v1168 = vld [vmem:[%s343 + $0x229] sm:$0xff]
        %v1169 = vld [vmem:[%s343 + $0x231] sm:$0xff]
        %v1170 = vld [vmem:[%s343 + $0x241] sm:$0xff]
        %v1171 = vld [vmem:[%s343 + $0x249] sm:$0xff]
        %v1172 = vld [vmem:[%s343 + $0x259] sm:$0xff]
        %v1173 = vld [vmem:[%s343 + $0x261] sm:$0xff]
        %v1174 = vld [vmem:[%s343 + $0x271] sm:$0xff]
        %v1175 = vld [vmem:[%s343 + $0x279] sm:$0xff]
        %v1176 = vld [vmem:[%s343 + $0x289] sm:$0xff]
        %v1177 = vld [vmem:[%s343 + $0x291] sm:$0xff]
        %v1178 = vld [vmem:[%s343 + $0x2a1] sm:$0xff]
        %v1179 = vld [vmem:[%s343 + $0x2a9] sm:$0xff]
        %v1180 = vld [vmem:[%s343 + $0x2b9] sm:$0xff]
        %v1181 = vld [vmem:[%s343 + $0x2c1] sm:$0xff]
        %v1182 = vld [vmem:[%s343 + $0x2d1] sm:$0xff]
        %v1183 = vld [vmem:[%s343 + $0x2d9] sm:$0xff]
        %v1184 = vld [vmem:[%s343 + $0x2e9] sm:$0xff]
        %v1185 = vld [vmem:[%s343 + $0x2f1] sm:$0xff]
        %v1186 = vld [vmem:[%s343 + $0x301] sm:$0xff]
        %v1187 = vld [vmem:[%s343 + $0x309] sm:$0xff]
        %v1188 = vld [vmem:[%s343 + $0x319] sm:$0xff]
        %v1189 = vld [vmem:[%s343 + $0x321] sm:$0xff]
        %v1190 = vpack.c.bf16 %v1127, %v1126
        %v1191 = vpack.c.bf16 %v1129, %v1128
        %v1192 = vpack.c.bf16 %v1131, %v1130
        %v1193 = vpack.c.bf16 %v1133, %v1132
        %v1194 = vpack.c.bf16 %v1135, %v1134
        %v1195 = vpack.c.bf16 %v1137, %v1136
        %v1196 = vpack.c.bf16 %v1139, %v1138
        %v1197 = vpack.c.bf16 %v1141, %v1140
        %v1198 = vpack.c.bf16 %v1143, %v1142
        %v1199 = vpack.c.bf16 %v1145, %v1144
        %v1200 = vpack.c.bf16 %v1147, %v1146
        %v1201 = vpack.c.bf16 %v1149, %v1148
        %v1202 = vpack.c.bf16 %v1151, %v1150
        %v1203 = vpack.c.bf16 %v1153, %v1152
        %v1204 = vpack.c.bf16 %v1155, %v1154
        %v1205 = vpack.c.bf16 %v1157, %v1156
        %v1206 = vpack.c.bf16 %v1159, %v1158
        %v1207 = vpack.c.bf16 %v1161, %v1160
        %v1208 = vpack.c.bf16 %v1163, %v1162
        %v1209 = vpack.c.bf16 %v1165, %v1164
        %v1210 = vpack.c.bf16 %v1167, %v1166
        %v1211 = vpack.c.bf16 %v1169, %v1168
        %v1212 = vpack.c.bf16 %v1171, %v1170
        %v1213 = vpack.c.bf16 %v1173, %v1172
        %v1214 = vpack.c.bf16 %v1175, %v1174
        %v1215 = vpack.c.bf16 %v1177, %v1176
        %v1216 = vpack.c.bf16 %v1179, %v1178
        %v1217 = vpack.c.bf16 %v1181, %v1180
        %v1218 = vpack.c.bf16 %v1183, %v1182
        %v1219 = vpack.c.bf16 %v1185, %v1184
        %v1220 = vpack.c.bf16 %v1187, %v1186
        %v1221 = vpack.c.bf16 %v1189, %v1188
        %1222 = vst [vmem:[#allocation3 + $0x20] sm:$0xff] %v1190
        %1223 = vst [vmem:[#allocation3 + $0x68] sm:$0xff] %v1191
        %1224 = vst [vmem:[#allocation3 + $0xb0] sm:$0xff] %v1192
        %1225 = vst [vmem:[#allocation3 + $0xf8] sm:$0xff] %v1193
        %1226 = vst [vmem:[#allocation3 + $0x140] sm:$0xff] %v1194
        %1227 = vst [vmem:[#allocation3 + $0x188] sm:$0xff] %v1195
        %1228 = vst [vmem:[#allocation3 + $0x1d0] sm:$0xff] %v1196
        %1229 = vst [vmem:[#allocation3 + $0x218] sm:$0xff] %v1197
        %1230 = vst [vmem:[#allocation3 + $0x260] sm:$0xff] %v1198
        %1231 = vst [vmem:[#allocation3 + $0x2a8] sm:$0xff] %v1199
        %1232 = vst [vmem:[#allocation3 + $0x2f0] sm:$0xff] %v1200
        %1233 = vst [vmem:[#allocation3 + $0x338] sm:$0xff] %v1201
        %1234 = vst [vmem:[#allocation3 + $0x380] sm:$0xff] %v1202
        %1235 = vst [vmem:[#allocation3 + $0x3c8] sm:$0xff] %v1203
        %1236 = vst [vmem:[#allocation3 + $0x410] sm:$0xff] %v1204
        %1237 = vst [vmem:[#allocation3 + $0x458] sm:$0xff] %v1205
        %1238 = vst [vmem:[#allocation3 + $0x4a0] sm:$0xff] %v1206
        %1239 = vst [vmem:[#allocation3 + $0x4e8] sm:$0xff] %v1207
        %1240 = vst [vmem:[#allocation3 + $0x530] sm:$0xff] %v1208
        %1241 = vst [vmem:[#allocation3 + $0x578] sm:$0xff] %v1209
        %1242 = vst [vmem:[#allocation3 + $0x5c0] sm:$0xff] %v1210
        %1243 = vst [vmem:[#allocation3 + $0x608] sm:$0xff] %v1211
        %1244 = vst [vmem:[#allocation3 + $0x650] sm:$0xff] %v1212
        %1245 = vst [vmem:[#allocation3 + $0x698] sm:$0xff] %v1213
        %1246 = vst [vmem:[#allocation3 + $0x6e0] sm:$0xff] %v1214
        %1247 = vst [vmem:[#allocation3 + $0x728] sm:$0xff] %v1215
        %1248 = vst [vmem:[#allocation3 + $0x770] sm:$0xff] %v1216
        %1249 = vst [vmem:[#allocation3 + $0x7b8] sm:$0xff] %v1217
        %1250 = vst [vmem:[#allocation3 + $0x800] sm:$0xff] %v1218
        %1251 = vst [vmem:[#allocation3 + $0x848] sm:$0xff] %v1219
        %1252 = vst [vmem:[#allocation3 + $0x890] sm:$0xff] %v1220
        %1253 = vst [vmem:[#allocation3 + $0x8d8] sm:$0xff] %v1221
        %v1254 = vld [vmem:[%s343 + $0x2] sm:$0xff]
        %v1255 = vld [vmem:[%s343 + $0xa] sm:$0xff]
        %v1256 = vld [vmem:[%s343 + $0x1a] sm:$0xff]
        %v1257 = vld [vmem:[%s343 + $0x22] sm:$0xff]
        %v1258 = vld [vmem:[%s343 + $0x32] sm:$0xff]
        %v1259 = vld [vmem:[%s343 + $0x3a] sm:$0xff]
        %v1260 = vld [vmem:[%s343 + $0x4a] sm:$0xff]
        %v1261 = vld [vmem:[%s343 + $0x52] sm:$0xff]
        %v1262 = vld [vmem:[%s343 + $0x62] sm:$0xff]
        %v1263 = vld [vmem:[%s343 + $0x6a] sm:$0xff]
        %v1264 = vld [vmem:[%s343 + $0x7a] sm:$0xff]
        %v1265 = vld [vmem:[%s343 + $0x82] sm:$0xff]
        %v1266 = vld [vmem:[%s343 + $0x92] sm:$0xff]
        %v1267 = vld [vmem:[%s343 + $0x9a] sm:$0xff]
        %v1268 = vld [vmem:[%s343 + $0xaa] sm:$0xff]
        %v1269 = vld [vmem:[%s343 + $0xb2] sm:$0xff]
        %v1270 = vld [vmem:[%s343 + $0xc2] sm:$0xff]
        %v1271 = vld [vmem:[%s343 + $0xca] sm:$0xff]
        %v1272 = vld [vmem:[%s343 + $0xda] sm:$0xff]
        %v1273 = vld [vmem:[%s343 + $0xe2] sm:$0xff]
        %v1274 = vld [vmem:[%s343 + $0xf2] sm:$0xff]
        %v1275 = vld [vmem:[%s343 + $0xfa] sm:$0xff]
        %v1276 = vld [vmem:[%s343 + $0x10a] sm:$0xff]
        %v1277 = vld [vmem:[%s343 + $0x112] sm:$0xff]
        %v1278 = vld [vmem:[%s343 + $0x122] sm:$0xff]
        %v1279 = vld [vmem:[%s343 + $0x12a] sm:$0xff]
        %v1280 = vld [vmem:[%s343 + $0x13a] sm:$0xff]
        %v1281 = vld [vmem:[%s343 + $0x142] sm:$0xff]
        %v1282 = vld [vmem:[%s343 + $0x152] sm:$0xff]
        %v1283 = vld [vmem:[%s343 + $0x15a] sm:$0xff]
        %v1284 = vld [vmem:[%s343 + $0x16a] sm:$0xff]
        %v1285 = vld [vmem:[%s343 + $0x172] sm:$0xff]
        %v1286 = vld [vmem:[%s343 + $0x1b2] sm:$0xff]
        %v1287 = vld [vmem:[%s343 + $0x1ba] sm:$0xff]
        %v1288 = vld [vmem:[%s343 + $0x1ca] sm:$0xff]
        %v1289 = vld [vmem:[%s343 + $0x1d2] sm:$0xff]
        %v1290 = vld [vmem:[%s343 + $0x1e2] sm:$0xff]
        %v1291 = vld [vmem:[%s343 + $0x1ea] sm:$0xff]
        %v1292 = vld [vmem:[%s343 + $0x1fa] sm:$0xff]
        %v1293 = vld [vmem:[%s343 + $0x202] sm:$0xff]
        %v1294 = vld [vmem:[%s343 + $0x212] sm:$0xff]
        %v1295 = vld [vmem:[%s343 + $0x21a] sm:$0xff]
        %v1296 = vld [vmem:[%s343 + $0x22a] sm:$0xff]
        %v1297 = vld [vmem:[%s343 + $0x232] sm:$0xff]
        %v1298 = vld [vmem:[%s343 + $0x242] sm:$0xff]
        %v1299 = vld [vmem:[%s343 + $0x24a] sm:$0xff]
        %v1300 = vld [vmem:[%s343 + $0x25a] sm:$0xff]
        %v1301 = vld [vmem:[%s343 + $0x262] sm:$0xff]
        %v1302 = vld [vmem:[%s343 + $0x272] sm:$0xff]
        %v1303 = vld [vmem:[%s343 + $0x27a] sm:$0xff]
        %v1304 = vld [vmem:[%s343 + $0x28a] sm:$0xff]
        %v1305 = vld [vmem:[%s343 + $0x292] sm:$0xff]
        %v1306 = vld [vmem:[%s343 + $0x2a2] sm:$0xff]
        %v1307 = vld [vmem:[%s343 + $0x2aa] sm:$0xff]
        %v1308 = vld [vmem:[%s343 + $0x2ba] sm:$0xff]
        %v1309 = vld [vmem:[%s343 + $0x2c2] sm:$0xff]
        %v1310 = vld [vmem:[%s343 + $0x2d2] sm:$0xff]
        %v1311 = vld [vmem:[%s343 + $0x2da] sm:$0xff]
        %v1312 = vld [vmem:[%s343 + $0x2ea] sm:$0xff]
        %v1313 = vld [vmem:[%s343 + $0x2f2] sm:$0xff]
        %v1314 = vld [vmem:[%s343 + $0x302] sm:$0xff]
        %v1315 = vld [vmem:[%s343 + $0x30a] sm:$0xff]
        %v1316 = vld [vmem:[%s343 + $0x31a] sm:$0xff]
        %v1317 = vld [vmem:[%s343 + $0x322] sm:$0xff]
        %v1318 = vpack.c.bf16 %v1255, %v1254
        %v1319 = vpack.c.bf16 %v1257, %v1256
        %v1320 = vpack.c.bf16 %v1259, %v1258
        %v1321 = vpack.c.bf16 %v1261, %v1260
        %v1322 = vpack.c.bf16 %v1263, %v1262
        %v1323 = vpack.c.bf16 %v1265, %v1264
        %v1324 = vpack.c.bf16 %v1267, %v1266
        %v1325 = vpack.c.bf16 %v1269, %v1268
        %v1326 = vpack.c.bf16 %v1271, %v1270
        %v1327 = vpack.c.bf16 %v1273, %v1272
        %v1328 = vpack.c.bf16 %v1275, %v1274
        %v1329 = vpack.c.bf16 %v1277, %v1276
        %v1330 = vpack.c.bf16 %v1279, %v1278
        %v1331 = vpack.c.bf16 %v1281, %v1280
        %v1332 = vpack.c.bf16 %v1283, %v1282
        %v1333 = vpack.c.bf16 %v1285, %v1284
        %v1334 = vpack.c.bf16 %v1287, %v1286
        %v1335 = vpack.c.bf16 %v1289, %v1288
        %v1336 = vpack.c.bf16 %v1291, %v1290
        %v1337 = vpack.c.bf16 %v1293, %v1292
        %v1338 = vpack.c.bf16 %v1295, %v1294
        %v1339 = vpack.c.bf16 %v1297, %v1296
        %v1340 = vpack.c.bf16 %v1299, %v1298
        %v1341 = vpack.c.bf16 %v1301, %v1300
        %v1342 = vpack.c.bf16 %v1303, %v1302
        %v1343 = vpack.c.bf16 %v1305, %v1304
        %v1344 = vpack.c.bf16 %v1307, %v1306
        %v1345 = vpack.c.bf16 %v1309, %v1308
        %v1346 = vpack.c.bf16 %v1311, %v1310
        %v1347 = vpack.c.bf16 %v1313, %v1312
        %v1348 = vpack.c.bf16 %v1315, %v1314
        %v1349 = vpack.c.bf16 %v1317, %v1316
        %1350 = vst [vmem:[#allocation3 + $0x28] sm:$0xff] %v1318
        %1351 = vst [vmem:[#allocation3 + $0x70] sm:$0xff] %v1319
        %1352 = vst [vmem:[#allocation3 + $0xb8] sm:$0xff] %v1320
        %1353 = vst [vmem:[#allocation3 + $0x100] sm:$0xff] %v1321
        %1354 = vst [vmem:[#allocation3 + $0x148] sm:$0xff] %v1322
        %1355 = vst [vmem:[#allocation3 + $0x190] sm:$0xff] %v1323
        %1356 = vst [vmem:[#allocation3 + $0x1d8] sm:$0xff] %v1324
        %1357 = vst [vmem:[#allocation3 + $0x220] sm:$0xff] %v1325
        %1358 = vst [vmem:[#allocation3 + $0x268] sm:$0xff] %v1326
        %1359 = vst [vmem:[#allocation3 + $0x2b0] sm:$0xff] %v1327
        %1360 = vst [vmem:[#allocation3 + $0x2f8] sm:$0xff] %v1328
        %1361 = vst [vmem:[#allocation3 + $0x340] sm:$0xff] %v1329
        %1362 = vst [vmem:[#allocation3 + $0x388] sm:$0xff] %v1330
        %1363 = vst [vmem:[#allocation3 + $0x3d0] sm:$0xff] %v1331
        %1364 = vst [vmem:[#allocation3 + $0x418] sm:$0xff] %v1332
        %1365 = vst [vmem:[#allocation3 + $0x460] sm:$0xff] %v1333
        %1366 = vst [vmem:[#allocation3 + $0x4a8] sm:$0xff] %v1334
        %1367 = vst [vmem:[#allocation3 + $0x4f0] sm:$0xff] %v1335
        %1368 = vst [vmem:[#allocation3 + $0x538] sm:$0xff] %v1336
        %1369 = vst [vmem:[#allocation3 + $0x580] sm:$0xff] %v1337
        %1370 = vst [vmem:[#allocation3 + $0x5c8] sm:$0xff] %v1338
        %1371 = vst [vmem:[#allocation3 + $0x610] sm:$0xff] %v1339
        %1372 = vst [vmem:[#allocation3 + $0x658] sm:$0xff] %v1340
        %1373 = vst [vmem:[#allocation3 + $0x6a0] sm:$0xff] %v1341
        %1374 = vst [vmem:[#allocation3 + $0x6e8] sm:$0xff] %v1342
        %1375 = vst [vmem:[#allocation3 + $0x730] sm:$0xff] %v1343
        %1376 = vst [vmem:[#allocation3 + $0x778] sm:$0xff] %v1344
        %1377 = vst [vmem:[#allocation3 + $0x7c0] sm:$0xff] %v1345
        %1378 = vst [vmem:[#allocation3 + $0x808] sm:$0xff] %v1346
        %1379 = vst [vmem:[#allocation3 + $0x850] sm:$0xff] %v1347
        %1380 = vst [vmem:[#allocation3 + $0x898] sm:$0xff] %v1348
        %1381 = vst [vmem:[#allocation3 + $0x8e0] sm:$0xff] %v1349
        %s1382 = scalar_lea.vmem [#allocation2], 48
        %v1383 = vld [vmem:[%s1382] sm:$0xff]
        %v1384 = vld [vmem:[%s1382 + $0x8] sm:$0xff]
        %v1385 = vld [vmem:[%s1382 + $0x18] sm:$0xff]
        %v1386 = vld [vmem:[%s1382 + $0x20] sm:$0xff]
        %v1387 = vld [vmem:[%s1382 + $0x30] sm:$0xff]
        %v1388 = vld [vmem:[%s1382 + $0x38] sm:$0xff]
        %v1389 = vld [vmem:[%s1382 + $0x48] sm:$0xff]
        %v1390 = vld [vmem:[%s1382 + $0x50] sm:$0xff]
        %v1391 = vld [vmem:[%s1382 + $0x60] sm:$0xff]
        %v1392 = vld [vmem:[%s1382 + $0x68] sm:$0xff]
        %v1393 = vld [vmem:[%s1382 + $0x78] sm:$0xff]
        %v1394 = vld [vmem:[%s1382 + $0x80] sm:$0xff]
        %v1395 = vld [vmem:[%s1382 + $0x90] sm:$0xff]
        %v1396 = vld [vmem:[%s1382 + $0x98] sm:$0xff]
        %v1397 = vld [vmem:[%s1382 + $0xa8] sm:$0xff]
        %v1398 = vld [vmem:[%s1382 + $0xb0] sm:$0xff]
        %v1399 = vld [vmem:[%s1382 + $0xc0] sm:$0xff]
        %v1400 = vld [vmem:[%s1382 + $0xc8] sm:$0xff]
        %v1401 = vld [vmem:[%s1382 + $0xd8] sm:$0xff]
        %v1402 = vld [vmem:[%s1382 + $0xe0] sm:$0xff]
        %v1403 = vld [vmem:[%s1382 + $0xf0] sm:$0xff]
        %v1404 = vld [vmem:[%s1382 + $0xf8] sm:$0xff]
        %v1405 = vld [vmem:[%s1382 + $0x108] sm:$0xff]
        %v1406 = vld [vmem:[%s1382 + $0x110] sm:$0xff]
        %v1407 = vld [vmem:[%s1382 + $0x120] sm:$0xff]
        %v1408 = vld [vmem:[%s1382 + $0x128] sm:$0xff]
        %v1409 = vld [vmem:[%s1382 + $0x138] sm:$0xff]
        %v1410 = vld [vmem:[%s1382 + $0x140] sm:$0xff]
        %v1411 = vld [vmem:[%s1382 + $0x150] sm:$0xff]
        %v1412 = vld [vmem:[%s1382 + $0x158] sm:$0xff]
        %v1413 = vld [vmem:[%s1382 + $0x168] sm:$0xff]
        %v1414 = vld [vmem:[%s1382 + $0x170] sm:$0xff]
        %v1415 = vld [vmem:[%s1382 + $0x1b0] sm:$0xff]
        %v1416 = vld [vmem:[%s1382 + $0x1b8] sm:$0xff]
        %v1417 = vld [vmem:[%s1382 + $0x1c8] sm:$0xff]
        %v1418 = vld [vmem:[%s1382 + $0x1d0] sm:$0xff]
        %v1419 = vld [vmem:[%s1382 + $0x1e0] sm:$0xff]
        %v1420 = vld [vmem:[%s1382 + $0x1e8] sm:$0xff]
        %v1421 = vld [vmem:[%s1382 + $0x1f8] sm:$0xff]
        %v1422 = vld [vmem:[%s1382 + $0x200] sm:$0xff]
        %v1423 = vld [vmem:[%s1382 + $0x210] sm:$0xff]
        %v1424 = vld [vmem:[%s1382 + $0x218] sm:$0xff]
        %v1425 = vld [vmem:[%s1382 + $0x228] sm:$0xff]
        %v1426 = vld [vmem:[%s1382 + $0x230] sm:$0xff]
        %v1427 = vld [vmem:[%s1382 + $0x240] sm:$0xff]
        %v1428 = vld [vmem:[%s1382 + $0x248] sm:$0xff]
        %v1429 = vld [vmem:[%s1382 + $0x258] sm:$0xff]
        %v1430 = vld [vmem:[%s1382 + $0x260] sm:$0xff]
        %v1431 = vld [vmem:[%s1382 + $0x270] sm:$0xff]
        %v1432 = vld [vmem:[%s1382 + $0x278] sm:$0xff]
        %v1433 = vld [vmem:[%s1382 + $0x288] sm:$0xff]
        %v1434 = vld [vmem:[%s1382 + $0x290] sm:$0xff]
        %v1435 = vld [vmem:[%s1382 + $0x2a0] sm:$0xff]
        %v1436 = vld [vmem:[%s1382 + $0x2a8] sm:$0xff]
        %v1437 = vld [vmem:[%s1382 + $0x2b8] sm:$0xff]
        %v1438 = vld [vmem:[%s1382 + $0x2c0] sm:$0xff]
        %v1439 = vld [vmem:[%s1382 + $0x2d0] sm:$0xff]
        %v1440 = vld [vmem:[%s1382 + $0x2d8] sm:$0xff]
        %v1441 = vld [vmem:[%s1382 + $0x2e8] sm:$0xff]
        %v1442 = vld [vmem:[%s1382 + $0x2f0] sm:$0xff]
        %v1443 = vld [vmem:[%s1382 + $0x300] sm:$0xff]
        %v1444 = vld [vmem:[%s1382 + $0x308] sm:$0xff]
        %v1445 = vld [vmem:[%s1382 + $0x318] sm:$0xff]
        %v1446 = vld [vmem:[%s1382 + $0x320] sm:$0xff]
        %v1447 = vpack.c.bf16 %v1384, %v1383
        %v1448 = vpack.c.bf16 %v1386, %v1385
        %v1449 = vpack.c.bf16 %v1388, %v1387
        %v1450 = vpack.c.bf16 %v1390, %v1389
        %v1451 = vpack.c.bf16 %v1392, %v1391
        %v1452 = vpack.c.bf16 %v1394, %v1393
        %v1453 = vpack.c.bf16 %v1396, %v1395
        %v1454 = vpack.c.bf16 %v1398, %v1397
        %v1455 = vpack.c.bf16 %v1400, %v1399
        %v1456 = vpack.c.bf16 %v1402, %v1401
        %v1457 = vpack.c.bf16 %v1404, %v1403
        %v1458 = vpack.c.bf16 %v1406, %v1405
        %v1459 = vpack.c.bf16 %v1408, %v1407
        %v1460 = vpack.c.bf16 %v1410, %v1409
        %v1461 = vpack.c.bf16 %v1412, %v1411
        %v1462 = vpack.c.bf16 %v1414, %v1413
        %v1463 = vpack.c.bf16 %v1416, %v1415
        %v1464 = vpack.c.bf16 %v1418, %v1417
        %v1465 = vpack.c.bf16 %v1420, %v1419
        %v1466 = vpack.c.bf16 %v1422, %v1421
        %v1467 = vpack.c.bf16 %v1424, %v1423
        %v1468 = vpack.c.bf16 %v1426, %v1425
        %v1469 = vpack.c.bf16 %v1428, %v1427
        %v1470 = vpack.c.bf16 %v1430, %v1429
        %v1471 = vpack.c.bf16 %v1432, %v1431
        %v1472 = vpack.c.bf16 %v1434, %v1433
        %v1473 = vpack.c.bf16 %v1436, %v1435
        %v1474 = vpack.c.bf16 %v1438, %v1437
        %v1475 = vpack.c.bf16 %v1440, %v1439
        %v1476 = vpack.c.bf16 %v1442, %v1441
        %v1477 = vpack.c.bf16 %v1444, %v1443
        %v1478 = vpack.c.bf16 %v1446, %v1445
        %1479 = vst [vmem:[#allocation3 + $0x30] sm:$0xff] %v1447
        %1480 = vst [vmem:[#allocation3 + $0x78] sm:$0xff] %v1448
        %1481 = vst [vmem:[#allocation3 + $0xc0] sm:$0xff] %v1449
        %1482 = vst [vmem:[#allocation3 + $0x108] sm:$0xff] %v1450
        %1483 = vst [vmem:[#allocation3 + $0x150] sm:$0xff] %v1451
        %1484 = vst [vmem:[#allocation3 + $0x198] sm:$0xff] %v1452
        %1485 = vst [vmem:[#allocation3 + $0x1e0] sm:$0xff] %v1453
        %1486 = vst [vmem:[#allocation3 + $0x228] sm:$0xff] %v1454
        %1487 = vst [vmem:[#allocation3 + $0x270] sm:$0xff] %v1455
        %1488 = vst [vmem:[#allocation3 + $0x2b8] sm:$0xff] %v1456
        %1489 = vst [vmem:[#allocation3 + $0x300] sm:$0xff] %v1457
        %1490 = vst [vmem:[#allocation3 + $0x348] sm:$0xff] %v1458
        %1491 = vst [vmem:[#allocation3 + $0x390] sm:$0xff] %v1459
        %1492 = vst [vmem:[#allocation3 + $0x3d8] sm:$0xff] %v1460
        %1493 = vst [vmem:[#allocation3 + $0x420] sm:$0xff] %v1461
        %1494 = vst [vmem:[#allocation3 + $0x468] sm:$0xff] %v1462
        %1495 = vst [vmem:[#allocation3 + $0x4b0] sm:$0xff] %v1463
        %1496 = vst [vmem:[#allocation3 + $0x4f8] sm:$0xff] %v1464
        %1497 = vst [vmem:[#allocation3 + $0x540] sm:$0xff] %v1465
        %1498 = vst [vmem:[#allocation3 + $0x588] sm:$0xff] %v1466
        %1499 = vst [vmem:[#allocation3 + $0x5d0] sm:$0xff] %v1467
        %1500 = vst [vmem:[#allocation3 + $0x618] sm:$0xff] %v1468
        %1501 = vst [vmem:[#allocation3 + $0x660] sm:$0xff] %v1469
        %1502 = vst [vmem:[#allocation3 + $0x6a8] sm:$0xff] %v1470
        %1503 = vst [vmem:[#allocation3 + $0x6f0] sm:$0xff] %v1471
        %1504 = vst [vmem:[#allocation3 + $0x738] sm:$0xff] %v1472
        %1505 = vst [vmem:[#allocation3 + $0x780] sm:$0xff] %v1473
        %1506 = vst [vmem:[#allocation3 + $0x7c8] sm:$0xff] %v1474
        %1507 = vst [vmem:[#allocation3 + $0x810] sm:$0xff] %v1475
        %1508 = vst [vmem:[#allocation3 + $0x858] sm:$0xff] %v1476
        %1509 = vst [vmem:[#allocation3 + $0x8a0] sm:$0xff] %v1477
        %1510 = vst [vmem:[#allocation3 + $0x8e8] sm:$0xff] %v1478
        %v1511 = vld [vmem:[%s1382 + $0x1] sm:$0xff]
        %v1512 = vld [vmem:[%s1382 + $0x9] sm:$0xff]
        %v1513 = vld [vmem:[%s1382 + $0x19] sm:$0xff]
        %v1514 = vld [vmem:[%s1382 + $0x21] sm:$0xff]
        %v1515 = vld [vmem:[%s1382 + $0x31] sm:$0xff]
        %v1516 = vld [vmem:[%s1382 + $0x39] sm:$0xff]
        %v1517 = vld [vmem:[%s1382 + $0x49] sm:$0xff]
        %v1518 = vld [vmem:[%s1382 + $0x51] sm:$0xff]
        %v1519 = vld [vmem:[%s1382 + $0x61] sm:$0xff]
        %v1520 = vld [vmem:[%s1382 + $0x69] sm:$0xff]
        %v1521 = vld [vmem:[%s1382 + $0x79] sm:$0xff]
        %v1522 = vld [vmem:[%s1382 + $0x81] sm:$0xff]
        %v1523 = vld [vmem:[%s1382 + $0x91] sm:$0xff]
        %v1524 = vld [vmem:[%s1382 + $0x99] sm:$0xff]
        %v1525 = vld [vmem:[%s1382 + $0xa9] sm:$0xff]
        %v1526 = vld [vmem:[%s1382 + $0xb1] sm:$0xff]
        %v1527 = vld [vmem:[%s1382 + $0xc1] sm:$0xff]
        %v1528 = vld [vmem:[%s1382 + $0xc9] sm:$0xff]
        %v1529 = vld [vmem:[%s1382 + $0xd9] sm:$0xff]
        %v1530 = vld [vmem:[%s1382 + $0xe1] sm:$0xff]
        %v1531 = vld [vmem:[%s1382 + $0xf1] sm:$0xff]
        %v1532 = vld [vmem:[%s1382 + $0xf9] sm:$0xff]
        %v1533 = vld [vmem:[%s1382 + $0x109] sm:$0xff]
        %v1534 = vld [vmem:[%s1382 + $0x111] sm:$0xff]
        %v1535 = vld [vmem:[%s1382 + $0x121] sm:$0xff]
        %v1536 = vld [vmem:[%s1382 + $0x129] sm:$0xff]
        %v1537 = vld [vmem:[%s1382 + $0x139] sm:$0xff]
        %v1538 = vld [vmem:[%s1382 + $0x141] sm:$0xff]
        %v1539 = vld [vmem:[%s1382 + $0x151] sm:$0xff]
        %v1540 = vld [vmem:[%s1382 + $0x159] sm:$0xff]
        %v1541 = vld [vmem:[%s1382 + $0x169] sm:$0xff]
        %v1542 = vld [vmem:[%s1382 + $0x171] sm:$0xff]
        %v1543 = vld [vmem:[%s1382 + $0x1b1] sm:$0xff]
        %v1544 = vld [vmem:[%s1382 + $0x1b9] sm:$0xff]
        %v1545 = vld [vmem:[%s1382 + $0x1c9] sm:$0xff]
        %v1546 = vld [vmem:[%s1382 + $0x1d1] sm:$0xff]
        %v1547 = vld [vmem:[%s1382 + $0x1e1] sm:$0xff]
        %v1548 = vld [vmem:[%s1382 + $0x1e9] sm:$0xff]
        %v1549 = vld [vmem:[%s1382 + $0x1f9] sm:$0xff]
        %v1550 = vld [vmem:[%s1382 + $0x201] sm:$0xff]
        %v1551 = vld [vmem:[%s1382 + $0x211] sm:$0xff]
        %v1552 = vld [vmem:[%s1382 + $0x219] sm:$0xff]
        %v1553 = vld [vmem:[%s1382 + $0x229] sm:$0xff]
        %v1554 = vld [vmem:[%s1382 + $0x231] sm:$0xff]
        %v1555 = vld [vmem:[%s1382 + $0x241] sm:$0xff]
        %v1556 = vld [vmem:[%s1382 + $0x249] sm:$0xff]
        %v1557 = vld [vmem:[%s1382 + $0x259] sm:$0xff]
        %v1558 = vld [vmem:[%s1382 + $0x261] sm:$0xff]
        %v1559 = vld [vmem:[%s1382 + $0x271] sm:$0xff]
        %v1560 = vld [vmem:[%s1382 + $0x279] sm:$0xff]
        %v1561 = vld [vmem:[%s1382 + $0x289] sm:$0xff]
        %v1562 = vld [vmem:[%s1382 + $0x291] sm:$0xff]
        %v1563 = vld [vmem:[%s1382 + $0x2a1] sm:$0xff]
        %v1564 = vld [vmem:[%s1382 + $0x2a9] sm:$0xff]
        %v1565 = vld [vmem:[%s1382 + $0x2b9] sm:$0xff]
        %v1566 = vld [vmem:[%s1382 + $0x2c1] sm:$0xff]
        %v1567 = vld [vmem:[%s1382 + $0x2d1] sm:$0xff]
        %v1568 = vld [vmem:[%s1382 + $0x2d9] sm:$0xff]
        %v1569 = vld [vmem:[%s1382 + $0x2e9] sm:$0xff]
        %v1570 = vld [vmem:[%s1382 + $0x2f1] sm:$0xff]
        %v1571 = vld [vmem:[%s1382 + $0x301] sm:$0xff]
        %v1572 = vld [vmem:[%s1382 + $0x309] sm:$0xff]
        %v1573 = vld [vmem:[%s1382 + $0x319] sm:$0xff]
        %v1574 = vld [vmem:[%s1382 + $0x321] sm:$0xff]
        %v1575 = vpack.c.bf16 %v1512, %v1511
        %v1576 = vpack.c.bf16 %v1514, %v1513
        %v1577 = vpack.c.bf16 %v1516, %v1515
        %v1578 = vpack.c.bf16 %v1518, %v1517
        %v1579 = vpack.c.bf16 %v1520, %v1519
        %v1580 = vpack.c.bf16 %v1522, %v1521
        %v1581 = vpack.c.bf16 %v1524, %v1523
        %v1582 = vpack.c.bf16 %v1526, %v1525
        %v1583 = vpack.c.bf16 %v1528, %v1527
        %v1584 = vpack.c.bf16 %v1530, %v1529
        %v1585 = vpack.c.bf16 %v1532, %v1531
        %v1586 = vpack.c.bf16 %v1534, %v1533
        %v1587 = vpack.c.bf16 %v1536, %v1535
        %v1588 = vpack.c.bf16 %v1538, %v1537
        %v1589 = vpack.c.bf16 %v1540, %v1539
        %v1590 = vpack.c.bf16 %v1542, %v1541
        %v1591 = vpack.c.bf16 %v1544, %v1543
        %v1592 = vpack.c.bf16 %v1546, %v1545
        %v1593 = vpack.c.bf16 %v1548, %v1547
        %v1594 = vpack.c.bf16 %v1550, %v1549
        %v1595 = vpack.c.bf16 %v1552, %v1551
        %v1596 = vpack.c.bf16 %v1554, %v1553
        %v1597 = vpack.c.bf16 %v1556, %v1555
        %v1598 = vpack.c.bf16 %v1558, %v1557
        %v1599 = vpack.c.bf16 %v1560, %v1559
        %v1600 = vpack.c.bf16 %v1562, %v1561
        %v1601 = vpack.c.bf16 %v1564, %v1563
        %v1602 = vpack.c.bf16 %v1566, %v1565
        %v1603 = vpack.c.bf16 %v1568, %v1567
        %v1604 = vpack.c.bf16 %v1570, %v1569
        %v1605 = vpack.c.bf16 %v1572, %v1571
        %v1606 = vpack.c.bf16 %v1574, %v1573
        %1607 = vst [vmem:[#allocation3 + $0x38] sm:$0xff] %v1575
        %1608 = vst [vmem:[#allocation3 + $0x80] sm:$0xff] %v1576
        %1609 = vst [vmem:[#allocation3 + $0xc8] sm:$0xff] %v1577
        %1610 = vst [vmem:[#allocation3 + $0x110] sm:$0xff] %v1578
        %1611 = vst [vmem:[#allocation3 + $0x158] sm:$0xff] %v1579
        %1612 = vst [vmem:[#allocation3 + $0x1a0] sm:$0xff] %v1580
        %1613 = vst [vmem:[#allocation3 + $0x1e8] sm:$0xff] %v1581
        %1614 = vst [vmem:[#allocation3 + $0x230] sm:$0xff] %v1582
        %1615 = vst [vmem:[#allocation3 + $0x278] sm:$0xff] %v1583
        %1616 = vst [vmem:[#allocation3 + $0x2c0] sm:$0xff] %v1584
        %1617 = vst [vmem:[#allocation3 + $0x308] sm:$0xff] %v1585
        %1618 = vst [vmem:[#allocation3 + $0x350] sm:$0xff] %v1586
        %1619 = vst [vmem:[#allocation3 + $0x398] sm:$0xff] %v1587
        %1620 = vst [vmem:[#allocation3 + $0x3e0] sm:$0xff] %v1588
        %1621 = vst [vmem:[#allocation3 + $0x428] sm:$0xff] %v1589
        %1622 = vst [vmem:[#allocation3 + $0x470] sm:$0xff] %v1590
        %1623 = vst [vmem:[#allocation3 + $0x4b8] sm:$0xff] %v1591
        %1624 = vst [vmem:[#allocation3 + $0x500] sm:$0xff] %v1592
        %1625 = vst [vmem:[#allocation3 + $0x548] sm:$0xff] %v1593
        %1626 = vst [vmem:[#allocation3 + $0x590] sm:$0xff] %v1594
        %1627 = vst [vmem:[#allocation3 + $0x5d8] sm:$0xff] %v1595
        %1628 = vst [vmem:[#allocation3 + $0x620] sm:$0xff] %v1596
        %1629 = vst [vmem:[#allocation3 + $0x668] sm:$0xff] %v1597
        %1630 = vst [vmem:[#allocation3 + $0x6b0] sm:$0xff] %v1598
        %1631 = vst [vmem:[#allocation3 + $0x6f8] sm:$0xff] %v1599
        %1632 = vst [vmem:[#allocation3 + $0x740] sm:$0xff] %v1600
        %1633 = vst [vmem:[#allocation3 + $0x788] sm:$0xff] %v1601
        %1634 = vst [vmem:[#allocation3 + $0x7d0] sm:$0xff] %v1602
        %1635 = vst [vmem:[#allocation3 + $0x818] sm:$0xff] %v1603
        %1636 = vst [vmem:[#allocation3 + $0x860] sm:$0xff] %v1604
        %1637 = vst [vmem:[#allocation3 + $0x8a8] sm:$0xff] %v1605
        %1638 = vst [vmem:[#allocation3 + $0x8f0] sm:$0xff] %v1606
        %v1639 = vld [vmem:[%s1382 + $0x2] sm:$0xff]
        %v1640 = vld [vmem:[%s1382 + $0xa] sm:$0xff]
        %v1641 = vld [vmem:[%s1382 + $0x1a] sm:$0xff]
        %v1642 = vld [vmem:[%s1382 + $0x22] sm:$0xff]
        %v1643 = vld [vmem:[%s1382 + $0x32] sm:$0xff]
        %v1644 = vld [vmem:[%s1382 + $0x3a] sm:$0xff]
        %v1645 = vld [vmem:[%s1382 + $0x4a] sm:$0xff]
        %v1646 = vld [vmem:[%s1382 + $0x52] sm:$0xff]
        %v1647 = vld [vmem:[%s1382 + $0x62] sm:$0xff]
        %v1648 = vld [vmem:[%s1382 + $0x6a] sm:$0xff]
        %v1649 = vld [vmem:[%s1382 + $0x7a] sm:$0xff]
        %v1650 = vld [vmem:[%s1382 + $0x82] sm:$0xff]
        %v1651 = vld [vmem:[%s1382 + $0x92] sm:$0xff]
        %v1652 = vld [vmem:[%s1382 + $0x9a] sm:$0xff]
        %v1653 = vld [vmem:[%s1382 + $0xaa] sm:$0xff]
        %v1654 = vld [vmem:[%s1382 + $0xb2] sm:$0xff]
        %v1655 = vld [vmem:[%s1382 + $0xc2] sm:$0xff]
        %v1656 = vld [vmem:[%s1382 + $0xca] sm:$0xff]
        %v1657 = vld [vmem:[%s1382 + $0xda] sm:$0xff]
        %v1658 = vld [vmem:[%s1382 + $0xe2] sm:$0xff]
        %v1659 = vld [vmem:[%s1382 + $0xf2] sm:$0xff]
        %v1660 = vld [vmem:[%s1382 + $0xfa] sm:$0xff]
        %v1661 = vld [vmem:[%s1382 + $0x10a] sm:$0xff]
        %v1662 = vld [vmem:[%s1382 + $0x112] sm:$0xff]
        %v1663 = vld [vmem:[%s1382 + $0x122] sm:$0xff]
        %v1664 = vld [vmem:[%s1382 + $0x12a] sm:$0xff]
        %v1665 = vld [vmem:[%s1382 + $0x13a] sm:$0xff]
        %v1666 = vld [vmem:[%s1382 + $0x142] sm:$0xff]
        %v1667 = vld [vmem:[%s1382 + $0x152] sm:$0xff]
        %v1668 = vld [vmem:[%s1382 + $0x15a] sm:$0xff]
        %v1669 = vld [vmem:[%s1382 + $0x16a] sm:$0xff]
        %v1670 = vld [vmem:[%s1382 + $0x172] sm:$0xff]
        %v1671 = vld [vmem:[%s1382 + $0x1b2] sm:$0xff]
        %v1672 = vld [vmem:[%s1382 + $0x1ba] sm:$0xff]
        %v1673 = vld [vmem:[%s1382 + $0x1ca] sm:$0xff]
        %v1674 = vld [vmem:[%s1382 + $0x1d2] sm:$0xff]
        %v1675 = vld [vmem:[%s1382 + $0x1e2] sm:$0xff]
        %v1676 = vld [vmem:[%s1382 + $0x1ea] sm:$0xff]
        %v1677 = vld [vmem:[%s1382 + $0x1fa] sm:$0xff]
        %v1678 = vld [vmem:[%s1382 + $0x202] sm:$0xff]
        %v1679 = vld [vmem:[%s1382 + $0x212] sm:$0xff]
        %v1680 = vld [vmem:[%s1382 + $0x21a] sm:$0xff]
        %v1681 = vld [vmem:[%s1382 + $0x22a] sm:$0xff]
        %v1682 = vld [vmem:[%s1382 + $0x232] sm:$0xff]
        %v1683 = vld [vmem:[%s1382 + $0x242] sm:$0xff]
        %v1684 = vld [vmem:[%s1382 + $0x24a] sm:$0xff]
        %v1685 = vld [vmem:[%s1382 + $0x25a] sm:$0xff]
        %v1686 = vld [vmem:[%s1382 + $0x262] sm:$0xff]
        %v1687 = vld [vmem:[%s1382 + $0x272] sm:$0xff]
        %v1688 = vld [vmem:[%s1382 + $0x27a] sm:$0xff]
        %v1689 = vld [vmem:[%s1382 + $0x28a] sm:$0xff]
        %v1690 = vld [vmem:[%s1382 + $0x292] sm:$0xff]
        %v1691 = vld [vmem:[%s1382 + $0x2a2] sm:$0xff]
        %v1692 = vld [vmem:[%s1382 + $0x2aa] sm:$0xff]
        %v1693 = vld [vmem:[%s1382 + $0x2ba] sm:$0xff]
        %v1694 = vld [vmem:[%s1382 + $0x2c2] sm:$0xff]
        %v1695 = vld [vmem:[%s1382 + $0x2d2] sm:$0xff]
        %v1696 = vld [vmem:[%s1382 + $0x2da] sm:$0xff]
        %v1697 = vld [vmem:[%s1382 + $0x2ea] sm:$0xff]
        %v1698 = vld [vmem:[%s1382 + $0x2f2] sm:$0xff]
        %v1699 = vld [vmem:[%s1382 + $0x302] sm:$0xff]
        %v1700 = vld [vmem:[%s1382 + $0x30a] sm:$0xff]
        %v1701 = vld [vmem:[%s1382 + $0x31a] sm:$0xff]
        %v1702 = vld [vmem:[%s1382 + $0x322] sm:$0xff]
        %v1703 = vpack.c.bf16 %v1640, %v1639
        %v1704 = vpack.c.bf16 %v1642, %v1641
        %v1705 = vpack.c.bf16 %v1644, %v1643
        %v1706 = vpack.c.bf16 %v1646, %v1645
        %v1707 = vpack.c.bf16 %v1648, %v1647
        %v1708 = vpack.c.bf16 %v1650, %v1649
        %v1709 = vpack.c.bf16 %v1652, %v1651
        %v1710 = vpack.c.bf16 %v1654, %v1653
        %v1711 = vpack.c.bf16 %v1656, %v1655
        %v1712 = vpack.c.bf16 %v1658, %v1657
        %v1713 = vpack.c.bf16 %v1660, %v1659
        %v1714 = vpack.c.bf16 %v1662, %v1661
        %v1715 = vpack.c.bf16 %v1664, %v1663
        %v1716 = vpack.c.bf16 %v1666, %v1665
        %v1717 = vpack.c.bf16 %v1668, %v1667
        %v1718 = vpack.c.bf16 %v1670, %v1669
        %v1719 = vpack.c.bf16 %v1672, %v1671
        %v1720 = vpack.c.bf16 %v1674, %v1673
        %v1721 = vpack.c.bf16 %v1676, %v1675
        %v1722 = vpack.c.bf16 %v1678, %v1677
        %v1723 = vpack.c.bf16 %v1680, %v1679
        %v1724 = vpack.c.bf16 %v1682, %v1681
        %v1725 = vpack.c.bf16 %v1684, %v1683
        %v1726 = vpack.c.bf16 %v1686, %v1685
        %v1727 = vpack.c.bf16 %v1688, %v1687
        %v1728 = vpack.c.bf16 %v1690, %v1689
        %v1729 = vpack.c.bf16 %v1692, %v1691
        %v1730 = vpack.c.bf16 %v1694, %v1693
        %v1731 = vpack.c.bf16 %v1696, %v1695
        %v1732 = vpack.c.bf16 %v1698, %v1697
        %v1733 = vpack.c.bf16 %v1700, %v1699
        %v1734 = vpack.c.bf16 %v1702, %v1701
        %1735 = vst [vmem:[#allocation3 + $0x40] sm:$0xff] %v1703
        %1736 = vst [vmem:[#allocation3 + $0x88] sm:$0xff] %v1704
        %1737 = vst [vmem:[#allocation3 + $0xd0] sm:$0xff] %v1705
        %1738 = vst [vmem:[#allocation3 + $0x118] sm:$0xff] %v1706
        %1739 = vst [vmem:[#allocation3 + $0x160] sm:$0xff] %v1707
        %1740 = vst [vmem:[#allocation3 + $0x1a8] sm:$0xff] %v1708
        %1741 = vst [vmem:[#allocation3 + $0x1f0] sm:$0xff] %v1709
        %1742 = vst [vmem:[#allocation3 + $0x238] sm:$0xff] %v1710
        %1743 = vst [vmem:[#allocation3 + $0x280] sm:$0xff] %v1711
        %1744 = vst [vmem:[#allocation3 + $0x2c8] sm:$0xff] %v1712
        %1745 = vst [vmem:[#allocation3 + $0x310] sm:$0xff] %v1713
        %1746 = vst [vmem:[#allocation3 + $0x358] sm:$0xff] %v1714
        %1747 = vst [vmem:[#allocation3 + $0x3a0] sm:$0xff] %v1715
        %1748 = vst [vmem:[#allocation3 + $0x3e8] sm:$0xff] %v1716
        %1749 = vst [vmem:[#allocation3 + $0x430] sm:$0xff] %v1717
        %1750 = vst [vmem:[#allocation3 + $0x478] sm:$0xff] %v1718
        %1751 = vst [vmem:[#allocation3 + $0x4c0] sm:$0xff] %v1719
        %1752 = vst [vmem:[#allocation3 + $0x508] sm:$0xff] %v1720
        %1753 = vst [vmem:[#allocation3 + $0x550] sm:$0xff] %v1721
        %1754 = vst [vmem:[#allocation3 + $0x598] sm:$0xff] %v1722
        %1755 = vst [vmem:[#allocation3 + $0x5e0] sm:$0xff] %v1723
        %1756 = vst [vmem:[#allocation3 + $0x628] sm:$0xff] %v1724
        %1757 = vst [vmem:[#allocation3 + $0x670] sm:$0xff] %v1725
        %1758 = vst [vmem:[#allocation3 + $0x6b8] sm:$0xff] %v1726
        %1759 = vst [vmem:[#allocation3 + $0x700] sm:$0xff] %v1727
        %1760 = vst [vmem:[#allocation3 + $0x748] sm:$0xff] %v1728
        %1761 = vst [vmem:[#allocation3 + $0x790] sm:$0xff] %v1729
        %1762 = vst [vmem:[#allocation3 + $0x7d8] sm:$0xff] %v1730
        %1763 = vst [vmem:[#allocation3 + $0x820] sm:$0xff] %v1731
        %1764 = vst [vmem:[#allocation3 + $0x868] sm:$0xff] %v1732
        %1765 = vst [vmem:[#allocation3 + $0x8b0] sm:$0xff] %v1733
        %1766 = vst [vmem:[#allocation3 + $0x8f8] sm:$0xff] %v1734
        %v1767 = vld [vmem:[#allocation3] sm:$0xff]
        %v1768 = vld [vmem:[#allocation3 + $0x8] sm:$0xff]
        %v1769 = vld [vmem:[#allocation3 + $0x10] sm:$0xff]
        %v1770 = vld [vmem:[#allocation3 + $0x18] sm:$0xff]
        %v1771 = vld [vmem:[#allocation3 + $0x20] sm:$0xff]
        %v1772 = vld [vmem:[#allocation3 + $0x28] sm:$0xff]
        %v1773 = vld [vmem:[#allocation3 + $0x30] sm:$0xff]
        %v1774 = vld [vmem:[#allocation3 + $0x38] sm:$0xff]
        %v1775 = vld [vmem:[#allocation3 + $0x40] sm:$0xff]
        %v1776 = vld [vmem:[#allocation3 + $0x48] sm:$0xff]
        %v1777 = vld [vmem:[#allocation3 + $0x50] sm:$0xff]
        %v1778 = vld [vmem:[#allocation3 + $0x58] sm:$0xff]
        %v1779 = vld [vmem:[#allocation3 + $0x60] sm:$0xff]
        %v1780 = vld [vmem:[#allocation3 + $0x68] sm:$0xff]
        %v1781 = vld [vmem:[#allocation3 + $0x70] sm:$0xff]
        %v1782 = vld [vmem:[#allocation3 + $0x78] sm:$0xff]
        %v1783 = vld [vmem:[#allocation3 + $0x80] sm:$0xff]
        %v1784 = vld [vmem:[#allocation3 + $0x88] sm:$0xff]
        %v1785 = vld [vmem:[#allocation3 + $0x90] sm:$0xff]
        %v1786 = vld [vmem:[#allocation3 + $0x98] sm:$0xff]
        %v1787 = vld [vmem:[#allocation3 + $0xa0] sm:$0xff]
        %v1788 = vld [vmem:[#allocation3 + $0xa8] sm:$0xff]
        %v1789 = vld [vmem:[#allocation3 + $0xb0] sm:$0xff]
        %v1790 = vld [vmem:[#allocation3 + $0xb8] sm:$0xff]
        %v1791 = vld [vmem:[#allocation3 + $0xc0] sm:$0xff]
        %v1792 = vld [vmem:[#allocation3 + $0xc8] sm:$0xff]
        %v1793 = vld [vmem:[#allocation3 + $0xd0] sm:$0xff]
        %v1794 = vld [vmem:[#allocation3 + $0xd8] sm:$0xff]
        %v1795 = vld [vmem:[#allocation3 + $0xe0] sm:$0xff]
        %v1796 = vld [vmem:[#allocation3 + $0xe8] sm:$0xff]
        %v1797 = vld [vmem:[#allocation3 + $0xf0] sm:$0xff]
        %v1798 = vld [vmem:[#allocation3 + $0xf8] sm:$0xff]
        %v1799 = vld [vmem:[#allocation3 + $0x100] sm:$0xff]
        %v1800 = vld [vmem:[#allocation3 + $0x108] sm:$0xff]
        %v1801 = vld [vmem:[#allocation3 + $0x110] sm:$0xff]
        %v1802 = vld [vmem:[#allocation3 + $0x118] sm:$0xff]
        %v1803 = vld [vmem:[#allocation3 + $0x120] sm:$0xff]
        %v1804 = vld [vmem:[#allocation3 + $0x128] sm:$0xff]
        %v1805 = vld [vmem:[#allocation3 + $0x130] sm:$0xff]
        %v1806 = vld [vmem:[#allocation3 + $0x138] sm:$0xff]
        %v1807 = vld [vmem:[#allocation3 + $0x140] sm:$0xff]
        %v1808 = vld [vmem:[#allocation3 + $0x148] sm:$0xff]
        %v1809 = vld [vmem:[#allocation3 + $0x150] sm:$0xff]
        %v1810 = vld [vmem:[#allocation3 + $0x158] sm:$0xff]
        %v1811 = vld [vmem:[#allocation3 + $0x160] sm:$0xff]
        %v1812 = vld [vmem:[#allocation3 + $0x168] sm:$0xff]
        %v1813 = vld [vmem:[#allocation3 + $0x170] sm:$0xff]
        %v1814 = vld [vmem:[#allocation3 + $0x178] sm:$0xff]
        %v1815 = vld [vmem:[#allocation3 + $0x180] sm:$0xff]
        %v1816 = vld [vmem:[#allocation3 + $0x188] sm:$0xff]
        %v1817 = vld [vmem:[#allocation3 + $0x190] sm:$0xff]
        %v1818 = vld [vmem:[#allocation3 + $0x198] sm:$0xff]
        %v1819 = vld [vmem:[#allocation3 + $0x1a0] sm:$0xff]
        %v1820 = vld [vmem:[#allocation3 + $0x1a8] sm:$0xff]
        %v1821 = vld [vmem:[#allocation3 + $0x1b0] sm:$0xff]
        %v1822 = vld [vmem:[#allocation3 + $0x1b8] sm:$0xff]
        %v1823 = vld [vmem:[#allocation3 + $0x1c0] sm:$0xff]
        %v1824 = vld [vmem:[#allocation3 + $0x1c8] sm:$0xff]
        %v1825 = vld [vmem:[#allocation3 + $0x1d0] sm:$0xff]
        %v1826 = vld [vmem:[#allocation3 + $0x1d8] sm:$0xff]
        %v1827 = vld [vmem:[#allocation3 + $0x1e0] sm:$0xff]
        %v1828 = vld [vmem:[#allocation3 + $0x1e8] sm:$0xff]
        %v1829 = vld [vmem:[#allocation3 + $0x1f0] sm:$0xff]
        %v1830 = vld [vmem:[#allocation3 + $0x1f8] sm:$0xff]
        %v1831 = vld [vmem:[#allocation3 + $0x200] sm:$0xff]
        %v1832 = vld [vmem:[#allocation3 + $0x208] sm:$0xff]
        %v1833 = vld [vmem:[#allocation3 + $0x210] sm:$0xff]
        %v1834 = vld [vmem:[#allocation3 + $0x218] sm:$0xff]
        %v1835 = vld [vmem:[#allocation3 + $0x220] sm:$0xff]
        %v1836 = vld [vmem:[#allocation3 + $0x228] sm:$0xff]
        %v1837 = vld [vmem:[#allocation3 + $0x230] sm:$0xff]
        %v1838 = vld [vmem:[#allocation3 + $0x238] sm:$0xff]
        %v1839 = vld [vmem:[#allocation3 + $0x240] sm:$0xff]
        %v1840 = vld [vmem:[#allocation3 + $0x248] sm:$0xff]
        %v1841 = vld [vmem:[#allocation3 + $0x250] sm:$0xff]
        %v1842 = vld [vmem:[#allocation3 + $0x258] sm:$0xff]
        %v1843 = vld [vmem:[#allocation3 + $0x260] sm:$0xff]
        %v1844 = vld [vmem:[#allocation3 + $0x268] sm:$0xff]
        %v1845 = vld [vmem:[#allocation3 + $0x270] sm:$0xff]
        %v1846 = vld [vmem:[#allocation3 + $0x278] sm:$0xff]
        %v1847 = vld [vmem:[#allocation3 + $0x280] sm:$0xff]
        %v1848 = vld [vmem:[#allocation3 + $0x288] sm:$0xff]
        %v1849 = vld [vmem:[#allocation3 + $0x290] sm:$0xff]
        %v1850 = vld [vmem:[#allocation3 + $0x298] sm:$0xff]
        %v1851 = vld [vmem:[#allocation3 + $0x2a0] sm:$0xff]
        %v1852 = vld [vmem:[#allocation3 + $0x2a8] sm:$0xff]
        %v1853 = vld [vmem:[#allocation3 + $0x2b0] sm:$0xff]
        %v1854 = vld [vmem:[#allocation3 + $0x2b8] sm:$0xff]
        %v1855 = vld [vmem:[#allocation3 + $0x2c0] sm:$0xff]
        %v1856 = vld [vmem:[#allocation3 + $0x2c8] sm:$0xff]
        %v1857 = vld [vmem:[#allocation3 + $0x2d0] sm:$0xff]
        %v1858 = vld [vmem:[#allocation3 + $0x2d8] sm:$0xff]
        %v1859 = vld [vmem:[#allocation3 + $0x2e0] sm:$0xff]
        %v1860 = vld [vmem:[#allocation3 + $0x2e8] sm:$0xff]
        %v1861 = vld [vmem:[#allocation3 + $0x2f0] sm:$0xff]
        %v1862 = vld [vmem:[#allocation3 + $0x2f8] sm:$0xff]
        %v1863 = vld [vmem:[#allocation3 + $0x300] sm:$0xff]
        %v1864 = vld [vmem:[#allocation3 + $0x308] sm:$0xff]
        %v1865 = vld [vmem:[#allocation3 + $0x310] sm:$0xff]
        %v1866 = vld [vmem:[#allocation3 + $0x318] sm:$0xff]
        %v1867 = vld [vmem:[#allocation3 + $0x320] sm:$0xff]
        %v1868 = vld [vmem:[#allocation3 + $0x328] sm:$0xff]
        %v1869 = vld [vmem:[#allocation3 + $0x330] sm:$0xff]
        %v1870 = vld [vmem:[#allocation3 + $0x338] sm:$0xff]
        %v1871 = vld [vmem:[#allocation3 + $0x340] sm:$0xff]
        %v1872 = vld [vmem:[#allocation3 + $0x348] sm:$0xff]
        %v1873 = vld [vmem:[#allocation3 + $0x350] sm:$0xff]
        %v1874 = vld [vmem:[#allocation3 + $0x358] sm:$0xff]
        %v1875 = vld [vmem:[#allocation3 + $0x360] sm:$0xff]
        %v1876 = vld [vmem:[#allocation3 + $0x368] sm:$0xff]
        %v1877 = vld [vmem:[#allocation3 + $0x370] sm:$0xff]
        %v1878 = vld [vmem:[#allocation3 + $0x378] sm:$0xff]
        %v1879 = vld [vmem:[#allocation3 + $0x380] sm:$0xff]
        %v1880 = vld [vmem:[#allocation3 + $0x388] sm:$0xff]
        %v1881 = vld [vmem:[#allocation3 + $0x390] sm:$0xff]
        %v1882 = vld [vmem:[#allocation3 + $0x398] sm:$0xff]
        %v1883 = vld [vmem:[#allocation3 + $0x3a0] sm:$0xff]
        %v1884 = vld [vmem:[#allocation3 + $0x3a8] sm:$0xff]
        %v1885 = vld [vmem:[#allocation3 + $0x3b0] sm:$0xff]
        %v1886 = vld [vmem:[#allocation3 + $0x3b8] sm:$0xff]
        %v1887 = vld [vmem:[#allocation3 + $0x3c0] sm:$0xff]
        %v1888 = vld [vmem:[#allocation3 + $0x3c8] sm:$0xff]
        %v1889 = vld [vmem:[#allocation3 + $0x3d0] sm:$0xff]
        %v1890 = vld [vmem:[#allocation3 + $0x3d8] sm:$0xff]
        %v1891 = vld [vmem:[#allocation3 + $0x3e0] sm:$0xff]
        %v1892 = vld [vmem:[#allocation3 + $0x3e8] sm:$0xff]
        %v1893 = vld [vmem:[#allocation3 + $0x3f0] sm:$0xff]
        %v1894 = vld [vmem:[#allocation3 + $0x3f8] sm:$0xff]
        %v1895 = vld [vmem:[#allocation3 + $0x400] sm:$0xff]
        %v1896 = vld [vmem:[#allocation3 + $0x408] sm:$0xff]
        %v1897 = vld [vmem:[#allocation3 + $0x410] sm:$0xff]
        %v1898 = vld [vmem:[#allocation3 + $0x418] sm:$0xff]
        %v1899 = vld [vmem:[#allocation3 + $0x420] sm:$0xff]
        %v1900 = vld [vmem:[#allocation3 + $0x428] sm:$0xff]
        %v1901 = vld [vmem:[#allocation3 + $0x430] sm:$0xff]
        %v1902 = vld [vmem:[#allocation3 + $0x438] sm:$0xff]
        %v1903 = vld [vmem:[#allocation3 + $0x440] sm:$0xff]
        %v1904 = vld [vmem:[#allocation3 + $0x448] sm:$0xff]
        %v1905 = vld [vmem:[#allocation3 + $0x450] sm:$0xff]
        %v1906 = vld [vmem:[#allocation3 + $0x458] sm:$0xff]
        %v1907 = vld [vmem:[#allocation3 + $0x460] sm:$0xff]
        %v1908 = vld [vmem:[#allocation3 + $0x468] sm:$0xff]
        %v1909 = vld [vmem:[#allocation3 + $0x470] sm:$0xff]
        %v1910 = vld [vmem:[#allocation3 + $0x478] sm:$0xff]
        %v1911 = vld [vmem:[#allocation3 + $0x480] sm:$0xff]
        %v1912 = vld [vmem:[#allocation3 + $0x488] sm:$0xff]
        %v1913 = vld [vmem:[#allocation3 + $0x490] sm:$0xff]
        %v1914 = vld [vmem:[#allocation3 + $0x498] sm:$0xff]
        %v1915 = vld [vmem:[#allocation3 + $0x4a0] sm:$0xff]
        %v1916 = vld [vmem:[#allocation3 + $0x4a8] sm:$0xff]
        %v1917 = vld [vmem:[#allocation3 + $0x4b0] sm:$0xff]
        %v1918 = vld [vmem:[#allocation3 + $0x4b8] sm:$0xff]
        %v1919 = vld [vmem:[#allocation3 + $0x4c0] sm:$0xff]
        %v1920 = vld [vmem:[#allocation3 + $0x4c8] sm:$0xff]
        %v1921 = vld [vmem:[#allocation3 + $0x4d0] sm:$0xff]
        %v1922 = vld [vmem:[#allocation3 + $0x4d8] sm:$0xff]
        %v1923 = vld [vmem:[#allocation3 + $0x4e0] sm:$0xff]
        %v1924 = vld [vmem:[#allocation3 + $0x4e8] sm:$0xff]
        %v1925 = vld [vmem:[#allocation3 + $0x4f0] sm:$0xff]
        %v1926 = vld [vmem:[#allocation3 + $0x4f8] sm:$0xff]
        %v1927 = vld [vmem:[#allocation3 + $0x500] sm:$0xff]
        %v1928 = vld [vmem:[#allocation3 + $0x508] sm:$0xff]
        %v1929 = vld [vmem:[#allocation3 + $0x510] sm:$0xff]
        %v1930 = vld [vmem:[#allocation3 + $0x518] sm:$0xff]
        %v1931 = vld [vmem:[#allocation3 + $0x520] sm:$0xff]
        %v1932 = vld [vmem:[#allocation3 + $0x528] sm:$0xff]
        %v1933 = vld [vmem:[#allocation3 + $0x530] sm:$0xff]
        %v1934 = vld [vmem:[#allocation3 + $0x538] sm:$0xff]
        %v1935 = vld [vmem:[#allocation3 + $0x540] sm:$0xff]
        %v1936 = vld [vmem:[#allocation3 + $0x548] sm:$0xff]
        %v1937 = vld [vmem:[#allocation3 + $0x550] sm:$0xff]
        %v1938 = vld [vmem:[#allocation3 + $0x558] sm:$0xff]
        %v1939 = vld [vmem:[#allocation3 + $0x560] sm:$0xff]
        %v1940 = vld [vmem:[#allocation3 + $0x568] sm:$0xff]
        %v1941 = vld [vmem:[#allocation3 + $0x570] sm:$0xff]
        %v1942 = vld [vmem:[#allocation3 + $0x578] sm:$0xff]
        %v1943 = vld [vmem:[#allocation3 + $0x580] sm:$0xff]
        %v1944 = vld [vmem:[#allocation3 + $0x588] sm:$0xff]
        %v1945 = vld [vmem:[#allocation3 + $0x590] sm:$0xff]
        %v1946 = vld [vmem:[#allocation3 + $0x598] sm:$0xff]
        %v1947 = vld [vmem:[#allocation3 + $0x5a0] sm:$0xff]
        %v1948 = vld [vmem:[#allocation3 + $0x5a8] sm:$0xff]
        %v1949 = vld [vmem:[#allocation3 + $0x5b0] sm:$0xff]
        %v1950 = vld [vmem:[#allocation3 + $0x5b8] sm:$0xff]
        %v1951 = vld [vmem:[#allocation3 + $0x5c0] sm:$0xff]
        %v1952 = vld [vmem:[#allocation3 + $0x5c8] sm:$0xff]
        %v1953 = vld [vmem:[#allocation3 + $0x5d0] sm:$0xff]
        %v1954 = vld [vmem:[#allocation3 + $0x5d8] sm:$0xff]
        %v1955 = vld [vmem:[#allocation3 + $0x5e0] sm:$0xff]
        %v1956 = vld [vmem:[#allocation3 + $0x5e8] sm:$0xff]
        %v1957 = vld [vmem:[#allocation3 + $0x5f0] sm:$0xff]
        %v1958 = vld [vmem:[#allocation3 + $0x5f8] sm:$0xff]
        %v1959 = vld [vmem:[#allocation3 + $0x600] sm:$0xff]
        %v1960 = vld [vmem:[#allocation3 + $0x608] sm:$0xff]
        %v1961 = vld [vmem:[#allocation3 + $0x610] sm:$0xff]
        %v1962 = vld [vmem:[#allocation3 + $0x618] sm:$0xff]
        %v1963 = vld [vmem:[#allocation3 + $0x620] sm:$0xff]
        %v1964 = vld [vmem:[#allocation3 + $0x628] sm:$0xff]
        %v1965 = vld [vmem:[#allocation3 + $0x630] sm:$0xff]
        %v1966 = vld [vmem:[#allocation3 + $0x638] sm:$0xff]
        %v1967 = vld [vmem:[#allocation3 + $0x640] sm:$0xff]
        %v1968 = vld [vmem:[#allocation3 + $0x648] sm:$0xff]
        %v1969 = vld [vmem:[#allocation3 + $0x650] sm:$0xff]
        %v1970 = vld [vmem:[#allocation3 + $0x658] sm:$0xff]
        %v1971 = vld [vmem:[#allocation3 + $0x660] sm:$0xff]
        %v1972 = vld [vmem:[#allocation3 + $0x668] sm:$0xff]
        %v1973 = vld [vmem:[#allocation3 + $0x670] sm:$0xff]
        %v1974 = vld [vmem:[#allocation3 + $0x678] sm:$0xff]
        %v1975 = vld [vmem:[#allocation3 + $0x680] sm:$0xff]
        %v1976 = vld [vmem:[#allocation3 + $0x688] sm:$0xff]
        %v1977 = vld [vmem:[#allocation3 + $0x690] sm:$0xff]
        %v1978 = vld [vmem:[#allocation3 + $0x698] sm:$0xff]
        %v1979 = vld [vmem:[#allocation3 + $0x6a0] sm:$0xff]
        %v1980 = vld [vmem:[#allocation3 + $0x6a8] sm:$0xff]
        %v1981 = vld [vmem:[#allocation3 + $0x6b0] sm:$0xff]
        %v1982 = vld [vmem:[#allocation3 + $0x6b8] sm:$0xff]
        %v1983 = vld [vmem:[#allocation3 + $0x6c0] sm:$0xff]
        %v1984 = vld [vmem:[#allocation3 + $0x6c8] sm:$0xff]
        %v1985 = vld [vmem:[#allocation3 + $0x6d0] sm:$0xff]
        %v1986 = vld [vmem:[#allocation3 + $0x6d8] sm:$0xff]
        %v1987 = vld [vmem:[#allocation3 + $0x6e0] sm:$0xff]
        %v1988 = vld [vmem:[#allocation3 + $0x6e8] sm:$0xff]
        %v1989 = vld [vmem:[#allocation3 + $0x6f0] sm:$0xff]
        %v1990 = vld [vmem:[#allocation3 + $0x6f8] sm:$0xff]
        %v1991 = vld [vmem:[#allocation3 + $0x700] sm:$0xff]
        %v1992 = vld [vmem:[#allocation3 + $0x708] sm:$0xff]
        %v1993 = vld [vmem:[#allocation3 + $0x710] sm:$0xff]
        %v1994 = vld [vmem:[#allocation3 + $0x718] sm:$0xff]
        %v1995 = vld [vmem:[#allocation3 + $0x720] sm:$0xff]
        %v1996 = vld [vmem:[#allocation3 + $0x728] sm:$0xff]
        %v1997 = vld [vmem:[#allocation3 + $0x730] sm:$0xff]
        %v1998 = vld [vmem:[#allocation3 + $0x738] sm:$0xff]
        %v1999 = vld [vmem:[#allocation3 + $0x740] sm:$0xff]
        %v2000 = vld [vmem:[#allocation3 + $0x748] sm:$0xff]
        %v2001 = vld [vmem:[#allocation3 + $0x750] sm:$0xff]
        %v2002 = vld [vmem:[#allocation3 + $0x758] sm:$0xff]
        %v2003 = vld [vmem:[#allocation3 + $0x760] sm:$0xff]
        %v2004 = vld [vmem:[#allocation3 + $0x768] sm:$0xff]
        %v2005 = vld [vmem:[#allocation3 + $0x770] sm:$0xff]
        %v2006 = vld [vmem:[#allocation3 + $0x778] sm:$0xff]
        %v2007 = vld [vmem:[#allocation3 + $0x780] sm:$0xff]
        %v2008 = vld [vmem:[#allocation3 + $0x788] sm:$0xff]
        %v2009 = vld [vmem:[#allocation3 + $0x790] sm:$0xff]
        %v2010 = vld [vmem:[#allocation3 + $0x798] sm:$0xff]
        %v2011 = vld [vmem:[#allocation3 + $0x7a0] sm:$0xff]
        %v2012 = vld [vmem:[#allocation3 + $0x7a8] sm:$0xff]
        %v2013 = vld [vmem:[#allocation3 + $0x7b0] sm:$0xff]
        %v2014 = vld [vmem:[#allocation3 + $0x7b8] sm:$0xff]
        %v2015 = vld [vmem:[#allocation3 + $0x7c0] sm:$0xff]
        %v2016 = vld [vmem:[#allocation3 + $0x7c8] sm:$0xff]
        %v2017 = vld [vmem:[#allocation3 + $0x7d0] sm:$0xff]
        %v2018 = vld [vmem:[#allocation3 + $0x7d8] sm:$0xff]
        %v2019 = vld [vmem:[#allocation3 + $0x7e0] sm:$0xff]
        %v2020 = vld [vmem:[#allocation3 + $0x7e8] sm:$0xff]
        %v2021 = vld [vmem:[#allocation3 + $0x7f0] sm:$0xff]
        %v2022 = vld [vmem:[#allocation3 + $0x7f8] sm:$0xff]
        %v2023 = vld [vmem:[#allocation3 + $0x800] sm:$0xff]
        %v2024 = vld [vmem:[#allocation3 + $0x808] sm:$0xff]
        %v2025 = vld [vmem:[#allocation3 + $0x810] sm:$0xff]
        %v2026 = vld [vmem:[#allocation3 + $0x818] sm:$0xff]
        %v2027 = vld [vmem:[#allocation3 + $0x820] sm:$0xff]
        %v2028 = vld [vmem:[#allocation3 + $0x828] sm:$0xff]
        %v2029 = vld [vmem:[#allocation3 + $0x830] sm:$0xff]
        %v2030 = vld [vmem:[#allocation3 + $0x838] sm:$0xff]
        %v2031 = vld [vmem:[#allocation3 + $0x840] sm:$0xff]
        %v2032 = vld [vmem:[#allocation3 + $0x848] sm:$0xff]
        %v2033 = vld [vmem:[#allocation3 + $0x850] sm:$0xff]
        %v2034 = vld [vmem:[#allocation3 + $0x858] sm:$0xff]
        %v2035 = vld [vmem:[#allocation3 + $0x860] sm:$0xff]
        %v2036 = vld [vmem:[#allocation3 + $0x868] sm:$0xff]
        %v2037 = vld [vmem:[#allocation3 + $0x870] sm:$0xff]
        %v2038 = vld [vmem:[#allocation3 + $0x878] sm:$0xff]
        %v2039 = vld [vmem:[#allocation3 + $0x880] sm:$0xff]
        %v2040 = vld [vmem:[#allocation3 + $0x888] sm:$0xff]
        %v2041 = vld [vmem:[#allocation3 + $0x890] sm:$0xff]
        %v2042 = vld [vmem:[#allocation3 + $0x898] sm:$0xff]
        %v2043 = vld [vmem:[#allocation3 + $0x8a0] sm:$0xff]
        %v2044 = vld [vmem:[#allocation3 + $0x8a8] sm:$0xff]
        %v2045 = vld [vmem:[#allocation3 + $0x8b0] sm:$0xff]
        %v2046 = vld [vmem:[#allocation3 + $0x8b8] sm:$0xff]
        %v2047 = vld [vmem:[#allocation3 + $0x8c0] sm:$0xff]
        %v2048 = vld [vmem:[#allocation3 + $0x8c8] sm:$0xff]
        %v2049 = vld [vmem:[#allocation3 + $0x8d0] sm:$0xff]
        %v2050 = vld [vmem:[#allocation3 + $0x8d8] sm:$0xff]
        %v2051 = vld [vmem:[#allocation3 + $0x8e0] sm:$0xff]
        %v2052 = vld [vmem:[#allocation3 + $0x8e8] sm:$0xff]
        %v2053 = vld [vmem:[#allocation3 + $0x8f0] sm:$0xff]
        %v2054 = vld [vmem:[#allocation3 + $0x8f8] sm:$0xff]
        %v2055 = vld [vmem:[#allocation9] sm:$0xf]
        %v2056 = vld [vmem:[#allocation9 + $0x4] sm:$0xf]
        %v2057 = vld [vmem:[#allocation9 + $0x8] sm:$0xf]
        %v2058 = vld [vmem:[#allocation9 + $0xc] sm:$0xf]
        %v2059 = vld [vmem:[#allocation9 + $0x10] sm:$0xf]
        %v2060 = vld [vmem:[#allocation9 + $0x14] sm:$0xf]
        %v2061 = vld [vmem:[#allocation9 + $0x18] sm:$0xf]
        %v2062 = vld [vmem:[#allocation9 + $0x1c] sm:$0xf]
        %v2063 = vld [vmem:[#allocation9 + $0x20] sm:$0xf]
        %v2064 = vld [vmem:[#allocation9 + $0x24] sm:$0xf]
        %v2065 = vld [vmem:[#allocation9 + $0x28] sm:$0xf]
        %v2066 = vld [vmem:[#allocation9 + $0x2c] sm:$0xf]
        %v2067 = vld [vmem:[#allocation9 + $0x30] sm:$0xf]
        %v2068 = vld [vmem:[#allocation9 + $0x34] sm:$0xf]
        %v2069 = vld [vmem:[#allocation9 + $0x38] sm:$0xf]
        %v2070 = vld [vmem:[#allocation9 + $0x3c] sm:$0xf]
        %v2071 = vld [vmem:[#allocation9 + $0x40] sm:$0xf]
        %v2072 = vld [vmem:[#allocation9 + $0x44] sm:$0xf]
        %v2073 = vld [vmem:[#allocation9 + $0x48] sm:$0xf]
        %v2074 = vld [vmem:[#allocation9 + $0x4c] sm:$0xf]
        %v2075 = vld [vmem:[#allocation9 + $0x50] sm:$0xf]
        %v2076 = vld [vmem:[#allocation9 + $0x54] sm:$0xf]
        %v2077 = vld [vmem:[#allocation9 + $0x58] sm:$0xf]
        %v2078 = vld [vmem:[#allocation9 + $0x5c] sm:$0xf]
        %v2079 = vld [vmem:[#allocation9 + $0x60] sm:$0xf]
        %v2080 = vld [vmem:[#allocation9 + $0x64] sm:$0xf]
        %v2081 = vld [vmem:[#allocation9 + $0x68] sm:$0xf]
        %v2082 = vld [vmem:[#allocation9 + $0x6c] sm:$0xf]
        %v2083 = vld [vmem:[#allocation9 + $0x70] sm:$0xf]
        %v2084 = vld [vmem:[#allocation9 + $0x74] sm:$0xf]
        %v2085 = vld [vmem:[#allocation9 + $0x78] sm:$0xf]
        %v2086 = vld [vmem:[#allocation9 + $0x7c] sm:$0xf]
        %v2087 = vld [vmem:[#allocation9 + $0x80] sm:$0xf]
        %v2088 = vld [vmem:[#allocation9 + $0x84] sm:$0xf]
        %v2089 = vld [vmem:[#allocation9 + $0x88] sm:$0xf]
        %v2090 = vld [vmem:[#allocation9 + $0x8c] sm:$0xf]
        %v2091 = vld [vmem:[#allocation9 + $0x90] sm:$0xf]
        %v2092 = vld [vmem:[#allocation9 + $0x94] sm:$0xf]
        %v2093 = vld [vmem:[#allocation9 + $0x98] sm:$0xf]
        %v2094 = vld [vmem:[#allocation9 + $0x9c] sm:$0xf]
        %v2095 = vld [vmem:[#allocation9 + $0xa0] sm:$0xf]
        %v2096 = vld [vmem:[#allocation9 + $0xa4] sm:$0xf]
        %v2097 = vld [vmem:[#allocation9 + $0xa8] sm:$0xf]
        %v2098 = vld [vmem:[#allocation9 + $0xac] sm:$0xf]
        %v2099 = vld [vmem:[#allocation9 + $0xb0] sm:$0xf]
        %v2100 = vld [vmem:[#allocation9 + $0xb4] sm:$0xf]
        %v2101 = vld [vmem:[#allocation9 + $0xb8] sm:$0xf]
        %v2102 = vld [vmem:[#allocation9 + $0xbc] sm:$0xf]
        %v2103 = vld [vmem:[#allocation9 + $0xc0] sm:$0xf]
        %v2104 = vld [vmem:[#allocation9 + $0xc4] sm:$0xf]
        %v2105 = vld [vmem:[#allocation9 + $0xc8] sm:$0xf]
        %v2106 = vld [vmem:[#allocation9 + $0xcc] sm:$0xf]
        %v2107 = vld [vmem:[#allocation9 + $0xd0] sm:$0xf]
        %v2108 = vld [vmem:[#allocation9 + $0xd4] sm:$0xf]
        %v2109 = vld [vmem:[#allocation9 + $0xd8] sm:$0xf]
        %v2110 = vld [vmem:[#allocation9 + $0xdc] sm:$0xf]
        %v2111 = vld [vmem:[#allocation9 + $0xe0] sm:$0xf]
        %v2112 = vld [vmem:[#allocation9 + $0xe4] sm:$0xf]
        %v2113 = vld [vmem:[#allocation9 + $0xe8] sm:$0xf]
        %v2114 = vld [vmem:[#allocation9 + $0xec] sm:$0xf]
        %v2115 = vld [vmem:[#allocation9 + $0xf0] sm:$0xf]
        %v2116 = vld [vmem:[#allocation9 + $0xf4] sm:$0xf]
        %v2117 = vld [vmem:[#allocation9 + $0xf8] sm:$0xf]
        %v2118 = vld [vmem:[#allocation9 + $0xfc] sm:$0xf]
        %v2119 = vld [vmem:[#allocation9 + $0x100] sm:$0xf]
        %v2120 = vld [vmem:[#allocation9 + $0x104] sm:$0xf]
        %v2121 = vld [vmem:[#allocation9 + $0x108] sm:$0xf]
        %v2122 = vld [vmem:[#allocation9 + $0x10c] sm:$0xf]
        %v2123 = vld [vmem:[#allocation9 + $0x110] sm:$0xf]
        %v2124 = vld [vmem:[#allocation9 + $0x114] sm:$0xf]
        %v2125 = vld [vmem:[#allocation9 + $0x118] sm:$0xf]
        %v2126 = vld [vmem:[#allocation9 + $0x11c] sm:$0xf]
        %v2127 = vld [vmem:[#allocation9 + $0x120] sm:$0xf]
        %v2128 = vld [vmem:[#allocation9 + $0x124] sm:$0xf]
        %v2129 = vld [vmem:[#allocation9 + $0x128] sm:$0xf]
        %v2130 = vld [vmem:[#allocation9 + $0x12c] sm:$0xf]
        %v2131 = vld [vmem:[#allocation9 + $0x130] sm:$0xf]
        %v2132 = vld [vmem:[#allocation9 + $0x134] sm:$0xf]
        %v2133 = vld [vmem:[#allocation9 + $0x138] sm:$0xf]
        %v2134 = vld [vmem:[#allocation9 + $0x13c] sm:$0xf]
        %v2135 = vld [vmem:[#allocation9 + $0x140] sm:$0xf]
        %v2136 = vld [vmem:[#allocation9 + $0x144] sm:$0xf]
        %v2137 = vld [vmem:[#allocation9 + $0x148] sm:$0xf]
        %v2138 = vld [vmem:[#allocation9 + $0x14c] sm:$0xf]
        %v2139 = vld [vmem:[#allocation9 + $0x150] sm:$0xf]
        %v2140 = vld [vmem:[#allocation9 + $0x154] sm:$0xf]
        %v2141 = vld [vmem:[#allocation9 + $0x158] sm:$0xf]
        %v2142 = vld [vmem:[#allocation9 + $0x15c] sm:$0xf]
        %v2143 = vld [vmem:[#allocation9 + $0x160] sm:$0xf]
        %v2144 = vld [vmem:[#allocation9 + $0x164] sm:$0xf]
        %v2145 = vld [vmem:[#allocation9 + $0x168] sm:$0xf]
        %v2146 = vld [vmem:[#allocation9 + $0x16c] sm:$0xf]
        %v2147 = vld [vmem:[#allocation9 + $0x170] sm:$0xf]
        %v2148 = vld [vmem:[#allocation9 + $0x174] sm:$0xf]
        %v2149 = vld [vmem:[#allocation9 + $0x178] sm:$0xf]
        %v2150 = vld [vmem:[#allocation9 + $0x17c] sm:$0xf]
        %v2151 = vld [vmem:[#allocation9 + $0x180] sm:$0xf]
        %v2152 = vld [vmem:[#allocation9 + $0x184] sm:$0xf]
        %v2153 = vld [vmem:[#allocation9 + $0x188] sm:$0xf]
        %v2154 = vld [vmem:[#allocation9 + $0x18c] sm:$0xf]
        %v2155 = vld [vmem:[#allocation9 + $0x190] sm:$0xf]
        %v2156 = vld [vmem:[#allocation9 + $0x194] sm:$0xf]
        %v2157 = vld [vmem:[#allocation9 + $0x198] sm:$0xf]
        %v2158 = vld [vmem:[#allocation9 + $0x19c] sm:$0xf]
        %v2159 = vld [vmem:[#allocation9 + $0x1a0] sm:$0xf]
        %v2160 = vld [vmem:[#allocation9 + $0x1a4] sm:$0xf]
        %v2161 = vld [vmem:[#allocation9 + $0x1a8] sm:$0xf]
        %v2162 = vld [vmem:[#allocation9 + $0x1ac] sm:$0xf]
        %v2163 = vld [vmem:[#allocation9 + $0x1b0] sm:$0xf]
        %v2164 = vld [vmem:[#allocation9 + $0x1b4] sm:$0xf]
        %v2165 = vld [vmem:[#allocation9 + $0x1b8] sm:$0xf]
        %v2166 = vld [vmem:[#allocation9 + $0x1bc] sm:$0xf]
        %v2167 = vld [vmem:[#allocation9 + $0x1c0] sm:$0xf]
        %v2168 = vld [vmem:[#allocation9 + $0x1c4] sm:$0xf]
        %v2169 = vld [vmem:[#allocation9 + $0x1c8] sm:$0xf]
        %v2170 = vld [vmem:[#allocation9 + $0x1cc] sm:$0xf]
        %v2171 = vld [vmem:[#allocation9 + $0x1d0] sm:$0xf]
        %v2172 = vld [vmem:[#allocation9 + $0x1d4] sm:$0xf]
        %v2173 = vld [vmem:[#allocation9 + $0x1d8] sm:$0xf]
        %v2174 = vld [vmem:[#allocation9 + $0x1dc] sm:$0xf]
        %v2175 = vld [vmem:[#allocation9 + $0x1e0] sm:$0xf]
        %v2176 = vld [vmem:[#allocation9 + $0x1e4] sm:$0xf]
        %v2177 = vld [vmem:[#allocation9 + $0x1e8] sm:$0xf]
        %v2178 = vld [vmem:[#allocation9 + $0x1ec] sm:$0xf]
        %v2179 = vld [vmem:[#allocation9 + $0x1f0] sm:$0xf]
        %v2180 = vld [vmem:[#allocation9 + $0x1f4] sm:$0xf]
        %v2181 = vld [vmem:[#allocation9 + $0x1f8] sm:$0xf]
        %v2182 = vld [vmem:[#allocation9 + $0x1fc] sm:$0xf]
        %v2183 = vld [vmem:[#allocation9 + $0x200] sm:$0xf]
        %v2184 = vld [vmem:[#allocation9 + $0x204] sm:$0xf]
        %v2185 = vld [vmem:[#allocation9 + $0x208] sm:$0xf]
        %v2186 = vld [vmem:[#allocation9 + $0x20c] sm:$0xf]
        %v2187 = vld [vmem:[#allocation9 + $0x210] sm:$0xf]
        %v2188 = vld [vmem:[#allocation9 + $0x214] sm:$0xf]
        %v2189 = vld [vmem:[#allocation9 + $0x218] sm:$0xf]
        %v2190 = vld [vmem:[#allocation9 + $0x21c] sm:$0xf]
        %v2191 = vld [vmem:[#allocation9 + $0x220] sm:$0xf]
        %v2192 = vld [vmem:[#allocation9 + $0x224] sm:$0xf]
        %v2193 = vld [vmem:[#allocation9 + $0x228] sm:$0xf]
        %v2194 = vld [vmem:[#allocation9 + $0x22c] sm:$0xf]
        %v2195 = vld [vmem:[#allocation9 + $0x230] sm:$0xf]
        %v2196 = vld [vmem:[#allocation9 + $0x234] sm:$0xf]
        %v2197 = vld [vmem:[#allocation9 + $0x238] sm:$0xf]
        %v2198 = vld [vmem:[#allocation9 + $0x23c] sm:$0xf]
        %v2343 = vunpack.c.l.b16 %v2055
        %v2344 = vunpack.c.l.b16 %v2056
        %v2345 = vunpack.c.l.b16 %v2057
        %v2346 = vunpack.c.l.b16 %v2058
        %v2347 = vunpack.c.l.b16 %v2059
        %v2348 = vunpack.c.l.b16 %v2060
        %v2349 = vunpack.c.l.b16 %v2061
        %v2350 = vunpack.c.l.b16 %v2062
        %v2351 = vunpack.c.l.b16 %v2063
        %v2352 = vunpack.c.l.b16 %v2064
        %v2353 = vunpack.c.l.b16 %v2065
        %v2354 = vunpack.c.l.b16 %v2066
        %v2355 = vunpack.c.l.b16 %v2067
        %v2356 = vunpack.c.l.b16 %v2068
        %v2357 = vunpack.c.l.b16 %v2069
        %v2358 = vunpack.c.l.b16 %v2070
        %v2359 = vunpack.c.l.b16 %v2071
        %v2360 = vunpack.c.l.b16 %v2072
        %v2361 = vunpack.c.l.b16 %v2073
        %v2362 = vunpack.c.l.b16 %v2074
        %v2363 = vunpack.c.l.b16 %v2075
        %v2364 = vunpack.c.l.b16 %v2076
        %v2365 = vunpack.c.l.b16 %v2077
        %v2366 = vunpack.c.l.b16 %v2078
        %v2367 = vunpack.c.l.b16 %v2079
        %v2368 = vunpack.c.l.b16 %v2080
        %v2369 = vunpack.c.l.b16 %v2081
        %v2370 = vunpack.c.l.b16 %v2082
        %v2371 = vunpack.c.l.b16 %v2083
        %v2372 = vunpack.c.l.b16 %v2084
        %v2373 = vunpack.c.l.b16 %v2085
        %v2374 = vunpack.c.l.b16 %v2086
        %v2375 = vunpack.c.l.b16 %v2087
        %v2376 = vunpack.c.l.b16 %v2088
        %v2377 = vunpack.c.l.b16 %v2089
        %v2378 = vunpack.c.l.b16 %v2090
        %v2379 = vunpack.c.l.b16 %v2091
        %v2380 = vunpack.c.l.b16 %v2092
        %v2381 = vunpack.c.l.b16 %v2093
        %v2382 = vunpack.c.l.b16 %v2094
        %v2383 = vunpack.c.l.b16 %v2095
        %v2384 = vunpack.c.l.b16 %v2096
        %v2385 = vunpack.c.l.b16 %v2097
        %v2386 = vunpack.c.l.b16 %v2098
        %v2387 = vunpack.c.l.b16 %v2099
        %v2388 = vunpack.c.l.b16 %v2100
        %v2389 = vunpack.c.l.b16 %v2101
        %v2390 = vunpack.c.l.b16 %v2102
        %v2391 = vunpack.c.l.b16 %v2103
        %v2392 = vunpack.c.l.b16 %v2104
        %v2393 = vunpack.c.l.b16 %v2105
        %v2394 = vunpack.c.l.b16 %v2106
        %v2395 = vunpack.c.l.b16 %v2107
        %v2396 = vunpack.c.l.b16 %v2108
        %v2397 = vunpack.c.l.b16 %v2109
        %v2398 = vunpack.c.l.b16 %v2110
        %v2399 = vunpack.c.l.b16 %v2111
        %v2400 = vunpack.c.l.b16 %v2112
        %v2401 = vunpack.c.l.b16 %v2113
        %v2402 = vunpack.c.l.b16 %v2114
        %v2403 = vunpack.c.l.b16 %v2115
        %v2404 = vunpack.c.l.b16 %v2116
        %v2405 = vunpack.c.l.b16 %v2117
        %v2406 = vunpack.c.l.b16 %v2118
        %v2407 = vunpack.c.l.b16 %v2119
        %v2408 = vunpack.c.l.b16 %v2120
        %v2409 = vunpack.c.l.b16 %v2121
        %v2410 = vunpack.c.l.b16 %v2122
        %v2411 = vunpack.c.l.b16 %v2123
        %v2412 = vunpack.c.l.b16 %v2124
        %v2413 = vunpack.c.l.b16 %v2125
        %v2414 = vunpack.c.l.b16 %v2126
        %v2415 = vunpack.c.l.b16 %v2127
        %v2416 = vunpack.c.l.b16 %v2128
        %v2417 = vunpack.c.l.b16 %v2129
        %v2418 = vunpack.c.l.b16 %v2130
        %v2419 = vunpack.c.l.b16 %v2131
        %v2420 = vunpack.c.l.b16 %v2132
        %v2421 = vunpack.c.l.b16 %v2133
        %v2422 = vunpack.c.l.b16 %v2134
        %v2423 = vunpack.c.l.b16 %v2135
        %v2424 = vunpack.c.l.b16 %v2136
        %v2425 = vunpack.c.l.b16 %v2137
        %v2426 = vunpack.c.l.b16 %v2138
        %v2427 = vunpack.c.l.b16 %v2139
        %v2428 = vunpack.c.l.b16 %v2140
        %v2429 = vunpack.c.l.b16 %v2141
        %v2430 = vunpack.c.l.b16 %v2142
        %v2431 = vunpack.c.l.b16 %v2143
        %v2432 = vunpack.c.l.b16 %v2144
        %v2433 = vunpack.c.l.b16 %v2145
        %v2434 = vunpack.c.l.b16 %v2146
        %v2435 = vunpack.c.l.b16 %v2147
        %v2436 = vunpack.c.l.b16 %v2148
        %v2437 = vunpack.c.l.b16 %v2149
        %v2438 = vunpack.c.l.b16 %v2150
        %v2439 = vunpack.c.l.b16 %v2151
        %v2440 = vunpack.c.l.b16 %v2152
        %v2441 = vunpack.c.l.b16 %v2153
        %v2442 = vunpack.c.l.b16 %v2154
        %v2443 = vunpack.c.l.b16 %v2155
        %v2444 = vunpack.c.l.b16 %v2156
        %v2445 = vunpack.c.l.b16 %v2157
        %v2446 = vunpack.c.l.b16 %v2158
        %v2447 = vunpack.c.l.b16 %v2159
        %v2448 = vunpack.c.l.b16 %v2160
        %v2449 = vunpack.c.l.b16 %v2161
        %v2450 = vunpack.c.l.b16 %v2162
        %v2451 = vunpack.c.l.b16 %v2163
        %v2452 = vunpack.c.l.b16 %v2164
        %v2453 = vunpack.c.l.b16 %v2165
        %v2454 = vunpack.c.l.b16 %v2166
        %v2455 = vunpack.c.l.b16 %v2167
        %v2456 = vunpack.c.l.b16 %v2168
        %v2457 = vunpack.c.l.b16 %v2169
        %v2458 = vunpack.c.l.b16 %v2170
        %v2459 = vunpack.c.l.b16 %v2171
        %v2460 = vunpack.c.l.b16 %v2172
        %v2461 = vunpack.c.l.b16 %v2173
        %v2462 = vunpack.c.l.b16 %v2174
        %v2463 = vunpack.c.l.b16 %v2175
        %v2464 = vunpack.c.l.b16 %v2176
        %v2465 = vunpack.c.l.b16 %v2177
        %v2466 = vunpack.c.l.b16 %v2178
        %v2467 = vunpack.c.l.b16 %v2179
        %v2468 = vunpack.c.l.b16 %v2180
        %v2469 = vunpack.c.l.b16 %v2181
        %v2470 = vunpack.c.l.b16 %v2182
        %v2471 = vunpack.c.l.b16 %v2183
        %v2472 = vunpack.c.l.b16 %v2184
        %v2473 = vunpack.c.l.b16 %v2185
        %v2474 = vunpack.c.l.b16 %v2186
        %v2475 = vunpack.c.l.b16 %v2187
        %v2476 = vunpack.c.l.b16 %v2188
        %v2477 = vunpack.c.l.b16 %v2189
        %v2478 = vunpack.c.l.b16 %v2190
        %v2479 = vunpack.c.l.b16 %v2191
        %v2480 = vunpack.c.l.b16 %v2192
        %v2481 = vunpack.c.l.b16 %v2193
        %v2482 = vunpack.c.l.b16 %v2194
        %v2483 = vunpack.c.l.b16 %v2195
        %v2484 = vunpack.c.l.b16 %v2196
        %v2485 = vunpack.c.l.b16 %v2197
        %v2486 = vunpack.c.l.b16 %v2198
        %v2487 = vpack.c.b16 %v2344, %v2343
        %v2488 = vpack.c.b16 %v2346, %v2345
        %v2489 = vpack.c.b16 %v2348, %v2347
        %v2490 = vpack.c.b16 %v2350, %v2349
        %v2491 = vpack.c.b16 %v2352, %v2351
        %v2492 = vpack.c.b16 %v2354, %v2353
        %v2493 = vpack.c.b16 %v2356, %v2355
        %v2494 = vpack.c.b16 %v2358, %v2357
        %v2495 = vpack.c.b16 %v2360, %v2359
        %v2496 = vpack.c.b16 %v2362, %v2361
        %v2497 = vpack.c.b16 %v2364, %v2363
        %v2498 = vpack.c.b16 %v2366, %v2365
        %v2499 = vpack.c.b16 %v2368, %v2367
        %v2500 = vpack.c.b16 %v2370, %v2369
        %v2501 = vpack.c.b16 %v2372, %v2371
        %v2502 = vpack.c.b16 %v2374, %v2373
        %v2503 = vpack.c.b16 %v2376, %v2375
        %v2504 = vpack.c.b16 %v2378, %v2377
        %v2505 = vpack.c.b16 %v2380, %v2379
        %v2506 = vpack.c.b16 %v2382, %v2381
        %v2507 = vpack.c.b16 %v2384, %v2383
        %v2508 = vpack.c.b16 %v2386, %v2385
        %v2509 = vpack.c.b16 %v2388, %v2387
        %v2510 = vpack.c.b16 %v2390, %v2389
        %v2511 = vpack.c.b16 %v2392, %v2391
        %v2512 = vpack.c.b16 %v2394, %v2393
        %v2513 = vpack.c.b16 %v2396, %v2395
        %v2514 = vpack.c.b16 %v2398, %v2397
        %v2515 = vpack.c.b16 %v2400, %v2399
        %v2516 = vpack.c.b16 %v2402, %v2401
        %v2517 = vpack.c.b16 %v2404, %v2403
        %v2518 = vpack.c.b16 %v2406, %v2405
        %v2519 = vpack.c.b16 %v2408, %v2407
        %v2520 = vpack.c.b16 %v2410, %v2409
        %v2521 = vpack.c.b16 %v2412, %v2411
        %v2522 = vpack.c.b16 %v2414, %v2413
        %v2523 = vpack.c.b16 %v2416, %v2415
        %v2524 = vpack.c.b16 %v2418, %v2417
        %v2525 = vpack.c.b16 %v2420, %v2419
        %v2526 = vpack.c.b16 %v2422, %v2421
        %v2527 = vpack.c.b16 %v2424, %v2423
        %v2528 = vpack.c.b16 %v2426, %v2425
        %v2529 = vpack.c.b16 %v2428, %v2427
        %v2530 = vpack.c.b16 %v2430, %v2429
        %v2531 = vpack.c.b16 %v2432, %v2431
        %v2532 = vpack.c.b16 %v2434, %v2433
        %v2533 = vpack.c.b16 %v2436, %v2435
        %v2534 = vpack.c.b16 %v2438, %v2437
        %v2535 = vpack.c.b16 %v2440, %v2439
        %v2536 = vpack.c.b16 %v2442, %v2441
        %v2537 = vpack.c.b16 %v2444, %v2443
        %v2538 = vpack.c.b16 %v2446, %v2445
        %v2539 = vpack.c.b16 %v2448, %v2447
        %v2540 = vpack.c.b16 %v2450, %v2449
        %v2541 = vpack.c.b16 %v2452, %v2451
        %v2542 = vpack.c.b16 %v2454, %v2453
        %v2543 = vpack.c.b16 %v2456, %v2455
        %v2544 = vpack.c.b16 %v2458, %v2457
        %v2545 = vpack.c.b16 %v2460, %v2459
        %v2546 = vpack.c.b16 %v2462, %v2461
        %v2547 = vpack.c.b16 %v2464, %v2463
        %v2548 = vpack.c.b16 %v2466, %v2465
        %v2549 = vpack.c.b16 %v2468, %v2467
        %v2550 = vpack.c.b16 %v2470, %v2469
        %v2551 = vpack.c.b16 %v2472, %v2471
        %v2552 = vpack.c.b16 %v2474, %v2473
        %v2553 = vpack.c.b16 %v2476, %v2475
        %v2554 = vpack.c.b16 %v2478, %v2477
        %v2555 = vpack.c.b16 %v2480, %v2479
        %v2556 = vpack.c.b16 %v2482, %v2481
        %v2557 = vpack.c.b16 %v2484, %v2483
        %v2558 = vpack.c.b16 %v2486, %v2485
        %2631 = vmatprep.subr.bf16.mxu0 0
        %2632 = vmatpush1.bf16.msra.mxu0 %v2487
        %2633 = vmatprep.subr.bf16.mxu0 0
        %2634 = vmatpush1.bf16.msra.mxu0 %v2488
        %2635 = vmatprep.subr.bf16.mxu0 0
        %2636 = vmatpush1.bf16.msra.mxu0 %v2489
        %2637 = vmatprep.subr.bf16.mxu0 0
        %2638 = vmatpush1.bf16.msra.mxu0 %v2490
        %2639 = vmatprep.subr.bf16.mxu0 0
        %2640 = vmatpush1.bf16.msra.mxu0 %v2491
        %2641 = vmatprep.subr.bf16.mxu0 0
        %2642 = vmatpush1.bf16.msra.mxu0 %v2492
        %2643 = vmatprep.subr.bf16.mxu0 0
        %2644 = vmatpush1.bf16.msra.mxu0 %v2493
        %2645 = vmatprep.subr.bf16.mxu0 0
        %2646 = vmatpush1.bf16.msra.mxu0 %v2494
        %2647 = vmatprep.subr.bf16.mxu0 0
        %2648 = vmatpush1.bf16.msra.mxu0 %v2495
        %2649 = vmatprep.subr.bf16.mxu0 0
        %2650 = vmatpush1.bf16.msra.mxu0 %v2496
        %2651 = vmatprep.subr.bf16.mxu0 0
        %2652 = vmatpush1.bf16.msra.mxu0 %v2497
        %2653 = vmatprep.subr.bf16.mxu0 0
        %2654 = vmatpush1.bf16.msra.mxu0 %v2498
        %2655 = vmatprep.subr.bf16.mxu0 0
        %2656 = vmatpush1.bf16.msra.mxu0 %v2499
        %2657 = vmatprep.subr.bf16.mxu0 0
        %2658 = vmatpush1.bf16.msra.mxu0 %v2500
        %2659 = vmatprep.subr.bf16.mxu0 0
        %2660 = vmatpush1.bf16.msra.mxu0 %v2501
        %2661 = vmatprep.subr.bf16.mxu0 0
        %2662 = vmatpush1.bf16.msra.mxu0 %v2502
        %2663 = vmatprep.mubr.bf16.mxu0 %v1768
        %2664 = vmatmul.mubr.bf16.gmra.mrb[0].mxu0 %v1767
        %v2665 = vpop.f32.mrb[0].mxu0
        %v2666 = vadd.f32 0.0, %v2665
        %v2667 = vpop.f32.mrb[0].mxu0
        %v2668 = vpop.f32.mrb[0].mxu0
        %v2669 = vadd.f32 0.0, %v2668
        %v2670 = vpop.f32.mrb[0].mxu0
        %2671 = vmatprep.mubr.bf16.mxu0 %v1777
        %2672 = vmatmul.mubr.bf16.gmra.mrb[0].mxu0 %v1776
        %v2673 = vpop.f32.mrb[0].mxu0
        %v2674 = vadd.f32 0.0, %v2673
        %v2675 = vpop.f32.mrb[0].mxu0
        %v2676 = vpop.f32.mrb[0].mxu0
        %v2677 = vadd.f32 0.0, %v2676
        %v2678 = vpop.f32.mrb[0].mxu0
        %2679 = vmatprep.mubr.bf16.mxu0 %v1786
        %2680 = vmatmul.mubr.bf16.gmra.mrb[0].mxu0 %v1785
        %v2681 = vpop.f32.mrb[0].mxu0
        %v2682 = vadd.f32 0.0, %v2681
        %v2683 = vpop.f32.mrb[0].mxu0
        %v2684 = vpop.f32.mrb[0].mxu0
        %v2685 = vadd.f32 0.0, %v2684
        %v2686 = vpop.f32.mrb[0].mxu0
        %2687 = vmatprep.mubr.bf16.mxu0 %v1795
        %2688 = vmatmul.mubr.bf16.gmra.mrb[0].mxu0 %v1794
        %v2689 = vpop.f32.mrb[0].mxu0
        %v2690 = vadd.f32 0.0, %v2689
        %v2691 = vpop.f32.mrb[0].mxu0
        %v2692 = vpop.f32.mrb[0].mxu0
        %v2693 = vadd.f32 0.0, %v2692
        %v2694 = vpop.f32.mrb[0].mxu0
        %2695 = vmatprep.mubr.bf16.mxu0 %v1804
        %2696 = vmatmul.mubr.bf16.gmra.mrb[0].mxu0 %v1803
        %v2697 = vpop.f32.mrb[0].mxu0
        %v2698 = vadd.f32 0.0, %v2697
        %v2699 = vpop.f32.mrb[0].mxu0
        %v2700 = vpop.f32.mrb[0].mxu0
        %v2701 = vadd.f32 0.0, %v2700
        %v2702 = vpop.f32.mrb[0].mxu0
        %2703 = vmatprep.mubr.bf16.mxu0 %v1813
        %2704 = vmatmul.mubr.bf16.gmra.mrb[0].mxu0 %v1812
        %v2705 = vpop.f32.mrb[0].mxu0
        %v2706 = vadd.f32 0.0, %v2705
        %v2707 = vpop.f32.mrb[0].mxu0
        %v2708 = vpop.f32.mrb[0].mxu0
        %v2709 = vadd.f32 0.0, %v2708
        %v2710 = vpop.f32.mrb[0].mxu0
        %2711 = vmatprep.mubr.bf16.mxu0 %v1822
        %2712 = vmatmul.mubr.bf16.gmra.mrb[0].mxu0 %v1821
        %v2713 = vpop.f32.mrb[0].mxu0
        %v2714 = vadd.f32 0.0, %v2713
        %v2715 = vpop.f32.mrb[0].mxu0
        %v2716 = vpop.f32.mrb[0].mxu0
        %v2717 = vadd.f32 0.0, %v2716
        %v2718 = vpop.f32.mrb[0].mxu0
        %2719 = vmatprep.mubr.bf16.mxu0 %v1831
        %2720 = vmatmul.mubr.bf16.gmra.mrb[0].mxu0 %v1830
        %v2721 = vpop.f32.mrb[0].mxu0
        %v2722 = vadd.f32 0.0, %v2721
        %v2723 = vpop.f32.mrb[0].mxu0
        %v2724 = vpop.f32.mrb[0].mxu0
        %v2725 = vadd.f32 0.0, %v2724
        %v2726 = vpop.f32.mrb[0].mxu0
        %2727 = vmatprep.mubr.bf16.mxu0 %v1840
        %2728 = vmatmul.mubr.bf16.gmra.mrb[0].mxu0 %v1839
        %v2729 = vpop.f32.mrb[0].mxu0
        %v2730 = vadd.f32 0.0, %v2729
        %v2731 = vpop.f32.mrb[0].mxu0
        %v2732 = vpop.f32.mrb[0].mxu0
        %v2733 = vadd.f32 0.0, %v2732
        %v2734 = vpop.f32.mrb[0].mxu0
        %2735 = vmatprep.mubr.bf16.mxu0 %v1849
        %2736 = vmatmul.mubr.bf16.gmra.mrb[0].mxu0 %v1848
        %v2737 = vpop.f32.mrb[0].mxu0
        %v2738 = vadd.f32 0.0, %v2737
        %v2739 = vpop.f32.mrb[0].mxu0
        %v2740 = vpop.f32.mrb[0].mxu0
        %v2741 = vadd.f32 0.0, %v2740
        %v2742 = vpop.f32.mrb[0].mxu0
        %2743 = vmatprep.mubr.bf16.mxu0 %v1858
        %2744 = vmatmul.mubr.bf16.gmra.mrb[0].mxu0 %v1857
        %v2745 = vpop.f32.mrb[0].mxu0
        %v2746 = vadd.f32 0.0, %v2745
        %v2747 = vpop.f32.mrb[0].mxu0
        %v2748 = vpop.f32.mrb[0].mxu0
        %v2749 = vadd.f32 0.0, %v2748
        %v2750 = vpop.f32.mrb[0].mxu0
        %2751 = vmatprep.mubr.bf16.mxu0 %v1867
        %2752 = vmatmul.mubr.bf16.gmra.mrb[0].mxu0 %v1866
        %v2753 = vpop.f32.mrb[0].mxu0
        %v2754 = vadd.f32 0.0, %v2753
        %v2755 = vpop.f32.mrb[0].mxu0
        %v2756 = vpop.f32.mrb[0].mxu0
        %v2757 = vadd.f32 0.0, %v2756
        %v2758 = vpop.f32.mrb[0].mxu0
        %2759 = vmatprep.mubr.bf16.mxu0 %v1876
        %2760 = vmatmul.mubr.bf16.gmra.mrb[0].mxu0 %v1875
        %v2761 = vpop.f32.mrb[0].mxu0
        %v2762 = vadd.f32 0.0, %v2761
        %v2763 = vpop.f32.mrb[0].mxu0
        %v2764 = vpop.f32.mrb[0].mxu0
        %v2765 = vadd.f32 0.0, %v2764
        %v2766 = vpop.f32.mrb[0].mxu0
        %2767 = vmatprep.mubr.bf16.mxu0 %v1885
        %2768 = vmatmul.mubr.bf16.gmra.mrb[0].mxu0 %v1884
        %v2769 = vpop.f32.mrb[0].mxu0
        %v2770 = vadd.f32 0.0, %v2769
        %v2771 = vpop.f32.mrb[0].mxu0
        %v2772 = vpop.f32.mrb[0].mxu0
        %v2773 = vadd.f32 0.0, %v2772
        %v2774 = vpop.f32.mrb[0].mxu0
        %2775 = vmatprep.mubr.bf16.mxu0 %v1894
        %2776 = vmatmul.mubr.bf16.gmra.mrb[0].mxu0 %v1893
        %v2777 = vpop.f32.mrb[0].mxu0
        %v2778 = vadd.f32 0.0, %v2777
        %v2779 = vpop.f32.mrb[0].mxu0
        %v2780 = vpop.f32.mrb[0].mxu0
        %v2781 = vadd.f32 0.0, %v2780
        %v2782 = vpop.f32.mrb[0].mxu0
        %2783 = vmatprep.mubr.bf16.mxu0 %v1903
        %2784 = vmatmul.mubr.bf16.gmra.mrb[0].mxu0 %v1902
        %v2785 = vpop.f32.mrb[0].mxu0
        %v2786 = vadd.f32 0.0, %v2785
        %v2787 = vpop.f32.mrb[0].mxu0
        %v2788 = vpop.f32.mrb[0].mxu0
        %v2789 = vadd.f32 0.0, %v2788
        %v2790 = vpop.f32.mrb[0].mxu0
        %2791 = vmatprep.mubr.bf16.mxu0 %v1912
        %2792 = vmatmul.mubr.bf16.gmra.mrb[0].mxu0 %v1911
        %v2793 = vpop.f32.mrb[0].mxu0
        %v2794 = vadd.f32 0.0, %v2793
        %v2795 = vpop.f32.mrb[0].mxu0
        %v2796 = vpop.f32.mrb[0].mxu0
        %v2797 = vadd.f32 0.0, %v2796
        %v2798 = vpop.f32.mrb[0].mxu0
        %2799 = vmatprep.mubr.bf16.mxu0 %v1921
        %2800 = vmatmul.mubr.bf16.gmra.mrb[0].mxu0 %v1920
        %v2801 = vpop.f32.mrb[0].mxu0
        %v2802 = vadd.f32 0.0, %v2801
        %v2803 = vpop.f32.mrb[0].mxu0
        %v2804 = vpop.f32.mrb[0].mxu0
        %v2805 = vadd.f32 0.0, %v2804
        %v2806 = vpop.f32.mrb[0].mxu0
        %2807 = vmatprep.mubr.bf16.mxu0 %v1930
        %2808 = vmatmul.mubr.bf16.gmra.mrb[0].mxu0 %v1929
        %v2809 = vpop.f32.mrb[0].mxu0
        %v2810 = vadd.f32 0.0, %v2809
        %v2811 = vpop.f32.mrb[0].mxu0
        %v2812 = vpop.f32.mrb[0].mxu0
        %v2813 = vadd.f32 0.0, %v2812
        %v2814 = vpop.f32.mrb[0].mxu0
        %2815 = vmatprep.mubr.bf16.mxu0 %v1939
        %2816 = vmatmul.mubr.bf16.gmra.mrb[0].mxu0 %v1938
        %v2817 = vpop.f32.mrb[0].mxu0
        %v2818 = vadd.f32 0.0, %v2817
        %v2819 = vpop.f32.mrb[0].mxu0
        %v2820 = vpop.f32.mrb[0].mxu0
        %v2821 = vadd.f32 0.0, %v2820
        %v2822 = vpop.f32.mrb[0].mxu0
        %2823 = vmatprep.mubr.bf16.mxu0 %v1948
        %2824 = vmatmul.mubr.bf16.gmra.mrb[0].mxu0 %v1947
        %v2825 = vpop.f32.mrb[0].mxu0
        %v2826 = vadd.f32 0.0, %v2825
        %v2827 = vpop.f32.mrb[0].mxu0
        %v2828 = vpop.f32.mrb[0].mxu0
        %v2829 = vadd.f32 0.0, %v2828
        %v2830 = vpop.f32.mrb[0].mxu0
        %2831 = vmatprep.mubr.bf16.mxu0 %v1957
        %2832 = vmatmul.mubr.bf16.gmra.mrb[0].mxu0 %v1956
        %v2833 = vpop.f32.mrb[0].mxu0
        %v2834 = vadd.f32 0.0, %v2833
        %v2835 = vpop.f32.mrb[0].mxu0
        %v2836 = vpop.f32.mrb[0].mxu0
        %v2837 = vadd.f32 0.0, %v2836
        %v2838 = vpop.f32.mrb[0].mxu0
        %2839 = vmatprep.mubr.bf16.mxu0 %v1966
        %2840 = vmatmul.mubr.bf16.gmra.mrb[0].mxu0 %v1965
        %v2841 = vpop.f32.mrb[0].mxu0
        %v2842 = vadd.f32 0.0, %v2841
        %v2843 = vpop.f32.mrb[0].mxu0
        %v2844 = vpop.f32.mrb[0].mxu0
        %v2845 = vadd.f32 0.0, %v2844
        %v2846 = vpop.f32.mrb[0].mxu0
        %2847 = vmatprep.mubr.bf16.mxu0 %v1975
        %2848 = vmatmul.mubr.bf16.gmra.mrb[0].mxu0 %v1974
        %v2849 = vpop.f32.mrb[0].mxu0
        %v2850 = vadd.f32 0.0, %v2849
        %v2851 = vpop.f32.mrb[0].mxu0
        %v2852 = vpop.f32.mrb[0].mxu0
        %v2853 = vadd.f32 0.0, %v2852
        %v2854 = vpop.f32.mrb[0].mxu0
        %2855 = vmatprep.mubr.bf16.mxu0 %v1984
        %2856 = vmatmul.mubr.bf16.gmra.mrb[0].mxu0 %v1983
        %v2857 = vpop.f32.mrb[0].mxu0
        %v2858 = vadd.f32 0.0, %v2857
        %v2859 = vpop.f32.mrb[0].mxu0
        %v2860 = vpop.f32.mrb[0].mxu0
        %v2861 = vadd.f32 0.0, %v2860
        %v2862 = vpop.f32.mrb[0].mxu0
        %2863 = vmatprep.mubr.bf16.mxu0 %v1993
        %2864 = vmatmul.mubr.bf16.gmra.mrb[0].mxu0 %v1992
        %v2865 = vpop.f32.mrb[0].mxu0
        %v2866 = vadd.f32 0.0, %v2865
        %v2867 = vpop.f32.mrb[0].mxu0
        %v2868 = vpop.f32.mrb[0].mxu0
        %v2869 = vadd.f32 0.0, %v2868
        %v2870 = vpop.f32.mrb[0].mxu0
        %2871 = vmatprep.mubr.bf16.mxu0 %v2002
        %2872 = vmatmul.mubr.bf16.gmra.mrb[0].mxu0 %v2001
        %v2873 = vpop.f32.mrb[0].mxu0
        %v2874 = vadd.f32 0.0, %v2873
        %v2875 = vpop.f32.mrb[0].mxu0
        %v2876 = vpop.f32.mrb[0].mxu0
        %v2877 = vadd.f32 0.0, %v2876
        %v2878 = vpop.f32.mrb[0].mxu0
        %2879 = vmatprep.mubr.bf16.mxu0 %v2011
        %2880 = vmatmul.mubr.bf16.gmra.mrb[0].mxu0 %v2010
        %v2881 = vpop.f32.mrb[0].mxu0
        %v2882 = vadd.f32 0.0, %v2881
        %v2883 = vpop.f32.mrb[0].mxu0
        %v2884 = vpop.f32.mrb[0].mxu0
        %v2885 = vadd.f32 0.0, %v2884
        %v2886 = vpop.f32.mrb[0].mxu0
        %2887 = vmatprep.mubr.bf16.mxu0 %v2020
        %2888 = vmatmul.mubr.bf16.gmra.mrb[0].mxu0 %v2019
        %v2889 = vpop.f32.mrb[0].mxu0
        %v2890 = vadd.f32 0.0, %v2889
        %v2891 = vpop.f32.mrb[0].mxu0
        %v2892 = vpop.f32.mrb[0].mxu0
        %v2893 = vadd.f32 0.0, %v2892
        %v2894 = vpop.f32.mrb[0].mxu0
        %2895 = vmatprep.mubr.bf16.mxu0 %v2029
        %2896 = vmatmul.mubr.bf16.gmra.mrb[0].mxu0 %v2028
        %v2897 = vpop.f32.mrb[0].mxu0
        %v2898 = vadd.f32 0.0, %v2897
        %v2899 = vpop.f32.mrb[0].mxu0
        %v2900 = vpop.f32.mrb[0].mxu0
        %v2901 = vadd.f32 0.0, %v2900
        %v2902 = vpop.f32.mrb[0].mxu0
        %2903 = vmatprep.mubr.bf16.mxu0 %v2038
        %2904 = vmatmul.mubr.bf16.gmra.mrb[0].mxu0 %v2037
        %v2905 = vpop.f32.mrb[0].mxu0
        %v2906 = vadd.f32 0.0, %v2905
        %v2907 = vpop.f32.mrb[0].mxu0
        %v2908 = vpop.f32.mrb[0].mxu0
        %v2909 = vadd.f32 0.0, %v2908
        %v2910 = vpop.f32.mrb[0].mxu0
        %2911 = vmatprep.mubr.bf16.mxu0 %v2047
        %2912 = vmatmul.mubr.bf16.gmra.mrb[0].mxu0 %v2046
        %v2913 = vpop.f32.mrb[0].mxu0
        %v2914 = vadd.f32 0.0, %v2913
        %v2915 = vpop.f32.mrb[0].mxu0
        %v2916 = vpop.f32.mrb[0].mxu0
        %v2917 = vadd.f32 0.0, %v2916
        %v2918 = vpop.f32.mrb[0].mxu0
        %2919 = vdwg.mxu0
        %2920 = vmatprep.subr.bf16.mxu0 0
        %2921 = vmatpush1.bf16.msra.mxu0 %v2503
        %2922 = vmatprep.subr.bf16.mxu0 0
        %2923 = vmatpush1.bf16.msra.mxu0 %v2504
        %2924 = vmatprep.subr.bf16.mxu0 0
        %2925 = vmatpush1.bf16.msra.mxu0 %v2505
        %2926 = vmatprep.subr.bf16.mxu0 0
        %2927 = vmatpush1.bf16.msra.mxu0 %v2506
        %2928 = vmatprep.subr.bf16.mxu0 0
        %2929 = vmatpush1.bf16.msra.mxu0 %v2507
        %2930 = vmatprep.subr.bf16.mxu0 0
        %2931 = vmatpush1.bf16.msra.mxu0 %v2508
        %2932 = vmatprep.subr.bf16.mxu0 0
        %2933 = vmatpush1.bf16.msra.mxu0 %v2509
        %2934 = vmatprep.subr.bf16.mxu0 0
        %2935 = vmatpush1.bf16.msra.mxu0 %v2510
        %2936 = vmatprep.subr.bf16.mxu0 0
        %2937 = vmatpush1.bf16.msra.mxu0 %v2511
        %2938 = vmatprep.subr.bf16.mxu0 0
        %2939 = vmatpush1.bf16.msra.mxu0 %v2512
        %2940 = vmatprep.subr.bf16.mxu0 0
        %2941 = vmatpush1.bf16.msra.mxu0 %v2513
        %2942 = vmatprep.subr.bf16.mxu0 0
        %2943 = vmatpush1.bf16.msra.mxu0 %v2514
        %2944 = vmatprep.subr.bf16.mxu0 0
        %2945 = vmatpush1.bf16.msra.mxu0 %v2515
        %2946 = vmatprep.subr.bf16.mxu0 0
        %2947 = vmatpush1.bf16.msra.mxu0 %v2516
        %2948 = vmatprep.subr.bf16.mxu0 0
        %2949 = vmatpush1.bf16.msra.mxu0 %v2517
        %2950 = vmatprep.subr.bf16.mxu0 0
        %2951 = vmatpush1.bf16.msra.mxu0 %v2518
        %2952 = vmatprep.mubr.bf16.mxu0 %v1770
        %2953 = vmatmul.mubr.bf16.gmra.mrb[0].mxu0 %v1769
        %v2954 = vpop.f32.mrb[0].mxu0
        %v2955 = vadd.f32 %v2666, %v2954
        %v2956 = vpop.f32.mrb[0].mxu0
        %v2957 = vpop.f32.mrb[0].mxu0
        %v2958 = vadd.f32 %v2669, %v2957
        %v2959 = vpop.f32.mrb[0].mxu0
        %2960 = vmatprep.mubr.bf16.mxu0 %v1779
        %2961 = vmatmul.mubr.bf16.gmra.mrb[0].mxu0 %v1778
        %v2962 = vpop.f32.mrb[0].mxu0
        %v2963 = vadd.f32 %v2674, %v2962
        %v2964 = vpop.f32.mrb[0].mxu0
        %v2965 = vpop.f32.mrb[0].mxu0
        %v2966 = vadd.f32 %v2677, %v2965
        %v2967 = vpop.f32.mrb[0].mxu0
        %2968 = vmatprep.mubr.bf16.mxu0 %v1788
        %2969 = vmatmul.mubr.bf16.gmra.mrb[0].mxu0 %v1787
        %v2970 = vpop.f32.mrb[0].mxu0
        %v2971 = vadd.f32 %v2682, %v2970
        %v2972 = vpop.f32.mrb[0].mxu0
        %v2973 = vpop.f32.mrb[0].mxu0
        %v2974 = vadd.f32 %v2685, %v2973
        %v2975 = vpop.f32.mrb[0].mxu0
        %2976 = vmatprep.mubr.bf16.mxu0 %v1797
        %2977 = vmatmul.mubr.bf16.gmra.mrb[0].mxu0 %v1796
        %v2978 = vpop.f32.mrb[0].mxu0
        %v2979 = vadd.f32 %v2690, %v2978
        %v2980 = vpop.f32.mrb[0].mxu0
        %v2981 = vpop.f32.mrb[0].mxu0
        %v2982 = vadd.f32 %v2693, %v2981
        %v2983 = vpop.f32.mrb[0].mxu0
        %2984 = vmatprep.mubr.bf16.mxu0 %v1806
        %2985 = vmatmul.mubr.bf16.gmra.mrb[0].mxu0 %v1805
        %v2986 = vpop.f32.mrb[0].mxu0
        %v2987 = vadd.f32 %v2698, %v2986
        %v2988 = vpop.f32.mrb[0].mxu0
        %v2989 = vpop.f32.mrb[0].mxu0
        %v2990 = vadd.f32 %v2701, %v2989
        %v2991 = vpop.f32.mrb[0].mxu0
        %2992 = vmatprep.mubr.bf16.mxu0 %v1815
        %2993 = vmatmul.mubr.bf16.gmra.mrb[0].mxu0 %v1814
        %v2994 = vpop.f32.mrb[0].mxu0
        %v2995 = vadd.f32 %v2706, %v2994
        %v2996 = vpop.f32.mrb[0].mxu0
        %v2997 = vpop.f32.mrb[0].mxu0
        %v2998 = vadd.f32 %v2709, %v2997
        %v2999 = vpop.f32.mrb[0].mxu0
        %3000 = vmatprep.mubr.bf16.mxu0 %v1824
        %3001 = vmatmul.mubr.bf16.gmra.mrb[0].mxu0 %v1823
        %v3002 = vpop.f32.mrb[0].mxu0
        %v3003 = vadd.f32 %v2714, %v3002
        %v3004 = vpop.f32.mrb[0].mxu0
        %v3005 = vpop.f32.mrb[0].mxu0
        %v3006 = vadd.f32 %v2717, %v3005
        %v3007 = vpop.f32.mrb[0].mxu0
        %3008 = vmatprep.mubr.bf16.mxu0 %v1833
        %3009 = vmatmul.mubr.bf16.gmra.mrb[0].mxu0 %v1832
        %v3010 = vpop.f32.mrb[0].mxu0
        %v3011 = vadd.f32 %v2722, %v3010
        %v3012 = vpop.f32.mrb[0].mxu0
        %v3013 = vpop.f32.mrb[0].mxu0
        %v3014 = vadd.f32 %v2725, %v3013
        %v3015 = vpop.f32.mrb[0].mxu0
        %3016 = vmatprep.mubr.bf16.mxu0 %v1842
        %3017 = vmatmul.mubr.bf16.gmra.mrb[0].mxu0 %v1841
        %v3018 = vpop.f32.mrb[0].mxu0
        %v3019 = vadd.f32 %v2730, %v3018
        %v3020 = vpop.f32.mrb[0].mxu0
        %v3021 = vpop.f32.mrb[0].mxu0
        %v3022 = vadd.f32 %v2733, %v3021
        %v3023 = vpop.f32.mrb[0].mxu0
        %3024 = vmatprep.mubr.bf16.mxu0 %v1851
        %3025 = vmatmul.mubr.bf16.gmra.mrb[0].mxu0 %v1850
        %v3026 = vpop.f32.mrb[0].mxu0
        %v3027 = vadd.f32 %v2738, %v3026
        %v3028 = vpop.f32.mrb[0].mxu0
        %v3029 = vpop.f32.mrb[0].mxu0
        %v3030 = vadd.f32 %v2741, %v3029
        %v3031 = vpop.f32.mrb[0].mxu0
        %3032 = vmatprep.mubr.bf16.mxu0 %v1860
        %3033 = vmatmul.mubr.bf16.gmra.mrb[0].mxu0 %v1859
        %v3034 = vpop.f32.mrb[0].mxu0
        %v3035 = vadd.f32 %v2746, %v3034
        %v3036 = vpop.f32.mrb[0].mxu0
        %v3037 = vpop.f32.mrb[0].mxu0
        %v3038 = vadd.f32 %v2749, %v3037
        %v3039 = vpop.f32.mrb[0].mxu0
        %3040 = vmatprep.mubr.bf16.mxu0 %v1869
        %3041 = vmatmul.mubr.bf16.gmra.mrb[0].mxu0 %v1868
        %v3042 = vpop.f32.mrb[0].mxu0
        %v3043 = vadd.f32 %v2754, %v3042
        %v3044 = vpop.f32.mrb[0].mxu0
        %v3045 = vpop.f32.mrb[0].mxu0
        %v3046 = vadd.f32 %v2757, %v3045
        %v3047 = vpop.f32.mrb[0].mxu0
        %3048 = vmatprep.mubr.bf16.mxu0 %v1878
        %3049 = vmatmul.mubr.bf16.gmra.mrb[0].mxu0 %v1877
        %v3050 = vpop.f32.mrb[0].mxu0
        %v3051 = vadd.f32 %v2762, %v3050
        %v3052 = vpop.f32.mrb[0].mxu0
        %v3053 = vpop.f32.mrb[0].mxu0
        %v3054 = vadd.f32 %v2765, %v3053
        %v3055 = vpop.f32.mrb[0].mxu0
        %3056 = vmatprep.mubr.bf16.mxu0 %v1887
        %3057 = vmatmul.mubr.bf16.gmra.mrb[0].mxu0 %v1886
        %v3058 = vpop.f32.mrb[0].mxu0
        %v3059 = vadd.f32 %v2770, %v3058
        %v3060 = vpop.f32.mrb[0].mxu0
        %v3061 = vpop.f32.mrb[0].mxu0
        %v3062 = vadd.f32 %v2773, %v3061
        %v3063 = vpop.f32.mrb[0].mxu0
        %3064 = vmatprep.mubr.bf16.mxu0 %v1896
        %3065 = vmatmul.mubr.bf16.gmra.mrb[0].mxu0 %v1895
        %v3066 = vpop.f32.mrb[0].mxu0
        %v3067 = vadd.f32 %v2778, %v3066
        %v3068 = vpop.f32.mrb[0].mxu0
        %v3069 = vpop.f32.mrb[0].mxu0
        %v3070 = vadd.f32 %v2781, %v3069
        %v3071 = vpop.f32.mrb[0].mxu0
        %3072 = vmatprep.mubr.bf16.mxu0 %v1905
        %3073 = vmatmul.mubr.bf16.gmra.mrb[0].mxu0 %v1904
        %v3074 = vpop.f32.mrb[0].mxu0
        %v3075 = vadd.f32 %v2786, %v3074
        %v3076 = vpop.f32.mrb[0].mxu0
        %v3077 = vpop.f32.mrb[0].mxu0
        %v3078 = vadd.f32 %v2789, %v3077
        %v3079 = vpop.f32.mrb[0].mxu0
        %3080 = vmatprep.mubr.bf16.mxu0 %v1914
        %3081 = vmatmul.mubr.bf16.gmra.mrb[0].mxu0 %v1913
        %v3082 = vpop.f32.mrb[0].mxu0
        %v3083 = vadd.f32 %v2794, %v3082
        %v3084 = vpop.f32.mrb[0].mxu0
        %v3085 = vpop.f32.mrb[0].mxu0
        %v3086 = vadd.f32 %v2797, %v3085
        %v3087 = vpop.f32.mrb[0].mxu0
        %3088 = vmatprep.mubr.bf16.mxu0 %v1923
        %3089 = vmatmul.mubr.bf16.gmra.mrb[0].mxu0 %v1922
        %v3090 = vpop.f32.mrb[0].mxu0
        %v3091 = vadd.f32 %v2802, %v3090
        %v3092 = vpop.f32.mrb[0].mxu0
        %v3093 = vpop.f32.mrb[0].mxu0
        %v3094 = vadd.f32 %v2805, %v3093
        %v3095 = vpop.f32.mrb[0].mxu0
        %3096 = vmatprep.mubr.bf16.mxu0 %v1932
        %3097 = vmatmul.mubr.bf16.gmra.mrb[0].mxu0 %v1931
        %v3098 = vpop.f32.mrb[0].mxu0
        %v3099 = vadd.f32 %v2810, %v3098
        %v3100 = vpop.f32.mrb[0].mxu0
        %v3101 = vpop.f32.mrb[0].mxu0
        %v3102 = vadd.f32 %v2813, %v3101
        %v3103 = vpop.f32.mrb[0].mxu0
        %3104 = vmatprep.mubr.bf16.mxu0 %v1941
        %3105 = vmatmul.mubr.bf16.gmra.mrb[0].mxu0 %v1940
        %v3106 = vpop.f32.mrb[0].mxu0
        %v3107 = vadd.f32 %v2818, %v3106
        %v3108 = vpop.f32.mrb[0].mxu0
        %v3109 = vpop.f32.mrb[0].mxu0
        %v3110 = vadd.f32 %v2821, %v3109
        %v3111 = vpop.f32.mrb[0].mxu0
        %3112 = vmatprep.mubr.bf16.mxu0 %v1950
        %3113 = vmatmul.mubr.bf16.gmra.mrb[0].mxu0 %v1949
        %v3114 = vpop.f32.mrb[0].mxu0
        %v3115 = vadd.f32 %v2826, %v3114
        %v3116 = vpop.f32.mrb[0].mxu0
        %v3117 = vpop.f32.mrb[0].mxu0
        %v3118 = vadd.f32 %v2829, %v3117
        %v3119 = vpop.f32.mrb[0].mxu0
        %3120 = vmatprep.mubr.bf16.mxu0 %v1959
        %3121 = vmatmul.mubr.bf16.gmra.mrb[0].mxu0 %v1958
        %v3122 = vpop.f32.mrb[0].mxu0
        %v3123 = vadd.f32 %v2834, %v3122
        %v3124 = vpop.f32.mrb[0].mxu0
        %v3125 = vpop.f32.mrb[0].mxu0
        %v3126 = vadd.f32 %v2837, %v3125
        %v3127 = vpop.f32.mrb[0].mxu0
        %3128 = vmatprep.mubr.bf16.mxu0 %v1968
        %3129 = vmatmul.mubr.bf16.gmra.mrb[0].mxu0 %v1967
        %v3130 = vpop.f32.mrb[0].mxu0
        %v3131 = vadd.f32 %v2842, %v3130
        %v3132 = vpop.f32.mrb[0].mxu0
        %v3133 = vpop.f32.mrb[0].mxu0
        %v3134 = vadd.f32 %v2845, %v3133
        %v3135 = vpop.f32.mrb[0].mxu0
        %3136 = vmatprep.mubr.bf16.mxu0 %v1977
        %3137 = vmatmul.mubr.bf16.gmra.mrb[0].mxu0 %v1976
        %v3138 = vpop.f32.mrb[0].mxu0
        %v3139 = vadd.f32 %v2850, %v3138
        %v3140 = vpop.f32.mrb[0].mxu0
        %v3141 = vpop.f32.mrb[0].mxu0
        %v3142 = vadd.f32 %v2853, %v3141
        %v3143 = vpop.f32.mrb[0].mxu0
        %3144 = vmatprep.mubr.bf16.mxu0 %v1986
        %3145 = vmatmul.mubr.bf16.gmra.mrb[0].mxu0 %v1985
        %v3146 = vpop.f32.mrb[0].mxu0
        %v3147 = vadd.f32 %v2858, %v3146
        %v3148 = vpop.f32.mrb[0].mxu0
        %v3149 = vpop.f32.mrb[0].mxu0
        %v3150 = vadd.f32 %v2861, %v3149
        %v3151 = vpop.f32.mrb[0].mxu0
        %3152 = vmatprep.mubr.bf16.mxu0 %v1995
        %3153 = vmatmul.mubr.bf16.gmra.mrb[0].mxu0 %v1994
        %v3154 = vpop.f32.mrb[0].mxu0
        %v3155 = vadd.f32 %v2866, %v3154
        %v3156 = vpop.f32.mrb[0].mxu0
        %v3157 = vpop.f32.mrb[0].mxu0
        %v3158 = vadd.f32 %v2869, %v3157
        %v3159 = vpop.f32.mrb[0].mxu0
        %3160 = vmatprep.mubr.bf16.mxu0 %v2004
        %3161 = vmatmul.mubr.bf16.gmra.mrb[0].mxu0 %v2003
        %v3162 = vpop.f32.mrb[0].mxu0
        %v3163 = vadd.f32 %v2874, %v3162
        %v3164 = vpop.f32.mrb[0].mxu0
        %v3165 = vpop.f32.mrb[0].mxu0
        %v3166 = vadd.f32 %v2877, %v3165
        %v3167 = vpop.f32.mrb[0].mxu0
        %3168 = vmatprep.mubr.bf16.mxu0 %v2013
        %3169 = vmatmul.mubr.bf16.gmra.mrb[0].mxu0 %v2012
        %v3170 = vpop.f32.mrb[0].mxu0
        %v3171 = vadd.f32 %v2882, %v3170
        %v3172 = vpop.f32.mrb[0].mxu0
        %v3173 = vpop.f32.mrb[0].mxu0
        %v3174 = vadd.f32 %v2885, %v3173
        %v3175 = vpop.f32.mrb[0].mxu0
        %3176 = vmatprep.mubr.bf16.mxu0 %v2022
        %3177 = vmatmul.mubr.bf16.gmra.mrb[0].mxu0 %v2021
        %v3178 = vpop.f32.mrb[0].mxu0
        %v3179 = vadd.f32 %v2890, %v3178
        %v3180 = vpop.f32.mrb[0].mxu0
        %v3181 = vpop.f32.mrb[0].mxu0
        %v3182 = vadd.f32 %v2893, %v3181
        %v3183 = vpop.f32.mrb[0].mxu0
        %3184 = vmatprep.mubr.bf16.mxu0 %v2031
        %3185 = vmatmul.mubr.bf16.gmra.mrb[0].mxu0 %v2030
        %v3186 = vpop.f32.mrb[0].mxu0
        %v3187 = vadd.f32 %v2898, %v3186
        %v3188 = vpop.f32.mrb[0].mxu0
        %v3189 = vpop.f32.mrb[0].mxu0
        %v3190 = vadd.f32 %v2901, %v3189
        %v3191 = vpop.f32.mrb[0].mxu0
        %3192 = vmatprep.mubr.bf16.mxu0 %v2040
        %3193 = vmatmul.mubr.bf16.gmra.mrb[0].mxu0 %v2039
        %v3194 = vpop.f32.mrb[0].mxu0
        %v3195 = vadd.f32 %v2906, %v3194
        %v3196 = vpop.f32.mrb[0].mxu0
        %v3197 = vpop.f32.mrb[0].mxu0
        %v3198 = vadd.f32 %v2909, %v3197
        %v3199 = vpop.f32.mrb[0].mxu0
        %3200 = vmatprep.mubr.bf16.mxu0 %v2049
        %3201 = vmatmul.mubr.bf16.gmra.mrb[0].mxu0 %v2048
        %v3202 = vpop.f32.mrb[0].mxu0
        %v3203 = vadd.f32 %v2914, %v3202
        %v3204 = vpop.f32.mrb[0].mxu0
        %v3205 = vpop.f32.mrb[0].mxu0
        %v3206 = vadd.f32 %v2917, %v3205
        %v3207 = vpop.f32.mrb[0].mxu0
        %3208 = vdwg.mxu0
        %3209 = vmatprep.subr.bf16.mxu0 0
        %3210 = vmatpush1.bf16.msra.mxu0 %v2519
        %3211 = vmatprep.subr.bf16.mxu0 0
        %3212 = vmatpush1.bf16.msra.mxu0 %v2520
        %3213 = vmatprep.subr.bf16.mxu0 0
        %3214 = vmatpush1.bf16.msra.mxu0 %v2521
        %3215 = vmatprep.subr.bf16.mxu0 0
        %3216 = vmatpush1.bf16.msra.mxu0 %v2522
        %3217 = vmatprep.subr.bf16.mxu0 0
        %3218 = vmatpush1.bf16.msra.mxu0 %v2523
        %3219 = vmatprep.subr.bf16.mxu0 0
        %3220 = vmatpush1.bf16.msra.mxu0 %v2524
        %3221 = vmatprep.subr.bf16.mxu0 0
        %3222 = vmatpush1.bf16.msra.mxu0 %v2525
        %3223 = vmatprep.subr.bf16.mxu0 0
        %3224 = vmatpush1.bf16.msra.mxu0 %v2526
        %3225 = vmatprep.subr.bf16.mxu0 0
        %3226 = vmatpush1.bf16.msra.mxu0 %v2527
        %3227 = vmatprep.subr.bf16.mxu0 0
        %3228 = vmatpush1.bf16.msra.mxu0 %v2528
        %3229 = vmatprep.subr.bf16.mxu0 0
        %3230 = vmatpush1.bf16.msra.mxu0 %v2529
        %3231 = vmatprep.subr.bf16.mxu0 0
        %3232 = vmatpush1.bf16.msra.mxu0 %v2530
        %3233 = vmatprep.subr.bf16.mxu0 0
        %3234 = vmatpush1.bf16.msra.mxu0 %v2531
        %3235 = vmatprep.subr.bf16.mxu0 0
        %3236 = vmatpush1.bf16.msra.mxu0 %v2532
        %3237 = vmatprep.subr.bf16.mxu0 0
        %3238 = vmatpush1.bf16.msra.mxu0 %v2533
        %3239 = vmatprep.subr.bf16.mxu0 0
        %3240 = vmatpush1.bf16.msra.mxu0 %v2534
        %3241 = vmatprep.mubr.bf16.mxu0 %v1772
        %3242 = vmatmul.mubr.bf16.gmra.mrb[0].mxu0 %v1771
        %v3243 = vpop.f32.mrb[0].mxu0
        %v3244 = vadd.f32 %v2955, %v3243
        %v3245 = vpop.f32.mrb[0].mxu0
        %v3246 = vpop.f32.mrb[0].mxu0
        %v3247 = vadd.f32 %v2958, %v3246
        %v3248 = vpop.f32.mrb[0].mxu0
        %3249 = vmatprep.mubr.bf16.mxu0 %v1781
        %3250 = vmatmul.mubr.bf16.gmra.mrb[0].mxu0 %v1780
        %v3251 = vpop.f32.mrb[0].mxu0
        %v3252 = vadd.f32 %v2963, %v3251
        %v3253 = vpop.f32.mrb[0].mxu0
        %v3254 = vpop.f32.mrb[0].mxu0
        %v3255 = vadd.f32 %v2966, %v3254
        %v3256 = vpop.f32.mrb[0].mxu0
        %3257 = vmatprep.mubr.bf16.mxu0 %v1790
        %3258 = vmatmul.mubr.bf16.gmra.mrb[0].mxu0 %v1789
        %v3259 = vpop.f32.mrb[0].mxu0
        %v3260 = vadd.f32 %v2971, %v3259
        %v3261 = vpop.f32.mrb[0].mxu0
        %v3262 = vpop.f32.mrb[0].mxu0
        %v3263 = vadd.f32 %v2974, %v3262
        %v3264 = vpop.f32.mrb[0].mxu0
        %3265 = vmatprep.mubr.bf16.mxu0 %v1799
        %3266 = vmatmul.mubr.bf16.gmra.mrb[0].mxu0 %v1798
        %v3267 = vpop.f32.mrb[0].mxu0
        %v3268 = vadd.f32 %v2979, %v3267
        %v3269 = vpop.f32.mrb[0].mxu0
        %v3270 = vpop.f32.mrb[0].mxu0
        %v3271 = vadd.f32 %v2982, %v3270
        %v3272 = vpop.f32.mrb[0].mxu0
        %3273 = vmatprep.mubr.bf16.mxu0 %v1808
        %3274 = vmatmul.mubr.bf16.gmra.mrb[0].mxu0 %v1807
        %v3275 = vpop.f32.mrb[0].mxu0
        %v3276 = vadd.f32 %v2987, %v3275
        %v3277 = vpop.f32.mrb[0].mxu0
        %v3278 = vpop.f32.mrb[0].mxu0
        %v3279 = vadd.f32 %v2990, %v3278
        %v3280 = vpop.f32.mrb[0].mxu0
        %3281 = vmatprep.mubr.bf16.mxu0 %v1817
        %3282 = vmatmul.mubr.bf16.gmra.mrb[0].mxu0 %v1816
        %v3283 = vpop.f32.mrb[0].mxu0
        %v3284 = vadd.f32 %v2995, %v3283
        %v3285 = vpop.f32.mrb[0].mxu0
        %v3286 = vpop.f32.mrb[0].mxu0
        %v3287 = vadd.f32 %v2998, %v3286
        %v3288 = vpop.f32.mrb[0].mxu0
        %3289 = vmatprep.mubr.bf16.mxu0 %v1826
        %3290 = vmatmul.mubr.bf16.gmra.mrb[0].mxu0 %v1825
        %v3291 = vpop.f32.mrb[0].mxu0
        %v3292 = vadd.f32 %v3003, %v3291
        %v3293 = vpop.f32.mrb[0].mxu0
        %v3294 = vpop.f32.mrb[0].mxu0
        %v3295 = vadd.f32 %v3006, %v3294
        %v3296 = vpop.f32.mrb[0].mxu0
        %3297 = vmatprep.mubr.bf16.mxu0 %v1835
        %3298 = vmatmul.mubr.bf16.gmra.mrb[0].mxu0 %v1834
        %v3299 = vpop.f32.mrb[0].mxu0
        %v3300 = vadd.f32 %v3011, %v3299
        %v3301 = vpop.f32.mrb[0].mxu0
        %v3302 = vpop.f32.mrb[0].mxu0
        %v3303 = vadd.f32 %v3014, %v3302
        %v3304 = vpop.f32.mrb[0].mxu0
        %3305 = vmatprep.mubr.bf16.mxu0 %v1844
        %3306 = vmatmul.mubr.bf16.gmra.mrb[0].mxu0 %v1843
        %v3307 = vpop.f32.mrb[0].mxu0
        %v3308 = vadd.f32 %v3019, %v3307
        %v3309 = vpop.f32.mrb[0].mxu0
        %v3310 = vpop.f32.mrb[0].mxu0
        %v3311 = vadd.f32 %v3022, %v3310
        %v3312 = vpop.f32.mrb[0].mxu0
        %3313 = vmatprep.mubr.bf16.mxu0 %v1853
        %3314 = vmatmul.mubr.bf16.gmra.mrb[0].mxu0 %v1852
        %v3315 = vpop.f32.mrb[0].mxu0
        %v3316 = vadd.f32 %v3027, %v3315
        %v3317 = vpop.f32.mrb[0].mxu0
        %v3318 = vpop.f32.mrb[0].mxu0
        %v3319 = vadd.f32 %v3030, %v3318
        %v3320 = vpop.f32.mrb[0].mxu0
        %3321 = vmatprep.mubr.bf16.mxu0 %v1862
        %3322 = vmatmul.mubr.bf16.gmra.mrb[0].mxu0 %v1861
        %v3323 = vpop.f32.mrb[0].mxu0
        %v3324 = vadd.f32 %v3035, %v3323
        %v3325 = vpop.f32.mrb[0].mxu0
        %v3326 = vpop.f32.mrb[0].mxu0
        %v3327 = vadd.f32 %v3038, %v3326
        %v3328 = vpop.f32.mrb[0].mxu0
        %3329 = vmatprep.mubr.bf16.mxu0 %v1871
        %3330 = vmatmul.mubr.bf16.gmra.mrb[0].mxu0 %v1870
        %v3331 = vpop.f32.mrb[0].mxu0
        %v3332 = vadd.f32 %v3043, %v3331
        %v3333 = vpop.f32.mrb[0].mxu0
        %v3334 = vpop.f32.mrb[0].mxu0
        %v3335 = vadd.f32 %v3046, %v3334
        %v3336 = vpop.f32.mrb[0].mxu0
        %3337 = vmatprep.mubr.bf16.mxu0 %v1880
        %3338 = vmatmul.mubr.bf16.gmra.mrb[0].mxu0 %v1879
        %v3339 = vpop.f32.mrb[0].mxu0
        %v3340 = vadd.f32 %v3051, %v3339
        %v3341 = vpop.f32.mrb[0].mxu0
        %v3342 = vpop.f32.mrb[0].mxu0
        %v3343 = vadd.f32 %v3054, %v3342
        %v3344 = vpop.f32.mrb[0].mxu0
        %3345 = vmatprep.mubr.bf16.mxu0 %v1889
        %3346 = vmatmul.mubr.bf16.gmra.mrb[0].mxu0 %v1888
        %v3347 = vpop.f32.mrb[0].mxu0
        %v3348 = vadd.f32 %v3059, %v3347
        %v3349 = vpop.f32.mrb[0].mxu0
        %v3350 = vpop.f32.mrb[0].mxu0
        %v3351 = vadd.f32 %v3062, %v3350
        %v3352 = vpop.f32.mrb[0].mxu0
        %3353 = vmatprep.mubr.bf16.mxu0 %v1898
        %3354 = vmatmul.mubr.bf16.gmra.mrb[0].mxu0 %v1897
        %v3355 = vpop.f32.mrb[0].mxu0
        %v3356 = vadd.f32 %v3067, %v3355
        %v3357 = vpop.f32.mrb[0].mxu0
        %v3358 = vpop.f32.mrb[0].mxu0
        %v3359 = vadd.f32 %v3070, %v3358
        %v3360 = vpop.f32.mrb[0].mxu0
        %3361 = vmatprep.mubr.bf16.mxu0 %v1907
        %3362 = vmatmul.mubr.bf16.gmra.mrb[0].mxu0 %v1906
        %v3363 = vpop.f32.mrb[0].mxu0
        %v3364 = vadd.f32 %v3075, %v3363
        %v3365 = vpop.f32.mrb[0].mxu0
        %v3366 = vpop.f32.mrb[0].mxu0
        %v3367 = vadd.f32 %v3078, %v3366
        %v3368 = vpop.f32.mrb[0].mxu0
        %3369 = vmatprep.mubr.bf16.mxu0 %v1916
        %3370 = vmatmul.mubr.bf16.gmra.mrb[0].mxu0 %v1915
        %v3371 = vpop.f32.mrb[0].mxu0
        %v3372 = vadd.f32 %v3083, %v3371
        %v3373 = vpop.f32.mrb[0].mxu0
        %v3374 = vpop.f32.mrb[0].mxu0
        %v3375 = vadd.f32 %v3086, %v3374
        %v3376 = vpop.f32.mrb[0].mxu0
        %3377 = vmatprep.mubr.bf16.mxu0 %v1925
        %3378 = vmatmul.mubr.bf16.gmra.mrb[0].mxu0 %v1924
        %v3379 = vpop.f32.mrb[0].mxu0
        %v3380 = vadd.f32 %v3091, %v3379
        %v3381 = vpop.f32.mrb[0].mxu0
        %v3382 = vpop.f32.mrb[0].mxu0
        %v3383 = vadd.f32 %v3094, %v3382
        %v3384 = vpop.f32.mrb[0].mxu0
        %3385 = vmatprep.mubr.bf16.mxu0 %v1934
        %3386 = vmatmul.mubr.bf16.gmra.mrb[0].mxu0 %v1933
        %v3387 = vpop.f32.mrb[0].mxu0
        %v3388 = vadd.f32 %v3099, %v3387
        %v3389 = vpop.f32.mrb[0].mxu0
        %v3390 = vpop.f32.mrb[0].mxu0
        %v3391 = vadd.f32 %v3102, %v3390
        %v3392 = vpop.f32.mrb[0].mxu0
        %3393 = vmatprep.mubr.bf16.mxu0 %v1943
        %3394 = vmatmul.mubr.bf16.gmra.mrb[0].mxu0 %v1942
        %v3395 = vpop.f32.mrb[0].mxu0
        %v3396 = vadd.f32 %v3107, %v3395
        %v3397 = vpop.f32.mrb[0].mxu0
        %v3398 = vpop.f32.mrb[0].mxu0
        %v3399 = vadd.f32 %v3110, %v3398
        %v3400 = vpop.f32.mrb[0].mxu0
        %3401 = vmatprep.mubr.bf16.mxu0 %v1952
        %3402 = vmatmul.mubr.bf16.gmra.mrb[0].mxu0 %v1951
        %v3403 = vpop.f32.mrb[0].mxu0
        %v3404 = vadd.f32 %v3115, %v3403
        %v3405 = vpop.f32.mrb[0].mxu0
        %v3406 = vpop.f32.mrb[0].mxu0
        %v3407 = vadd.f32 %v3118, %v3406
        %v3408 = vpop.f32.mrb[0].mxu0
        %3409 = vmatprep.mubr.bf16.mxu0 %v1961
        %3410 = vmatmul.mubr.bf16.gmra.mrb[0].mxu0 %v1960
        %v3411 = vpop.f32.mrb[0].mxu0
        %v3412 = vadd.f32 %v3123, %v3411
        %v3413 = vpop.f32.mrb[0].mxu0
        %v3414 = vpop.f32.mrb[0].mxu0
        %v3415 = vadd.f32 %v3126, %v3414
        %v3416 = vpop.f32.mrb[0].mxu0
        %3417 = vmatprep.mubr.bf16.mxu0 %v1970
        %3418 = vmatmul.mubr.bf16.gmra.mrb[0].mxu0 %v1969
        %v3419 = vpop.f32.mrb[0].mxu0
        %v3420 = vadd.f32 %v3131, %v3419
        %v3421 = vpop.f32.mrb[0].mxu0
        %v3422 = vpop.f32.mrb[0].mxu0
        %v3423 = vadd.f32 %v3134, %v3422
        %v3424 = vpop.f32.mrb[0].mxu0
        %3425 = vmatprep.mubr.bf16.mxu0 %v1979
        %3426 = vmatmul.mubr.bf16.gmra.mrb[0].mxu0 %v1978
        %v3427 = vpop.f32.mrb[0].mxu0
        %v3428 = vadd.f32 %v3139, %v3427
        %v3429 = vpop.f32.mrb[0].mxu0
        %v3430 = vpop.f32.mrb[0].mxu0
        %v3431 = vadd.f32 %v3142, %v3430
        %v3432 = vpop.f32.mrb[0].mxu0
        %3433 = vmatprep.mubr.bf16.mxu0 %v1988
        %3434 = vmatmul.mubr.bf16.gmra.mrb[0].mxu0 %v1987
        %v3435 = vpop.f32.mrb[0].mxu0
        %v3436 = vadd.f32 %v3147, %v3435
        %v3437 = vpop.f32.mrb[0].mxu0
        %v3438 = vpop.f32.mrb[0].mxu0
        %v3439 = vadd.f32 %v3150, %v3438
        %v3440 = vpop.f32.mrb[0].mxu0
        %3441 = vmatprep.mubr.bf16.mxu0 %v1997
        %3442 = vmatmul.mubr.bf16.gmra.mrb[0].mxu0 %v1996
        %v3443 = vpop.f32.mrb[0].mxu0
        %v3444 = vadd.f32 %v3155, %v3443
        %v3445 = vpop.f32.mrb[0].mxu0
        %v3446 = vpop.f32.mrb[0].mxu0
        %v3447 = vadd.f32 %v3158, %v3446
        %v3448 = vpop.f32.mrb[0].mxu0
        %3449 = vmatprep.mubr.bf16.mxu0 %v2006
        %3450 = vmatmul.mubr.bf16.gmra.mrb[0].mxu0 %v2005
        %v3451 = vpop.f32.mrb[0].mxu0
        %v3452 = vadd.f32 %v3163, %v3451
        %v3453 = vpop.f32.mrb[0].mxu0
        %v3454 = vpop.f32.mrb[0].mxu0
        %v3455 = vadd.f32 %v3166, %v3454
        %v3456 = vpop.f32.mrb[0].mxu0
        %3457 = vmatprep.mubr.bf16.mxu0 %v2015
        %3458 = vmatmul.mubr.bf16.gmra.mrb[0].mxu0 %v2014
        %v3459 = vpop.f32.mrb[0].mxu0
        %v3460 = vadd.f32 %v3171, %v3459
        %v3461 = vpop.f32.mrb[0].mxu0
        %v3462 = vpop.f32.mrb[0].mxu0
        %v3463 = vadd.f32 %v3174, %v3462
        %v3464 = vpop.f32.mrb[0].mxu0
        %3465 = vmatprep.mubr.bf16.mxu0 %v2024
        %3466 = vmatmul.mubr.bf16.gmra.mrb[0].mxu0 %v2023
        %v3467 = vpop.f32.mrb[0].mxu0
        %v3468 = vadd.f32 %v3179, %v3467
        %v3469 = vpop.f32.mrb[0].mxu0
        %v3470 = vpop.f32.mrb[0].mxu0
        %v3471 = vadd.f32 %v3182, %v3470
        %v3472 = vpop.f32.mrb[0].mxu0
        %3473 = vmatprep.mubr.bf16.mxu0 %v2033
        %3474 = vmatmul.mubr.bf16.gmra.mrb[0].mxu0 %v2032
        %v3475 = vpop.f32.mrb[0].mxu0
        %v3476 = vadd.f32 %v3187, %v3475
        %v3477 = vpop.f32.mrb[0].mxu0
        %v3478 = vpop.f32.mrb[0].mxu0
        %v3479 = vadd.f32 %v3190, %v3478
        %v3480 = vpop.f32.mrb[0].mxu0
        %3481 = vmatprep.mubr.bf16.mxu0 %v2042
        %3482 = vmatmul.mubr.bf16.gmra.mrb[0].mxu0 %v2041
        %v3483 = vpop.f32.mrb[0].mxu0
        %v3484 = vadd.f32 %v3195, %v3483
        %v3485 = vpop.f32.mrb[0].mxu0
        %v3486 = vpop.f32.mrb[0].mxu0
        %v3487 = vadd.f32 %v3198, %v3486
        %v3488 = vpop.f32.mrb[0].mxu0
        %3489 = vmatprep.mubr.bf16.mxu0 %v2051
        %3490 = vmatmul.mubr.bf16.gmra.mrb[0].mxu0 %v2050
        %v3491 = vpop.f32.mrb[0].mxu0
        %v3492 = vadd.f32 %v3203, %v3491
        %v3493 = vpop.f32.mrb[0].mxu0
        %v3494 = vpop.f32.mrb[0].mxu0
        %v3495 = vadd.f32 %v3206, %v3494
        %v3496 = vpop.f32.mrb[0].mxu0
        %3497 = vdwg.mxu0
        %3498 = vmatprep.subr.bf16.mxu0 0
        %3499 = vmatpush1.bf16.msra.mxu0 %v2535
        %3500 = vmatprep.subr.bf16.mxu0 0
        %3501 = vmatpush1.bf16.msra.mxu0 %v2536
        %3502 = vmatprep.subr.bf16.mxu0 0
        %3503 = vmatpush1.bf16.msra.mxu0 %v2537
        %3504 = vmatprep.subr.bf16.mxu0 0
        %3505 = vmatpush1.bf16.msra.mxu0 %v2538
        %3506 = vmatprep.subr.bf16.mxu0 0
        %3507 = vmatpush1.bf16.msra.mxu0 %v2539
        %3508 = vmatprep.subr.bf16.mxu0 0
        %3509 = vmatpush1.bf16.msra.mxu0 %v2540
        %3510 = vmatprep.subr.bf16.mxu0 0
        %3511 = vmatpush1.bf16.msra.mxu0 %v2541
        %3512 = vmatprep.subr.bf16.mxu0 0
        %3513 = vmatpush1.bf16.msra.mxu0 %v2542
        %3514 = vmatprep.subr.bf16.mxu0 0
        %3515 = vmatpush1.bf16.msra.mxu0 %v2543
        %3516 = vmatprep.subr.bf16.mxu0 0
        %3517 = vmatpush1.bf16.msra.mxu0 %v2544
        %3518 = vmatprep.subr.bf16.mxu0 0
        %3519 = vmatpush1.bf16.msra.mxu0 %v2545
        %3520 = vmatprep.subr.bf16.mxu0 0
        %3521 = vmatpush1.bf16.msra.mxu0 %v2546
        %3522 = vmatprep.subr.bf16.mxu0 0
        %3523 = vmatpush1.bf16.msra.mxu0 %v2547
        %3524 = vmatprep.subr.bf16.mxu0 0
        %3525 = vmatpush1.bf16.msra.mxu0 %v2548
        %3526 = vmatprep.subr.bf16.mxu0 0
        %3527 = vmatpush1.bf16.msra.mxu0 %v2549
        %3528 = vmatprep.subr.bf16.mxu0 0
        %3529 = vmatpush1.bf16.msra.mxu0 %v2550
        %3530 = vmatprep.mubr.bf16.mxu0 %v1774
        %3531 = vmatmul.mubr.bf16.gmra.mrb[0].mxu0 %v1773
        %v3532 = vpop.f32.mrb[0].mxu0
        %v3533 = vadd.f32 %v3244, %v3532
        %v3534 = vpop.f32.mrb[0].mxu0
        %v3535 = vpop.f32.mrb[0].mxu0
        %v3536 = vadd.f32 %v3247, %v3535
        %v3537 = vpop.f32.mrb[0].mxu0
        %3538 = vmatprep.mubr.bf16.mxu0 %v1783
        %3539 = vmatmul.mubr.bf16.gmra.mrb[0].mxu0 %v1782
        %v3540 = vpop.f32.mrb[0].mxu0
        %v3541 = vadd.f32 %v3252, %v3540
        %v3542 = vpop.f32.mrb[0].mxu0
        %v3543 = vpop.f32.mrb[0].mxu0
        %v3544 = vadd.f32 %v3255, %v3543
        %v3545 = vpop.f32.mrb[0].mxu0
        %3546 = vmatprep.mubr.bf16.mxu0 %v1792
        %3547 = vmatmul.mubr.bf16.gmra.mrb[0].mxu0 %v1791
        %v3548 = vpop.f32.mrb[0].mxu0
        %v3549 = vadd.f32 %v3260, %v3548
        %v3550 = vpop.f32.mrb[0].mxu0
        %v3551 = vpop.f32.mrb[0].mxu0
        %v3552 = vadd.f32 %v3263, %v3551
        %v3553 = vpop.f32.mrb[0].mxu0
        %3554 = vmatprep.mubr.bf16.mxu0 %v1801
        %3555 = vmatmul.mubr.bf16.gmra.mrb[0].mxu0 %v1800
        %v3556 = vpop.f32.mrb[0].mxu0
        %v3557 = vadd.f32 %v3268, %v3556
        %v3558 = vpop.f32.mrb[0].mxu0
        %v3559 = vpop.f32.mrb[0].mxu0
        %v3560 = vadd.f32 %v3271, %v3559
        %v3561 = vpop.f32.mrb[0].mxu0
        %3562 = vmatprep.mubr.bf16.mxu0 %v1810
        %3563 = vmatmul.mubr.bf16.gmra.mrb[0].mxu0 %v1809
        %v3564 = vpop.f32.mrb[0].mxu0
        %v3565 = vadd.f32 %v3276, %v3564
        %v3566 = vpop.f32.mrb[0].mxu0
        %v3567 = vpop.f32.mrb[0].mxu0
        %v3568 = vadd.f32 %v3279, %v3567
        %v3569 = vpop.f32.mrb[0].mxu0
        %3570 = vmatprep.mubr.bf16.mxu0 %v1819
        %3571 = vmatmul.mubr.bf16.gmra.mrb[0].mxu0 %v1818
        %v3572 = vpop.f32.mrb[0].mxu0
        %v3573 = vadd.f32 %v3284, %v3572
        %v3574 = vpop.f32.mrb[0].mxu0
        %v3575 = vpop.f32.mrb[0].mxu0
        %v3576 = vadd.f32 %v3287, %v3575
        %v3577 = vpop.f32.mrb[0].mxu0
        %3578 = vmatprep.mubr.bf16.mxu0 %v1828
        %3579 = vmatmul.mubr.bf16.gmra.mrb[0].mxu0 %v1827
        %v3580 = vpop.f32.mrb[0].mxu0
        %v3581 = vadd.f32 %v3292, %v3580
        %v3582 = vpop.f32.mrb[0].mxu0
        %v3583 = vpop.f32.mrb[0].mxu0
        %v3584 = vadd.f32 %v3295, %v3583
        %v3585 = vpop.f32.mrb[0].mxu0
        %3586 = vmatprep.mubr.bf16.mxu0 %v1837
        %3587 = vmatmul.mubr.bf16.gmra.mrb[0].mxu0 %v1836
        %v3588 = vpop.f32.mrb[0].mxu0
        %v3589 = vadd.f32 %v3300, %v3588
        %v3590 = vpop.f32.mrb[0].mxu0
        %v3591 = vpop.f32.mrb[0].mxu0
        %v3592 = vadd.f32 %v3303, %v3591
        %v3593 = vpop.f32.mrb[0].mxu0
        %3594 = vmatprep.mubr.bf16.mxu0 %v1846
        %3595 = vmatmul.mubr.bf16.gmra.mrb[0].mxu0 %v1845
        %v3596 = vpop.f32.mrb[0].mxu0
        %v3597 = vadd.f32 %v3308, %v3596
        %v3598 = vpop.f32.mrb[0].mxu0
        %v3599 = vpop.f32.mrb[0].mxu0
        %v3600 = vadd.f32 %v3311, %v3599
        %v3601 = vpop.f32.mrb[0].mxu0
        %3602 = vmatprep.mubr.bf16.mxu0 %v1855
        %3603 = vmatmul.mubr.bf16.gmra.mrb[0].mxu0 %v1854
        %v3604 = vpop.f32.mrb[0].mxu0
        %v3605 = vadd.f32 %v3316, %v3604
        %v3606 = vpop.f32.mrb[0].mxu0
        %v3607 = vpop.f32.mrb[0].mxu0
        %v3608 = vadd.f32 %v3319, %v3607
        %v3609 = vpop.f32.mrb[0].mxu0
        %3610 = vmatprep.mubr.bf16.mxu0 %v1864
        %3611 = vmatmul.mubr.bf16.gmra.mrb[0].mxu0 %v1863
        %v3612 = vpop.f32.mrb[0].mxu0
        %v3613 = vadd.f32 %v3324, %v3612
        %v3614 = vpop.f32.mrb[0].mxu0
        %v3615 = vpop.f32.mrb[0].mxu0
        %v3616 = vadd.f32 %v3327, %v3615
        %v3617 = vpop.f32.mrb[0].mxu0
        %3618 = vmatprep.mubr.bf16.mxu0 %v1873
        %3619 = vmatmul.mubr.bf16.gmra.mrb[0].mxu0 %v1872
        %v3620 = vpop.f32.mrb[0].mxu0
        %v3621 = vadd.f32 %v3332, %v3620
        %v3622 = vpop.f32.mrb[0].mxu0
        %v3623 = vpop.f32.mrb[0].mxu0
        %v3624 = vadd.f32 %v3335, %v3623
        %v3625 = vpop.f32.mrb[0].mxu0
        %3626 = vmatprep.mubr.bf16.mxu0 %v1882
        %3627 = vmatmul.mubr.bf16.gmra.mrb[0].mxu0 %v1881
        %v3628 = vpop.f32.mrb[0].mxu0
        %v3629 = vadd.f32 %v3340, %v3628
        %v3630 = vpop.f32.mrb[0].mxu0
        %v3631 = vpop.f32.mrb[0].mxu0
        %v3632 = vadd.f32 %v3343, %v3631
        %v3633 = vpop.f32.mrb[0].mxu0
        %3634 = vmatprep.mubr.bf16.mxu0 %v1891
        %3635 = vmatmul.mubr.bf16.gmra.mrb[0].mxu0 %v1890
        %v3636 = vpop.f32.mrb[0].mxu0
        %v3637 = vadd.f32 %v3348, %v3636
        %v3638 = vpop.f32.mrb[0].mxu0
        %v3639 = vpop.f32.mrb[0].mxu0
        %v3640 = vadd.f32 %v3351, %v3639
        %v3641 = vpop.f32.mrb[0].mxu0
        %3642 = vmatprep.mubr.bf16.mxu0 %v1900
        %3643 = vmatmul.mubr.bf16.gmra.mrb[0].mxu0 %v1899
        %v3644 = vpop.f32.mrb[0].mxu0
        %v3645 = vadd.f32 %v3356, %v3644
        %v3646 = vpop.f32.mrb[0].mxu0
        %v3647 = vpop.f32.mrb[0].mxu0
        %v3648 = vadd.f32 %v3359, %v3647
        %v3649 = vpop.f32.mrb[0].mxu0
        %3650 = vmatprep.mubr.bf16.mxu0 %v1909
        %3651 = vmatmul.mubr.bf16.gmra.mrb[0].mxu0 %v1908
        %v3652 = vpop.f32.mrb[0].mxu0
        %v3653 = vadd.f32 %v3364, %v3652
        %v3654 = vpop.f32.mrb[0].mxu0
        %v3655 = vpop.f32.mrb[0].mxu0
        %v3656 = vadd.f32 %v3367, %v3655
        %v3657 = vpop.f32.mrb[0].mxu0
        %3658 = vmatprep.mubr.bf16.mxu0 %v1918
        %3659 = vmatmul.mubr.bf16.gmra.mrb[0].mxu0 %v1917
        %v3660 = vpop.f32.mrb[0].mxu0
        %v3661 = vadd.f32 %v3372, %v3660
        %v3662 = vpop.f32.mrb[0].mxu0
        %v3663 = vpop.f32.mrb[0].mxu0
        %v3664 = vadd.f32 %v3375, %v3663
        %v3665 = vpop.f32.mrb[0].mxu0
        %3666 = vmatprep.mubr.bf16.mxu0 %v1927
        %3667 = vmatmul.mubr.bf16.gmra.mrb[0].mxu0 %v1926
        %v3668 = vpop.f32.mrb[0].mxu0
        %v3669 = vadd.f32 %v3380, %v3668
        %v3670 = vpop.f32.mrb[0].mxu0
        %v3671 = vpop.f32.mrb[0].mxu0
        %v3672 = vadd.f32 %v3383, %v3671
        %v3673 = vpop.f32.mrb[0].mxu0
        %3674 = vmatprep.mubr.bf16.mxu0 %v1936
        %3675 = vmatmul.mubr.bf16.gmra.mrb[0].mxu0 %v1935
        %v3676 = vpop.f32.mrb[0].mxu0
        %v3677 = vadd.f32 %v3388, %v3676
        %v3678 = vpop.f32.mrb[0].mxu0
        %v3679 = vpop.f32.mrb[0].mxu0
        %v3680 = vadd.f32 %v3391, %v3679
        %v3681 = vpop.f32.mrb[0].mxu0
        %3682 = vmatprep.mubr.bf16.mxu0 %v1945
        %3683 = vmatmul.mubr.bf16.gmra.mrb[0].mxu0 %v1944
        %v3684 = vpop.f32.mrb[0].mxu0
        %v3685 = vadd.f32 %v3396, %v3684
        %v3686 = vpop.f32.mrb[0].mxu0
        %v3687 = vpop.f32.mrb[0].mxu0
        %v3688 = vadd.f32 %v3399, %v3687
        %v3689 = vpop.f32.mrb[0].mxu0
        %3690 = vmatprep.mubr.bf16.mxu0 %v1954
        %3691 = vmatmul.mubr.bf16.gmra.mrb[0].mxu0 %v1953
        %v3692 = vpop.f32.mrb[0].mxu0
        %v3693 = vadd.f32 %v3404, %v3692
        %v3694 = vpop.f32.mrb[0].mxu0
        %v3695 = vpop.f32.mrb[0].mxu0
        %v3696 = vadd.f32 %v3407, %v3695
        %v3697 = vpop.f32.mrb[0].mxu0
        %3698 = vmatprep.mubr.bf16.mxu0 %v1963
        %3699 = vmatmul.mubr.bf16.gmra.mrb[0].mxu0 %v1962
        %v3700 = vpop.f32.mrb[0].mxu0
        %v3701 = vadd.f32 %v3412, %v3700
        %v3702 = vpop.f32.mrb[0].mxu0
        %v3703 = vpop.f32.mrb[0].mxu0
        %v3704 = vadd.f32 %v3415, %v3703
        %v3705 = vpop.f32.mrb[0].mxu0
        %3706 = vmatprep.mubr.bf16.mxu0 %v1972
        %3707 = vmatmul.mubr.bf16.gmra.mrb[0].mxu0 %v1971
        %v3708 = vpop.f32.mrb[0].mxu0
        %v3709 = vadd.f32 %v3420, %v3708
        %v3710 = vpop.f32.mrb[0].mxu0
        %v3711 = vpop.f32.mrb[0].mxu0
        %v3712 = vadd.f32 %v3423, %v3711
        %v3713 = vpop.f32.mrb[0].mxu0
        %3714 = vmatprep.mubr.bf16.mxu0 %v1981
        %3715 = vmatmul.mubr.bf16.gmra.mrb[0].mxu0 %v1980
        %v3716 = vpop.f32.mrb[0].mxu0
        %v3717 = vadd.f32 %v3428, %v3716
        %v3718 = vpop.f32.mrb[0].mxu0
        %v3719 = vpop.f32.mrb[0].mxu0
        %v3720 = vadd.f32 %v3431, %v3719
        %v3721 = vpop.f32.mrb[0].mxu0
        %3722 = vmatprep.mubr.bf16.mxu0 %v1990
        %3723 = vmatmul.mubr.bf16.gmra.mrb[0].mxu0 %v1989
        %v3724 = vpop.f32.mrb[0].mxu0
        %v3725 = vadd.f32 %v3436, %v3724
        %v3726 = vpop.f32.mrb[0].mxu0
        %v3727 = vpop.f32.mrb[0].mxu0
        %v3728 = vadd.f32 %v3439, %v3727
        %v3729 = vpop.f32.mrb[0].mxu0
        %3730 = vmatprep.mubr.bf16.mxu0 %v1999
        %3731 = vmatmul.mubr.bf16.gmra.mrb[0].mxu0 %v1998
        %v3732 = vpop.f32.mrb[0].mxu0
        %v3733 = vadd.f32 %v3444, %v3732
        %v3734 = vpop.f32.mrb[0].mxu0
        %v3735 = vpop.f32.mrb[0].mxu0
        %v3736 = vadd.f32 %v3447, %v3735
        %v3737 = vpop.f32.mrb[0].mxu0
        %3738 = vmatprep.mubr.bf16.mxu0 %v2008
        %3739 = vmatmul.mubr.bf16.gmra.mrb[0].mxu0 %v2007
        %v3740 = vpop.f32.mrb[0].mxu0
        %v3741 = vadd.f32 %v3452, %v3740
        %v3742 = vpop.f32.mrb[0].mxu0
        %v3743 = vpop.f32.mrb[0].mxu0
        %v3744 = vadd.f32 %v3455, %v3743
        %v3745 = vpop.f32.mrb[0].mxu0
        %3746 = vmatprep.mubr.bf16.mxu0 %v2017
        %3747 = vmatmul.mubr.bf16.gmra.mrb[0].mxu0 %v2016
        %v3748 = vpop.f32.mrb[0].mxu0
        %v3749 = vadd.f32 %v3460, %v3748
        %v3750 = vpop.f32.mrb[0].mxu0
        %v3751 = vpop.f32.mrb[0].mxu0
        %v3752 = vadd.f32 %v3463, %v3751
        %v3753 = vpop.f32.mrb[0].mxu0
        %3754 = vmatprep.mubr.bf16.mxu0 %v2026
        %3755 = vmatmul.mubr.bf16.gmra.mrb[0].mxu0 %v2025
        %v3756 = vpop.f32.mrb[0].mxu0
        %v3757 = vadd.f32 %v3468, %v3756
        %v3758 = vpop.f32.mrb[0].mxu0
        %v3759 = vpop.f32.mrb[0].mxu0
        %v3760 = vadd.f32 %v3471, %v3759
        %v3761 = vpop.f32.mrb[0].mxu0
        %3762 = vmatprep.mubr.bf16.mxu0 %v2035
        %3763 = vmatmul.mubr.bf16.gmra.mrb[0].mxu0 %v2034
        %v3764 = vpop.f32.mrb[0].mxu0
        %v3765 = vadd.f32 %v3476, %v3764
        %v3766 = vpop.f32.mrb[0].mxu0
        %v3767 = vpop.f32.mrb[0].mxu0
        %v3768 = vadd.f32 %v3479, %v3767
        %v3769 = vpop.f32.mrb[0].mxu0
        %3770 = vmatprep.mubr.bf16.mxu0 %v2044
        %3771 = vmatmul.mubr.bf16.gmra.mrb[0].mxu0 %v2043
        %v3772 = vpop.f32.mrb[0].mxu0
        %v3773 = vadd.f32 %v3484, %v3772
        %v3774 = vpop.f32.mrb[0].mxu0
        %v3775 = vpop.f32.mrb[0].mxu0
        %v3776 = vadd.f32 %v3487, %v3775
        %v3777 = vpop.f32.mrb[0].mxu0
        %3778 = vmatprep.mubr.bf16.mxu0 %v2053
        %3779 = vmatmul.mubr.bf16.gmra.mrb[0].mxu0 %v2052
        %v3780 = vpop.f32.mrb[0].mxu0
        %v3781 = vadd.f32 %v3492, %v3780
        %v3782 = vpop.f32.mrb[0].mxu0
        %v3783 = vpop.f32.mrb[0].mxu0
        %v3784 = vadd.f32 %v3495, %v3783
        %v3785 = vpop.f32.mrb[0].mxu0
        %3786 = vdwg.mxu0
        %3787 = vmatprep.subr.bf16.mxu0 0
        %3788 = vmatpush1.bf16.msra.mxu0 %v2551
        %3789 = vmatprep.subr.bf16.mxu0 0
        %3790 = vmatpush1.bf16.msra.mxu0 %v2552
        %3791 = vmatprep.subr.bf16.mxu0 0
        %3792 = vmatpush1.bf16.msra.mxu0 %v2553
        %3793 = vmatprep.subr.bf16.mxu0 0
        %3794 = vmatpush1.bf16.msra.mxu0 %v2554
        %3795 = vmatprep.subr.bf16.mxu0 0
        %3796 = vmatpush1.bf16.msra.mxu0 %v2555
        %3797 = vmatprep.subr.bf16.mxu0 0
        %3798 = vmatpush1.bf16.msra.mxu0 %v2556
        %3799 = vmatprep.subr.bf16.mxu0 0
        %3800 = vmatpush1.bf16.msra.mxu0 %v2557
        %3801 = vmatprep.subr.bf16.mxu0 0
        %3802 = vmatpush1.bf16.msra.mxu0 %v2558
        %3803 = vmatprep.subr.bf16.mxu0 0
        %3804 = vmatpush1.bf16.msra.mxu0 0
        %3805 = vmatprep.subr.bf16.mxu0 0
        %3806 = vmatpush1.bf16.msra.mxu0 0
        %3807 = vmatprep.subr.bf16.mxu0 0
        %3808 = vmatpush1.bf16.msra.mxu0 0
        %3809 = vmatprep.subr.bf16.mxu0 0
        %3810 = vmatpush1.bf16.msra.mxu0 0
        %3811 = vmatprep.subr.bf16.mxu0 0
        %3812 = vmatpush1.bf16.msra.mxu0 0
        %3813 = vmatprep.subr.bf16.mxu0 0
        %3814 = vmatpush1.bf16.msra.mxu0 0
        %3815 = vmatprep.subr.bf16.mxu0 0
        %3816 = vmatpush1.bf16.msra.mxu0 0
        %3817 = vmatprep.subr.bf16.mxu0 0
        %3818 = vmatpush1.bf16.msra.mxu0 0
        %3819 = vmatprep.mubr.bf16.mxu0 0
        %3820 = vmatmul.mubr.bf16.gmra.mrb[0].mxu0 %v1775
        %v3821 = vpop.f32.mrb[0].mxu0
        %v3822 = vadd.f32 %v3533, %v3821
        %v3823 = vpop.f32.mrb[0].mxu0
        %v3824 = vpop.f32.mrb[0].mxu0
        %v3825 = vadd.f32 %v3536, %v3824
        %v3826 = vpop.f32.mrb[0].mxu0
        %3827 = vmatprep.mubr.bf16.mxu0 0
        %3828 = vmatmul.mubr.bf16.gmra.mrb[0].mxu0 %v1784
        %v3829 = vpop.f32.mrb[0].mxu0
        %v3830 = vadd.f32 %v3541, %v3829
        %v3831 = vpop.f32.mrb[0].mxu0
        %v3832 = vpop.f32.mrb[0].mxu0
        %v3833 = vadd.f32 %v3544, %v3832
        %v3834 = vpop.f32.mrb[0].mxu0
        %3835 = vmatprep.mubr.bf16.mxu0 0
        %3836 = vmatmul.mubr.bf16.gmra.mrb[0].mxu0 %v1793
        %v3837 = vpop.f32.mrb[0].mxu0
        %v3838 = vadd.f32 %v3549, %v3837
        %v3839 = vpop.f32.mrb[0].mxu0
        %v3840 = vpop.f32.mrb[0].mxu0
        %v3841 = vadd.f32 %v3552, %v3840
        %v3842 = vpop.f32.mrb[0].mxu0
        %3843 = vmatprep.mubr.bf16.mxu0 0
        %3844 = vmatmul.mubr.bf16.gmra.mrb[0].mxu0 %v1802
        %v3845 = vpop.f32.mrb[0].mxu0
        %v3846 = vadd.f32 %v3557, %v3845
        %v3847 = vpop.f32.mrb[0].mxu0
        %v3848 = vpop.f32.mrb[0].mxu0
        %v3849 = vadd.f32 %v3560, %v3848
        %v3850 = vpop.f32.mrb[0].mxu0
        %3851 = vmatprep.mubr.bf16.mxu0 0
        %3852 = vmatmul.mubr.bf16.gmra.mrb[0].mxu0 %v1811
        %v3853 = vpop.f32.mrb[0].mxu0
        %v3854 = vadd.f32 %v3565, %v3853
        %v3855 = vpop.f32.mrb[0].mxu0
        %v3856 = vpop.f32.mrb[0].mxu0
        %v3857 = vadd.f32 %v3568, %v3856
        %v3858 = vpop.f32.mrb[0].mxu0
        %3859 = vmatprep.mubr.bf16.mxu0 0
        %3860 = vmatmul.mubr.bf16.gmra.mrb[0].mxu0 %v1820
        %v3861 = vpop.f32.mrb[0].mxu0
        %v3862 = vadd.f32 %v3573, %v3861
        %v3863 = vpop.f32.mrb[0].mxu0
        %v3864 = vpop.f32.mrb[0].mxu0
        %v3865 = vadd.f32 %v3576, %v3864
        %v3866 = vpop.f32.mrb[0].mxu0
        %3867 = vmatprep.mubr.bf16.mxu0 0
        %3868 = vmatmul.mubr.bf16.gmra.mrb[0].mxu0 %v1829
        %v3869 = vpop.f32.mrb[0].mxu0
        %v3870 = vadd.f32 %v3581, %v3869
        %v3871 = vpop.f32.mrb[0].mxu0
        %v3872 = vpop.f32.mrb[0].mxu0
        %v3873 = vadd.f32 %v3584, %v3872
        %v3874 = vpop.f32.mrb[0].mxu0
        %3875 = vmatprep.mubr.bf16.mxu0 0
        %3876 = vmatmul.mubr.bf16.gmra.mrb[0].mxu0 %v1838
        %v3877 = vpop.f32.mrb[0].mxu0
        %v3878 = vadd.f32 %v3589, %v3877
        %v3879 = vpop.f32.mrb[0].mxu0
        %v3880 = vpop.f32.mrb[0].mxu0
        %v3881 = vadd.f32 %v3592, %v3880
        %v3882 = vpop.f32.mrb[0].mxu0
        %3883 = vmatprep.mubr.bf16.mxu0 0
        %3884 = vmatmul.mubr.bf16.gmra.mrb[0].mxu0 %v1847
        %v3885 = vpop.f32.mrb[0].mxu0
        %v3886 = vadd.f32 %v3597, %v3885
        %v3887 = vpop.f32.mrb[0].mxu0
        %v3888 = vpop.f32.mrb[0].mxu0
        %v3889 = vadd.f32 %v3600, %v3888
        %v3890 = vpop.f32.mrb[0].mxu0
        %3891 = vmatprep.mubr.bf16.mxu0 0
        %3892 = vmatmul.mubr.bf16.gmra.mrb[0].mxu0 %v1856
        %v3893 = vpop.f32.mrb[0].mxu0
        %v3894 = vadd.f32 %v3605, %v3893
        %v3895 = vpop.f32.mrb[0].mxu0
        %v3896 = vpop.f32.mrb[0].mxu0
        %v3897 = vadd.f32 %v3608, %v3896
        %v3898 = vpop.f32.mrb[0].mxu0
        %3899 = vmatprep.mubr.bf16.mxu0 0
        %3900 = vmatmul.mubr.bf16.gmra.mrb[0].mxu0 %v1865
        %v3901 = vpop.f32.mrb[0].mxu0
        %v3902 = vadd.f32 %v3613, %v3901
        %v3903 = vpop.f32.mrb[0].mxu0
        %v3904 = vpop.f32.mrb[0].mxu0
        %v3905 = vadd.f32 %v3616, %v3904
        %v3906 = vpop.f32.mrb[0].mxu0
        %3907 = vmatprep.mubr.bf16.mxu0 0
        %3908 = vmatmul.mubr.bf16.gmra.mrb[0].mxu0 %v1874
        %v3909 = vpop.f32.mrb[0].mxu0
        %v3910 = vadd.f32 %v3621, %v3909
        %v3911 = vpop.f32.mrb[0].mxu0
        %v3912 = vpop.f32.mrb[0].mxu0
        %v3913 = vadd.f32 %v3624, %v3912
        %v3914 = vpop.f32.mrb[0].mxu0
        %3915 = vmatprep.mubr.bf16.mxu0 0
        %3916 = vmatmul.mubr.bf16.gmra.mrb[0].mxu0 %v1883
        %v3917 = vpop.f32.mrb[0].mxu0
        %v3918 = vadd.f32 %v3629, %v3917
        %v3919 = vpop.f32.mrb[0].mxu0
        %v3920 = vpop.f32.mrb[0].mxu0
        %v3921 = vadd.f32 %v3632, %v3920
        %v3922 = vpop.f32.mrb[0].mxu0
        %3923 = vmatprep.mubr.bf16.mxu0 0
        %3924 = vmatmul.mubr.bf16.gmra.mrb[0].mxu0 %v1892
        %v3925 = vpop.f32.mrb[0].mxu0
        %v3926 = vadd.f32 %v3637, %v3925
        %v3927 = vpop.f32.mrb[0].mxu0
        %v3928 = vpop.f32.mrb[0].mxu0
        %v3929 = vadd.f32 %v3640, %v3928
        %v3930 = vpop.f32.mrb[0].mxu0
        %3931 = vmatprep.mubr.bf16.mxu0 0
        %3932 = vmatmul.mubr.bf16.gmra.mrb[0].mxu0 %v1901
        %v3933 = vpop.f32.mrb[0].mxu0
        %v3934 = vadd.f32 %v3645, %v3933
        %v3935 = vpop.f32.mrb[0].mxu0
        %v3936 = vpop.f32.mrb[0].mxu0
        %v3937 = vadd.f32 %v3648, %v3936
        %v3938 = vpop.f32.mrb[0].mxu0
        %3939 = vmatprep.mubr.bf16.mxu0 0
        %3940 = vmatmul.mubr.bf16.gmra.mrb[0].mxu0 %v1910
        %v3941 = vpop.f32.mrb[0].mxu0
        %v3942 = vadd.f32 %v3653, %v3941
        %v3943 = vpop.f32.mrb[0].mxu0
        %v3944 = vpop.f32.mrb[0].mxu0
        %v3945 = vadd.f32 %v3656, %v3944
        %v3946 = vpop.f32.mrb[0].mxu0
        %3947 = vmatprep.mubr.bf16.mxu0 0
        %3948 = vmatmul.mubr.bf16.gmra.mrb[0].mxu0 %v1919
        %v3949 = vpop.f32.mrb[0].mxu0
        %v3950 = vadd.f32 %v3661, %v3949
        %v3951 = vpop.f32.mrb[0].mxu0
        %v3952 = vpop.f32.mrb[0].mxu0
        %v3953 = vadd.f32 %v3664, %v3952
        %v3954 = vpop.f32.mrb[0].mxu0
        %3955 = vmatprep.mubr.bf16.mxu0 0
        %3956 = vmatmul.mubr.bf16.gmra.mrb[0].mxu0 %v1928
        %v3957 = vpop.f32.mrb[0].mxu0
        %v3958 = vadd.f32 %v3669, %v3957
        %v3959 = vpop.f32.mrb[0].mxu0
        %v3960 = vpop.f32.mrb[0].mxu0
        %v3961 = vadd.f32 %v3672, %v3960
        %v3962 = vpop.f32.mrb[0].mxu0
        %3963 = vmatprep.mubr.bf16.mxu0 0
        %3964 = vmatmul.mubr.bf16.gmra.mrb[0].mxu0 %v1937
        %v3965 = vpop.f32.mrb[0].mxu0
        %v3966 = vadd.f32 %v3677, %v3965
        %v3967 = vpop.f32.mrb[0].mxu0
        %v3968 = vpop.f32.mrb[0].mxu0
        %v3969 = vadd.f32 %v3680, %v3968
        %v3970 = vpop.f32.mrb[0].mxu0
        %3971 = vmatprep.mubr.bf16.mxu0 0
        %3972 = vmatmul.mubr.bf16.gmra.mrb[0].mxu0 %v1946
        %v3973 = vpop.f32.mrb[0].mxu0
        %v3974 = vadd.f32 %v3685, %v3973
        %v3975 = vpop.f32.mrb[0].mxu0
        %v3976 = vpop.f32.mrb[0].mxu0
        %v3977 = vadd.f32 %v3688, %v3976
        %v3978 = vpop.f32.mrb[0].mxu0
        %3979 = vmatprep.mubr.bf16.mxu0 0
        %3980 = vmatmul.mubr.bf16.gmra.mrb[0].mxu0 %v1955
        %v3981 = vpop.f32.mrb[0].mxu0
        %v3982 = vadd.f32 %v3693, %v3981
        %v3983 = vpop.f32.mrb[0].mxu0
        %v3984 = vpop.f32.mrb[0].mxu0
        %v3985 = vadd.f32 %v3696, %v3984
        %v3986 = vpop.f32.mrb[0].mxu0
        %3987 = vmatprep.mubr.bf16.mxu0 0
        %3988 = vmatmul.mubr.bf16.gmra.mrb[0].mxu0 %v1964
        %v3989 = vpop.f32.mrb[0].mxu0
        %v3990 = vadd.f32 %v3701, %v3989
        %v3991 = vpop.f32.mrb[0].mxu0
        %v3992 = vpop.f32.mrb[0].mxu0
        %v3993 = vadd.f32 %v3704, %v3992
        %v3994 = vpop.f32.mrb[0].mxu0
        %3995 = vmatprep.mubr.bf16.mxu0 0
        %3996 = vmatmul.mubr.bf16.gmra.mrb[0].mxu0 %v1973
        %v3997 = vpop.f32.mrb[0].mxu0
        %v3998 = vadd.f32 %v3709, %v3997
        %v3999 = vpop.f32.mrb[0].mxu0
        %v4000 = vpop.f32.mrb[0].mxu0
        %v4001 = vadd.f32 %v3712, %v4000
        %v4002 = vpop.f32.mrb[0].mxu0
        %4003 = vmatprep.mubr.bf16.mxu0 0
        %4004 = vmatmul.mubr.bf16.gmra.mrb[0].mxu0 %v1982
        %v4005 = vpop.f32.mrb[0].mxu0
        %v4006 = vadd.f32 %v3717, %v4005
        %v4007 = vpop.f32.mrb[0].mxu0
        %v4008 = vpop.f32.mrb[0].mxu0
        %v4009 = vadd.f32 %v3720, %v4008
        %v4010 = vpop.f32.mrb[0].mxu0
        %4011 = vmatprep.mubr.bf16.mxu0 0
        %4012 = vmatmul.mubr.bf16.gmra.mrb[0].mxu0 %v1991
        %v4013 = vpop.f32.mrb[0].mxu0
        %v4014 = vadd.f32 %v3725, %v4013
        %v4015 = vpop.f32.mrb[0].mxu0
        %v4016 = vpop.f32.mrb[0].mxu0
        %v4017 = vadd.f32 %v3728, %v4016
        %v4018 = vpop.f32.mrb[0].mxu0
        %4019 = vmatprep.mubr.bf16.mxu0 0
        %4020 = vmatmul.mubr.bf16.gmra.mrb[0].mxu0 %v2000
        %v4021 = vpop.f32.mrb[0].mxu0
        %v4022 = vadd.f32 %v3733, %v4021
        %v4023 = vpop.f32.mrb[0].mxu0
        %v4024 = vpop.f32.mrb[0].mxu0
        %v4025 = vadd.f32 %v3736, %v4024
        %v4026 = vpop.f32.mrb[0].mxu0
        %4027 = vmatprep.mubr.bf16.mxu0 0
        %4028 = vmatmul.mubr.bf16.gmra.mrb[0].mxu0 %v2009
        %v4029 = vpop.f32.mrb[0].mxu0
        %v4030 = vadd.f32 %v3741, %v4029
        %v4031 = vpop.f32.mrb[0].mxu0
        %v4032 = vpop.f32.mrb[0].mxu0
        %v4033 = vadd.f32 %v3744, %v4032
        %v4034 = vpop.f32.mrb[0].mxu0
        %4035 = vmatprep.mubr.bf16.mxu0 0
        %4036 = vmatmul.mubr.bf16.gmra.mrb[0].mxu0 %v2018
        %v4037 = vpop.f32.mrb[0].mxu0
        %v4038 = vadd.f32 %v3749, %v4037
        %v4039 = vpop.f32.mrb[0].mxu0
        %v4040 = vpop.f32.mrb[0].mxu0
        %v4041 = vadd.f32 %v3752, %v4040
        %v4042 = vpop.f32.mrb[0].mxu0
        %4043 = vmatprep.mubr.bf16.mxu0 0
        %4044 = vmatmul.mubr.bf16.gmra.mrb[0].mxu0 %v2027
        %v4045 = vpop.f32.mrb[0].mxu0
        %v4046 = vadd.f32 %v3757, %v4045
        %v4047 = vpop.f32.mrb[0].mxu0
        %v4048 = vpop.f32.mrb[0].mxu0
        %v4049 = vadd.f32 %v3760, %v4048
        %v4050 = vpop.f32.mrb[0].mxu0
        %4051 = vmatprep.mubr.bf16.mxu0 0
        %4052 = vmatmul.mubr.bf16.gmra.mrb[0].mxu0 %v2036
        %v4053 = vpop.f32.mrb[0].mxu0
        %v4054 = vadd.f32 %v3765, %v4053
        %v4055 = vpop.f32.mrb[0].mxu0
        %v4056 = vpop.f32.mrb[0].mxu0
        %v4057 = vadd.f32 %v3768, %v4056
        %v4058 = vpop.f32.mrb[0].mxu0
        %4059 = vmatprep.mubr.bf16.mxu0 0
        %4060 = vmatmul.mubr.bf16.gmra.mrb[0].mxu0 %v2045
        %v4061 = vpop.f32.mrb[0].mxu0
        %v4062 = vadd.f32 %v3773, %v4061
        %v4063 = vpop.f32.mrb[0].mxu0
        %v4064 = vpop.f32.mrb[0].mxu0
        %v4065 = vadd.f32 %v3776, %v4064
        %v4066 = vpop.f32.mrb[0].mxu0
        %4067 = vmatprep.mubr.bf16.mxu0 0
        %4068 = vmatmul.mubr.bf16.gmra.mrb[0].mxu0 %v2054
        %v4069 = vpop.f32.mrb[0].mxu0
        %v4070 = vadd.f32 %v3781, %v4069
        %v4071 = vpop.f32.mrb[0].mxu0
        %v4072 = vpop.f32.mrb[0].mxu0
        %v4073 = vadd.f32 %v3784, %v4072
        %v4074 = vpop.f32.mrb[0].mxu0
        %4075 = vdwg.mxu0
        %v4076 = vld [vmem:[%s2] sm:$0x1]
        %v4078 = vlaneseq
        %v4079 = vshrl.u32 %v4078, 7
        %v4080 = vsub.s32 0, %v4079
        %v4081 = vrot.slane %v4076, %v4080
        %v4083 = vmul.f32 %v3822, %v4081
        %v4084 = vmul.f32 %v3825, %v4081
        %v4085 = vmul.f32 %v3830, %v4081
        %v4086 = vmul.f32 %v3833, %v4081
        %v4087 = vmul.f32 %v3838, %v4081
        %v4088 = vmul.f32 %v3841, %v4081
        %v4089 = vmul.f32 %v3846, %v4081
        %v4090 = vmul.f32 %v3849, %v4081
        %v4091 = vmul.f32 %v3854, %v4081
        %v4092 = vmul.f32 %v3857, %v4081
        %v4093 = vmul.f32 %v3862, %v4081
        %v4094 = vmul.f32 %v3865, %v4081
        %v4095 = vmul.f32 %v3870, %v4081
        %v4096 = vmul.f32 %v3873, %v4081
        %v4097 = vmul.f32 %v3878, %v4081
        %v4098 = vmul.f32 %v3881, %v4081
        %v4099 = vmul.f32 %v3886, %v4081
        %v4100 = vmul.f32 %v3889, %v4081
        %v4101 = vmul.f32 %v3894, %v4081
        %v4102 = vmul.f32 %v3897, %v4081
        %v4103 = vmul.f32 %v3902, %v4081
        %v4104 = vmul.f32 %v3905, %v4081
        %v4105 = vmul.f32 %v3910, %v4081
        %v4106 = vmul.f32 %v3913, %v4081
        %v4107 = vmul.f32 %v3918, %v4081
        %v4108 = vmul.f32 %v3921, %v4081
        %v4109 = vmul.f32 %v3926, %v4081
        %v4110 = vmul.f32 %v3929, %v4081
        %v4111 = vmul.f32 %v3934, %v4081
        %v4112 = vmul.f32 %v3937, %v4081
        %v4113 = vmul.f32 %v3942, %v4081
        %v4114 = vmul.f32 %v3945, %v4081
        %v4115 = vmul.f32 %v3950, %v4081
        %v4116 = vmul.f32 %v3953, %v4081
        %v4117 = vmul.f32 %v3958, %v4081
        %v4118 = vmul.f32 %v3961, %v4081
        %v4119 = vmul.f32 %v3966, %v4081
        %v4120 = vmul.f32 %v3969, %v4081
        %v4121 = vmul.f32 %v3974, %v4081
        %v4122 = vmul.f32 %v3977, %v4081
        %v4123 = vmul.f32 %v3982, %v4081
        %v4124 = vmul.f32 %v3985, %v4081
        %v4125 = vmul.f32 %v3990, %v4081
        %v4126 = vmul.f32 %v3993, %v4081
        %v4127 = vmul.f32 %v3998, %v4081
        %v4128 = vmul.f32 %v4001, %v4081
        %v4129 = vmul.f32 %v4006, %v4081
        %v4130 = vmul.f32 %v4009, %v4081
        %v4131 = vmul.f32 %v4014, %v4081
        %v4132 = vmul.f32 %v4017, %v4081
        %v4133 = vmul.f32 %v4022, %v4081
        %v4134 = vmul.f32 %v4025, %v4081
        %v4135 = vmul.f32 %v4030, %v4081
        %v4136 = vmul.f32 %v4033, %v4081
        %v4137 = vmul.f32 %v4038, %v4081
        %v4138 = vmul.f32 %v4041, %v4081
        %v4139 = vmul.f32 %v4046, %v4081
        %v4140 = vmul.f32 %v4049, %v4081
        %v4141 = vmul.f32 %v4054, %v4081
        %v4142 = vmul.f32 %v4057, %v4081
        %v4143 = vmul.f32 %v4062, %v4081
        %v4144 = vmul.f32 %v4065, %v4081
        %v4145 = vmul.f32 %v4070, %v4081
        %v4146 = vmul.f32 %v4073, %v4081
        %v4147 = vld [vmem:[%s3] sm:$0x1]
        %v4149 = vlaneseq
        %v4150 = vshrl.u32 %v4149, 7
        %v4151 = vsub.s32 0, %v4150
        %v4152 = vrot.slane %v4147, %v4151
        %v4154 = vadd.f32 %v4083, %v4152
        %v4155 = vadd.f32 %v4084, %v4152
        %v4156 = vadd.f32 %v4085, %v4152
        %v4157 = vadd.f32 %v4086, %v4152
        %v4158 = vadd.f32 %v4087, %v4152
        %v4159 = vadd.f32 %v4088, %v4152
        %v4160 = vadd.f32 %v4089, %v4152
        %v4161 = vadd.f32 %v4090, %v4152
        %v4162 = vadd.f32 %v4091, %v4152
        %v4163 = vadd.f32 %v4092, %v4152
        %v4164 = vadd.f32 %v4093, %v4152
        %v4165 = vadd.f32 %v4094, %v4152
        %v4166 = vadd.f32 %v4095, %v4152
        %v4167 = vadd.f32 %v4096, %v4152
        %v4168 = vadd.f32 %v4097, %v4152
        %v4169 = vadd.f32 %v4098, %v4152
        %v4170 = vadd.f32 %v4099, %v4152
        %v4171 = vadd.f32 %v4100, %v4152
        %v4172 = vadd.f32 %v4101, %v4152
        %v4173 = vadd.f32 %v4102, %v4152
        %v4174 = vadd.f32 %v4103, %v4152
        %v4175 = vadd.f32 %v4104, %v4152
        %v4176 = vadd.f32 %v4105, %v4152
        %v4177 = vadd.f32 %v4106, %v4152
        %v4178 = vadd.f32 %v4107, %v4152
        %v4179 = vadd.f32 %v4108, %v4152
        %v4180 = vadd.f32 %v4109, %v4152
        %v4181 = vadd.f32 %v4110, %v4152
        %v4182 = vadd.f32 %v4111, %v4152
        %v4183 = vadd.f32 %v4112, %v4152
        %v4184 = vadd.f32 %v4113, %v4152
        %v4185 = vadd.f32 %v4114, %v4152
        %v4186 = vadd.f32 %v4115, %v4152
        %v4187 = vadd.f32 %v4116, %v4152
        %v4188 = vadd.f32 %v4117, %v4152
        %v4189 = vadd.f32 %v4118, %v4152
        %v4190 = vadd.f32 %v4119, %v4152
        %v4191 = vadd.f32 %v4120, %v4152
        %v4192 = vadd.f32 %v4121, %v4152
        %v4193 = vadd.f32 %v4122, %v4152
        %v4194 = vadd.f32 %v4123, %v4152
        %v4195 = vadd.f32 %v4124, %v4152
        %v4196 = vadd.f32 %v4125, %v4152
        %v4197 = vadd.f32 %v4126, %v4152
        %v4198 = vadd.f32 %v4127, %v4152
        %v4199 = vadd.f32 %v4128, %v4152
        %v4200 = vadd.f32 %v4129, %v4152
        %v4201 = vadd.f32 %v4130, %v4152
        %v4202 = vadd.f32 %v4131, %v4152
        %v4203 = vadd.f32 %v4132, %v4152
        %v4204 = vadd.f32 %v4133, %v4152
        %v4205 = vadd.f32 %v4134, %v4152
        %v4206 = vadd.f32 %v4135, %v4152
        %v4207 = vadd.f32 %v4136, %v4152
        %v4208 = vadd.f32 %v4137, %v4152
        %v4209 = vadd.f32 %v4138, %v4152
        %v4210 = vadd.f32 %v4139, %v4152
        %v4211 = vadd.f32 %v4140, %v4152
        %v4212 = vadd.f32 %v4141, %v4152
        %v4213 = vadd.f32 %v4142, %v4152
        %v4214 = vadd.f32 %v4143, %v4152
        %v4215 = vadd.f32 %v4144, %v4152
        %v4216 = vadd.f32 %v4145, %v4152
        %v4217 = vadd.f32 %v4146, %v4152
        %v4218 = vmax.f32 %v4154, 0.0
        %v4219 = vmax.f32 %v4155, 0.0
        %v4220 = vmax.f32 %v4156, 0.0
        %v4221 = vmax.f32 %v4157, 0.0
        %v4222 = vmax.f32 %v4158, 0.0
        %v4223 = vmax.f32 %v4159, 0.0
        %v4224 = vmax.f32 %v4160, 0.0
        %v4225 = vmax.f32 %v4161, 0.0
        %v4226 = vmax.f32 %v4162, 0.0
        %v4227 = vmax.f32 %v4163, 0.0
        %v4228 = vmax.f32 %v4164, 0.0
        %v4229 = vmax.f32 %v4165, 0.0
        %v4230 = vmax.f32 %v4166, 0.0
        %v4231 = vmax.f32 %v4167, 0.0
        %v4232 = vmax.f32 %v4168, 0.0
        %v4233 = vmax.f32 %v4169, 0.0
        %v4234 = vmax.f32 %v4170, 0.0
        %v4235 = vmax.f32 %v4171, 0.0
        %v4236 = vmax.f32 %v4172, 0.0
        %v4237 = vmax.f32 %v4173, 0.0
        %v4238 = vmax.f32 %v4174, 0.0
        %v4239 = vmax.f32 %v4175, 0.0
        %v4240 = vmax.f32 %v4176, 0.0
        %v4241 = vmax.f32 %v4177, 0.0
        %v4242 = vmax.f32 %v4178, 0.0
        %v4243 = vmax.f32 %v4179, 0.0
        %v4244 = vmax.f32 %v4180, 0.0
        %v4245 = vmax.f32 %v4181, 0.0
        %v4246 = vmax.f32 %v4182, 0.0
        %v4247 = vmax.f32 %v4183, 0.0
        %v4248 = vmax.f32 %v4184, 0.0
        %v4249 = vmax.f32 %v4185, 0.0
        %v4250 = vmax.f32 %v4186, 0.0
        %v4251 = vmax.f32 %v4187, 0.0
        %v4252 = vmax.f32 %v4188, 0.0
        %v4253 = vmax.f32 %v4189, 0.0
        %v4254 = vmax.f32 %v4190, 0.0
        %v4255 = vmax.f32 %v4191, 0.0
        %v4256 = vmax.f32 %v4192, 0.0
        %v4257 = vmax.f32 %v4193, 0.0
        %v4258 = vmax.f32 %v4194, 0.0
        %v4259 = vmax.f32 %v4195, 0.0
        %v4260 = vmax.f32 %v4196, 0.0
        %v4261 = vmax.f32 %v4197, 0.0
        %v4262 = vmax.f32 %v4198, 0.0
        %v4263 = vmax.f32 %v4199, 0.0
        %v4264 = vmax.f32 %v4200, 0.0
        %v4265 = vmax.f32 %v4201, 0.0
        %v4266 = vmax.f32 %v4202, 0.0
        %v4267 = vmax.f32 %v4203, 0.0
        %v4268 = vmax.f32 %v4204, 0.0
        %v4269 = vmax.f32 %v4205, 0.0
        %v4270 = vmax.f32 %v4206, 0.0
        %v4271 = vmax.f32 %v4207, 0.0
        %v4272 = vmax.f32 %v4208, 0.0
        %v4273 = vmax.f32 %v4209, 0.0
        %v4274 = vmax.f32 %v4210, 0.0
        %v4275 = vmax.f32 %v4211, 0.0
        %v4276 = vmax.f32 %v4212, 0.0
        %v4277 = vmax.f32 %v4213, 0.0
        %v4278 = vmax.f32 %v4214, 0.0
        %v4279 = vmax.f32 %v4215, 0.0
        %v4280 = vmax.f32 %v4216, 0.0
        %v4281 = vmax.f32 %v4217, 0.0
        %4282 = vst [vmem:[%s421 + $0x1] sm:$0xff] %v4218
        %4283 = vst [vmem:[%s421 + $0x9] sm:$0xff] %v4219
        %4284 = vst [vmem:[%s421 + $0x19] sm:$0xff] %v4220
        %4285 = vst [vmem:[%s421 + $0x21] sm:$0xff] %v4221
        %4286 = vst [vmem:[%s421 + $0x31] sm:$0xff] %v4222
        %4287 = vst [vmem:[%s421 + $0x39] sm:$0xff] %v4223
        %4288 = vst [vmem:[%s421 + $0x49] sm:$0xff] %v4224
        %4289 = vst [vmem:[%s421 + $0x51] sm:$0xff] %v4225
        %4290 = vst [vmem:[%s421 + $0x61] sm:$0xff] %v4226
        %4291 = vst [vmem:[%s421 + $0x69] sm:$0xff] %v4227
        %4292 = vst [vmem:[%s421 + $0x79] sm:$0xff] %v4228
        %4293 = vst [vmem:[%s421 + $0x81] sm:$0xff] %v4229
        %4294 = vst [vmem:[%s421 + $0x91] sm:$0xff] %v4230
        %4295 = vst [vmem:[%s421 + $0x99] sm:$0xff] %v4231
        %4296 = vst [vmem:[%s421 + $0xa9] sm:$0xff] %v4232
        %4297 = vst [vmem:[%s421 + $0xb1] sm:$0xff] %v4233
        %4298 = vst [vmem:[%s421 + $0xc1] sm:$0xff] %v4234
        %4299 = vst [vmem:[%s421 + $0xc9] sm:$0xff] %v4235
        %4300 = vst [vmem:[%s421 + $0xd9] sm:$0xff] %v4236
        %4301 = vst [vmem:[%s421 + $0xe1] sm:$0xff] %v4237
        %4302 = vst [vmem:[%s421 + $0xf1] sm:$0xff] %v4238
        %4303 = vst [vmem:[%s421 + $0xf9] sm:$0xff] %v4239
        %4304 = vst [vmem:[%s421 + $0x109] sm:$0xff] %v4240
        %4305 = vst [vmem:[%s421 + $0x111] sm:$0xff] %v4241
        %4306 = vst [vmem:[%s421 + $0x121] sm:$0xff] %v4242
        %4307 = vst [vmem:[%s421 + $0x129] sm:$0xff] %v4243
        %4308 = vst [vmem:[%s421 + $0x139] sm:$0xff] %v4244
        %4309 = vst [vmem:[%s421 + $0x141] sm:$0xff] %v4245
        %4310 = vst [vmem:[%s421 + $0x151] sm:$0xff] %v4246
        %4311 = vst [vmem:[%s421 + $0x159] sm:$0xff] %v4247
        %4312 = vst [vmem:[%s421 + $0x169] sm:$0xff] %v4248
        %4313 = vst [vmem:[%s421 + $0x171] sm:$0xff] %v4249
        %4314 = vst [vmem:[%s421 + $0x1b1] sm:$0xff] %v4250
        %4315 = vst [vmem:[%s421 + $0x1b9] sm:$0xff] %v4251
        %4316 = vst [vmem:[%s421 + $0x1c9] sm:$0xff] %v4252
        %4317 = vst [vmem:[%s421 + $0x1d1] sm:$0xff] %v4253
        %4318 = vst [vmem:[%s421 + $0x1e1] sm:$0xff] %v4254
        %4319 = vst [vmem:[%s421 + $0x1e9] sm:$0xff] %v4255
        %4320 = vst [vmem:[%s421 + $0x1f9] sm:$0xff] %v4256
        %4321 = vst [vmem:[%s421 + $0x201] sm:$0xff] %v4257
        %4322 = vst [vmem:[%s421 + $0x211] sm:$0xff] %v4258
        %4323 = vst [vmem:[%s421 + $0x219] sm:$0xff] %v4259
        %4324 = vst [vmem:[%s421 + $0x229] sm:$0xff] %v4260
        %4325 = vst [vmem:[%s421 + $0x231] sm:$0xff] %v4261
        %4326 = vst [vmem:[%s421 + $0x241] sm:$0xff] %v4262
        %4327 = vst [vmem:[%s421 + $0x249] sm:$0xff] %v4263
        %4328 = vst [vmem:[%s421 + $0x259] sm:$0xff] %v4264
        %4329 = vst [vmem:[%s421 + $0x261] sm:$0xff] %v4265
        %4330 = vst [vmem:[%s421 + $0x271] sm:$0xff] %v4266
        %4331 = vst [vmem:[%s421 + $0x279] sm:$0xff] %v4267
        %4332 = vst [vmem:[%s421 + $0x289] sm:$0xff] %v4268
        %4333 = vst [vmem:[%s421 + $0x291] sm:$0xff] %v4269
        %4334 = vst [vmem:[%s421 + $0x2a1] sm:$0xff] %v4270
        %4335 = vst [vmem:[%s421 + $0x2a9] sm:$0xff] %v4271
        %4336 = vst [vmem:[%s421 + $0x2b9] sm:$0xff] %v4272
        %4337 = vst [vmem:[%s421 + $0x2c1] sm:$0xff] %v4273
        %4338 = vst [vmem:[%s421 + $0x2d1] sm:$0xff] %v4274
        %4339 = vst [vmem:[%s421 + $0x2d9] sm:$0xff] %v4275
        %4340 = vst [vmem:[%s421 + $0x2e9] sm:$0xff] %v4276
        %4341 = vst [vmem:[%s421 + $0x2f1] sm:$0xff] %v4277
        %4342 = vst [vmem:[%s421 + $0x301] sm:$0xff] %v4278
        %4343 = vst [vmem:[%s421 + $0x309] sm:$0xff] %v4279
        %4344 = vst [vmem:[%s421 + $0x319] sm:$0xff] %v4280
        %4345 = vst [vmem:[%s421 + $0x321] sm:$0xff] %v4281
        %v4346 = vld [vmem:[#allocation4] sm:$0xff]
        %v4347 = vld [vmem:[#allocation4 + $0x8] sm:$0xff]
        %v4348 = vld [vmem:[#allocation4 + $0x18] sm:$0xff]
        %v4349 = vld [vmem:[#allocation4 + $0x20] sm:$0xff]
        %v4350 = vld [vmem:[#allocation4 + $0x30] sm:$0xff]
        %v4351 = vld [vmem:[#allocation4 + $0x38] sm:$0xff]
        %v4352 = vld [vmem:[#allocation4 + $0x48] sm:$0xff]
        %v4353 = vld [vmem:[#allocation4 + $0x50] sm:$0xff]
        %v4354 = vld [vmem:[#allocation4 + $0x60] sm:$0xff]
        %v4355 = vld [vmem:[#allocation4 + $0x68] sm:$0xff]
        %v4356 = vld [vmem:[#allocation4 + $0x78] sm:$0xff]
        %v4357 = vld [vmem:[#allocation4 + $0x80] sm:$0xff]
        %v4358 = vld [vmem:[#allocation4 + $0x90] sm:$0xff]
        %v4359 = vld [vmem:[#allocation4 + $0x98] sm:$0xff]
        %v4360 = vld [vmem:[#allocation4 + $0xa8] sm:$0xff]
        %v4361 = vld [vmem:[#allocation4 + $0xb0] sm:$0xff]
        %v4362 = vld [vmem:[#allocation4 + $0xc0] sm:$0xff]
        %v4363 = vld [vmem:[#allocation4 + $0xc8] sm:$0xff]
        %v4364 = vld [vmem:[#allocation4 + $0xd8] sm:$0xff]
        %v4365 = vld [vmem:[#allocation4 + $0xe0] sm:$0xff]
        %v4366 = vld [vmem:[#allocation4 + $0xf0] sm:$0xff]
        %v4367 = vld [vmem:[#allocation4 + $0xf8] sm:$0xff]
        %v4368 = vld [vmem:[#allocation4 + $0x108] sm:$0xff]
        %v4369 = vld [vmem:[#allocation4 + $0x110] sm:$0xff]
        %v4370 = vld [vmem:[#allocation4 + $0x120] sm:$0xff]
        %v4371 = vld [vmem:[#allocation4 + $0x128] sm:$0xff]
        %v4372 = vld [vmem:[#allocation4 + $0x138] sm:$0xff]
        %v4373 = vld [vmem:[#allocation4 + $0x140] sm:$0xff]
        %v4374 = vld [vmem:[#allocation4 + $0x150] sm:$0xff]
        %v4375 = vld [vmem:[#allocation4 + $0x158] sm:$0xff]
        %v4376 = vld [vmem:[#allocation4 + $0x168] sm:$0xff]
        %v4377 = vld [vmem:[#allocation4 + $0x170] sm:$0xff]
        %v4378 = vld [vmem:[#allocation4 + $0x1b0] sm:$0xff]
        %v4379 = vld [vmem:[#allocation4 + $0x1b8] sm:$0xff]
        %v4380 = vld [vmem:[#allocation4 + $0x1c8] sm:$0xff]
        %v4381 = vld [vmem:[#allocation4 + $0x1d0] sm:$0xff]
        %v4382 = vld [vmem:[#allocation4 + $0x1e0] sm:$0xff]
        %v4383 = vld [vmem:[#allocation4 + $0x1e8] sm:$0xff]
        %v4384 = vld [vmem:[#allocation4 + $0x1f8] sm:$0xff]
        %v4385 = vld [vmem:[#allocation4 + $0x200] sm:$0xff]
        %v4386 = vld [vmem:[#allocation4 + $0x210] sm:$0xff]
        %v4387 = vld [vmem:[#allocation4 + $0x218] sm:$0xff]
        %v4388 = vld [vmem:[#allocation4 + $0x228] sm:$0xff]
        %v4389 = vld [vmem:[#allocation4 + $0x230] sm:$0xff]
        %v4390 = vld [vmem:[#allocation4 + $0x240] sm:$0xff]
        %v4391 = vld [vmem:[#allocation4 + $0x248] sm:$0xff]
        %v4392 = vld [vmem:[#allocation4 + $0x258] sm:$0xff]
        %v4393 = vld [vmem:[#allocation4 + $0x260] sm:$0xff]
        %v4394 = vld [vmem:[#allocation4 + $0x270] sm:$0xff]
        %v4395 = vld [vmem:[#allocation4 + $0x278] sm:$0xff]
        %v4396 = vld [vmem:[#allocation4 + $0x288] sm:$0xff]
        %v4397 = vld [vmem:[#allocation4 + $0x290] sm:$0xff]
        %v4398 = vld [vmem:[#allocation4 + $0x2a0] sm:$0xff]
        %v4399 = vld [vmem:[#allocation4 + $0x2a8] sm:$0xff]
        %v4400 = vld [vmem:[#allocation4 + $0x2b8] sm:$0xff]
        %v4401 = vld [vmem:[#allocation4 + $0x2c0] sm:$0xff]
        %v4402 = vld [vmem:[#allocation4 + $0x2d0] sm:$0xff]
        %v4403 = vld [vmem:[#allocation4 + $0x2d8] sm:$0xff]
        %v4404 = vld [vmem:[#allocation4 + $0x2e8] sm:$0xff]
        %v4405 = vld [vmem:[#allocation4 + $0x2f0] sm:$0xff]
        %v4406 = vld [vmem:[#allocation4 + $0x300] sm:$0xff]
        %v4407 = vld [vmem:[#allocation4 + $0x308] sm:$0xff]
        %v4408 = vld [vmem:[#allocation4 + $0x318] sm:$0xff]
        %v4409 = vld [vmem:[#allocation4 + $0x320] sm:$0xff]
        %v4410 = vpack.c.bf16 %v4347, %v4346
        %v4411 = vpack.c.bf16 %v4349, %v4348
        %v4412 = vpack.c.bf16 %v4351, %v4350
        %v4413 = vpack.c.bf16 %v4353, %v4352
        %v4414 = vpack.c.bf16 %v4355, %v4354
        %v4415 = vpack.c.bf16 %v4357, %v4356
        %v4416 = vpack.c.bf16 %v4359, %v4358
        %v4417 = vpack.c.bf16 %v4361, %v4360
        %v4418 = vpack.c.bf16 %v4363, %v4362
        %v4419 = vpack.c.bf16 %v4365, %v4364
        %v4420 = vpack.c.bf16 %v4367, %v4366
        %v4421 = vpack.c.bf16 %v4369, %v4368
        %v4422 = vpack.c.bf16 %v4371, %v4370
        %v4423 = vpack.c.bf16 %v4373, %v4372
        %v4424 = vpack.c.bf16 %v4375, %v4374
        %v4425 = vpack.c.bf16 %v4377, %v4376
        %v4426 = vpack.c.bf16 %v4379, %v4378
        %v4427 = vpack.c.bf16 %v4381, %v4380
        %v4428 = vpack.c.bf16 %v4383, %v4382
        %v4429 = vpack.c.bf16 %v4385, %v4384
        %v4430 = vpack.c.bf16 %v4387, %v4386
        %v4431 = vpack.c.bf16 %v4389, %v4388
        %v4432 = vpack.c.bf16 %v4391, %v4390
        %v4433 = vpack.c.bf16 %v4393, %v4392
        %v4434 = vpack.c.bf16 %v4395, %v4394
        %v4435 = vpack.c.bf16 %v4397, %v4396
        %v4436 = vpack.c.bf16 %v4399, %v4398
        %v4437 = vpack.c.bf16 %v4401, %v4400
        %v4438 = vpack.c.bf16 %v4403, %v4402
        %v4439 = vpack.c.bf16 %v4405, %v4404
        %v4440 = vpack.c.bf16 %v4407, %v4406
        %v4441 = vpack.c.bf16 %v4409, %v4408
        %4442 = vst [vmem:[#allocation5] sm:$0xff] %v4410
        %4443 = vst [vmem:[#allocation5 + $0x48] sm:$0xff] %v4411
        %4444 = vst [vmem:[#allocation5 + $0x90] sm:$0xff] %v4412
        %4445 = vst [vmem:[#allocation5 + $0xd8] sm:$0xff] %v4413
        %4446 = vst [vmem:[#allocation5 + $0x120] sm:$0xff] %v4414
        %4447 = vst [vmem:[#allocation5 + $0x168] sm:$0xff] %v4415
        %4448 = vst [vmem:[#allocation5 + $0x1b0] sm:$0xff] %v4416
        %4449 = vst [vmem:[#allocation5 + $0x1f8] sm:$0xff] %v4417
        %4450 = vst [vmem:[#allocation5 + $0x240] sm:$0xff] %v4418
        %4451 = vst [vmem:[#allocation5 + $0x288] sm:$0xff] %v4419
        %4452 = vst [vmem:[#allocation5 + $0x2d0] sm:$0xff] %v4420
        %4453 = vst [vmem:[#allocation5 + $0x318] sm:$0xff] %v4421
        %4454 = vst [vmem:[#allocation5 + $0x360] sm:$0xff] %v4422
        %4455 = vst [vmem:[#allocation5 + $0x3a8] sm:$0xff] %v4423
        %4456 = vst [vmem:[#allocation5 + $0x3f0] sm:$0xff] %v4424
        %4457 = vst [vmem:[#allocation5 + $0x438] sm:$0xff] %v4425
        %4458 = vst [vmem:[#allocation5 + $0x480] sm:$0xff] %v4426
        %4459 = vst [vmem:[#allocation5 + $0x4c8] sm:$0xff] %v4427
        %4460 = vst [vmem:[#allocation5 + $0x510] sm:$0xff] %v4428
        %4461 = vst [vmem:[#allocation5 + $0x558] sm:$0xff] %v4429
        %4462 = vst [vmem:[#allocation5 + $0x5a0] sm:$0xff] %v4430
        %4463 = vst [vmem:[#allocation5 + $0x5e8] sm:$0xff] %v4431
        %4464 = vst [vmem:[#allocation5 + $0x630] sm:$0xff] %v4432
        %4465 = vst [vmem:[#allocation5 + $0x678] sm:$0xff] %v4433
        %4466 = vst [vmem:[#allocation5 + $0x6c0] sm:$0xff] %v4434
        %4467 = vst [vmem:[#allocation5 + $0x708] sm:$0xff] %v4435
        %4468 = vst [vmem:[#allocation5 + $0x750] sm:$0xff] %v4436
        %4469 = vst [vmem:[#allocation5 + $0x798] sm:$0xff] %v4437
        %4470 = vst [vmem:[#allocation5 + $0x7e0] sm:$0xff] %v4438
        %4471 = vst [vmem:[#allocation5 + $0x828] sm:$0xff] %v4439
        %4472 = vst [vmem:[#allocation5 + $0x870] sm:$0xff] %v4440
        %4473 = vst [vmem:[#allocation5 + $0x8b8] sm:$0xff] %v4441
        %v4474 = vld [vmem:[#allocation4 + $0x1] sm:$0xff]
        %v4475 = vld [vmem:[#allocation4 + $0x9] sm:$0xff]
        %v4476 = vld [vmem:[#allocation4 + $0x19] sm:$0xff]
        %v4477 = vld [vmem:[#allocation4 + $0x21] sm:$0xff]
        %v4478 = vld [vmem:[#allocation4 + $0x31] sm:$0xff]
        %v4479 = vld [vmem:[#allocation4 + $0x39] sm:$0xff]
        %v4480 = vld [vmem:[#allocation4 + $0x49] sm:$0xff]
        %v4481 = vld [vmem:[#allocation4 + $0x51] sm:$0xff]
        %v4482 = vld [vmem:[#allocation4 + $0x61] sm:$0xff]
        %v4483 = vld [vmem:[#allocation4 + $0x69] sm:$0xff]
        %v4484 = vld [vmem:[#allocation4 + $0x79] sm:$0xff]
        %v4485 = vld [vmem:[#allocation4 + $0x81] sm:$0xff]
        %v4486 = vld [vmem:[#allocation4 + $0x91] sm:$0xff]
        %v4487 = vld [vmem:[#allocation4 + $0x99] sm:$0xff]
        %v4488 = vld [vmem:[#allocation4 + $0xa9] sm:$0xff]
        %v4489 = vld [vmem:[#allocation4 + $0xb1] sm:$0xff]
        %v4490 = vld [vmem:[#allocation4 + $0xc1] sm:$0xff]
        %v4491 = vld [vmem:[#allocation4 + $0xc9] sm:$0xff]
        %v4492 = vld [vmem:[#allocation4 + $0xd9] sm:$0xff]
        %v4493 = vld [vmem:[#allocation4 + $0xe1] sm:$0xff]
        %v4494 = vld [vmem:[#allocation4 + $0xf1] sm:$0xff]
        %v4495 = vld [vmem:[#allocation4 + $0xf9] sm:$0xff]
        %v4496 = vld [vmem:[#allocation4 + $0x109] sm:$0xff]
        %v4497 = vld [vmem:[#allocation4 + $0x111] sm:$0xff]
        %v4498 = vld [vmem:[#allocation4 + $0x121] sm:$0xff]
        %v4499 = vld [vmem:[#allocation4 + $0x129] sm:$0xff]
        %v4500 = vld [vmem:[#allocation4 + $0x139] sm:$0xff]
        %v4501 = vld [vmem:[#allocation4 + $0x141] sm:$0xff]
        %v4502 = vld [vmem:[#allocation4 + $0x151] sm:$0xff]
        %v4503 = vld [vmem:[#allocation4 + $0x159] sm:$0xff]
        %v4504 = vld [vmem:[#allocation4 + $0x169] sm:$0xff]
        %v4505 = vld [vmem:[#allocation4 + $0x171] sm:$0xff]
        %v4506 = vld [vmem:[#allocation4 + $0x1b1] sm:$0xff]
        %v4507 = vld [vmem:[#allocation4 + $0x1b9] sm:$0xff]
        %v4508 = vld [vmem:[#allocation4 + $0x1c9] sm:$0xff]
        %v4509 = vld [vmem:[#allocation4 + $0x1d1] sm:$0xff]
        %v4510 = vld [vmem:[#allocation4 + $0x1e1] sm:$0xff]
        %v4511 = vld [vmem:[#allocation4 + $0x1e9] sm:$0xff]
        %v4512 = vld [vmem:[#allocation4 + $0x1f9] sm:$0xff]
        %v4513 = vld [vmem:[#allocation4 + $0x201] sm:$0xff]
        %v4514 = vld [vmem:[#allocation4 + $0x211] sm:$0xff]
        %v4515 = vld [vmem:[#allocation4 + $0x219] sm:$0xff]
        %v4516 = vld [vmem:[#allocation4 + $0x229] sm:$0xff]
        %v4517 = vld [vmem:[#allocation4 + $0x231] sm:$0xff]
        %v4518 = vld [vmem:[#allocation4 + $0x241] sm:$0xff]
        %v4519 = vld [vmem:[#allocation4 + $0x249] sm:$0xff]
        %v4520 = vld [vmem:[#allocation4 + $0x259] sm:$0xff]
        %v4521 = vld [vmem:[#allocation4 + $0x261] sm:$0xff]
        %v4522 = vld [vmem:[#allocation4 + $0x271] sm:$0xff]
        %v4523 = vld [vmem:[#allocation4 + $0x279] sm:$0xff]
        %v4524 = vld [vmem:[#allocation4 + $0x289] sm:$0xff]
        %v4525 = vld [vmem:[#allocation4 + $0x291] sm:$0xff]
        %v4526 = vld [vmem:[#allocation4 + $0x2a1] sm:$0xff]
        %v4527 = vld [vmem:[#allocation4 + $0x2a9] sm:$0xff]
        %v4528 = vld [vmem:[#allocation4 + $0x2b9] sm:$0xff]
        %v4529 = vld [vmem:[#allocation4 + $0x2c1] sm:$0xff]
        %v4530 = vld [vmem:[#allocation4 + $0x2d1] sm:$0xff]
        %v4531 = vld [vmem:[#allocation4 + $0x2d9] sm:$0xff]
        %v4532 = vld [vmem:[#allocation4 + $0x2e9] sm:$0xff]
        %v4533 = vld [vmem:[#allocation4 + $0x2f1] sm:$0xff]
        %v4534 = vld [vmem:[#allocation4 + $0x301] sm:$0xff]
        %v4535 = vld [vmem:[#allocation4 + $0x309] sm:$0xff]
        %v4536 = vld [vmem:[#allocation4 + $0x319] sm:$0xff]
        %v4537 = vld [vmem:[#allocation4 + $0x321] sm:$0xff]
        %v4538 = vpack.c.bf16 %v4475, %v4474
        %v4539 = vpack.c.bf16 %v4477, %v4476
        %v4540 = vpack.c.bf16 %v4479, %v4478
        %v4541 = vpack.c.bf16 %v4481, %v4480
        %v4542 = vpack.c.bf16 %v4483, %v4482
        %v4543 = vpack.c.bf16 %v4485, %v4484
        %v4544 = vpack.c.bf16 %v4487, %v4486
        %v4545 = vpack.c.bf16 %v4489, %v4488
        %v4546 = vpack.c.bf16 %v4491, %v4490
        %v4547 = vpack.c.bf16 %v4493, %v4492
        %v4548 = vpack.c.bf16 %v4495, %v4494
        %v4549 = vpack.c.bf16 %v4497, %v4496
        %v4550 = vpack.c.bf16 %v4499, %v4498
        %v4551 = vpack.c.bf16 %v4501, %v4500
        %v4552 = vpack.c.bf16 %v4503, %v4502
        %v4553 = vpack.c.bf16 %v4505, %v4504
        %v4554 = vpack.c.bf16 %v4507, %v4506
        %v4555 = vpack.c.bf16 %v4509, %v4508
        %v4556 = vpack.c.bf16 %v4511, %v4510
        %v4557 = vpack.c.bf16 %v4513, %v4512
        %v4558 = vpack.c.bf16 %v4515, %v4514
        %v4559 = vpack.c.bf16 %v4517, %v4516
        %v4560 = vpack.c.bf16 %v4519, %v4518
        %v4561 = vpack.c.bf16 %v4521, %v4520
        %v4562 = vpack.c.bf16 %v4523, %v4522
        %v4563 = vpack.c.bf16 %v4525, %v4524
        %v4564 = vpack.c.bf16 %v4527, %v4526
        %v4565 = vpack.c.bf16 %v4529, %v4528
        %v4566 = vpack.c.bf16 %v4531, %v4530
        %v4567 = vpack.c.bf16 %v4533, %v4532
        %v4568 = vpack.c.bf16 %v4535, %v4534
        %v4569 = vpack.c.bf16 %v4537, %v4536
        %4570 = vst [vmem:[#allocation5 + $0x8] sm:$0xff] %v4538
        %4571 = vst [vmem:[#allocation5 + $0x50] sm:$0xff] %v4539
        %4572 = vst [vmem:[#allocation5 + $0x98] sm:$0xff] %v4540
        %4573 = vst [vmem:[#allocation5 + $0xe0] sm:$0xff] %v4541
        %4574 = vst [vmem:[#allocation5 + $0x128] sm:$0xff] %v4542
        %4575 = vst [vmem:[#allocation5 + $0x170] sm:$0xff] %v4543
        %4576 = vst [vmem:[#allocation5 + $0x1b8] sm:$0xff] %v4544
        %4577 = vst [vmem:[#allocation5 + $0x200] sm:$0xff] %v4545
        %4578 = vst [vmem:[#allocation5 + $0x248] sm:$0xff] %v4546
        %4579 = vst [vmem:[#allocation5 + $0x290] sm:$0xff] %v4547
        %4580 = vst [vmem:[#allocation5 + $0x2d8] sm:$0xff] %v4548
        %4581 = vst [vmem:[#allocation5 + $0x320] sm:$0xff] %v4549
        %4582 = vst [vmem:[#allocation5 + $0x368] sm:$0xff] %v4550
        %4583 = vst [vmem:[#allocation5 + $0x3b0] sm:$0xff] %v4551
        %4584 = vst [vmem:[#allocation5 + $0x3f8] sm:$0xff] %v4552
        %4585 = vst [vmem:[#allocation5 + $0x440] sm:$0xff] %v4553
        %4586 = vst [vmem:[#allocation5 + $0x488] sm:$0xff] %v4554
        %4587 = vst [vmem:[#allocation5 + $0x4d0] sm:$0xff] %v4555
        %4588 = vst [vmem:[#allocation5 + $0x518] sm:$0xff] %v4556
        %4589 = vst [vmem:[#allocation5 + $0x560] sm:$0xff] %v4557
        %4590 = vst [vmem:[#allocation5 + $0x5a8] sm:$0xff] %v4558
        %4591 = vst [vmem:[#allocation5 + $0x5f0] sm:$0xff] %v4559
        %4592 = vst [vmem:[#allocation5 + $0x638] sm:$0xff] %v4560
        %4593 = vst [vmem:[#allocation5 + $0x680] sm:$0xff] %v4561
        %4594 = vst [vmem:[#allocation5 + $0x6c8] sm:$0xff] %v4562
        %4595 = vst [vmem:[#allocation5 + $0x710] sm:$0xff] %v4563
        %4596 = vst [vmem:[#allocation5 + $0x758] sm:$0xff] %v4564
        %4597 = vst [vmem:[#allocation5 + $0x7a0] sm:$0xff] %v4565
        %4598 = vst [vmem:[#allocation5 + $0x7e8] sm:$0xff] %v4566
        %4599 = vst [vmem:[#allocation5 + $0x830] sm:$0xff] %v4567
        %4600 = vst [vmem:[#allocation5 + $0x878] sm:$0xff] %v4568
        %4601 = vst [vmem:[#allocation5 + $0x8c0] sm:$0xff] %v4569
        %v4602 = vld [vmem:[#allocation4 + $0x2] sm:$0xff]
        %v4603 = vld [vmem:[#allocation4 + $0xa] sm:$0xff]
        %v4604 = vld [vmem:[#allocation4 + $0x1a] sm:$0xff]
        %v4605 = vld [vmem:[#allocation4 + $0x22] sm:$0xff]
        %v4606 = vld [vmem:[#allocation4 + $0x32] sm:$0xff]
        %v4607 = vld [vmem:[#allocation4 + $0x3a] sm:$0xff]
        %v4608 = vld [vmem:[#allocation4 + $0x4a] sm:$0xff]
        %v4609 = vld [vmem:[#allocation4 + $0x52] sm:$0xff]
        %v4610 = vld [vmem:[#allocation4 + $0x62] sm:$0xff]
        %v4611 = vld [vmem:[#allocation4 + $0x6a] sm:$0xff]
        %v4612 = vld [vmem:[#allocation4 + $0x7a] sm:$0xff]
        %v4613 = vld [vmem:[#allocation4 + $0x82] sm:$0xff]
        %v4614 = vld [vmem:[#allocation4 + $0x92] sm:$0xff]
        %v4615 = vld [vmem:[#allocation4 + $0x9a] sm:$0xff]
        %v4616 = vld [vmem:[#allocation4 + $0xaa] sm:$0xff]
        %v4617 = vld [vmem:[#allocation4 + $0xb2] sm:$0xff]
        %v4618 = vld [vmem:[#allocation4 + $0xc2] sm:$0xff]
        %v4619 = vld [vmem:[#allocation4 + $0xca] sm:$0xff]
        %v4620 = vld [vmem:[#allocation4 + $0xda] sm:$0xff]
        %v4621 = vld [vmem:[#allocation4 + $0xe2] sm:$0xff]
        %v4622 = vld [vmem:[#allocation4 + $0xf2] sm:$0xff]
        %v4623 = vld [vmem:[#allocation4 + $0xfa] sm:$0xff]
        %v4624 = vld [vmem:[#allocation4 + $0x10a] sm:$0xff]
        %v4625 = vld [vmem:[#allocation4 + $0x112] sm:$0xff]
        %v4626 = vld [vmem:[#allocation4 + $0x122] sm:$0xff]
        %v4627 = vld [vmem:[#allocation4 + $0x12a] sm:$0xff]
        %v4628 = vld [vmem:[#allocation4 + $0x13a] sm:$0xff]
        %v4629 = vld [vmem:[#allocation4 + $0x142] sm:$0xff]
        %v4630 = vld [vmem:[#allocation4 + $0x152] sm:$0xff]
        %v4631 = vld [vmem:[#allocation4 + $0x15a] sm:$0xff]
        %v4632 = vld [vmem:[#allocation4 + $0x16a] sm:$0xff]
        %v4633 = vld [vmem:[#allocation4 + $0x172] sm:$0xff]
        %v4634 = vld [vmem:[#allocation4 + $0x1b2] sm:$0xff]
        %v4635 = vld [vmem:[#allocation4 + $0x1ba] sm:$0xff]
        %v4636 = vld [vmem:[#allocation4 + $0x1ca] sm:$0xff]
        %v4637 = vld [vmem:[#allocation4 + $0x1d2] sm:$0xff]
        %v4638 = vld [vmem:[#allocation4 + $0x1e2] sm:$0xff]
        %v4639 = vld [vmem:[#allocation4 + $0x1ea] sm:$0xff]
        %v4640 = vld [vmem:[#allocation4 + $0x1fa] sm:$0xff]
        %v4641 = vld [vmem:[#allocation4 + $0x202] sm:$0xff]
        %v4642 = vld [vmem:[#allocation4 + $0x212] sm:$0xff]
        %v4643 = vld [vmem:[#allocation4 + $0x21a] sm:$0xff]
        %v4644 = vld [vmem:[#allocation4 + $0x22a] sm:$0xff]
        %v4645 = vld [vmem:[#allocation4 + $0x232] sm:$0xff]
        %v4646 = vld [vmem:[#allocation4 + $0x242] sm:$0xff]
        %v4647 = vld [vmem:[#allocation4 + $0x24a] sm:$0xff]
        %v4648 = vld [vmem:[#allocation4 + $0x25a] sm:$0xff]
        %v4649 = vld [vmem:[#allocation4 + $0x262] sm:$0xff]
        %v4650 = vld [vmem:[#allocation4 + $0x272] sm:$0xff]
        %v4651 = vld [vmem:[#allocation4 + $0x27a] sm:$0xff]
        %v4652 = vld [vmem:[#allocation4 + $0x28a] sm:$0xff]
        %v4653 = vld [vmem:[#allocation4 + $0x292] sm:$0xff]
        %v4654 = vld [vmem:[#allocation4 + $0x2a2] sm:$0xff]
        %v4655 = vld [vmem:[#allocation4 + $0x2aa] sm:$0xff]
        %v4656 = vld [vmem:[#allocation4 + $0x2ba] sm:$0xff]
        %v4657 = vld [vmem:[#allocation4 + $0x2c2] sm:$0xff]
        %v4658 = vld [vmem:[#allocation4 + $0x2d2] sm:$0xff]
        %v4659 = vld [vmem:[#allocation4 + $0x2da] sm:$0xff]
        %v4660 = vld [vmem:[#allocation4 + $0x2ea] sm:$0xff]
        %v4661 = vld [vmem:[#allocation4 + $0x2f2] sm:$0xff]
        %v4662 = vld [vmem:[#allocation4 + $0x302] sm:$0xff]
        %v4663 = vld [vmem:[#allocation4 + $0x30a] sm:$0xff]
        %v4664 = vld [vmem:[#allocation4 + $0x31a] sm:$0xff]
        %v4665 = vld [vmem:[#allocation4 + $0x322] sm:$0xff]
        %v4666 = vpack.c.bf16 %v4603, %v4602
        %v4667 = vpack.c.bf16 %v4605, %v4604
        %v4668 = vpack.c.bf16 %v4607, %v4606
        %v4669 = vpack.c.bf16 %v4609, %v4608
        %v4670 = vpack.c.bf16 %v4611, %v4610
        %v4671 = vpack.c.bf16 %v4613, %v4612
        %v4672 = vpack.c.bf16 %v4615, %v4614
        %v4673 = vpack.c.bf16 %v4617, %v4616
        %v4674 = vpack.c.bf16 %v4619, %v4618
        %v4675 = vpack.c.bf16 %v4621, %v4620
        %v4676 = vpack.c.bf16 %v4623, %v4622
        %v4677 = vpack.c.bf16 %v4625, %v4624
        %v4678 = vpack.c.bf16 %v4627, %v4626
        %v4679 = vpack.c.bf16 %v4629, %v4628
        %v4680 = vpack.c.bf16 %v4631, %v4630
        %v4681 = vpack.c.bf16 %v4633, %v4632
        %v4682 = vpack.c.bf16 %v4635, %v4634
        %v4683 = vpack.c.bf16 %v4637, %v4636
        %v4684 = vpack.c.bf16 %v4639, %v4638
        %v4685 = vpack.c.bf16 %v4641, %v4640
        %v4686 = vpack.c.bf16 %v4643, %v4642
        %v4687 = vpack.c.bf16 %v4645, %v4644
        %v4688 = vpack.c.bf16 %v4647, %v4646
        %v4689 = vpack.c.bf16 %v4649, %v4648
        %v4690 = vpack.c.bf16 %v4651, %v4650
        %v4691 = vpack.c.bf16 %v4653, %v4652
        %v4692 = vpack.c.bf16 %v4655, %v4654
        %v4693 = vpack.c.bf16 %v4657, %v4656
        %v4694 = vpack.c.bf16 %v4659, %v4658
        %v4695 = vpack.c.bf16 %v4661, %v4660
        %v4696 = vpack.c.bf16 %v4663, %v4662
        %v4697 = vpack.c.bf16 %v4665, %v4664
        %4698 = vst [vmem:[#allocation5 + $0x10] sm:$0xff] %v4666
        %4699 = vst [vmem:[#allocation5 + $0x58] sm:$0xff] %v4667
        %4700 = vst [vmem:[#allocation5 + $0xa0] sm:$0xff] %v4668
        %4701 = vst [vmem:[#allocation5 + $0xe8] sm:$0xff] %v4669
        %4702 = vst [vmem:[#allocation5 + $0x130] sm:$0xff] %v4670
        %4703 = vst [vmem:[#allocation5 + $0x178] sm:$0xff] %v4671
        %4704 = vst [vmem:[#allocation5 + $0x1c0] sm:$0xff] %v4672
        %4705 = vst [vmem:[#allocation5 + $0x208] sm:$0xff] %v4673
        %4706 = vst [vmem:[#allocation5 + $0x250] sm:$0xff] %v4674
        %4707 = vst [vmem:[#allocation5 + $0x298] sm:$0xff] %v4675
        %4708 = vst [vmem:[#allocation5 + $0x2e0] sm:$0xff] %v4676
        %4709 = vst [vmem:[#allocation5 + $0x328] sm:$0xff] %v4677
        %4710 = vst [vmem:[#allocation5 + $0x370] sm:$0xff] %v4678
        %4711 = vst [vmem:[#allocation5 + $0x3b8] sm:$0xff] %v4679
        %4712 = vst [vmem:[#allocation5 + $0x400] sm:$0xff] %v4680
        %4713 = vst [vmem:[#allocation5 + $0x448] sm:$0xff] %v4681
        %4714 = vst [vmem:[#allocation5 + $0x490] sm:$0xff] %v4682
        %4715 = vst [vmem:[#allocation5 + $0x4d8] sm:$0xff] %v4683
        %4716 = vst [vmem:[#allocation5 + $0x520] sm:$0xff] %v4684
        %4717 = vst [vmem:[#allocation5 + $0x568] sm:$0xff] %v4685
        %4718 = vst [vmem:[#allocation5 + $0x5b0] sm:$0xff] %v4686
        %4719 = vst [vmem:[#allocation5 + $0x5f8] sm:$0xff] %v4687
        %4720 = vst [vmem:[#allocation5 + $0x640] sm:$0xff] %v4688
        %4721 = vst [vmem:[#allocation5 + $0x688] sm:$0xff] %v4689
        %4722 = vst [vmem:[#allocation5 + $0x6d0] sm:$0xff] %v4690
        %4723 = vst [vmem:[#allocation5 + $0x718] sm:$0xff] %v4691
        %4724 = vst [vmem:[#allocation5 + $0x760] sm:$0xff] %v4692
        %4725 = vst [vmem:[#allocation5 + $0x7a8] sm:$0xff] %v4693
        %4726 = vst [vmem:[#allocation5 + $0x7f0] sm:$0xff] %v4694
        %4727 = vst [vmem:[#allocation5 + $0x838] sm:$0xff] %v4695
        %4728 = vst [vmem:[#allocation5 + $0x880] sm:$0xff] %v4696
        %4729 = vst [vmem:[#allocation5 + $0x8c8] sm:$0xff] %v4697
        %v4730 = vld [vmem:[%s421] sm:$0xff]
        %v4731 = vld [vmem:[%s421 + $0x8] sm:$0xff]
        %v4732 = vld [vmem:[%s421 + $0x18] sm:$0xff]
        %v4733 = vld [vmem:[%s421 + $0x20] sm:$0xff]
        %v4734 = vld [vmem:[%s421 + $0x30] sm:$0xff]
        %v4735 = vld [vmem:[%s421 + $0x38] sm:$0xff]
        %v4736 = vld [vmem:[%s421 + $0x48] sm:$0xff]
        %v4737 = vld [vmem:[%s421 + $0x50] sm:$0xff]
        %v4738 = vld [vmem:[%s421 + $0x60] sm:$0xff]
        %v4739 = vld [vmem:[%s421 + $0x68] sm:$0xff]
        %v4740 = vld [vmem:[%s421 + $0x78] sm:$0xff]
        %v4741 = vld [vmem:[%s421 + $0x80] sm:$0xff]
        %v4742 = vld [vmem:[%s421 + $0x90] sm:$0xff]
        %v4743 = vld [vmem:[%s421 + $0x98] sm:$0xff]
        %v4744 = vld [vmem:[%s421 + $0xa8] sm:$0xff]
        %v4745 = vld [vmem:[%s421 + $0xb0] sm:$0xff]
        %v4746 = vld [vmem:[%s421 + $0xc0] sm:$0xff]
        %v4747 = vld [vmem:[%s421 + $0xc8] sm:$0xff]
        %v4748 = vld [vmem:[%s421 + $0xd8] sm:$0xff]
        %v4749 = vld [vmem:[%s421 + $0xe0] sm:$0xff]
        %v4750 = vld [vmem:[%s421 + $0xf0] sm:$0xff]
        %v4751 = vld [vmem:[%s421 + $0xf8] sm:$0xff]
        %v4752 = vld [vmem:[%s421 + $0x108] sm:$0xff]
        %v4753 = vld [vmem:[%s421 + $0x110] sm:$0xff]
        %v4754 = vld [vmem:[%s421 + $0x120] sm:$0xff]
        %v4755 = vld [vmem:[%s421 + $0x128] sm:$0xff]
        %v4756 = vld [vmem:[%s421 + $0x138] sm:$0xff]
        %v4757 = vld [vmem:[%s421 + $0x140] sm:$0xff]
        %v4758 = vld [vmem:[%s421 + $0x150] sm:$0xff]
        %v4759 = vld [vmem:[%s421 + $0x158] sm:$0xff]
        %v4760 = vld [vmem:[%s421 + $0x168] sm:$0xff]
        %v4761 = vld [vmem:[%s421 + $0x170] sm:$0xff]
        %v4762 = vld [vmem:[%s421 + $0x1b0] sm:$0xff]
        %v4763 = vld [vmem:[%s421 + $0x1b8] sm:$0xff]
        %v4764 = vld [vmem:[%s421 + $0x1c8] sm:$0xff]
        %v4765 = vld [vmem:[%s421 + $0x1d0] sm:$0xff]
        %v4766 = vld [vmem:[%s421 + $0x1e0] sm:$0xff]
        %v4767 = vld [vmem:[%s421 + $0x1e8] sm:$0xff]
        %v4768 = vld [vmem:[%s421 + $0x1f8] sm:$0xff]
        %v4769 = vld [vmem:[%s421 + $0x200] sm:$0xff]
        %v4770 = vld [vmem:[%s421 + $0x210] sm:$0xff]
        %v4771 = vld [vmem:[%s421 + $0x218] sm:$0xff]
        %v4772 = vld [vmem:[%s421 + $0x228] sm:$0xff]
        %v4773 = vld [vmem:[%s421 + $0x230] sm:$0xff]
        %v4774 = vld [vmem:[%s421 + $0x240] sm:$0xff]
        %v4775 = vld [vmem:[%s421 + $0x248] sm:$0xff]
        %v4776 = vld [vmem:[%s421 + $0x258] sm:$0xff]
        %v4777 = vld [vmem:[%s421 + $0x260] sm:$0xff]
        %v4778 = vld [vmem:[%s421 + $0x270] sm:$0xff]
        %v4779 = vld [vmem:[%s421 + $0x278] sm:$0xff]
        %v4780 = vld [vmem:[%s421 + $0x288] sm:$0xff]
        %v4781 = vld [vmem:[%s421 + $0x290] sm:$0xff]
        %v4782 = vld [vmem:[%s421 + $0x2a0] sm:$0xff]
        %v4783 = vld [vmem:[%s421 + $0x2a8] sm:$0xff]
        %v4784 = vld [vmem:[%s421 + $0x2b8] sm:$0xff]
        %v4785 = vld [vmem:[%s421 + $0x2c0] sm:$0xff]
        %v4786 = vld [vmem:[%s421 + $0x2d0] sm:$0xff]
        %v4787 = vld [vmem:[%s421 + $0x2d8] sm:$0xff]
        %v4788 = vld [vmem:[%s421 + $0x2e8] sm:$0xff]
        %v4789 = vld [vmem:[%s421 + $0x2f0] sm:$0xff]
        %v4790 = vld [vmem:[%s421 + $0x300] sm:$0xff]
        %v4791 = vld [vmem:[%s421 + $0x308] sm:$0xff]
        %v4792 = vld [vmem:[%s421 + $0x318] sm:$0xff]
        %v4793 = vld [vmem:[%s421 + $0x320] sm:$0xff]
        %v4794 = vpack.c.bf16 %v4731, %v4730
        %v4795 = vpack.c.bf16 %v4733, %v4732
        %v4796 = vpack.c.bf16 %v4735, %v4734
        %v4797 = vpack.c.bf16 %v4737, %v4736
        %v4798 = vpack.c.bf16 %v4739, %v4738
        %v4799 = vpack.c.bf16 %v4741, %v4740
        %v4800 = vpack.c.bf16 %v4743, %v4742
        %v4801 = vpack.c.bf16 %v4745, %v4744
        %v4802 = vpack.c.bf16 %v4747, %v4746
        %v4803 = vpack.c.bf16 %v4749, %v4748
        %v4804 = vpack.c.bf16 %v4751, %v4750
        %v4805 = vpack.c.bf16 %v4753, %v4752
        %v4806 = vpack.c.bf16 %v4755, %v4754
        %v4807 = vpack.c.bf16 %v4757, %v4756
        %v4808 = vpack.c.bf16 %v4759, %v4758
        %v4809 = vpack.c.bf16 %v4761, %v4760
        %v4810 = vpack.c.bf16 %v4763, %v4762
        %v4811 = vpack.c.bf16 %v4765, %v4764
        %v4812 = vpack.c.bf16 %v4767, %v4766
        %v4813 = vpack.c.bf16 %v4769, %v4768
        %v4814 = vpack.c.bf16 %v4771, %v4770
        %v4815 = vpack.c.bf16 %v4773, %v4772
        %v4816 = vpack.c.bf16 %v4775, %v4774
        %v4817 = vpack.c.bf16 %v4777, %v4776
        %v4818 = vpack.c.bf16 %v4779, %v4778
        %v4819 = vpack.c.bf16 %v4781, %v4780
        %v4820 = vpack.c.bf16 %v4783, %v4782
        %v4821 = vpack.c.bf16 %v4785, %v4784
        %v4822 = vpack.c.bf16 %v4787, %v4786
        %v4823 = vpack.c.bf16 %v4789, %v4788
        %v4824 = vpack.c.bf16 %v4791, %v4790
        %v4825 = vpack.c.bf16 %v4793, %v4792
        %4826 = vst [vmem:[#allocation5 + $0x18] sm:$0xff] %v4794
        %4827 = vst [vmem:[#allocation5 + $0x60] sm:$0xff] %v4795
        %4828 = vst [vmem:[#allocation5 + $0xa8] sm:$0xff] %v4796
        %4829 = vst [vmem:[#allocation5 + $0xf0] sm:$0xff] %v4797
        %4830 = vst [vmem:[#allocation5 + $0x138] sm:$0xff] %v4798
        %4831 = vst [vmem:[#allocation5 + $0x180] sm:$0xff] %v4799
        %4832 = vst [vmem:[#allocation5 + $0x1c8] sm:$0xff] %v4800
        %4833 = vst [vmem:[#allocation5 + $0x210] sm:$0xff] %v4801
        %4834 = vst [vmem:[#allocation5 + $0x258] sm:$0xff] %v4802
        %4835 = vst [vmem:[#allocation5 + $0x2a0] sm:$0xff] %v4803
        %4836 = vst [vmem:[#allocation5 + $0x2e8] sm:$0xff] %v4804
        %4837 = vst [vmem:[#allocation5 + $0x330] sm:$0xff] %v4805
        %4838 = vst [vmem:[#allocation5 + $0x378] sm:$0xff] %v4806
        %4839 = vst [vmem:[#allocation5 + $0x3c0] sm:$0xff] %v4807
        %4840 = vst [vmem:[#allocation5 + $0x408] sm:$0xff] %v4808
        %4841 = vst [vmem:[#allocation5 + $0x450] sm:$0xff] %v4809
        %4842 = vst [vmem:[#allocation5 + $0x498] sm:$0xff] %v4810
        %4843 = vst [vmem:[#allocation5 + $0x4e0] sm:$0xff] %v4811
        %4844 = vst [vmem:[#allocation5 + $0x528] sm:$0xff] %v4812
        %4845 = vst [vmem:[#allocation5 + $0x570] sm:$0xff] %v4813
        %4846 = vst [vmem:[#allocation5 + $0x5b8] sm:$0xff] %v4814
        %4847 = vst [vmem:[#allocation5 + $0x600] sm:$0xff] %v4815
        %4848 = vst [vmem:[#allocation5 + $0x648] sm:$0xff] %v4816
        %4849 = vst [vmem:[#allocation5 + $0x690] sm:$0xff] %v4817
        %4850 = vst [vmem:[#allocation5 + $0x6d8] sm:$0xff] %v4818
        %4851 = vst [vmem:[#allocation5 + $0x720] sm:$0xff] %v4819
        %4852 = vst [vmem:[#allocation5 + $0x768] sm:$0xff] %v4820
        %4853 = vst [vmem:[#allocation5 + $0x7b0] sm:$0xff] %v4821
        %4854 = vst [vmem:[#allocation5 + $0x7f8] sm:$0xff] %v4822
        %4855 = vst [vmem:[#allocation5 + $0x840] sm:$0xff] %v4823
        %4856 = vst [vmem:[#allocation5 + $0x888] sm:$0xff] %v4824
        %4857 = vst [vmem:[#allocation5 + $0x8d0] sm:$0xff] %v4825
        %v4858 = vld [vmem:[%s421 + $0x1] sm:$0xff]
        %v4859 = vld [vmem:[%s421 + $0x9] sm:$0xff]
        %v4860 = vld [vmem:[%s421 + $0x19] sm:$0xff]
        %v4861 = vld [vmem:[%s421 + $0x21] sm:$0xff]
        %v4862 = vld [vmem:[%s421 + $0x31] sm:$0xff]
        %v4863 = vld [vmem:[%s421 + $0x39] sm:$0xff]
        %v4864 = vld [vmem:[%s421 + $0x49] sm:$0xff]
        %v4865 = vld [vmem:[%s421 + $0x51] sm:$0xff]
        %v4866 = vld [vmem:[%s421 + $0x61] sm:$0xff]
        %v4867 = vld [vmem:[%s421 + $0x69] sm:$0xff]
        %v4868 = vld [vmem:[%s421 + $0x79] sm:$0xff]
        %v4869 = vld [vmem:[%s421 + $0x81] sm:$0xff]
        %v4870 = vld [vmem:[%s421 + $0x91] sm:$0xff]
        %v4871 = vld [vmem:[%s421 + $0x99] sm:$0xff]
        %v4872 = vld [vmem:[%s421 + $0xa9] sm:$0xff]
        %v4873 = vld [vmem:[%s421 + $0xb1] sm:$0xff]
        %v4874 = vld [vmem:[%s421 + $0xc1] sm:$0xff]
        %v4875 = vld [vmem:[%s421 + $0xc9] sm:$0xff]
        %v4876 = vld [vmem:[%s421 + $0xd9] sm:$0xff]
        %v4877 = vld [vmem:[%s421 + $0xe1] sm:$0xff]
        %v4878 = vld [vmem:[%s421 + $0xf1] sm:$0xff]
        %v4879 = vld [vmem:[%s421 + $0xf9] sm:$0xff]
        %v4880 = vld [vmem:[%s421 + $0x109] sm:$0xff]
        %v4881 = vld [vmem:[%s421 + $0x111] sm:$0xff]
        %v4882 = vld [vmem:[%s421 + $0x121] sm:$0xff]
        %v4883 = vld [vmem:[%s421 + $0x129] sm:$0xff]
        %v4884 = vld [vmem:[%s421 + $0x139] sm:$0xff]
        %v4885 = vld [vmem:[%s421 + $0x141] sm:$0xff]
        %v4886 = vld [vmem:[%s421 + $0x151] sm:$0xff]
        %v4887 = vld [vmem:[%s421 + $0x159] sm:$0xff]
        %v4888 = vld [vmem:[%s421 + $0x169] sm:$0xff]
        %v4889 = vld [vmem:[%s421 + $0x171] sm:$0xff]
        %v4890 = vld [vmem:[%s421 + $0x1b1] sm:$0xff]
        %v4891 = vld [vmem:[%s421 + $0x1b9] sm:$0xff]
        %v4892 = vld [vmem:[%s421 + $0x1c9] sm:$0xff]
        %v4893 = vld [vmem:[%s421 + $0x1d1] sm:$0xff]
        %v4894 = vld [vmem:[%s421 + $0x1e1] sm:$0xff]
        %v4895 = vld [vmem:[%s421 + $0x1e9] sm:$0xff]
        %v4896 = vld [vmem:[%s421 + $0x1f9] sm:$0xff]
        %v4897 = vld [vmem:[%s421 + $0x201] sm:$0xff]
        %v4898 = vld [vmem:[%s421 + $0x211] sm:$0xff]
        %v4899 = vld [vmem:[%s421 + $0x219] sm:$0xff]
        %v4900 = vld [vmem:[%s421 + $0x229] sm:$0xff]
        %v4901 = vld [vmem:[%s421 + $0x231] sm:$0xff]
        %v4902 = vld [vmem:[%s421 + $0x241] sm:$0xff]
        %v4903 = vld [vmem:[%s421 + $0x249] sm:$0xff]
        %v4904 = vld [vmem:[%s421 + $0x259] sm:$0xff]
        %v4905 = vld [vmem:[%s421 + $0x261] sm:$0xff]
        %v4906 = vld [vmem:[%s421 + $0x271] sm:$0xff]
        %v4907 = vld [vmem:[%s421 + $0x279] sm:$0xff]
        %v4908 = vld [vmem:[%s421 + $0x289] sm:$0xff]
        %v4909 = vld [vmem:[%s421 + $0x291] sm:$0xff]
        %v4910 = vld [vmem:[%s421 + $0x2a1] sm:$0xff]
        %v4911 = vld [vmem:[%s421 + $0x2a9] sm:$0xff]
        %v4912 = vld [vmem:[%s421 + $0x2b9] sm:$0xff]
        %v4913 = vld [vmem:[%s421 + $0x2c1] sm:$0xff]
        %v4914 = vld [vmem:[%s421 + $0x2d1] sm:$0xff]
        %v4915 = vld [vmem:[%s421 + $0x2d9] sm:$0xff]
        %v4916 = vld [vmem:[%s421 + $0x2e9] sm:$0xff]
        %v4917 = vld [vmem:[%s421 + $0x2f1] sm:$0xff]
        %v4918 = vld [vmem:[%s421 + $0x301] sm:$0xff]
        %v4919 = vld [vmem:[%s421 + $0x309] sm:$0xff]
        %v4920 = vld [vmem:[%s421 + $0x319] sm:$0xff]
        %v4921 = vld [vmem:[%s421 + $0x321] sm:$0xff]
        %v4922 = vpack.c.bf16 %v4859, %v4858
        %v4923 = vpack.c.bf16 %v4861, %v4860
        %v4924 = vpack.c.bf16 %v4863, %v4862
        %v4925 = vpack.c.bf16 %v4865, %v4864
        %v4926 = vpack.c.bf16 %v4867, %v4866
        %v4927 = vpack.c.bf16 %v4869, %v4868
        %v4928 = vpack.c.bf16 %v4871, %v4870
        %v4929 = vpack.c.bf16 %v4873, %v4872
        %v4930 = vpack.c.bf16 %v4875, %v4874
        %v4931 = vpack.c.bf16 %v4877, %v4876
        %v4932 = vpack.c.bf16 %v4879, %v4878
        %v4933 = vpack.c.bf16 %v4881, %v4880
        %v4934 = vpack.c.bf16 %v4883, %v4882
        %v4935 = vpack.c.bf16 %v4885, %v4884
        %v4936 = vpack.c.bf16 %v4887, %v4886
        %v4937 = vpack.c.bf16 %v4889, %v4888
        %v4938 = vpack.c.bf16 %v4891, %v4890
        %v4939 = vpack.c.bf16 %v4893, %v4892
        %v4940 = vpack.c.bf16 %v4895, %v4894
        %v4941 = vpack.c.bf16 %v4897, %v4896
        %v4942 = vpack.c.bf16 %v4899, %v4898
        %v4943 = vpack.c.bf16 %v4901, %v4900
        %v4944 = vpack.c.bf16 %v4903, %v4902
        %v4945 = vpack.c.bf16 %v4905, %v4904
        %v4946 = vpack.c.bf16 %v4907, %v4906
        %v4947 = vpack.c.bf16 %v4909, %v4908
        %v4948 = vpack.c.bf16 %v4911, %v4910
        %v4949 = vpack.c.bf16 %v4913, %v4912
        %v4950 = vpack.c.bf16 %v4915, %v4914
        %v4951 = vpack.c.bf16 %v4917, %v4916
        %v4952 = vpack.c.bf16 %v4919, %v4918
        %v4953 = vpack.c.bf16 %v4921, %v4920
        %4954 = vst [vmem:[#allocation5 + $0x20] sm:$0xff] %v4922
        %4955 = vst [vmem:[#allocation5 + $0x68] sm:$0xff] %v4923
        %4956 = vst [vmem:[#allocation5 + $0xb0] sm:$0xff] %v4924
        %4957 = vst [vmem:[#allocation5 + $0xf8] sm:$0xff] %v4925
        %4958 = vst [vmem:[#allocation5 + $0x140] sm:$0xff] %v4926
        %4959 = vst [vmem:[#allocation5 + $0x188] sm:$0xff] %v4927
        %4960 = vst [vmem:[#allocation5 + $0x1d0] sm:$0xff] %v4928
        %4961 = vst [vmem:[#allocation5 + $0x218] sm:$0xff] %v4929
        %4962 = vst [vmem:[#allocation5 + $0x260] sm:$0xff] %v4930
        %4963 = vst [vmem:[#allocation5 + $0x2a8] sm:$0xff] %v4931
        %4964 = vst [vmem:[#allocation5 + $0x2f0] sm:$0xff] %v4932
        %4965 = vst [vmem:[#allocation5 + $0x338] sm:$0xff] %v4933
        %4966 = vst [vmem:[#allocation5 + $0x380] sm:$0xff] %v4934
        %4967 = vst [vmem:[#allocation5 + $0x3c8] sm:$0xff] %v4935
        %4968 = vst [vmem:[#allocation5 + $0x410] sm:$0xff] %v4936
        %4969 = vst [vmem:[#allocation5 + $0x458] sm:$0xff] %v4937
        %4970 = vst [vmem:[#allocation5 + $0x4a0] sm:$0xff] %v4938
        %4971 = vst [vmem:[#allocation5 + $0x4e8] sm:$0xff] %v4939
        %4972 = vst [vmem:[#allocation5 + $0x530] sm:$0xff] %v4940
        %4973 = vst [vmem:[#allocation5 + $0x578] sm:$0xff] %v4941
        %4974 = vst [vmem:[#allocation5 + $0x5c0] sm:$0xff] %v4942
        %4975 = vst [vmem:[#allocation5 + $0x608] sm:$0xff] %v4943
        %4976 = vst [vmem:[#allocation5 + $0x650] sm:$0xff] %v4944
        %4977 = vst [vmem:[#allocation5 + $0x698] sm:$0xff] %v4945
        %4978 = vst [vmem:[#allocation5 + $0x6e0] sm:$0xff] %v4946
        %4979 = vst [vmem:[#allocation5 + $0x728] sm:$0xff] %v4947
        %4980 = vst [vmem:[#allocation5 + $0x770] sm:$0xff] %v4948
        %4981 = vst [vmem:[#allocation5 + $0x7b8] sm:$0xff] %v4949
        %4982 = vst [vmem:[#allocation5 + $0x800] sm:$0xff] %v4950
        %4983 = vst [vmem:[#allocation5 + $0x848] sm:$0xff] %v4951
        %4984 = vst [vmem:[#allocation5 + $0x890] sm:$0xff] %v4952
        %4985 = vst [vmem:[#allocation5 + $0x8d8] sm:$0xff] %v4953
        %v4986 = vld [vmem:[%s421 + $0x2] sm:$0xff]
        %v4987 = vld [vmem:[%s421 + $0xa] sm:$0xff]
        %v4988 = vld [vmem:[%s421 + $0x1a] sm:$0xff]
        %v4989 = vld [vmem:[%s421 + $0x22] sm:$0xff]
        %v4990 = vld [vmem:[%s421 + $0x32] sm:$0xff]
        %v4991 = vld [vmem:[%s421 + $0x3a] sm:$0xff]
        %v4992 = vld [vmem:[%s421 + $0x4a] sm:$0xff]
        %v4993 = vld [vmem:[%s421 + $0x52] sm:$0xff]
        %v4994 = vld [vmem:[%s421 + $0x62] sm:$0xff]
        %v4995 = vld [vmem:[%s421 + $0x6a] sm:$0xff]
        %v4996 = vld [vmem:[%s421 + $0x7a] sm:$0xff]
        %v4997 = vld [vmem:[%s421 + $0x82] sm:$0xff]
        %v4998 = vld [vmem:[%s421 + $0x92] sm:$0xff]
        %v4999 = vld [vmem:[%s421 + $0x9a] sm:$0xff]
        %v5000 = vld [vmem:[%s421 + $0xaa] sm:$0xff]
        %v5001 = vld [vmem:[%s421 + $0xb2] sm:$0xff]
        %v5002 = vld [vmem:[%s421 + $0xc2] sm:$0xff]
        %v5003 = vld [vmem:[%s421 + $0xca] sm:$0xff]
        %v5004 = vld [vmem:[%s421 + $0xda] sm:$0xff]
        %v5005 = vld [vmem:[%s421 + $0xe2] sm:$0xff]
        %v5006 = vld [vmem:[%s421 + $0xf2] sm:$0xff]
        %v5007 = vld [vmem:[%s421 + $0xfa] sm:$0xff]
        %v5008 = vld [vmem:[%s421 + $0x10a] sm:$0xff]
        %v5009 = vld [vmem:[%s421 + $0x112] sm:$0xff]
        %v5010 = vld [vmem:[%s421 + $0x122] sm:$0xff]
        %v5011 = vld [vmem:[%s421 + $0x12a] sm:$0xff]
        %v5012 = vld [vmem:[%s421 + $0x13a] sm:$0xff]
        %v5013 = vld [vmem:[%s421 + $0x142] sm:$0xff]
        %v5014 = vld [vmem:[%s421 + $0x152] sm:$0xff]
        %v5015 = vld [vmem:[%s421 + $0x15a] sm:$0xff]
        %v5016 = vld [vmem:[%s421 + $0x16a] sm:$0xff]
        %v5017 = vld [vmem:[%s421 + $0x172] sm:$0xff]
        %v5018 = vld [vmem:[%s421 + $0x1b2] sm:$0xff]
        %v5019 = vld [vmem:[%s421 + $0x1ba] sm:$0xff]
        %v5020 = vld [vmem:[%s421 + $0x1ca] sm:$0xff]
        %v5021 = vld [vmem:[%s421 + $0x1d2] sm:$0xff]
        %v5022 = vld [vmem:[%s421 + $0x1e2] sm:$0xff]
        %v5023 = vld [vmem:[%s421 + $0x1ea] sm:$0xff]
        %v5024 = vld [vmem:[%s421 + $0x1fa] sm:$0xff]
        %v5025 = vld [vmem:[%s421 + $0x202] sm:$0xff]
        %v5026 = vld [vmem:[%s421 + $0x212] sm:$0xff]
        %v5027 = vld [vmem:[%s421 + $0x21a] sm:$0xff]
        %v5028 = vld [vmem:[%s421 + $0x22a] sm:$0xff]
        %v5029 = vld [vmem:[%s421 + $0x232] sm:$0xff]
        %v5030 = vld [vmem:[%s421 + $0x242] sm:$0xff]
        %v5031 = vld [vmem:[%s421 + $0x24a] sm:$0xff]
        %v5032 = vld [vmem:[%s421 + $0x25a] sm:$0xff]
        %v5033 = vld [vmem:[%s421 + $0x262] sm:$0xff]
        %v5034 = vld [vmem:[%s421 + $0x272] sm:$0xff]
        %v5035 = vld [vmem:[%s421 + $0x27a] sm:$0xff]
        %v5036 = vld [vmem:[%s421 + $0x28a] sm:$0xff]
        %v5037 = vld [vmem:[%s421 + $0x292] sm:$0xff]
        %v5038 = vld [vmem:[%s421 + $0x2a2] sm:$0xff]
        %v5039 = vld [vmem:[%s421 + $0x2aa] sm:$0xff]
        %v5040 = vld [vmem:[%s421 + $0x2ba] sm:$0xff]
        %v5041 = vld [vmem:[%s421 + $0x2c2] sm:$0xff]
        %v5042 = vld [vmem:[%s421 + $0x2d2] sm:$0xff]
        %v5043 = vld [vmem:[%s421 + $0x2da] sm:$0xff]
        %v5044 = vld [vmem:[%s421 + $0x2ea] sm:$0xff]
        %v5045 = vld [vmem:[%s421 + $0x2f2] sm:$0xff]
        %v5046 = vld [vmem:[%s421 + $0x302] sm:$0xff]
        %v5047 = vld [vmem:[%s421 + $0x30a] sm:$0xff]
        %v5048 = vld [vmem:[%s421 + $0x31a] sm:$0xff]
        %v5049 = vld [vmem:[%s421 + $0x322] sm:$0xff]
        %v5050 = vpack.c.bf16 %v4987, %v4986
        %v5051 = vpack.c.bf16 %v4989, %v4988
        %v5052 = vpack.c.bf16 %v4991, %v4990
        %v5053 = vpack.c.bf16 %v4993, %v4992
        %v5054 = vpack.c.bf16 %v4995, %v4994
        %v5055 = vpack.c.bf16 %v4997, %v4996
        %v5056 = vpack.c.bf16 %v4999, %v4998
        %v5057 = vpack.c.bf16 %v5001, %v5000
        %v5058 = vpack.c.bf16 %v5003, %v5002
        %v5059 = vpack.c.bf16 %v5005, %v5004
        %v5060 = vpack.c.bf16 %v5007, %v5006
        %v5061 = vpack.c.bf16 %v5009, %v5008
        %v5062 = vpack.c.bf16 %v5011, %v5010
        %v5063 = vpack.c.bf16 %v5013, %v5012
        %v5064 = vpack.c.bf16 %v5015, %v5014
        %v5065 = vpack.c.bf16 %v5017, %v5016
        %v5066 = vpack.c.bf16 %v5019, %v5018
        %v5067 = vpack.c.bf16 %v5021, %v5020
        %v5068 = vpack.c.bf16 %v5023, %v5022
        %v5069 = vpack.c.bf16 %v5025, %v5024
        %v5070 = vpack.c.bf16 %v5027, %v5026
        %v5071 = vpack.c.bf16 %v5029, %v5028
        %v5072 = vpack.c.bf16 %v5031, %v5030
        %v5073 = vpack.c.bf16 %v5033, %v5032
        %v5074 = vpack.c.bf16 %v5035, %v5034
        %v5075 = vpack.c.bf16 %v5037, %v5036
        %v5076 = vpack.c.bf16 %v5039, %v5038
        %v5077 = vpack.c.bf16 %v5041, %v5040
        %v5078 = vpack.c.bf16 %v5043, %v5042
        %v5079 = vpack.c.bf16 %v5045, %v5044
        %v5080 = vpack.c.bf16 %v5047, %v5046
        %v5081 = vpack.c.bf16 %v5049, %v5048
        %5082 = vst [vmem:[#allocation5 + $0x28] sm:$0xff] %v5050
        %5083 = vst [vmem:[#allocation5 + $0x70] sm:$0xff] %v5051
        %5084 = vst [vmem:[#allocation5 + $0xb8] sm:$0xff] %v5052
        %5085 = vst [vmem:[#allocation5 + $0x100] sm:$0xff] %v5053
        %5086 = vst [vmem:[#allocation5 + $0x148] sm:$0xff] %v5054
        %5087 = vst [vmem:[#allocation5 + $0x190] sm:$0xff] %v5055
        %5088 = vst [vmem:[#allocation5 + $0x1d8] sm:$0xff] %v5056
        %5089 = vst [vmem:[#allocation5 + $0x220] sm:$0xff] %v5057
        %5090 = vst [vmem:[#allocation5 + $0x268] sm:$0xff] %v5058
        %5091 = vst [vmem:[#allocation5 + $0x2b0] sm:$0xff] %v5059
        %5092 = vst [vmem:[#allocation5 + $0x2f8] sm:$0xff] %v5060
        %5093 = vst [vmem:[#allocation5 + $0x340] sm:$0xff] %v5061
        %5094 = vst [vmem:[#allocation5 + $0x388] sm:$0xff] %v5062
        %5095 = vst [vmem:[#allocation5 + $0x3d0] sm:$0xff] %v5063
        %5096 = vst [vmem:[#allocation5 + $0x418] sm:$0xff] %v5064
        %5097 = vst [vmem:[#allocation5 + $0x460] sm:$0xff] %v5065
        %5098 = vst [vmem:[#allocation5 + $0x4a8] sm:$0xff] %v5066
        %5099 = vst [vmem:[#allocation5 + $0x4f0] sm:$0xff] %v5067
        %5100 = vst [vmem:[#allocation5 + $0x538] sm:$0xff] %v5068
        %5101 = vst [vmem:[#allocation5 + $0x580] sm:$0xff] %v5069
        %5102 = vst [vmem:[#allocation5 + $0x5c8] sm:$0xff] %v5070
        %5103 = vst [vmem:[#allocation5 + $0x610] sm:$0xff] %v5071
        %5104 = vst [vmem:[#allocation5 + $0x658] sm:$0xff] %v5072
        %5105 = vst [vmem:[#allocation5 + $0x6a0] sm:$0xff] %v5073
        %5106 = vst [vmem:[#allocation5 + $0x6e8] sm:$0xff] %v5074
        %5107 = vst [vmem:[#allocation5 + $0x730] sm:$0xff] %v5075
        %5108 = vst [vmem:[#allocation5 + $0x778] sm:$0xff] %v5076
        %5109 = vst [vmem:[#allocation5 + $0x7c0] sm:$0xff] %v5077
        %5110 = vst [vmem:[#allocation5 + $0x808] sm:$0xff] %v5078
        %5111 = vst [vmem:[#allocation5 + $0x850] sm:$0xff] %v5079
        %5112 = vst [vmem:[#allocation5 + $0x898] sm:$0xff] %v5080
        %5113 = vst [vmem:[#allocation5 + $0x8e0] sm:$0xff] %v5081
        %s5114 = scalar_lea.vmem [#allocation4], 48
        %v5115 = vld [vmem:[%s5114] sm:$0xff]
        %v5116 = vld [vmem:[%s5114 + $0x8] sm:$0xff]
        %v5117 = vld [vmem:[%s5114 + $0x18] sm:$0xff]
        %v5118 = vld [vmem:[%s5114 + $0x20] sm:$0xff]
        %v5119 = vld [vmem:[%s5114 + $0x30] sm:$0xff]
        %v5120 = vld [vmem:[%s5114 + $0x38] sm:$0xff]
        %v5121 = vld [vmem:[%s5114 + $0x48] sm:$0xff]
        %v5122 = vld [vmem:[%s5114 + $0x50] sm:$0xff]
        %v5123 = vld [vmem:[%s5114 + $0x60] sm:$0xff]
        %v5124 = vld [vmem:[%s5114 + $0x68] sm:$0xff]
        %v5125 = vld [vmem:[%s5114 + $0x78] sm:$0xff]
        %v5126 = vld [vmem:[%s5114 + $0x80] sm:$0xff]
        %v5127 = vld [vmem:[%s5114 + $0x90] sm:$0xff]
        %v5128 = vld [vmem:[%s5114 + $0x98] sm:$0xff]
        %v5129 = vld [vmem:[%s5114 + $0xa8] sm:$0xff]
        %v5130 = vld [vmem:[%s5114 + $0xb0] sm:$0xff]
        %v5131 = vld [vmem:[%s5114 + $0xc0] sm:$0xff]
        %v5132 = vld [vmem:[%s5114 + $0xc8] sm:$0xff]
        %v5133 = vld [vmem:[%s5114 + $0xd8] sm:$0xff]
        %v5134 = vld [vmem:[%s5114 + $0xe0] sm:$0xff]
        %v5135 = vld [vmem:[%s5114 + $0xf0] sm:$0xff]
        %v5136 = vld [vmem:[%s5114 + $0xf8] sm:$0xff]
        %v5137 = vld [vmem:[%s5114 + $0x108] sm:$0xff]
        %v5138 = vld [vmem:[%s5114 + $0x110] sm:$0xff]
        %v5139 = vld [vmem:[%s5114 + $0x120] sm:$0xff]
        %v5140 = vld [vmem:[%s5114 + $0x128] sm:$0xff]
        %v5141 = vld [vmem:[%s5114 + $0x138] sm:$0xff]
        %v5142 = vld [vmem:[%s5114 + $0x140] sm:$0xff]
        %v5143 = vld [vmem:[%s5114 + $0x150] sm:$0xff]
        %v5144 = vld [vmem:[%s5114 + $0x158] sm:$0xff]
        %v5145 = vld [vmem:[%s5114 + $0x168] sm:$0xff]
        %v5146 = vld [vmem:[%s5114 + $0x170] sm:$0xff]
        %v5147 = vld [vmem:[%s5114 + $0x1b0] sm:$0xff]
        %v5148 = vld [vmem:[%s5114 + $0x1b8] sm:$0xff]
        %v5149 = vld [vmem:[%s5114 + $0x1c8] sm:$0xff]
        %v5150 = vld [vmem:[%s5114 + $0x1d0] sm:$0xff]
        %v5151 = vld [vmem:[%s5114 + $0x1e0] sm:$0xff]
        %v5152 = vld [vmem:[%s5114 + $0x1e8] sm:$0xff]
        %v5153 = vld [vmem:[%s5114 + $0x1f8] sm:$0xff]
        %v5154 = vld [vmem:[%s5114 + $0x200] sm:$0xff]
        %v5155 = vld [vmem:[%s5114 + $0x210] sm:$0xff]
        %v5156 = vld [vmem:[%s5114 + $0x218] sm:$0xff]
        %v5157 = vld [vmem:[%s5114 + $0x228] sm:$0xff]
        %v5158 = vld [vmem:[%s5114 + $0x230] sm:$0xff]
        %v5159 = vld [vmem:[%s5114 + $0x240] sm:$0xff]
        %v5160 = vld [vmem:[%s5114 + $0x248] sm:$0xff]
        %v5161 = vld [vmem:[%s5114 + $0x258] sm:$0xff]
        %v5162 = vld [vmem:[%s5114 + $0x260] sm:$0xff]
        %v5163 = vld [vmem:[%s5114 + $0x270] sm:$0xff]
        %v5164 = vld [vmem:[%s5114 + $0x278] sm:$0xff]
        %v5165 = vld [vmem:[%s5114 + $0x288] sm:$0xff]
        %v5166 = vld [vmem:[%s5114 + $0x290] sm:$0xff]
        %v5167 = vld [vmem:[%s5114 + $0x2a0] sm:$0xff]
        %v5168 = vld [vmem:[%s5114 + $0x2a8] sm:$0xff]
        %v5169 = vld [vmem:[%s5114 + $0x2b8] sm:$0xff]
        %v5170 = vld [vmem:[%s5114 + $0x2c0] sm:$0xff]
        %v5171 = vld [vmem:[%s5114 + $0x2d0] sm:$0xff]
        %v5172 = vld [vmem:[%s5114 + $0x2d8] sm:$0xff]
        %v5173 = vld [vmem:[%s5114 + $0x2e8] sm:$0xff]
        %v5174 = vld [vmem:[%s5114 + $0x2f0] sm:$0xff]
        %v5175 = vld [vmem:[%s5114 + $0x300] sm:$0xff]
        %v5176 = vld [vmem:[%s5114 + $0x308] sm:$0xff]
        %v5177 = vld [vmem:[%s5114 + $0x318] sm:$0xff]
        %v5178 = vld [vmem:[%s5114 + $0x320] sm:$0xff]
        %v5179 = vpack.c.bf16 %v5116, %v5115
        %v5180 = vpack.c.bf16 %v5118, %v5117
        %v5181 = vpack.c.bf16 %v5120, %v5119
        %v5182 = vpack.c.bf16 %v5122, %v5121
        %v5183 = vpack.c.bf16 %v5124, %v5123
        %v5184 = vpack.c.bf16 %v5126, %v5125
        %v5185 = vpack.c.bf16 %v5128, %v5127
        %v5186 = vpack.c.bf16 %v5130, %v5129
        %v5187 = vpack.c.bf16 %v5132, %v5131
        %v5188 = vpack.c.bf16 %v5134, %v5133
        %v5189 = vpack.c.bf16 %v5136, %v5135
        %v5190 = vpack.c.bf16 %v5138, %v5137
        %v5191 = vpack.c.bf16 %v5140, %v5139
        %v5192 = vpack.c.bf16 %v5142, %v5141
        %v5193 = vpack.c.bf16 %v5144, %v5143
        %v5194 = vpack.c.bf16 %v5146, %v5145
        %v5195 = vpack.c.bf16 %v5148, %v5147
        %v5196 = vpack.c.bf16 %v5150, %v5149
        %v5197 = vpack.c.bf16 %v5152, %v5151
        %v5198 = vpack.c.bf16 %v5154, %v5153
        %v5199 = vpack.c.bf16 %v5156, %v5155
        %v5200 = vpack.c.bf16 %v5158, %v5157
        %v5201 = vpack.c.bf16 %v5160, %v5159
        %v5202 = vpack.c.bf16 %v5162, %v5161
        %v5203 = vpack.c.bf16 %v5164, %v5163
        %v5204 = vpack.c.bf16 %v5166, %v5165
        %v5205 = vpack.c.bf16 %v5168, %v5167
        %v5206 = vpack.c.bf16 %v5170, %v5169
        %v5207 = vpack.c.bf16 %v5172, %v5171
        %v5208 = vpack.c.bf16 %v5174, %v5173
        %v5209 = vpack.c.bf16 %v5176, %v5175
        %v5210 = vpack.c.bf16 %v5178, %v5177
        %5211 = vst [vmem:[#allocation5 + $0x30] sm:$0xff] %v5179
        %5212 = vst [vmem:[#allocation5 + $0x78] sm:$0xff] %v5180
        %5213 = vst [vmem:[#allocation5 + $0xc0] sm:$0xff] %v5181
        %5214 = vst [vmem:[#allocation5 + $0x108] sm:$0xff] %v5182
        %5215 = vst [vmem:[#allocation5 + $0x150] sm:$0xff] %v5183
        %5216 = vst [vmem:[#allocation5 + $0x198] sm:$0xff] %v5184
        %5217 = vst [vmem:[#allocation5 + $0x1e0] sm:$0xff] %v5185
        %5218 = vst [vmem:[#allocation5 + $0x228] sm:$0xff] %v5186
        %5219 = vst [vmem:[#allocation5 + $0x270] sm:$0xff] %v5187
        %5220 = vst [vmem:[#allocation5 + $0x2b8] sm:$0xff] %v5188
        %5221 = vst [vmem:[#allocation5 + $0x300] sm:$0xff] %v5189
        %5222 = vst [vmem:[#allocation5 + $0x348] sm:$0xff] %v5190
        %5223 = vst [vmem:[#allocation5 + $0x390] sm:$0xff] %v5191
        %5224 = vst [vmem:[#allocation5 + $0x3d8] sm:$0xff] %v5192
        %5225 = vst [vmem:[#allocation5 + $0x420] sm:$0xff] %v5193
        %5226 = vst [vmem:[#allocation5 + $0x468] sm:$0xff] %v5194
        %5227 = vst [vmem:[#allocation5 + $0x4b0] sm:$0xff] %v5195
        %5228 = vst [vmem:[#allocation5 + $0x4f8] sm:$0xff] %v5196
        %5229 = vst [vmem:[#allocation5 + $0x540] sm:$0xff] %v5197
        %5230 = vst [vmem:[#allocation5 + $0x588] sm:$0xff] %v5198
        %5231 = vst [vmem:[#allocation5 + $0x5d0] sm:$0xff] %v5199
        %5232 = vst [vmem:[#allocation5 + $0x618] sm:$0xff] %v5200
        %5233 = vst [vmem:[#allocation5 + $0x660] sm:$0xff] %v5201
        %5234 = vst [vmem:[#allocation5 + $0x6a8] sm:$0xff] %v5202
        %5235 = vst [vmem:[#allocation5 + $0x6f0] sm:$0xff] %v5203
        %5236 = vst [vmem:[#allocation5 + $0x738] sm:$0xff] %v5204
        %5237 = vst [vmem:[#allocation5 + $0x780] sm:$0xff] %v5205
        %5238 = vst [vmem:[#allocation5 + $0x7c8] sm:$0xff] %v5206
        %5239 = vst [vmem:[#allocation5 + $0x810] sm:$0xff] %v5207
        %5240 = vst [vmem:[#allocation5 + $0x858] sm:$0xff] %v5208
        %5241 = vst [vmem:[#allocation5 + $0x8a0] sm:$0xff] %v5209
        %5242 = vst [vmem:[#allocation5 + $0x8e8] sm:$0xff] %v5210
        %v5243 = vld [vmem:[%s5114 + $0x1] sm:$0xff]
        %v5244 = vld [vmem:[%s5114 + $0x9] sm:$0xff]
        %v5245 = vld [vmem:[%s5114 + $0x19] sm:$0xff]
        %v5246 = vld [vmem:[%s5114 + $0x21] sm:$0xff]
        %v5247 = vld [vmem:[%s5114 + $0x31] sm:$0xff]
        %v5248 = vld [vmem:[%s5114 + $0x39] sm:$0xff]
        %v5249 = vld [vmem:[%s5114 + $0x49] sm:$0xff]
        %v5250 = vld [vmem:[%s5114 + $0x51] sm:$0xff]
        %v5251 = vld [vmem:[%s5114 + $0x61] sm:$0xff]
        %v5252 = vld [vmem:[%s5114 + $0x69] sm:$0xff]
        %v5253 = vld [vmem:[%s5114 + $0x79] sm:$0xff]
        %v5254 = vld [vmem:[%s5114 + $0x81] sm:$0xff]
        %v5255 = vld [vmem:[%s5114 + $0x91] sm:$0xff]
        %v5256 = vld [vmem:[%s5114 + $0x99] sm:$0xff]
        %v5257 = vld [vmem:[%s5114 + $0xa9] sm:$0xff]
        %v5258 = vld [vmem:[%s5114 + $0xb1] sm:$0xff]
        %v5259 = vld [vmem:[%s5114 + $0xc1] sm:$0xff]
        %v5260 = vld [vmem:[%s5114 + $0xc9] sm:$0xff]
        %v5261 = vld [vmem:[%s5114 + $0xd9] sm:$0xff]
        %v5262 = vld [vmem:[%s5114 + $0xe1] sm:$0xff]
        %v5263 = vld [vmem:[%s5114 + $0xf1] sm:$0xff]
        %v5264 = vld [vmem:[%s5114 + $0xf9] sm:$0xff]
        %v5265 = vld [vmem:[%s5114 + $0x109] sm:$0xff]
        %v5266 = vld [vmem:[%s5114 + $0x111] sm:$0xff]
        %v5267 = vld [vmem:[%s5114 + $0x121] sm:$0xff]
        %v5268 = vld [vmem:[%s5114 + $0x129] sm:$0xff]
        %v5269 = vld [vmem:[%s5114 + $0x139] sm:$0xff]
        %v5270 = vld [vmem:[%s5114 + $0x141] sm:$0xff]
        %v5271 = vld [vmem:[%s5114 + $0x151] sm:$0xff]
        %v5272 = vld [vmem:[%s5114 + $0x159] sm:$0xff]
        %v5273 = vld [vmem:[%s5114 + $0x169] sm:$0xff]
        %v5274 = vld [vmem:[%s5114 + $0x171] sm:$0xff]
        %v5275 = vld [vmem:[%s5114 + $0x1b1] sm:$0xff]
        %v5276 = vld [vmem:[%s5114 + $0x1b9] sm:$0xff]
        %v5277 = vld [vmem:[%s5114 + $0x1c9] sm:$0xff]
        %v5278 = vld [vmem:[%s5114 + $0x1d1] sm:$0xff]
        %v5279 = vld [vmem:[%s5114 + $0x1e1] sm:$0xff]
        %v5280 = vld [vmem:[%s5114 + $0x1e9] sm:$0xff]
        %v5281 = vld [vmem:[%s5114 + $0x1f9] sm:$0xff]
        %v5282 = vld [vmem:[%s5114 + $0x201] sm:$0xff]
        %v5283 = vld [vmem:[%s5114 + $0x211] sm:$0xff]
        %v5284 = vld [vmem:[%s5114 + $0x219] sm:$0xff]
        %v5285 = vld [vmem:[%s5114 + $0x229] sm:$0xff]
        %v5286 = vld [vmem:[%s5114 + $0x231] sm:$0xff]
        %v5287 = vld [vmem:[%s5114 + $0x241] sm:$0xff]
        %v5288 = vld [vmem:[%s5114 + $0x249] sm:$0xff]
        %v5289 = vld [vmem:[%s5114 + $0x259] sm:$0xff]
        %v5290 = vld [vmem:[%s5114 + $0x261] sm:$0xff]
        %v5291 = vld [vmem:[%s5114 + $0x271] sm:$0xff]
        %v5292 = vld [vmem:[%s5114 + $0x279] sm:$0xff]
        %v5293 = vld [vmem:[%s5114 + $0x289] sm:$0xff]
        %v5294 = vld [vmem:[%s5114 + $0x291] sm:$0xff]
        %v5295 = vld [vmem:[%s5114 + $0x2a1] sm:$0xff]
        %v5296 = vld [vmem:[%s5114 + $0x2a9] sm:$0xff]
        %v5297 = vld [vmem:[%s5114 + $0x2b9] sm:$0xff]
        %v5298 = vld [vmem:[%s5114 + $0x2c1] sm:$0xff]
        %v5299 = vld [vmem:[%s5114 + $0x2d1] sm:$0xff]
        %v5300 = vld [vmem:[%s5114 + $0x2d9] sm:$0xff]
        %v5301 = vld [vmem:[%s5114 + $0x2e9] sm:$0xff]
        %v5302 = vld [vmem:[%s5114 + $0x2f1] sm:$0xff]
        %v5303 = vld [vmem:[%s5114 + $0x301] sm:$0xff]
        %v5304 = vld [vmem:[%s5114 + $0x309] sm:$0xff]
        %v5305 = vld [vmem:[%s5114 + $0x319] sm:$0xff]
        %v5306 = vld [vmem:[%s5114 + $0x321] sm:$0xff]
        %v5307 = vpack.c.bf16 %v5244, %v5243
        %v5308 = vpack.c.bf16 %v5246, %v5245
        %v5309 = vpack.c.bf16 %v5248, %v5247
        %v5310 = vpack.c.bf16 %v5250, %v5249
        %v5311 = vpack.c.bf16 %v5252, %v5251
        %v5312 = vpack.c.bf16 %v5254, %v5253
        %v5313 = vpack.c.bf16 %v5256, %v5255
        %v5314 = vpack.c.bf16 %v5258, %v5257
        %v5315 = vpack.c.bf16 %v5260, %v5259
        %v5316 = vpack.c.bf16 %v5262, %v5261
        %v5317 = vpack.c.bf16 %v5264, %v5263
        %v5318 = vpack.c.bf16 %v5266, %v5265
        %v5319 = vpack.c.bf16 %v5268, %v5267
        %v5320 = vpack.c.bf16 %v5270, %v5269
        %v5321 = vpack.c.bf16 %v5272, %v5271
        %v5322 = vpack.c.bf16 %v5274, %v5273
        %v5323 = vpack.c.bf16 %v5276, %v5275
        %v5324 = vpack.c.bf16 %v5278, %v5277
        %v5325 = vpack.c.bf16 %v5280, %v5279
        %v5326 = vpack.c.bf16 %v5282, %v5281
        %v5327 = vpack.c.bf16 %v5284, %v5283
        %v5328 = vpack.c.bf16 %v5286, %v5285
        %v5329 = vpack.c.bf16 %v5288, %v5287
        %v5330 = vpack.c.bf16 %v5290, %v5289
        %v5331 = vpack.c.bf16 %v5292, %v5291
        %v5332 = vpack.c.bf16 %v5294, %v5293
        %v5333 = vpack.c.bf16 %v5296, %v5295
        %v5334 = vpack.c.bf16 %v5298, %v5297
        %v5335 = vpack.c.bf16 %v5300, %v5299
        %v5336 = vpack.c.bf16 %v5302, %v5301
        %v5337 = vpack.c.bf16 %v5304, %v5303
        %v5338 = vpack.c.bf16 %v5306, %v5305
        %5339 = vst [vmem:[#allocation5 + $0x38] sm:$0xff] %v5307
        %5340 = vst [vmem:[#allocation5 + $0x80] sm:$0xff] %v5308
        %5341 = vst [vmem:[#allocation5 + $0xc8] sm:$0xff] %v5309
        %5342 = vst [vmem:[#allocation5 + $0x110] sm:$0xff] %v5310
        %5343 = vst [vmem:[#allocation5 + $0x158] sm:$0xff] %v5311
        %5344 = vst [vmem:[#allocation5 + $0x1a0] sm:$0xff] %v5312
        %5345 = vst [vmem:[#allocation5 + $0x1e8] sm:$0xff] %v5313
        %5346 = vst [vmem:[#allocation5 + $0x230] sm:$0xff] %v5314
        %5347 = vst [vmem:[#allocation5 + $0x278] sm:$0xff] %v5315
        %5348 = vst [vmem:[#allocation5 + $0x2c0] sm:$0xff] %v5316
        %5349 = vst [vmem:[#allocation5 + $0x308] sm:$0xff] %v5317
        %5350 = vst [vmem:[#allocation5 + $0x350] sm:$0xff] %v5318
        %5351 = vst [vmem:[#allocation5 + $0x398] sm:$0xff] %v5319
        %5352 = vst [vmem:[#allocation5 + $0x3e0] sm:$0xff] %v5320
        %5353 = vst [vmem:[#allocation5 + $0x428] sm:$0xff] %v5321
        %5354 = vst [vmem:[#allocation5 + $0x470] sm:$0xff] %v5322
        %5355 = vst [vmem:[#allocation5 + $0x4b8] sm:$0xff] %v5323
        %5356 = vst [vmem:[#allocation5 + $0x500] sm:$0xff] %v5324
        %5357 = vst [vmem:[#allocation5 + $0x548] sm:$0xff] %v5325
        %5358 = vst [vmem:[#allocation5 + $0x590] sm:$0xff] %v5326
        %5359 = vst [vmem:[#allocation5 + $0x5d8] sm:$0xff] %v5327
        %5360 = vst [vmem:[#allocation5 + $0x620] sm:$0xff] %v5328
        %5361 = vst [vmem:[#allocation5 + $0x668] sm:$0xff] %v5329
        %5362 = vst [vmem:[#allocation5 + $0x6b0] sm:$0xff] %v5330
        %5363 = vst [vmem:[#allocation5 + $0x6f8] sm:$0xff] %v5331
        %5364 = vst [vmem:[#allocation5 + $0x740] sm:$0xff] %v5332
        %5365 = vst [vmem:[#allocation5 + $0x788] sm:$0xff] %v5333
        %5366 = vst [vmem:[#allocation5 + $0x7d0] sm:$0xff] %v5334
        %5367 = vst [vmem:[#allocation5 + $0x818] sm:$0xff] %v5335
        %5368 = vst [vmem:[#allocation5 + $0x860] sm:$0xff] %v5336
        %5369 = vst [vmem:[#allocation5 + $0x8a8] sm:$0xff] %v5337
        %5370 = vst [vmem:[#allocation5 + $0x8f0] sm:$0xff] %v5338
        %v5371 = vld [vmem:[%s5114 + $0x2] sm:$0xff]
        %v5372 = vld [vmem:[%s5114 + $0xa] sm:$0xff]
        %v5373 = vld [vmem:[%s5114 + $0x1a] sm:$0xff]
        %v5374 = vld [vmem:[%s5114 + $0x22] sm:$0xff]
        %v5375 = vld [vmem:[%s5114 + $0x32] sm:$0xff]
        %v5376 = vld [vmem:[%s5114 + $0x3a] sm:$0xff]
        %v5377 = vld [vmem:[%s5114 + $0x4a] sm:$0xff]
        %v5378 = vld [vmem:[%s5114 + $0x52] sm:$0xff]
        %v5379 = vld [vmem:[%s5114 + $0x62] sm:$0xff]
        %v5380 = vld [vmem:[%s5114 + $0x6a] sm:$0xff]
        %v5381 = vld [vmem:[%s5114 + $0x7a] sm:$0xff]
        %v5382 = vld [vmem:[%s5114 + $0x82] sm:$0xff]
        %v5383 = vld [vmem:[%s5114 + $0x92] sm:$0xff]
        %v5384 = vld [vmem:[%s5114 + $0x9a] sm:$0xff]
        %v5385 = vld [vmem:[%s5114 + $0xaa] sm:$0xff]
        %v5386 = vld [vmem:[%s5114 + $0xb2] sm:$0xff]
        %v5387 = vld [vmem:[%s5114 + $0xc2] sm:$0xff]
        %v5388 = vld [vmem:[%s5114 + $0xca] sm:$0xff]
        %v5389 = vld [vmem:[%s5114 + $0xda] sm:$0xff]
        %v5390 = vld [vmem:[%s5114 + $0xe2] sm:$0xff]
        %v5391 = vld [vmem:[%s5114 + $0xf2] sm:$0xff]
        %v5392 = vld [vmem:[%s5114 + $0xfa] sm:$0xff]
        %v5393 = vld [vmem:[%s5114 + $0x10a] sm:$0xff]
        %v5394 = vld [vmem:[%s5114 + $0x112] sm:$0xff]
        %v5395 = vld [vmem:[%s5114 + $0x122] sm:$0xff]
        %v5396 = vld [vmem:[%s5114 + $0x12a] sm:$0xff]
        %v5397 = vld [vmem:[%s5114 + $0x13a] sm:$0xff]
        %v5398 = vld [vmem:[%s5114 + $0x142] sm:$0xff]
        %v5399 = vld [vmem:[%s5114 + $0x152] sm:$0xff]
        %v5400 = vld [vmem:[%s5114 + $0x15a] sm:$0xff]
        %v5401 = vld [vmem:[%s5114 + $0x16a] sm:$0xff]
        %v5402 = vld [vmem:[%s5114 + $0x172] sm:$0xff]
        %v5403 = vld [vmem:[%s5114 + $0x1b2] sm:$0xff]
        %v5404 = vld [vmem:[%s5114 + $0x1ba] sm:$0xff]
        %v5405 = vld [vmem:[%s5114 + $0x1ca] sm:$0xff]
        %v5406 = vld [vmem:[%s5114 + $0x1d2] sm:$0xff]
        %v5407 = vld [vmem:[%s5114 + $0x1e2] sm:$0xff]
        %v5408 = vld [vmem:[%s5114 + $0x1ea] sm:$0xff]
        %v5409 = vld [vmem:[%s5114 + $0x1fa] sm:$0xff]
        %v5410 = vld [vmem:[%s5114 + $0x202] sm:$0xff]
        %v5411 = vld [vmem:[%s5114 + $0x212] sm:$0xff]
        %v5412 = vld [vmem:[%s5114 + $0x21a] sm:$0xff]
        %v5413 = vld [vmem:[%s5114 + $0x22a] sm:$0xff]
        %v5414 = vld [vmem:[%s5114 + $0x232] sm:$0xff]
        %v5415 = vld [vmem:[%s5114 + $0x242] sm:$0xff]
        %v5416 = vld [vmem:[%s5114 + $0x24a] sm:$0xff]
        %v5417 = vld [vmem:[%s5114 + $0x25a] sm:$0xff]
        %v5418 = vld [vmem:[%s5114 + $0x262] sm:$0xff]
        %v5419 = vld [vmem:[%s5114 + $0x272] sm:$0xff]
        %v5420 = vld [vmem:[%s5114 + $0x27a] sm:$0xff]
        %v5421 = vld [vmem:[%s5114 + $0x28a] sm:$0xff]
        %v5422 = vld [vmem:[%s5114 + $0x292] sm:$0xff]
        %v5423 = vld [vmem:[%s5114 + $0x2a2] sm:$0xff]
        %v5424 = vld [vmem:[%s5114 + $0x2aa] sm:$0xff]
        %v5425 = vld [vmem:[%s5114 + $0x2ba] sm:$0xff]
        %v5426 = vld [vmem:[%s5114 + $0x2c2] sm:$0xff]
        %v5427 = vld [vmem:[%s5114 + $0x2d2] sm:$0xff]
        %v5428 = vld [vmem:[%s5114 + $0x2da] sm:$0xff]
        %v5429 = vld [vmem:[%s5114 + $0x2ea] sm:$0xff]
        %v5430 = vld [vmem:[%s5114 + $0x2f2] sm:$0xff]
        %v5431 = vld [vmem:[%s5114 + $0x302] sm:$0xff]
        %v5432 = vld [vmem:[%s5114 + $0x30a] sm:$0xff]
        %v5433 = vld [vmem:[%s5114 + $0x31a] sm:$0xff]
        %v5434 = vld [vmem:[%s5114 + $0x322] sm:$0xff]
        %v5435 = vpack.c.bf16 %v5372, %v5371
        %v5436 = vpack.c.bf16 %v5374, %v5373
        %v5437 = vpack.c.bf16 %v5376, %v5375
        %v5438 = vpack.c.bf16 %v5378, %v5377
        %v5439 = vpack.c.bf16 %v5380, %v5379
        %v5440 = vpack.c.bf16 %v5382, %v5381
        %v5441 = vpack.c.bf16 %v5384, %v5383
        %v5442 = vpack.c.bf16 %v5386, %v5385
        %v5443 = vpack.c.bf16 %v5388, %v5387
        %v5444 = vpack.c.bf16 %v5390, %v5389
        %v5445 = vpack.c.bf16 %v5392, %v5391
        %v5446 = vpack.c.bf16 %v5394, %v5393
        %v5447 = vpack.c.bf16 %v5396, %v5395
        %v5448 = vpack.c.bf16 %v5398, %v5397
        %v5449 = vpack.c.bf16 %v5400, %v5399
        %v5450 = vpack.c.bf16 %v5402, %v5401
        %v5451 = vpack.c.bf16 %v5404, %v5403
        %v5452 = vpack.c.bf16 %v5406, %v5405
        %v5453 = vpack.c.bf16 %v5408, %v5407
        %v5454 = vpack.c.bf16 %v5410, %v5409
        %v5455 = vpack.c.bf16 %v5412, %v5411
        %v5456 = vpack.c.bf16 %v5414, %v5413
        %v5457 = vpack.c.bf16 %v5416, %v5415
        %v5458 = vpack.c.bf16 %v5418, %v5417
        %v5459 = vpack.c.bf16 %v5420, %v5419
        %v5460 = vpack.c.bf16 %v5422, %v5421
        %v5461 = vpack.c.bf16 %v5424, %v5423
        %v5462 = vpack.c.bf16 %v5426, %v5425
        %v5463 = vpack.c.bf16 %v5428, %v5427
        %v5464 = vpack.c.bf16 %v5430, %v5429
        %v5465 = vpack.c.bf16 %v5432, %v5431
        %v5466 = vpack.c.bf16 %v5434, %v5433
        %5467 = vst [vmem:[#allocation5 + $0x40] sm:$0xff] %v5435
        %5468 = vst [vmem:[#allocation5 + $0x88] sm:$0xff] %v5436
        %5469 = vst [vmem:[#allocation5 + $0xd0] sm:$0xff] %v5437
        %5470 = vst [vmem:[#allocation5 + $0x118] sm:$0xff] %v5438
        %5471 = vst [vmem:[#allocation5 + $0x160] sm:$0xff] %v5439
        %5472 = vst [vmem:[#allocation5 + $0x1a8] sm:$0xff] %v5440
        %5473 = vst [vmem:[#allocation5 + $0x1f0] sm:$0xff] %v5441
        %5474 = vst [vmem:[#allocation5 + $0x238] sm:$0xff] %v5442
        %5475 = vst [vmem:[#allocation5 + $0x280] sm:$0xff] %v5443
        %5476 = vst [vmem:[#allocation5 + $0x2c8] sm:$0xff] %v5444
        %5477 = vst [vmem:[#allocation5 + $0x310] sm:$0xff] %v5445
        %5478 = vst [vmem:[#allocation5 + $0x358] sm:$0xff] %v5446
        %5479 = vst [vmem:[#allocation5 + $0x3a0] sm:$0xff] %v5447
        %5480 = vst [vmem:[#allocation5 + $0x3e8] sm:$0xff] %v5448
        %5481 = vst [vmem:[#allocation5 + $0x430] sm:$0xff] %v5449
        %5482 = vst [vmem:[#allocation5 + $0x478] sm:$0xff] %v5450
        %5483 = vst [vmem:[#allocation5 + $0x4c0] sm:$0xff] %v5451
        %5484 = vst [vmem:[#allocation5 + $0x508] sm:$0xff] %v5452
        %5485 = vst [vmem:[#allocation5 + $0x550] sm:$0xff] %v5453
        %5486 = vst [vmem:[#allocation5 + $0x598] sm:$0xff] %v5454
        %5487 = vst [vmem:[#allocation5 + $0x5e0] sm:$0xff] %v5455
        %5488 = vst [vmem:[#allocation5 + $0x628] sm:$0xff] %v5456
        %5489 = vst [vmem:[#allocation5 + $0x670] sm:$0xff] %v5457
        %5490 = vst [vmem:[#allocation5 + $0x6b8] sm:$0xff] %v5458
        %5491 = vst [vmem:[#allocation5 + $0x700] sm:$0xff] %v5459
        %5492 = vst [vmem:[#allocation5 + $0x748] sm:$0xff] %v5460
        %5493 = vst [vmem:[#allocation5 + $0x790] sm:$0xff] %v5461
        %5494 = vst [vmem:[#allocation5 + $0x7d8] sm:$0xff] %v5462
        %5495 = vst [vmem:[#allocation5 + $0x820] sm:$0xff] %v5463
        %5496 = vst [vmem:[#allocation5 + $0x868] sm:$0xff] %v5464
        %5497 = vst [vmem:[#allocation5 + $0x8b0] sm:$0xff] %v5465
        %5498 = vst [vmem:[#allocation5 + $0x8f8] sm:$0xff] %v5466
        %v5499 = vld [vmem:[#allocation5] sm:$0xff]
        %v5500 = vld [vmem:[#allocation5 + $0x8] sm:$0xff]
        %v5501 = vld [vmem:[#allocation5 + $0x10] sm:$0xff]
        %v5502 = vld [vmem:[#allocation5 + $0x18] sm:$0xff]
        %v5503 = vld [vmem:[#allocation5 + $0x20] sm:$0xff]
        %v5504 = vld [vmem:[#allocation5 + $0x28] sm:$0xff]
        %v5505 = vld [vmem:[#allocation5 + $0x30] sm:$0xff]
        %v5506 = vld [vmem:[#allocation5 + $0x38] sm:$0xff]
        %v5507 = vld [vmem:[#allocation5 + $0x40] sm:$0xff]
        %v5508 = vld [vmem:[#allocation5 + $0x48] sm:$0xff]
        %v5509 = vld [vmem:[#allocation5 + $0x50] sm:$0xff]
        %v5510 = vld [vmem:[#allocation5 + $0x58] sm:$0xff]
        %v5511 = vld [vmem:[#allocation5 + $0x60] sm:$0xff]
        %v5512 = vld [vmem:[#allocation5 + $0x68] sm:$0xff]
        %v5513 = vld [vmem:[#allocation5 + $0x70] sm:$0xff]
        %v5514 = vld [vmem:[#allocation5 + $0x78] sm:$0xff]
        %v5515 = vld [vmem:[#allocation5 + $0x80] sm:$0xff]
        %v5516 = vld [vmem:[#allocation5 + $0x88] sm:$0xff]
        %v5517 = vld [vmem:[#allocation5 + $0x90] sm:$0xff]
        %v5518 = vld [vmem:[#allocation5 + $0x98] sm:$0xff]
        %v5519 = vld [vmem:[#allocation5 + $0xa0] sm:$0xff]
        %v5520 = vld [vmem:[#allocation5 + $0xa8] sm:$0xff]
        %v5521 = vld [vmem:[#allocation5 + $0xb0] sm:$0xff]
        %v5522 = vld [vmem:[#allocation5 + $0xb8] sm:$0xff]
        %v5523 = vld [vmem:[#allocation5 + $0xc0] sm:$0xff]
        %v5524 = vld [vmem:[#allocation5 + $0xc8] sm:$0xff]
        %v5525 = vld [vmem:[#allocation5 + $0xd0] sm:$0xff]
        %v5526 = vld [vmem:[#allocation5 + $0xd8] sm:$0xff]
        %v5527 = vld [vmem:[#allocation5 + $0xe0] sm:$0xff]
        %v5528 = vld [vmem:[#allocation5 + $0xe8] sm:$0xff]
        %v5529 = vld [vmem:[#allocation5 + $0xf0] sm:$0xff]
        %v5530 = vld [vmem:[#allocation5 + $0xf8] sm:$0xff]
        %v5531 = vld [vmem:[#allocation5 + $0x100] sm:$0xff]
        %v5532 = vld [vmem:[#allocation5 + $0x108] sm:$0xff]
        %v5533 = vld [vmem:[#allocation5 + $0x110] sm:$0xff]
        %v5534 = vld [vmem:[#allocation5 + $0x118] sm:$0xff]
        %v5535 = vld [vmem:[#allocation5 + $0x120] sm:$0xff]
        %v5536 = vld [vmem:[#allocation5 + $0x128] sm:$0xff]
        %v5537 = vld [vmem:[#allocation5 + $0x130] sm:$0xff]
        %v5538 = vld [vmem:[#allocation5 + $0x138] sm:$0xff]
        %v5539 = vld [vmem:[#allocation5 + $0x140] sm:$0xff]
        %v5540 = vld [vmem:[#allocation5 + $0x148] sm:$0xff]
        %v5541 = vld [vmem:[#allocation5 + $0x150] sm:$0xff]
        %v5542 = vld [vmem:[#allocation5 + $0x158] sm:$0xff]
        %v5543 = vld [vmem:[#allocation5 + $0x160] sm:$0xff]
        %v5544 = vld [vmem:[#allocation5 + $0x168] sm:$0xff]
        %v5545 = vld [vmem:[#allocation5 + $0x170] sm:$0xff]
        %v5546 = vld [vmem:[#allocation5 + $0x178] sm:$0xff]
        %v5547 = vld [vmem:[#allocation5 + $0x180] sm:$0xff]
        %v5548 = vld [vmem:[#allocation5 + $0x188] sm:$0xff]
        %v5549 = vld [vmem:[#allocation5 + $0x190] sm:$0xff]
        %v5550 = vld [vmem:[#allocation5 + $0x198] sm:$0xff]
        %v5551 = vld [vmem:[#allocation5 + $0x1a0] sm:$0xff]
        %v5552 = vld [vmem:[#allocation5 + $0x1a8] sm:$0xff]
        %v5553 = vld [vmem:[#allocation5 + $0x1b0] sm:$0xff]
        %v5554 = vld [vmem:[#allocation5 + $0x1b8] sm:$0xff]
        %v5555 = vld [vmem:[#allocation5 + $0x1c0] sm:$0xff]
        %v5556 = vld [vmem:[#allocation5 + $0x1c8] sm:$0xff]
        %v5557 = vld [vmem:[#allocation5 + $0x1d0] sm:$0xff]
        %v5558 = vld [vmem:[#allocation5 + $0x1d8] sm:$0xff]
        %v5559 = vld [vmem:[#allocation5 + $0x1e0] sm:$0xff]
        %v5560 = vld [vmem:[#allocation5 + $0x1e8] sm:$0xff]
        %v5561 = vld [vmem:[#allocation5 + $0x1f0] sm:$0xff]
        %v5562 = vld [vmem:[#allocation5 + $0x1f8] sm:$0xff]
        %v5563 = vld [vmem:[#allocation5 + $0x200] sm:$0xff]
        %v5564 = vld [vmem:[#allocation5 + $0x208] sm:$0xff]
        %v5565 = vld [vmem:[#allocation5 + $0x210] sm:$0xff]
        %v5566 = vld [vmem:[#allocation5 + $0x218] sm:$0xff]
        %v5567 = vld [vmem:[#allocation5 + $0x220] sm:$0xff]
        %v5568 = vld [vmem:[#allocation5 + $0x228] sm:$0xff]
        %v5569 = vld [vmem:[#allocation5 + $0x230] sm:$0xff]
        %v5570 = vld [vmem:[#allocation5 + $0x238] sm:$0xff]
        %v5571 = vld [vmem:[#allocation5 + $0x240] sm:$0xff]
        %v5572 = vld [vmem:[#allocation5 + $0x248] sm:$0xff]
        %v5573 = vld [vmem:[#allocation5 + $0x250] sm:$0xff]
        %v5574 = vld [vmem:[#allocation5 + $0x258] sm:$0xff]
        %v5575 = vld [vmem:[#allocation5 + $0x260] sm:$0xff]
        %v5576 = vld [vmem:[#allocation5 + $0x268] sm:$0xff]
        %v5577 = vld [vmem:[#allocation5 + $0x270] sm:$0xff]
        %v5578 = vld [vmem:[#allocation5 + $0x278] sm:$0xff]
        %v5579 = vld [vmem:[#allocation5 + $0x280] sm:$0xff]
        %v5580 = vld [vmem:[#allocation5 + $0x288] sm:$0xff]
        %v5581 = vld [vmem:[#allocation5 + $0x290] sm:$0xff]
        %v5582 = vld [vmem:[#allocation5 + $0x298] sm:$0xff]
        %v5583 = vld [vmem:[#allocation5 + $0x2a0] sm:$0xff]
        %v5584 = vld [vmem:[#allocation5 + $0x2a8] sm:$0xff]
        %v5585 = vld [vmem:[#allocation5 + $0x2b0] sm:$0xff]
        %v5586 = vld [vmem:[#allocation5 + $0x2b8] sm:$0xff]
        %v5587 = vld [vmem:[#allocation5 + $0x2c0] sm:$0xff]
        %v5588 = vld [vmem:[#allocation5 + $0x2c8] sm:$0xff]
        %v5589 = vld [vmem:[#allocation5 + $0x2d0] sm:$0xff]
        %v5590 = vld [vmem:[#allocation5 + $0x2d8] sm:$0xff]
        %v5591 = vld [vmem:[#allocation5 + $0x2e0] sm:$0xff]
        %v5592 = vld [vmem:[#allocation5 + $0x2e8] sm:$0xff]
        %v5593 = vld [vmem:[#allocation5 + $0x2f0] sm:$0xff]
        %v5594 = vld [vmem:[#allocation5 + $0x2f8] sm:$0xff]
        %v5595 = vld [vmem:[#allocation5 + $0x300] sm:$0xff]
        %v5596 = vld [vmem:[#allocation5 + $0x308] sm:$0xff]
        %v5597 = vld [vmem:[#allocation5 + $0x310] sm:$0xff]
        %v5598 = vld [vmem:[#allocation5 + $0x318] sm:$0xff]
        %v5599 = vld [vmem:[#allocation5 + $0x320] sm:$0xff]
        %v5600 = vld [vmem:[#allocation5 + $0x328] sm:$0xff]
        %v5601 = vld [vmem:[#allocation5 + $0x330] sm:$0xff]
        %v5602 = vld [vmem:[#allocation5 + $0x338] sm:$0xff]
        %v5603 = vld [vmem:[#allocation5 + $0x340] sm:$0xff]
        %v5604 = vld [vmem:[#allocation5 + $0x348] sm:$0xff]
        %v5605 = vld [vmem:[#allocation5 + $0x350] sm:$0xff]
        %v5606 = vld [vmem:[#allocation5 + $0x358] sm:$0xff]
        %v5607 = vld [vmem:[#allocation5 + $0x360] sm:$0xff]
        %v5608 = vld [vmem:[#allocation5 + $0x368] sm:$0xff]
        %v5609 = vld [vmem:[#allocation5 + $0x370] sm:$0xff]
        %v5610 = vld [vmem:[#allocation5 + $0x378] sm:$0xff]
        %v5611 = vld [vmem:[#allocation5 + $0x380] sm:$0xff]
        %v5612 = vld [vmem:[#allocation5 + $0x388] sm:$0xff]
        %v5613 = vld [vmem:[#allocation5 + $0x390] sm:$0xff]
        %v5614 = vld [vmem:[#allocation5 + $0x398] sm:$0xff]
        %v5615 = vld [vmem:[#allocation5 + $0x3a0] sm:$0xff]
        %v5616 = vld [vmem:[#allocation5 + $0x3a8] sm:$0xff]
        %v5617 = vld [vmem:[#allocation5 + $0x3b0] sm:$0xff]
        %v5618 = vld [vmem:[#allocation5 + $0x3b8] sm:$0xff]
        %v5619 = vld [vmem:[#allocation5 + $0x3c0] sm:$0xff]
        %v5620 = vld [vmem:[#allocation5 + $0x3c8] sm:$0xff]
        %v5621 = vld [vmem:[#allocation5 + $0x3d0] sm:$0xff]
        %v5622 = vld [vmem:[#allocation5 + $0x3d8] sm:$0xff]
        %v5623 = vld [vmem:[#allocation5 + $0x3e0] sm:$0xff]
        %v5624 = vld [vmem:[#allocation5 + $0x3e8] sm:$0xff]
        %v5625 = vld [vmem:[#allocation5 + $0x3f0] sm:$0xff]
        %v5626 = vld [vmem:[#allocation5 + $0x3f8] sm:$0xff]
        %v5627 = vld [vmem:[#allocation5 + $0x400] sm:$0xff]
        %v5628 = vld [vmem:[#allocation5 + $0x408] sm:$0xff]
        %v5629 = vld [vmem:[#allocation5 + $0x410] sm:$0xff]
        %v5630 = vld [vmem:[#allocation5 + $0x418] sm:$0xff]
        %v5631 = vld [vmem:[#allocation5 + $0x420] sm:$0xff]
        %v5632 = vld [vmem:[#allocation5 + $0x428] sm:$0xff]
        %v5633 = vld [vmem:[#allocation5 + $0x430] sm:$0xff]
        %v5634 = vld [vmem:[#allocation5 + $0x438] sm:$0xff]
        %v5635 = vld [vmem:[#allocation5 + $0x440] sm:$0xff]
        %v5636 = vld [vmem:[#allocation5 + $0x448] sm:$0xff]
        %v5637 = vld [vmem:[#allocation5 + $0x450] sm:$0xff]
        %v5638 = vld [vmem:[#allocation5 + $0x458] sm:$0xff]
        %v5639 = vld [vmem:[#allocation5 + $0x460] sm:$0xff]
        %v5640 = vld [vmem:[#allocation5 + $0x468] sm:$0xff]
        %v5641 = vld [vmem:[#allocation5 + $0x470] sm:$0xff]
        %v5642 = vld [vmem:[#allocation5 + $0x478] sm:$0xff]
        %v5643 = vld [vmem:[#allocation5 + $0x480] sm:$0xff]
        %v5644 = vld [vmem:[#allocation5 + $0x488] sm:$0xff]
        %v5645 = vld [vmem:[#allocation5 + $0x490] sm:$0xff]
        %v5646 = vld [vmem:[#allocation5 + $0x498] sm:$0xff]
        %v5647 = vld [vmem:[#allocation5 + $0x4a0] sm:$0xff]
        %v5648 = vld [vmem:[#allocation5 + $0x4a8] sm:$0xff]
        %v5649 = vld [vmem:[#allocation5 + $0x4b0] sm:$0xff]
        %v5650 = vld [vmem:[#allocation5 + $0x4b8] sm:$0xff]
        %v5651 = vld [vmem:[#allocation5 + $0x4c0] sm:$0xff]
        %v5652 = vld [vmem:[#allocation5 + $0x4c8] sm:$0xff]
        %v5653 = vld [vmem:[#allocation5 + $0x4d0] sm:$0xff]
        %v5654 = vld [vmem:[#allocation5 + $0x4d8] sm:$0xff]
        %v5655 = vld [vmem:[#allocation5 + $0x4e0] sm:$0xff]
        %v5656 = vld [vmem:[#allocation5 + $0x4e8] sm:$0xff]
        %v5657 = vld [vmem:[#allocation5 + $0x4f0] sm:$0xff]
        %v5658 = vld [vmem:[#allocation5 + $0x4f8] sm:$0xff]
        %v5659 = vld [vmem:[#allocation5 + $0x500] sm:$0xff]
        %v5660 = vld [vmem:[#allocation5 + $0x508] sm:$0xff]
        %v5661 = vld [vmem:[#allocation5 + $0x510] sm:$0xff]
        %v5662 = vld [vmem:[#allocation5 + $0x518] sm:$0xff]
        %v5663 = vld [vmem:[#allocation5 + $0x520] sm:$0xff]
        %v5664 = vld [vmem:[#allocation5 + $0x528] sm:$0xff]
        %v5665 = vld [vmem:[#allocation5 + $0x530] sm:$0xff]
        %v5666 = vld [vmem:[#allocation5 + $0x538] sm:$0xff]
        %v5667 = vld [vmem:[#allocation5 + $0x540] sm:$0xff]
        %v5668 = vld [vmem:[#allocation5 + $0x548] sm:$0xff]
        %v5669 = vld [vmem:[#allocation5 + $0x550] sm:$0xff]
        %v5670 = vld [vmem:[#allocation5 + $0x558] sm:$0xff]
        %v5671 = vld [vmem:[#allocation5 + $0x560] sm:$0xff]
        %v5672 = vld [vmem:[#allocation5 + $0x568] sm:$0xff]
        %v5673 = vld [vmem:[#allocation5 + $0x570] sm:$0xff]
        %v5674 = vld [vmem:[#allocation5 + $0x578] sm:$0xff]
        %v5675 = vld [vmem:[#allocation5 + $0x580] sm:$0xff]
        %v5676 = vld [vmem:[#allocation5 + $0x588] sm:$0xff]
        %v5677 = vld [vmem:[#allocation5 + $0x590] sm:$0xff]
        %v5678 = vld [vmem:[#allocation5 + $0x598] sm:$0xff]
        %v5679 = vld [vmem:[#allocation5 + $0x5a0] sm:$0xff]
        %v5680 = vld [vmem:[#allocation5 + $0x5a8] sm:$0xff]
        %v5681 = vld [vmem:[#allocation5 + $0x5b0] sm:$0xff]
        %v5682 = vld [vmem:[#allocation5 + $0x5b8] sm:$0xff]
        %v5683 = vld [vmem:[#allocation5 + $0x5c0] sm:$0xff]
        %v5684 = vld [vmem:[#allocation5 + $0x5c8] sm:$0xff]
        %v5685 = vld [vmem:[#allocation5 + $0x5d0] sm:$0xff]
        %v5686 = vld [vmem:[#allocation5 + $0x5d8] sm:$0xff]
        %v5687 = vld [vmem:[#allocation5 + $0x5e0] sm:$0xff]
        %v5688 = vld [vmem:[#allocation5 + $0x5e8] sm:$0xff]
        %v5689 = vld [vmem:[#allocation5 + $0x5f0] sm:$0xff]
        %v5690 = vld [vmem:[#allocation5 + $0x5f8] sm:$0xff]
        %v5691 = vld [vmem:[#allocation5 + $0x600] sm:$0xff]
        %v5692 = vld [vmem:[#allocation5 + $0x608] sm:$0xff]
        %v5693 = vld [vmem:[#allocation5 + $0x610] sm:$0xff]
        %v5694 = vld [vmem:[#allocation5 + $0x618] sm:$0xff]
        %v5695 = vld [vmem:[#allocation5 + $0x620] sm:$0xff]
        %v5696 = vld [vmem:[#allocation5 + $0x628] sm:$0xff]
        %v5697 = vld [vmem:[#allocation5 + $0x630] sm:$0xff]
        %v5698 = vld [vmem:[#allocation5 + $0x638] sm:$0xff]
        %v5699 = vld [vmem:[#allocation5 + $0x640] sm:$0xff]
        %v5700 = vld [vmem:[#allocation5 + $0x648] sm:$0xff]
        %v5701 = vld [vmem:[#allocation5 + $0x650] sm:$0xff]
        %v5702 = vld [vmem:[#allocation5 + $0x658] sm:$0xff]
        %v5703 = vld [vmem:[#allocation5 + $0x660] sm:$0xff]
        %v5704 = vld [vmem:[#allocation5 + $0x668] sm:$0xff]
        %v5705 = vld [vmem:[#allocation5 + $0x670] sm:$0xff]
        %v5706 = vld [vmem:[#allocation5 + $0x678] sm:$0xff]
        %v5707 = vld [vmem:[#allocation5 + $0x680] sm:$0xff]
        %v5708 = vld [vmem:[#allocation5 + $0x688] sm:$0xff]
        %v5709 = vld [vmem:[#allocation5 + $0x690] sm:$0xff]
        %v5710 = vld [vmem:[#allocation5 + $0x698] sm:$0xff]
        %v5711 = vld [vmem:[#allocation5 + $0x6a0] sm:$0xff]
        %v5712 = vld [vmem:[#allocation5 + $0x6a8] sm:$0xff]
        %v5713 = vld [vmem:[#allocation5 + $0x6b0] sm:$0xff]
        %v5714 = vld [vmem:[#allocation5 + $0x6b8] sm:$0xff]
        %v5715 = vld [vmem:[#allocation5 + $0x6c0] sm:$0xff]
        %v5716 = vld [vmem:[#allocation5 + $0x6c8] sm:$0xff]
        %v5717 = vld [vmem:[#allocation5 + $0x6d0] sm:$0xff]
        %v5718 = vld [vmem:[#allocation5 + $0x6d8] sm:$0xff]
        %v5719 = vld [vmem:[#allocation5 + $0x6e0] sm:$0xff]
        %v5720 = vld [vmem:[#allocation5 + $0x6e8] sm:$0xff]
        %v5721 = vld [vmem:[#allocation5 + $0x6f0] sm:$0xff]
        %v5722 = vld [vmem:[#allocation5 + $0x6f8] sm:$0xff]
        %v5723 = vld [vmem:[#allocation5 + $0x700] sm:$0xff]
        %v5724 = vld [vmem:[#allocation5 + $0x708] sm:$0xff]
        %v5725 = vld [vmem:[#allocation5 + $0x710] sm:$0xff]
        %v5726 = vld [vmem:[#allocation5 + $0x718] sm:$0xff]
        %v5727 = vld [vmem:[#allocation5 + $0x720] sm:$0xff]
        %v5728 = vld [vmem:[#allocation5 + $0x728] sm:$0xff]
        %v5729 = vld [vmem:[#allocation5 + $0x730] sm:$0xff]
        %v5730 = vld [vmem:[#allocation5 + $0x738] sm:$0xff]
        %v5731 = vld [vmem:[#allocation5 + $0x740] sm:$0xff]
        %v5732 = vld [vmem:[#allocation5 + $0x748] sm:$0xff]
        %v5733 = vld [vmem:[#allocation5 + $0x750] sm:$0xff]
        %v5734 = vld [vmem:[#allocation5 + $0x758] sm:$0xff]
        %v5735 = vld [vmem:[#allocation5 + $0x760] sm:$0xff]
        %v5736 = vld [vmem:[#allocation5 + $0x768] sm:$0xff]
        %v5737 = vld [vmem:[#allocation5 + $0x770] sm:$0xff]
        %v5738 = vld [vmem:[#allocation5 + $0x778] sm:$0xff]
        %v5739 = vld [vmem:[#allocation5 + $0x780] sm:$0xff]
        %v5740 = vld [vmem:[#allocation5 + $0x788] sm:$0xff]
        %v5741 = vld [vmem:[#allocation5 + $0x790] sm:$0xff]
        %v5742 = vld [vmem:[#allocation5 + $0x798] sm:$0xff]
        %v5743 = vld [vmem:[#allocation5 + $0x7a0] sm:$0xff]
        %v5744 = vld [vmem:[#allocation5 + $0x7a8] sm:$0xff]
        %v5745 = vld [vmem:[#allocation5 + $0x7b0] sm:$0xff]
        %v5746 = vld [vmem:[#allocation5 + $0x7b8] sm:$0xff]
        %v5747 = vld [vmem:[#allocation5 + $0x7c0] sm:$0xff]
        %v5748 = vld [vmem:[#allocation5 + $0x7c8] sm:$0xff]
        %v5749 = vld [vmem:[#allocation5 + $0x7d0] sm:$0xff]
        %v5750 = vld [vmem:[#allocation5 + $0x7d8] sm:$0xff]
        %v5751 = vld [vmem:[#allocation5 + $0x7e0] sm:$0xff]
        %v5752 = vld [vmem:[#allocation5 + $0x7e8] sm:$0xff]
        %v5753 = vld [vmem:[#allocation5 + $0x7f0] sm:$0xff]
        %v5754 = vld [vmem:[#allocation5 + $0x7f8] sm:$0xff]
        %v5755 = vld [vmem:[#allocation5 + $0x800] sm:$0xff]
        %v5756 = vld [vmem:[#allocation5 + $0x808] sm:$0xff]
        %v5757 = vld [vmem:[#allocation5 + $0x810] sm:$0xff]
        %v5758 = vld [vmem:[#allocation5 + $0x818] sm:$0xff]
        %v5759 = vld [vmem:[#allocation5 + $0x820] sm:$0xff]
        %v5760 = vld [vmem:[#allocation5 + $0x828] sm:$0xff]
        %v5761 = vld [vmem:[#allocation5 + $0x830] sm:$0xff]
        %v5762 = vld [vmem:[#allocation5 + $0x838] sm:$0xff]
        %v5763 = vld [vmem:[#allocation5 + $0x840] sm:$0xff]
        %v5764 = vld [vmem:[#allocation5 + $0x848] sm:$0xff]
        %v5765 = vld [vmem:[#allocation5 + $0x850] sm:$0xff]
        %v5766 = vld [vmem:[#allocation5 + $0x858] sm:$0xff]
        %v5767 = vld [vmem:[#allocation5 + $0x860] sm:$0xff]
        %v5768 = vld [vmem:[#allocation5 + $0x868] sm:$0xff]
        %v5769 = vld [vmem:[#allocation5 + $0x870] sm:$0xff]
        %v5770 = vld [vmem:[#allocation5 + $0x878] sm:$0xff]
        %v5771 = vld [vmem:[#allocation5 + $0x880] sm:$0xff]
        %v5772 = vld [vmem:[#allocation5 + $0x888] sm:$0xff]
        %v5773 = vld [vmem:[#allocation5 + $0x890] sm:$0xff]
        %v5774 = vld [vmem:[#allocation5 + $0x898] sm:$0xff]
        %v5775 = vld [vmem:[#allocation5 + $0x8a0] sm:$0xff]
        %v5776 = vld [vmem:[#allocation5 + $0x8a8] sm:$0xff]
        %v5777 = vld [vmem:[#allocation5 + $0x8b0] sm:$0xff]
        %v5778 = vld [vmem:[#allocation5 + $0x8b8] sm:$0xff]
        %v5779 = vld [vmem:[#allocation5 + $0x8c0] sm:$0xff]
        %v5780 = vld [vmem:[#allocation5 + $0x8c8] sm:$0xff]
        %v5781 = vld [vmem:[#allocation5 + $0x8d0] sm:$0xff]
        %v5782 = vld [vmem:[#allocation5 + $0x8d8] sm:$0xff]
        %v5783 = vld [vmem:[#allocation5 + $0x8e0] sm:$0xff]
        %v5784 = vld [vmem:[#allocation5 + $0x8e8] sm:$0xff]
        %v5785 = vld [vmem:[#allocation5 + $0x8f0] sm:$0xff]
        %v5786 = vld [vmem:[#allocation5 + $0x8f8] sm:$0xff]
        %v5787 = vld [vmem:[#allocation11] sm:$0xf]
        %v5788 = vld [vmem:[#allocation11 + $0x4] sm:$0xf]
        %v5789 = vld [vmem:[#allocation11 + $0x8] sm:$0xf]
        %v5790 = vld [vmem:[#allocation11 + $0xc] sm:$0xf]
        %v5791 = vld [vmem:[#allocation11 + $0x10] sm:$0xf]
        %v5792 = vld [vmem:[#allocation11 + $0x14] sm:$0xf]
        %v5793 = vld [vmem:[#allocation11 + $0x18] sm:$0xf]
        %v5794 = vld [vmem:[#allocation11 + $0x1c] sm:$0xf]
        %v5795 = vld [vmem:[#allocation11 + $0x20] sm:$0xf]
        %v5796 = vld [vmem:[#allocation11 + $0x24] sm:$0xf]
        %v5797 = vld [vmem:[#allocation11 + $0x28] sm:$0xf]
        %v5798 = vld [vmem:[#allocation11 + $0x2c] sm:$0xf]
        %v5799 = vld [vmem:[#allocation11 + $0x30] sm:$0xf]
        %v5800 = vld [vmem:[#allocation11 + $0x34] sm:$0xf]
        %v5801 = vld [vmem:[#allocation11 + $0x38] sm:$0xf]
        %v5802 = vld [vmem:[#allocation11 + $0x3c] sm:$0xf]
        %v5803 = vld [vmem:[#allocation11 + $0x40] sm:$0xf]
        %v5804 = vld [vmem:[#allocation11 + $0x44] sm:$0xf]
        %v5805 = vld [vmem:[#allocation11 + $0x48] sm:$0xf]
        %v5806 = vld [vmem:[#allocation11 + $0x4c] sm:$0xf]
        %v5807 = vld [vmem:[#allocation11 + $0x50] sm:$0xf]
        %v5808 = vld [vmem:[#allocation11 + $0x54] sm:$0xf]
        %v5809 = vld [vmem:[#allocation11 + $0x58] sm:$0xf]
        %v5810 = vld [vmem:[#allocation11 + $0x5c] sm:$0xf]
        %v5811 = vld [vmem:[#allocation11 + $0x60] sm:$0xf]
        %v5812 = vld [vmem:[#allocation11 + $0x64] sm:$0xf]
        %v5813 = vld [vmem:[#allocation11 + $0x68] sm:$0xf]
        %v5814 = vld [vmem:[#allocation11 + $0x6c] sm:$0xf]
        %v5815 = vld [vmem:[#allocation11 + $0x70] sm:$0xf]
        %v5816 = vld [vmem:[#allocation11 + $0x74] sm:$0xf]
        %v5817 = vld [vmem:[#allocation11 + $0x78] sm:$0xf]
        %v5818 = vld [vmem:[#allocation11 + $0x7c] sm:$0xf]
        %v5819 = vld [vmem:[#allocation11 + $0x80] sm:$0xf]
        %v5820 = vld [vmem:[#allocation11 + $0x84] sm:$0xf]
        %v5821 = vld [vmem:[#allocation11 + $0x88] sm:$0xf]
        %v5822 = vld [vmem:[#allocation11 + $0x8c] sm:$0xf]
        %v5823 = vld [vmem:[#allocation11 + $0x90] sm:$0xf]
        %v5824 = vld [vmem:[#allocation11 + $0x94] sm:$0xf]
        %v5825 = vld [vmem:[#allocation11 + $0x98] sm:$0xf]
        %v5826 = vld [vmem:[#allocation11 + $0x9c] sm:$0xf]
        %v5827 = vld [vmem:[#allocation11 + $0xa0] sm:$0xf]
        %v5828 = vld [vmem:[#allocation11 + $0xa4] sm:$0xf]
        %v5829 = vld [vmem:[#allocation11 + $0xa8] sm:$0xf]
        %v5830 = vld [vmem:[#allocation11 + $0xac] sm:$0xf]
        %v5831 = vld [vmem:[#allocation11 + $0xb0] sm:$0xf]
        %v5832 = vld [vmem:[#allocation11 + $0xb4] sm:$0xf]
        %v5833 = vld [vmem:[#allocation11 + $0xb8] sm:$0xf]
        %v5834 = vld [vmem:[#allocation11 + $0xbc] sm:$0xf]
        %v5835 = vld [vmem:[#allocation11 + $0xc0] sm:$0xf]
        %v5836 = vld [vmem:[#allocation11 + $0xc4] sm:$0xf]
        %v5837 = vld [vmem:[#allocation11 + $0xc8] sm:$0xf]
        %v5838 = vld [vmem:[#allocation11 + $0xcc] sm:$0xf]
        %v5839 = vld [vmem:[#allocation11 + $0xd0] sm:$0xf]
        %v5840 = vld [vmem:[#allocation11 + $0xd4] sm:$0xf]
        %v5841 = vld [vmem:[#allocation11 + $0xd8] sm:$0xf]
        %v5842 = vld [vmem:[#allocation11 + $0xdc] sm:$0xf]
        %v5843 = vld [vmem:[#allocation11 + $0xe0] sm:$0xf]
        %v5844 = vld [vmem:[#allocation11 + $0xe4] sm:$0xf]
        %v5845 = vld [vmem:[#allocation11 + $0xe8] sm:$0xf]
        %v5846 = vld [vmem:[#allocation11 + $0xec] sm:$0xf]
        %v5847 = vld [vmem:[#allocation11 + $0xf0] sm:$0xf]
        %v5848 = vld [vmem:[#allocation11 + $0xf4] sm:$0xf]
        %v5849 = vld [vmem:[#allocation11 + $0xf8] sm:$0xf]
        %v5850 = vld [vmem:[#allocation11 + $0xfc] sm:$0xf]
        %v5851 = vld [vmem:[#allocation11 + $0x100] sm:$0xf]
        %v5852 = vld [vmem:[#allocation11 + $0x104] sm:$0xf]
        %v5853 = vld [vmem:[#allocation11 + $0x108] sm:$0xf]
        %v5854 = vld [vmem:[#allocation11 + $0x10c] sm:$0xf]
        %v5855 = vld [vmem:[#allocation11 + $0x110] sm:$0xf]
        %v5856 = vld [vmem:[#allocation11 + $0x114] sm:$0xf]
        %v5857 = vld [vmem:[#allocation11 + $0x118] sm:$0xf]
        %v5858 = vld [vmem:[#allocation11 + $0x11c] sm:$0xf]
        %v5859 = vld [vmem:[#allocation11 + $0x120] sm:$0xf]
        %v5860 = vld [vmem:[#allocation11 + $0x124] sm:$0xf]
        %v5861 = vld [vmem:[#allocation11 + $0x128] sm:$0xf]
        %v5862 = vld [vmem:[#allocation11 + $0x12c] sm:$0xf]
        %v5863 = vld [vmem:[#allocation11 + $0x130] sm:$0xf]
        %v5864 = vld [vmem:[#allocation11 + $0x134] sm:$0xf]
        %v5865 = vld [vmem:[#allocation11 + $0x138] sm:$0xf]
        %v5866 = vld [vmem:[#allocation11 + $0x13c] sm:$0xf]
        %v5867 = vld [vmem:[#allocation11 + $0x140] sm:$0xf]
        %v5868 = vld [vmem:[#allocation11 + $0x144] sm:$0xf]
        %v5869 = vld [vmem:[#allocation11 + $0x148] sm:$0xf]
        %v5870 = vld [vmem:[#allocation11 + $0x14c] sm:$0xf]
        %v5871 = vld [vmem:[#allocation11 + $0x150] sm:$0xf]
        %v5872 = vld [vmem:[#allocation11 + $0x154] sm:$0xf]
        %v5873 = vld [vmem:[#allocation11 + $0x158] sm:$0xf]
        %v5874 = vld [vmem:[#allocation11 + $0x15c] sm:$0xf]
        %v5875 = vld [vmem:[#allocation11 + $0x160] sm:$0xf]
        %v5876 = vld [vmem:[#allocation11 + $0x164] sm:$0xf]
        %v5877 = vld [vmem:[#allocation11 + $0x168] sm:$0xf]
        %v5878 = vld [vmem:[#allocation11 + $0x16c] sm:$0xf]
        %v5879 = vld [vmem:[#allocation11 + $0x170] sm:$0xf]
        %v5880 = vld [vmem:[#allocation11 + $0x174] sm:$0xf]
        %v5881 = vld [vmem:[#allocation11 + $0x178] sm:$0xf]
        %v5882 = vld [vmem:[#allocation11 + $0x17c] sm:$0xf]
        %v5883 = vld [vmem:[#allocation11 + $0x180] sm:$0xf]
        %v5884 = vld [vmem:[#allocation11 + $0x184] sm:$0xf]
        %v5885 = vld [vmem:[#allocation11 + $0x188] sm:$0xf]
        %v5886 = vld [vmem:[#allocation11 + $0x18c] sm:$0xf]
        %v5887 = vld [vmem:[#allocation11 + $0x190] sm:$0xf]
        %v5888 = vld [vmem:[#allocation11 + $0x194] sm:$0xf]
        %v5889 = vld [vmem:[#allocation11 + $0x198] sm:$0xf]
        %v5890 = vld [vmem:[#allocation11 + $0x19c] sm:$0xf]
        %v5891 = vld [vmem:[#allocation11 + $0x1a0] sm:$0xf]
        %v5892 = vld [vmem:[#allocation11 + $0x1a4] sm:$0xf]
        %v5893 = vld [vmem:[#allocation11 + $0x1a8] sm:$0xf]
        %v5894 = vld [vmem:[#allocation11 + $0x1ac] sm:$0xf]
        %v5895 = vld [vmem:[#allocation11 + $0x1b0] sm:$0xf]
        %v5896 = vld [vmem:[#allocation11 + $0x1b4] sm:$0xf]
        %v5897 = vld [vmem:[#allocation11 + $0x1b8] sm:$0xf]
        %v5898 = vld [vmem:[#allocation11 + $0x1bc] sm:$0xf]
        %v5899 = vld [vmem:[#allocation11 + $0x1c0] sm:$0xf]
        %v5900 = vld [vmem:[#allocation11 + $0x1c4] sm:$0xf]
        %v5901 = vld [vmem:[#allocation11 + $0x1c8] sm:$0xf]
        %v5902 = vld [vmem:[#allocation11 + $0x1cc] sm:$0xf]
        %v5903 = vld [vmem:[#allocation11 + $0x1d0] sm:$0xf]
        %v5904 = vld [vmem:[#allocation11 + $0x1d4] sm:$0xf]
        %v5905 = vld [vmem:[#allocation11 + $0x1d8] sm:$0xf]
        %v5906 = vld [vmem:[#allocation11 + $0x1dc] sm:$0xf]
        %v5907 = vld [vmem:[#allocation11 + $0x1e0] sm:$0xf]
        %v5908 = vld [vmem:[#allocation11 + $0x1e4] sm:$0xf]
        %v5909 = vld [vmem:[#allocation11 + $0x1e8] sm:$0xf]
        %v5910 = vld [vmem:[#allocation11 + $0x1ec] sm:$0xf]
        %v5911 = vld [vmem:[#allocation11 + $0x1f0] sm:$0xf]
        %v5912 = vld [vmem:[#allocation11 + $0x1f4] sm:$0xf]
        %v5913 = vld [vmem:[#allocation11 + $0x1f8] sm:$0xf]
        %v5914 = vld [vmem:[#allocation11 + $0x1fc] sm:$0xf]
        %v5915 = vld [vmem:[#allocation11 + $0x200] sm:$0xf]
        %v5916 = vld [vmem:[#allocation11 + $0x204] sm:$0xf]
        %v5917 = vld [vmem:[#allocation11 + $0x208] sm:$0xf]
        %v5918 = vld [vmem:[#allocation11 + $0x20c] sm:$0xf]
        %v5919 = vld [vmem:[#allocation11 + $0x210] sm:$0xf]
        %v5920 = vld [vmem:[#allocation11 + $0x214] sm:$0xf]
        %v5921 = vld [vmem:[#allocation11 + $0x218] sm:$0xf]
        %v5922 = vld [vmem:[#allocation11 + $0x21c] sm:$0xf]
        %v5923 = vld [vmem:[#allocation11 + $0x220] sm:$0xf]
        %v5924 = vld [vmem:[#allocation11 + $0x224] sm:$0xf]
        %v5925 = vld [vmem:[#allocation11 + $0x228] sm:$0xf]
        %v5926 = vld [vmem:[#allocation11 + $0x22c] sm:$0xf]
        %v5927 = vld [vmem:[#allocation11 + $0x230] sm:$0xf]
        %v5928 = vld [vmem:[#allocation11 + $0x234] sm:$0xf]
        %v5929 = vld [vmem:[#allocation11 + $0x238] sm:$0xf]
        %v5930 = vld [vmem:[#allocation11 + $0x23c] sm:$0xf]
        %v6075 = vunpack.c.l.b16 %v5787
        %v6076 = vunpack.c.l.b16 %v5788
        %v6077 = vunpack.c.l.b16 %v5789
        %v6078 = vunpack.c.l.b16 %v5790
        %v6079 = vunpack.c.l.b16 %v5791
        %v6080 = vunpack.c.l.b16 %v5792
        %v6081 = vunpack.c.l.b16 %v5793
        %v6082 = vunpack.c.l.b16 %v5794
        %v6083 = vunpack.c.l.b16 %v5795
        %v6084 = vunpack.c.l.b16 %v5796
        %v6085 = vunpack.c.l.b16 %v5797
        %v6086 = vunpack.c.l.b16 %v5798
        %v6087 = vunpack.c.l.b16 %v5799
        %v6088 = vunpack.c.l.b16 %v5800
        %v6089 = vunpack.c.l.b16 %v5801
        %v6090 = vunpack.c.l.b16 %v5802
        %v6091 = vunpack.c.l.b16 %v5803
        %v6092 = vunpack.c.l.b16 %v5804
        %v6093 = vunpack.c.l.b16 %v5805
        %v6094 = vunpack.c.l.b16 %v5806
        %v6095 = vunpack.c.l.b16 %v5807
        %v6096 = vunpack.c.l.b16 %v5808
        %v6097 = vunpack.c.l.b16 %v5809
        %v6098 = vunpack.c.l.b16 %v5810
        %v6099 = vunpack.c.l.b16 %v5811
        %v6100 = vunpack.c.l.b16 %v5812
        %v6101 = vunpack.c.l.b16 %v5813
        %v6102 = vunpack.c.l.b16 %v5814
        %v6103 = vunpack.c.l.b16 %v5815
        %v6104 = vunpack.c.l.b16 %v5816
        %v6105 = vunpack.c.l.b16 %v5817
        %v6106 = vunpack.c.l.b16 %v5818
        %v6107 = vunpack.c.l.b16 %v5819
        %v6108 = vunpack.c.l.b16 %v5820
        %v6109 = vunpack.c.l.b16 %v5821
        %v6110 = vunpack.c.l.b16 %v5822
        %v6111 = vunpack.c.l.b16 %v5823
        %v6112 = vunpack.c.l.b16 %v5824
        %v6113 = vunpack.c.l.b16 %v5825
        %v6114 = vunpack.c.l.b16 %v5826
        %v6115 = vunpack.c.l.b16 %v5827
        %v6116 = vunpack.c.l.b16 %v5828
        %v6117 = vunpack.c.l.b16 %v5829
        %v6118 = vunpack.c.l.b16 %v5830
        %v6119 = vunpack.c.l.b16 %v5831
        %v6120 = vunpack.c.l.b16 %v5832
        %v6121 = vunpack.c.l.b16 %v5833
        %v6122 = vunpack.c.l.b16 %v5834
        %v6123 = vunpack.c.l.b16 %v5835
        %v6124 = vunpack.c.l.b16 %v5836
        %v6125 = vunpack.c.l.b16 %v5837
        %v6126 = vunpack.c.l.b16 %v5838
        %v6127 = vunpack.c.l.b16 %v5839
        %v6128 = vunpack.c.l.b16 %v5840
        %v6129 = vunpack.c.l.b16 %v5841
        %v6130 = vunpack.c.l.b16 %v5842
        %v6131 = vunpack.c.l.b16 %v5843
        %v6132 = vunpack.c.l.b16 %v5844
        %v6133 = vunpack.c.l.b16 %v5845
        %v6134 = vunpack.c.l.b16 %v5846
        %v6135 = vunpack.c.l.b16 %v5847
        %v6136 = vunpack.c.l.b16 %v5848
        %v6137 = vunpack.c.l.b16 %v5849
        %v6138 = vunpack.c.l.b16 %v5850
        %v6139 = vunpack.c.l.b16 %v5851
        %v6140 = vunpack.c.l.b16 %v5852
        %v6141 = vunpack.c.l.b16 %v5853
        %v6142 = vunpack.c.l.b16 %v5854
        %v6143 = vunpack.c.l.b16 %v5855
        %v6144 = vunpack.c.l.b16 %v5856
        %v6145 = vunpack.c.l.b16 %v5857
        %v6146 = vunpack.c.l.b16 %v5858
        %v6147 = vunpack.c.l.b16 %v5859
        %v6148 = vunpack.c.l.b16 %v5860
        %v6149 = vunpack.c.l.b16 %v5861
        %v6150 = vunpack.c.l.b16 %v5862
        %v6151 = vunpack.c.l.b16 %v5863
        %v6152 = vunpack.c.l.b16 %v5864
        %v6153 = vunpack.c.l.b16 %v5865
        %v6154 = vunpack.c.l.b16 %v5866
        %v6155 = vunpack.c.l.b16 %v5867
        %v6156 = vunpack.c.l.b16 %v5868
        %v6157 = vunpack.c.l.b16 %v5869
        %v6158 = vunpack.c.l.b16 %v5870
        %v6159 = vunpack.c.l.b16 %v5871
        %v6160 = vunpack.c.l.b16 %v5872
        %v6161 = vunpack.c.l.b16 %v5873
        %v6162 = vunpack.c.l.b16 %v5874
        %v6163 = vunpack.c.l.b16 %v5875
        %v6164 = vunpack.c.l.b16 %v5876
        %v6165 = vunpack.c.l.b16 %v5877
        %v6166 = vunpack.c.l.b16 %v5878
        %v6167 = vunpack.c.l.b16 %v5879
        %v6168 = vunpack.c.l.b16 %v5880
        %v6169 = vunpack.c.l.b16 %v5881
        %v6170 = vunpack.c.l.b16 %v5882
        %v6171 = vunpack.c.l.b16 %v5883
        %v6172 = vunpack.c.l.b16 %v5884
        %v6173 = vunpack.c.l.b16 %v5885
        %v6174 = vunpack.c.l.b16 %v5886
        %v6175 = vunpack.c.l.b16 %v5887
        %v6176 = vunpack.c.l.b16 %v5888
        %v6177 = vunpack.c.l.b16 %v5889
        %v6178 = vunpack.c.l.b16 %v5890
        %v6179 = vunpack.c.l.b16 %v5891
        %v6180 = vunpack.c.l.b16 %v5892
        %v6181 = vunpack.c.l.b16 %v5893
        %v6182 = vunpack.c.l.b16 %v5894
        %v6183 = vunpack.c.l.b16 %v5895
        %v6184 = vunpack.c.l.b16 %v5896
        %v6185 = vunpack.c.l.b16 %v5897
        %v6186 = vunpack.c.l.b16 %v5898
        %v6187 = vunpack.c.l.b16 %v5899
        %v6188 = vunpack.c.l.b16 %v5900
        %v6189 = vunpack.c.l.b16 %v5901
        %v6190 = vunpack.c.l.b16 %v5902
        %v6191 = vunpack.c.l.b16 %v5903
        %v6192 = vunpack.c.l.b16 %v5904
        %v6193 = vunpack.c.l.b16 %v5905
        %v6194 = vunpack.c.l.b16 %v5906
        %v6195 = vunpack.c.l.b16 %v5907
        %v6196 = vunpack.c.l.b16 %v5908
        %v6197 = vunpack.c.l.b16 %v5909
        %v6198 = vunpack.c.l.b16 %v5910
        %v6199 = vunpack.c.l.b16 %v5911
        %v6200 = vunpack.c.l.b16 %v5912
        %v6201 = vunpack.c.l.b16 %v5913
        %v6202 = vunpack.c.l.b16 %v5914
        %v6203 = vunpack.c.l.b16 %v5915
        %v6204 = vunpack.c.l.b16 %v5916
        %v6205 = vunpack.c.l.b16 %v5917
        %v6206 = vunpack.c.l.b16 %v5918
        %v6207 = vunpack.c.l.b16 %v5919
        %v6208 = vunpack.c.l.b16 %v5920
        %v6209 = vunpack.c.l.b16 %v5921
        %v6210 = vunpack.c.l.b16 %v5922
        %v6211 = vunpack.c.l.b16 %v5923
        %v6212 = vunpack.c.l.b16 %v5924
        %v6213 = vunpack.c.l.b16 %v5925
        %v6214 = vunpack.c.l.b16 %v5926
        %v6215 = vunpack.c.l.b16 %v5927
        %v6216 = vunpack.c.l.b16 %v5928
        %v6217 = vunpack.c.l.b16 %v5929
        %v6218 = vunpack.c.l.b16 %v5930
        %v6219 = vpack.c.b16 %v6076, %v6075
        %v6220 = vpack.c.b16 %v6078, %v6077
        %v6221 = vpack.c.b16 %v6080, %v6079
        %v6222 = vpack.c.b16 %v6082, %v6081
        %v6223 = vpack.c.b16 %v6084, %v6083
        %v6224 = vpack.c.b16 %v6086, %v6085
        %v6225 = vpack.c.b16 %v6088, %v6087
        %v6226 = vpack.c.b16 %v6090, %v6089
        %v6227 = vpack.c.b16 %v6092, %v6091
        %v6228 = vpack.c.b16 %v6094, %v6093
        %v6229 = vpack.c.b16 %v6096, %v6095
        %v6230 = vpack.c.b16 %v6098, %v6097
        %v6231 = vpack.c.b16 %v6100, %v6099
        %v6232 = vpack.c.b16 %v6102, %v6101
        %v6233 = vpack.c.b16 %v6104, %v6103
        %v6234 = vpack.c.b16 %v6106, %v6105
        %v6235 = vpack.c.b16 %v6108, %v6107
        %v6236 = vpack.c.b16 %v6110, %v6109
        %v6237 = vpack.c.b16 %v6112, %v6111
        %v6238 = vpack.c.b16 %v6114, %v6113
        %v6239 = vpack.c.b16 %v6116, %v6115
        %v6240 = vpack.c.b16 %v6118, %v6117
        %v6241 = vpack.c.b16 %v6120, %v6119
        %v6242 = vpack.c.b16 %v6122, %v6121
        %v6243 = vpack.c.b16 %v6124, %v6123
        %v6244 = vpack.c.b16 %v6126, %v6125
        %v6245 = vpack.c.b16 %v6128, %v6127
        %v6246 = vpack.c.b16 %v6130, %v6129
        %v6247 = vpack.c.b16 %v6132, %v6131
        %v6248 = vpack.c.b16 %v6134, %v6133
        %v6249 = vpack.c.b16 %v6136, %v6135
        %v6250 = vpack.c.b16 %v6138, %v6137
        %v6251 = vpack.c.b16 %v6140, %v6139
        %v6252 = vpack.c.b16 %v6142, %v6141
        %v6253 = vpack.c.b16 %v6144, %v6143
        %v6254 = vpack.c.b16 %v6146, %v6145
        %v6255 = vpack.c.b16 %v6148, %v6147
        %v6256 = vpack.c.b16 %v6150, %v6149
        %v6257 = vpack.c.b16 %v6152, %v6151
        %v6258 = vpack.c.b16 %v6154, %v6153
        %v6259 = vpack.c.b16 %v6156, %v6155
        %v6260 = vpack.c.b16 %v6158, %v6157
        %v6261 = vpack.c.b16 %v6160, %v6159
        %v6262 = vpack.c.b16 %v6162, %v6161
        %v6263 = vpack.c.b16 %v6164, %v6163
        %v6264 = vpack.c.b16 %v6166, %v6165
        %v6265 = vpack.c.b16 %v6168, %v6167
        %v6266 = vpack.c.b16 %v6170, %v6169
        %v6267 = vpack.c.b16 %v6172, %v6171
        %v6268 = vpack.c.b16 %v6174, %v6173
        %v6269 = vpack.c.b16 %v6176, %v6175
        %v6270 = vpack.c.b16 %v6178, %v6177
        %v6271 = vpack.c.b16 %v6180, %v6179
        %v6272 = vpack.c.b16 %v6182, %v6181
        %v6273 = vpack.c.b16 %v6184, %v6183
        %v6274 = vpack.c.b16 %v6186, %v6185
        %v6275 = vpack.c.b16 %v6188, %v6187
        %v6276 = vpack.c.b16 %v6190, %v6189
        %v6277 = vpack.c.b16 %v6192, %v6191
        %v6278 = vpack.c.b16 %v6194, %v6193
        %v6279 = vpack.c.b16 %v6196, %v6195
        %v6280 = vpack.c.b16 %v6198, %v6197
        %v6281 = vpack.c.b16 %v6200, %v6199
        %v6282 = vpack.c.b16 %v6202, %v6201
        %v6283 = vpack.c.b16 %v6204, %v6203
        %v6284 = vpack.c.b16 %v6206, %v6205
        %v6285 = vpack.c.b16 %v6208, %v6207
        %v6286 = vpack.c.b16 %v6210, %v6209
        %v6287 = vpack.c.b16 %v6212, %v6211
        %v6288 = vpack.c.b16 %v6214, %v6213
        %v6289 = vpack.c.b16 %v6216, %v6215
        %v6290 = vpack.c.b16 %v6218, %v6217
        %6363 = vmatprep.subr.bf16.mxu0 0
        %6364 = vmatpush1.bf16.msra.mxu0 %v6219
        %6365 = vmatprep.subr.bf16.mxu0 0
        %6366 = vmatpush1.bf16.msra.mxu0 %v6220
        %6367 = vmatprep.subr.bf16.mxu0 0
        %6368 = vmatpush1.bf16.msra.mxu0 %v6221
        %6369 = vmatprep.subr.bf16.mxu0 0
        %6370 = vmatpush1.bf16.msra.mxu0 %v6222
        %6371 = vmatprep.subr.bf16.mxu0 0
        %6372 = vmatpush1.bf16.msra.mxu0 %v6223
        %6373 = vmatprep.subr.bf16.mxu0 0
        %6374 = vmatpush1.bf16.msra.mxu0 %v6224
        %6375 = vmatprep.subr.bf16.mxu0 0
        %6376 = vmatpush1.bf16.msra.mxu0 %v6225
        %6377 = vmatprep.subr.bf16.mxu0 0
        %6378 = vmatpush1.bf16.msra.mxu0 %v6226
        %6379 = vmatprep.subr.bf16.mxu0 0
        %6380 = vmatpush1.bf16.msra.mxu0 %v6227
        %6381 = vmatprep.subr.bf16.mxu0 0
        %6382 = vmatpush1.bf16.msra.mxu0 %v6228
        %6383 = vmatprep.subr.bf16.mxu0 0
        %6384 = vmatpush1.bf16.msra.mxu0 %v6229
        %6385 = vmatprep.subr.bf16.mxu0 0
        %6386 = vmatpush1.bf16.msra.mxu0 %v6230
        %6387 = vmatprep.subr.bf16.mxu0 0
        %6388 = vmatpush1.bf16.msra.mxu0 %v6231
        %6389 = vmatprep.subr.bf16.mxu0 0
        %6390 = vmatpush1.bf16.msra.mxu0 %v6232
        %6391 = vmatprep.subr.bf16.mxu0 0
        %6392 = vmatpush1.bf16.msra.mxu0 %v6233
        %6393 = vmatprep.subr.bf16.mxu0 0
        %6394 = vmatpush1.bf16.msra.mxu0 %v6234
        %6395 = vmatprep.mubr.bf16.mxu0 %v5500
        %6396 = vmatmul.mubr.bf16.gmra.mrb[0].mxu0 %v5499
        %v6397 = vpop.f32.mrb[0].mxu0
        %v6398 = vadd.f32 0.0, %v6397
        %v6399 = vpop.f32.mrb[0].mxu0
        %v6400 = vpop.f32.mrb[0].mxu0
        %v6401 = vadd.f32 0.0, %v6400
        %v6402 = vpop.f32.mrb[0].mxu0
        %6403 = vmatprep.mubr.bf16.mxu0 %v5509
        %6404 = vmatmul.mubr.bf16.gmra.mrb[0].mxu0 %v5508
        %v6405 = vpop.f32.mrb[0].mxu0
        %v6406 = vadd.f32 0.0, %v6405
        %v6407 = vpop.f32.mrb[0].mxu0
        %v6408 = vpop.f32.mrb[0].mxu0
        %v6409 = vadd.f32 0.0, %v6408
        %v6410 = vpop.f32.mrb[0].mxu0
        %6411 = vmatprep.mubr.bf16.mxu0 %v5518
        %6412 = vmatmul.mubr.bf16.gmra.mrb[0].mxu0 %v5517
        %v6413 = vpop.f32.mrb[0].mxu0
        %v6414 = vadd.f32 0.0, %v6413
        %v6415 = vpop.f32.mrb[0].mxu0
        %v6416 = vpop.f32.mrb[0].mxu0
        %v6417 = vadd.f32 0.0, %v6416
        %v6418 = vpop.f32.mrb[0].mxu0
        %6419 = vmatprep.mubr.bf16.mxu0 %v5527
        %6420 = vmatmul.mubr.bf16.gmra.mrb[0].mxu0 %v5526
        %v6421 = vpop.f32.mrb[0].mxu0
        %v6422 = vadd.f32 0.0, %v6421
        %v6423 = vpop.f32.mrb[0].mxu0
        %v6424 = vpop.f32.mrb[0].mxu0
        %v6425 = vadd.f32 0.0, %v6424
        %v6426 = vpop.f32.mrb[0].mxu0
        %6427 = vmatprep.mubr.bf16.mxu0 %v5536
        %6428 = vmatmul.mubr.bf16.gmra.mrb[0].mxu0 %v5535
        %v6429 = vpop.f32.mrb[0].mxu0
        %v6430 = vadd.f32 0.0, %v6429
        %v6431 = vpop.f32.mrb[0].mxu0
        %v6432 = vpop.f32.mrb[0].mxu0
        %v6433 = vadd.f32 0.0, %v6432
        %v6434 = vpop.f32.mrb[0].mxu0
        %6435 = vmatprep.mubr.bf16.mxu0 %v5545
        %6436 = vmatmul.mubr.bf16.gmra.mrb[0].mxu0 %v5544
        %v6437 = vpop.f32.mrb[0].mxu0
        %v6438 = vadd.f32 0.0, %v6437
        %v6439 = vpop.f32.mrb[0].mxu0
        %v6440 = vpop.f32.mrb[0].mxu0
        %v6441 = vadd.f32 0.0, %v6440
        %v6442 = vpop.f32.mrb[0].mxu0
        %6443 = vmatprep.mubr.bf16.mxu0 %v5554
        %6444 = vmatmul.mubr.bf16.gmra.mrb[0].mxu0 %v5553
        %v6445 = vpop.f32.mrb[0].mxu0
        %v6446 = vadd.f32 0.0, %v6445
        %v6447 = vpop.f32.mrb[0].mxu0
        %v6448 = vpop.f32.mrb[0].mxu0
        %v6449 = vadd.f32 0.0, %v6448
        %v6450 = vpop.f32.mrb[0].mxu0
        %6451 = vmatprep.mubr.bf16.mxu0 %v5563
        %6452 = vmatmul.mubr.bf16.gmra.mrb[0].mxu0 %v5562
        %v6453 = vpop.f32.mrb[0].mxu0
        %v6454 = vadd.f32 0.0, %v6453
        %v6455 = vpop.f32.mrb[0].mxu0
        %v6456 = vpop.f32.mrb[0].mxu0
        %v6457 = vadd.f32 0.0, %v6456
        %v6458 = vpop.f32.mrb[0].mxu0
        %6459 = vmatprep.mubr.bf16.mxu0 %v5572
        %6460 = vmatmul.mubr.bf16.gmra.mrb[0].mxu0 %v5571
        %v6461 = vpop.f32.mrb[0].mxu0
        %v6462 = vadd.f32 0.0, %v6461
        %v6463 = vpop.f32.mrb[0].mxu0
        %v6464 = vpop.f32.mrb[0].mxu0
        %v6465 = vadd.f32 0.0, %v6464
        %v6466 = vpop.f32.mrb[0].mxu0
        %6467 = vmatprep.mubr.bf16.mxu0 %v5581
        %6468 = vmatmul.mubr.bf16.gmra.mrb[0].mxu0 %v5580
        %v6469 = vpop.f32.mrb[0].mxu0
        %v6470 = vadd.f32 0.0, %v6469
        %v6471 = vpop.f32.mrb[0].mxu0
        %v6472 = vpop.f32.mrb[0].mxu0
        %v6473 = vadd.f32 0.0, %v6472
        %v6474 = vpop.f32.mrb[0].mxu0
        %6475 = vmatprep.mubr.bf16.mxu0 %v5590
        %6476 = vmatmul.mubr.bf16.gmra.mrb[0].mxu0 %v5589
        %v6477 = vpop.f32.mrb[0].mxu0
        %v6478 = vadd.f32 0.0, %v6477
        %v6479 = vpop.f32.mrb[0].mxu0
        %v6480 = vpop.f32.mrb[0].mxu0
        %v6481 = vadd.f32 0.0, %v6480
        %v6482 = vpop.f32.mrb[0].mxu0
        %6483 = vmatprep.mubr.bf16.mxu0 %v5599
        %6484 = vmatmul.mubr.bf16.gmra.mrb[0].mxu0 %v5598
        %v6485 = vpop.f32.mrb[0].mxu0
        %v6486 = vadd.f32 0.0, %v6485
        %v6487 = vpop.f32.mrb[0].mxu0
        %v6488 = vpop.f32.mrb[0].mxu0
        %v6489 = vadd.f32 0.0, %v6488
        %v6490 = vpop.f32.mrb[0].mxu0
        %6491 = vmatprep.mubr.bf16.mxu0 %v5608
        %6492 = vmatmul.mubr.bf16.gmra.mrb[0].mxu0 %v5607
        %v6493 = vpop.f32.mrb[0].mxu0
        %v6494 = vadd.f32 0.0, %v6493
        %v6495 = vpop.f32.mrb[0].mxu0
        %v6496 = vpop.f32.mrb[0].mxu0
        %v6497 = vadd.f32 0.0, %v6496
        %v6498 = vpop.f32.mrb[0].mxu0
        %6499 = vmatprep.mubr.bf16.mxu0 %v5617
        %6500 = vmatmul.mubr.bf16.gmra.mrb[0].mxu0 %v5616
        %v6501 = vpop.f32.mrb[0].mxu0
        %v6502 = vadd.f32 0.0, %v6501
        %v6503 = vpop.f32.mrb[0].mxu0
        %v6504 = vpop.f32.mrb[0].mxu0
        %v6505 = vadd.f32 0.0, %v6504
        %v6506 = vpop.f32.mrb[0].mxu0
        %6507 = vmatprep.mubr.bf16.mxu0 %v5626
        %6508 = vmatmul.mubr.bf16.gmra.mrb[0].mxu0 %v5625
        %v6509 = vpop.f32.mrb[0].mxu0
        %v6510 = vadd.f32 0.0, %v6509
        %v6511 = vpop.f32.mrb[0].mxu0
        %v6512 = vpop.f32.mrb[0].mxu0
        %v6513 = vadd.f32 0.0, %v6512
        %v6514 = vpop.f32.mrb[0].mxu0
        %6515 = vmatprep.mubr.bf16.mxu0 %v5635
        %6516 = vmatmul.mubr.bf16.gmra.mrb[0].mxu0 %v5634
        %v6517 = vpop.f32.mrb[0].mxu0
        %v6518 = vadd.f32 0.0, %v6517
        %v6519 = vpop.f32.mrb[0].mxu0
        %v6520 = vpop.f32.mrb[0].mxu0
        %v6521 = vadd.f32 0.0, %v6520
        %v6522 = vpop.f32.mrb[0].mxu0
        %6523 = vmatprep.mubr.bf16.mxu0 %v5644
        %6524 = vmatmul.mubr.bf16.gmra.mrb[0].mxu0 %v5643
        %v6525 = vpop.f32.mrb[0].mxu0
        %v6526 = vadd.f32 0.0, %v6525
        %v6527 = vpop.f32.mrb[0].mxu0
        %v6528 = vpop.f32.mrb[0].mxu0
        %v6529 = vadd.f32 0.0, %v6528
        %v6530 = vpop.f32.mrb[0].mxu0
        %6531 = vmatprep.mubr.bf16.mxu0 %v5653
        %6532 = vmatmul.mubr.bf16.gmra.mrb[0].mxu0 %v5652
        %v6533 = vpop.f32.mrb[0].mxu0
        %v6534 = vadd.f32 0.0, %v6533
        %v6535 = vpop.f32.mrb[0].mxu0
        %v6536 = vpop.f32.mrb[0].mxu0
        %v6537 = vadd.f32 0.0, %v6536
        %v6538 = vpop.f32.mrb[0].mxu0
        %6539 = vmatprep.mubr.bf16.mxu0 %v5662
        %6540 = vmatmul.mubr.bf16.gmra.mrb[0].mxu0 %v5661
        %v6541 = vpop.f32.mrb[0].mxu0
        %v6542 = vadd.f32 0.0, %v6541
        %v6543 = vpop.f32.mrb[0].mxu0
        %v6544 = vpop.f32.mrb[0].mxu0
        %v6545 = vadd.f32 0.0, %v6544
        %v6546 = vpop.f32.mrb[0].mxu0
        %6547 = vmatprep.mubr.bf16.mxu0 %v5671
        %6548 = vmatmul.mubr.bf16.gmra.mrb[0].mxu0 %v5670
        %v6549 = vpop.f32.mrb[0].mxu0
        %v6550 = vadd.f32 0.0, %v6549
        %v6551 = vpop.f32.mrb[0].mxu0
        %v6552 = vpop.f32.mrb[0].mxu0
        %v6553 = vadd.f32 0.0, %v6552
        %v6554 = vpop.f32.mrb[0].mxu0
        %6555 = vmatprep.mubr.bf16.mxu0 %v5680
        %6556 = vmatmul.mubr.bf16.gmra.mrb[0].mxu0 %v5679
        %v6557 = vpop.f32.mrb[0].mxu0
        %v6558 = vadd.f32 0.0, %v6557
        %v6559 = vpop.f32.mrb[0].mxu0
        %v6560 = vpop.f32.mrb[0].mxu0
        %v6561 = vadd.f32 0.0, %v6560
        %v6562 = vpop.f32.mrb[0].mxu0
        %6563 = vmatprep.mubr.bf16.mxu0 %v5689
        %6564 = vmatmul.mubr.bf16.gmra.mrb[0].mxu0 %v5688
        %v6565 = vpop.f32.mrb[0].mxu0
        %v6566 = vadd.f32 0.0, %v6565
        %v6567 = vpop.f32.mrb[0].mxu0
        %v6568 = vpop.f32.mrb[0].mxu0
        %v6569 = vadd.f32 0.0, %v6568
        %v6570 = vpop.f32.mrb[0].mxu0
        %6571 = vmatprep.mubr.bf16.mxu0 %v5698
        %6572 = vmatmul.mubr.bf16.gmra.mrb[0].mxu0 %v5697
        %v6573 = vpop.f32.mrb[0].mxu0
        %v6574 = vadd.f32 0.0, %v6573
        %v6575 = vpop.f32.mrb[0].mxu0
        %v6576 = vpop.f32.mrb[0].mxu0
        %v6577 = vadd.f32 0.0, %v6576
        %v6578 = vpop.f32.mrb[0].mxu0
        %6579 = vmatprep.mubr.bf16.mxu0 %v5707
        %6580 = vmatmul.mubr.bf16.gmra.mrb[0].mxu0 %v5706
        %v6581 = vpop.f32.mrb[0].mxu0
        %v6582 = vadd.f32 0.0, %v6581
        %v6583 = vpop.f32.mrb[0].mxu0
        %v6584 = vpop.f32.mrb[0].mxu0
        %v6585 = vadd.f32 0.0, %v6584
        %v6586 = vpop.f32.mrb[0].mxu0
        %6587 = vmatprep.mubr.bf16.mxu0 %v5716
        %6588 = vmatmul.mubr.bf16.gmra.mrb[0].mxu0 %v5715
        %v6589 = vpop.f32.mrb[0].mxu0
        %v6590 = vadd.f32 0.0, %v6589
        %v6591 = vpop.f32.mrb[0].mxu0
        %v6592 = vpop.f32.mrb[0].mxu0
        %v6593 = vadd.f32 0.0, %v6592
        %v6594 = vpop.f32.mrb[0].mxu0
        %6595 = vmatprep.mubr.bf16.mxu0 %v5725
        %6596 = vmatmul.mubr.bf16.gmra.mrb[0].mxu0 %v5724
        %v6597 = vpop.f32.mrb[0].mxu0
        %v6598 = vadd.f32 0.0, %v6597
        %v6599 = vpop.f32.mrb[0].mxu0
        %v6600 = vpop.f32.mrb[0].mxu0
        %v6601 = vadd.f32 0.0, %v6600
        %v6602 = vpop.f32.mrb[0].mxu0
        %6603 = vmatprep.mubr.bf16.mxu0 %v5734
        %6604 = vmatmul.mubr.bf16.gmra.mrb[0].mxu0 %v5733
        %v6605 = vpop.f32.mrb[0].mxu0
        %v6606 = vadd.f32 0.0, %v6605
        %v6607 = vpop.f32.mrb[0].mxu0
        %v6608 = vpop.f32.mrb[0].mxu0
        %v6609 = vadd.f32 0.0, %v6608
        %v6610 = vpop.f32.mrb[0].mxu0
        %6611 = vmatprep.mubr.bf16.mxu0 %v5743
        %6612 = vmatmul.mubr.bf16.gmra.mrb[0].mxu0 %v5742
        %v6613 = vpop.f32.mrb[0].mxu0
        %v6614 = vadd.f32 0.0, %v6613
        %v6615 = vpop.f32.mrb[0].mxu0
        %v6616 = vpop.f32.mrb[0].mxu0
        %v6617 = vadd.f32 0.0, %v6616
        %v6618 = vpop.f32.mrb[0].mxu0
        %6619 = vmatprep.mubr.bf16.mxu0 %v5752
        %6620 = vmatmul.mubr.bf16.gmra.mrb[0].mxu0 %v5751
        %v6621 = vpop.f32.mrb[0].mxu0
        %v6622 = vadd.f32 0.0, %v6621
        %v6623 = vpop.f32.mrb[0].mxu0
        %v6624 = vpop.f32.mrb[0].mxu0
        %v6625 = vadd.f32 0.0, %v6624
        %v6626 = vpop.f32.mrb[0].mxu0
        %6627 = vmatprep.mubr.bf16.mxu0 %v5761
        %6628 = vmatmul.mubr.bf16.gmra.mrb[0].mxu0 %v5760
        %v6629 = vpop.f32.mrb[0].mxu0
        %v6630 = vadd.f32 0.0, %v6629
        %v6631 = vpop.f32.mrb[0].mxu0
        %v6632 = vpop.f32.mrb[0].mxu0
        %v6633 = vadd.f32 0.0, %v6632
        %v6634 = vpop.f32.mrb[0].mxu0
        %6635 = vmatprep.mubr.bf16.mxu0 %v5770
        %6636 = vmatmul.mubr.bf16.gmra.mrb[0].mxu0 %v5769
        %v6637 = vpop.f32.mrb[0].mxu0
        %v6638 = vadd.f32 0.0, %v6637
        %v6639 = vpop.f32.mrb[0].mxu0
        %v6640 = vpop.f32.mrb[0].mxu0
        %v6641 = vadd.f32 0.0, %v6640
        %v6642 = vpop.f32.mrb[0].mxu0
        %6643 = vmatprep.mubr.bf16.mxu0 %v5779
        %6644 = vmatmul.mubr.bf16.gmra.mrb[0].mxu0 %v5778
        %v6645 = vpop.f32.mrb[0].mxu0
        %v6646 = vadd.f32 0.0, %v6645
        %v6647 = vpop.f32.mrb[0].mxu0
        %v6648 = vpop.f32.mrb[0].mxu0
        %v6649 = vadd.f32 0.0, %v6648
        %v6650 = vpop.f32.mrb[0].mxu0
        %6651 = vdwg.mxu0
        %6652 = vmatprep.subr.bf16.mxu0 0
        %6653 = vmatpush1.bf16.msra.mxu0 %v6235
        %6654 = vmatprep.subr.bf16.mxu0 0
        %6655 = vmatpush1.bf16.msra.mxu0 %v6236
        %6656 = vmatprep.subr.bf16.mxu0 0
        %6657 = vmatpush1.bf16.msra.mxu0 %v6237
        %6658 = vmatprep.subr.bf16.mxu0 0
        %6659 = vmatpush1.bf16.msra.mxu0 %v6238
        %6660 = vmatprep.subr.bf16.mxu0 0
        %6661 = vmatpush1.bf16.msra.mxu0 %v6239
        %6662 = vmatprep.subr.bf16.mxu0 0
        %6663 = vmatpush1.bf16.msra.mxu0 %v6240
        %6664 = vmatprep.subr.bf16.mxu0 0
        %6665 = vmatpush1.bf16.msra.mxu0 %v6241
        %6666 = vmatprep.subr.bf16.mxu0 0
        %6667 = vmatpush1.bf16.msra.mxu0 %v6242
        %6668 = vmatprep.subr.bf16.mxu0 0
        %6669 = vmatpush1.bf16.msra.mxu0 %v6243
        %6670 = vmatprep.subr.bf16.mxu0 0
        %6671 = vmatpush1.bf16.msra.mxu0 %v6244
        %6672 = vmatprep.subr.bf16.mxu0 0
        %6673 = vmatpush1.bf16.msra.mxu0 %v6245
        %6674 = vmatprep.subr.bf16.mxu0 0
        %6675 = vmatpush1.bf16.msra.mxu0 %v6246
        %6676 = vmatprep.subr.bf16.mxu0 0
        %6677 = vmatpush1.bf16.msra.mxu0 %v6247
        %6678 = vmatprep.subr.bf16.mxu0 0
        %6679 = vmatpush1.bf16.msra.mxu0 %v6248
        %6680 = vmatprep.subr.bf16.mxu0 0
        %6681 = vmatpush1.bf16.msra.mxu0 %v6249
        %6682 = vmatprep.subr.bf16.mxu0 0
        %6683 = vmatpush1.bf16.msra.mxu0 %v6250
        %6684 = vmatprep.mubr.bf16.mxu0 %v5502
        %6685 = vmatmul.mubr.bf16.gmra.mrb[0].mxu0 %v5501
        %v6686 = vpop.f32.mrb[0].mxu0
        %v6687 = vadd.f32 %v6398, %v6686
        %v6688 = vpop.f32.mrb[0].mxu0
        %v6689 = vpop.f32.mrb[0].mxu0
        %v6690 = vadd.f32 %v6401, %v6689
        %v6691 = vpop.f32.mrb[0].mxu0
        %6692 = vmatprep.mubr.bf16.mxu0 %v5511
        %6693 = vmatmul.mubr.bf16.gmra.mrb[0].mxu0 %v5510
        %v6694 = vpop.f32.mrb[0].mxu0
        %v6695 = vadd.f32 %v6406, %v6694
        %v6696 = vpop.f32.mrb[0].mxu0
        %v6697 = vpop.f32.mrb[0].mxu0
        %v6698 = vadd.f32 %v6409, %v6697
        %v6699 = vpop.f32.mrb[0].mxu0
        %6700 = vmatprep.mubr.bf16.mxu0 %v5520
        %6701 = vmatmul.mubr.bf16.gmra.mrb[0].mxu0 %v5519
        %v6702 = vpop.f32.mrb[0].mxu0
        %v6703 = vadd.f32 %v6414, %v6702
        %v6704 = vpop.f32.mrb[0].mxu0
        %v6705 = vpop.f32.mrb[0].mxu0
        %v6706 = vadd.f32 %v6417, %v6705
        %v6707 = vpop.f32.mrb[0].mxu0
        %6708 = vmatprep.mubr.bf16.mxu0 %v5529
        %6709 = vmatmul.mubr.bf16.gmra.mrb[0].mxu0 %v5528
        %v6710 = vpop.f32.mrb[0].mxu0
        %v6711 = vadd.f32 %v6422, %v6710
        %v6712 = vpop.f32.mrb[0].mxu0
        %v6713 = vpop.f32.mrb[0].mxu0
        %v6714 = vadd.f32 %v6425, %v6713
        %v6715 = vpop.f32.mrb[0].mxu0
        %6716 = vmatprep.mubr.bf16.mxu0 %v5538
        %6717 = vmatmul.mubr.bf16.gmra.mrb[0].mxu0 %v5537
        %v6718 = vpop.f32.mrb[0].mxu0
        %v6719 = vadd.f32 %v6430, %v6718
        %v6720 = vpop.f32.mrb[0].mxu0
        %v6721 = vpop.f32.mrb[0].mxu0
        %v6722 = vadd.f32 %v6433, %v6721
        %v6723 = vpop.f32.mrb[0].mxu0
        %6724 = vmatprep.mubr.bf16.mxu0 %v5547
        %6725 = vmatmul.mubr.bf16.gmra.mrb[0].mxu0 %v5546
        %v6726 = vpop.f32.mrb[0].mxu0
        %v6727 = vadd.f32 %v6438, %v6726
        %v6728 = vpop.f32.mrb[0].mxu0
        %v6729 = vpop.f32.mrb[0].mxu0
        %v6730 = vadd.f32 %v6441, %v6729
        %v6731 = vpop.f32.mrb[0].mxu0
        %6732 = vmatprep.mubr.bf16.mxu0 %v5556
        %6733 = vmatmul.mubr.bf16.gmra.mrb[0].mxu0 %v5555
        %v6734 = vpop.f32.mrb[0].mxu0
        %v6735 = vadd.f32 %v6446, %v6734
        %v6736 = vpop.f32.mrb[0].mxu0
        %v6737 = vpop.f32.mrb[0].mxu0
        %v6738 = vadd.f32 %v6449, %v6737
        %v6739 = vpop.f32.mrb[0].mxu0
        %6740 = vmatprep.mubr.bf16.mxu0 %v5565
        %6741 = vmatmul.mubr.bf16.gmra.mrb[0].mxu0 %v5564
        %v6742 = vpop.f32.mrb[0].mxu0
        %v6743 = vadd.f32 %v6454, %v6742
        %v6744 = vpop.f32.mrb[0].mxu0
        %v6745 = vpop.f32.mrb[0].mxu0
        %v6746 = vadd.f32 %v6457, %v6745
        %v6747 = vpop.f32.mrb[0].mxu0
        %6748 = vmatprep.mubr.bf16.mxu0 %v5574
        %6749 = vmatmul.mubr.bf16.gmra.mrb[0].mxu0 %v5573
        %v6750 = vpop.f32.mrb[0].mxu0
        %v6751 = vadd.f32 %v6462, %v6750
        %v6752 = vpop.f32.mrb[0].mxu0
        %v6753 = vpop.f32.mrb[0].mxu0
        %v6754 = vadd.f32 %v6465, %v6753
        %v6755 = vpop.f32.mrb[0].mxu0
        %6756 = vmatprep.mubr.bf16.mxu0 %v5583
        %6757 = vmatmul.mubr.bf16.gmra.mrb[0].mxu0 %v5582
        %v6758 = vpop.f32.mrb[0].mxu0
        %v6759 = vadd.f32 %v6470, %v6758
        %v6760 = vpop.f32.mrb[0].mxu0
        %v6761 = vpop.f32.mrb[0].mxu0
        %v6762 = vadd.f32 %v6473, %v6761
        %v6763 = vpop.f32.mrb[0].mxu0
        %6764 = vmatprep.mubr.bf16.mxu0 %v5592
        %6765 = vmatmul.mubr.bf16.gmra.mrb[0].mxu0 %v5591
        %v6766 = vpop.f32.mrb[0].mxu0
        %v6767 = vadd.f32 %v6478, %v6766
        %v6768 = vpop.f32.mrb[0].mxu0
        %v6769 = vpop.f32.mrb[0].mxu0
        %v6770 = vadd.f32 %v6481, %v6769
        %v6771 = vpop.f32.mrb[0].mxu0
        %6772 = vmatprep.mubr.bf16.mxu0 %v5601
        %6773 = vmatmul.mubr.bf16.gmra.mrb[0].mxu0 %v5600
        %v6774 = vpop.f32.mrb[0].mxu0
        %v6775 = vadd.f32 %v6486, %v6774
        %v6776 = vpop.f32.mrb[0].mxu0
        %v6777 = vpop.f32.mrb[0].mxu0
        %v6778 = vadd.f32 %v6489, %v6777
        %v6779 = vpop.f32.mrb[0].mxu0
        %6780 = vmatprep.mubr.bf16.mxu0 %v5610
        %6781 = vmatmul.mubr.bf16.gmra.mrb[0].mxu0 %v5609
        %v6782 = vpop.f32.mrb[0].mxu0
        %v6783 = vadd.f32 %v6494, %v6782
        %v6784 = vpop.f32.mrb[0].mxu0
        %v6785 = vpop.f32.mrb[0].mxu0
        %v6786 = vadd.f32 %v6497, %v6785
        %v6787 = vpop.f32.mrb[0].mxu0
        %6788 = vmatprep.mubr.bf16.mxu0 %v5619
        %6789 = vmatmul.mubr.bf16.gmra.mrb[0].mxu0 %v5618
        %v6790 = vpop.f32.mrb[0].mxu0
        %v6791 = vadd.f32 %v6502, %v6790
        %v6792 = vpop.f32.mrb[0].mxu0
        %v6793 = vpop.f32.mrb[0].mxu0
        %v6794 = vadd.f32 %v6505, %v6793
        %v6795 = vpop.f32.mrb[0].mxu0
        %6796 = vmatprep.mubr.bf16.mxu0 %v5628
        %6797 = vmatmul.mubr.bf16.gmra.mrb[0].mxu0 %v5627
        %v6798 = vpop.f32.mrb[0].mxu0
        %v6799 = vadd.f32 %v6510, %v6798
        %v6800 = vpop.f32.mrb[0].mxu0
        %v6801 = vpop.f32.mrb[0].mxu0
        %v6802 = vadd.f32 %v6513, %v6801
        %v6803 = vpop.f32.mrb[0].mxu0
        %6804 = vmatprep.mubr.bf16.mxu0 %v5637
        %6805 = vmatmul.mubr.bf16.gmra.mrb[0].mxu0 %v5636
        %v6806 = vpop.f32.mrb[0].mxu0
        %v6807 = vadd.f32 %v6518, %v6806
        %v6808 = vpop.f32.mrb[0].mxu0
        %v6809 = vpop.f32.mrb[0].mxu0
        %v6810 = vadd.f32 %v6521, %v6809
        %v6811 = vpop.f32.mrb[0].mxu0
        %6812 = vmatprep.mubr.bf16.mxu0 %v5646
        %6813 = vmatmul.mubr.bf16.gmra.mrb[0].mxu0 %v5645
        %v6814 = vpop.f32.mrb[0].mxu0
        %v6815 = vadd.f32 %v6526, %v6814
        %v6816 = vpop.f32.mrb[0].mxu0
        %v6817 = vpop.f32.mrb[0].mxu0
        %v6818 = vadd.f32 %v6529, %v6817
        %v6819 = vpop.f32.mrb[0].mxu0
        %6820 = vmatprep.mubr.bf16.mxu0 %v5655
        %6821 = vmatmul.mubr.bf16.gmra.mrb[0].mxu0 %v5654
        %v6822 = vpop.f32.mrb[0].mxu0
        %v6823 = vadd.f32 %v6534, %v6822
        %v6824 = vpop.f32.mrb[0].mxu0
        %v6825 = vpop.f32.mrb[0].mxu0
        %v6826 = vadd.f32 %v6537, %v6825
        %v6827 = vpop.f32.mrb[0].mxu0
        %6828 = vmatprep.mubr.bf16.mxu0 %v5664
        %6829 = vmatmul.mubr.bf16.gmra.mrb[0].mxu0 %v5663
        %v6830 = vpop.f32.mrb[0].mxu0
        %v6831 = vadd.f32 %v6542, %v6830
        %v6832 = vpop.f32.mrb[0].mxu0
        %v6833 = vpop.f32.mrb[0].mxu0
        %v6834 = vadd.f32 %v6545, %v6833
        %v6835 = vpop.f32.mrb[0].mxu0
        %6836 = vmatprep.mubr.bf16.mxu0 %v5673
        %6837 = vmatmul.mubr.bf16.gmra.mrb[0].mxu0 %v5672
        %v6838 = vpop.f32.mrb[0].mxu0
        %v6839 = vadd.f32 %v6550, %v6838
        %v6840 = vpop.f32.mrb[0].mxu0
        %v6841 = vpop.f32.mrb[0].mxu0
        %v6842 = vadd.f32 %v6553, %v6841
        %v6843 = vpop.f32.mrb[0].mxu0
        %6844 = vmatprep.mubr.bf16.mxu0 %v5682
        %6845 = vmatmul.mubr.bf16.gmra.mrb[0].mxu0 %v5681
        %v6846 = vpop.f32.mrb[0].mxu0
        %v6847 = vadd.f32 %v6558, %v6846
        %v6848 = vpop.f32.mrb[0].mxu0
        %v6849 = vpop.f32.mrb[0].mxu0
        %v6850 = vadd.f32 %v6561, %v6849
        %v6851 = vpop.f32.mrb[0].mxu0
        %6852 = vmatprep.mubr.bf16.mxu0 %v5691
        %6853 = vmatmul.mubr.bf16.gmra.mrb[0].mxu0 %v5690
        %v6854 = vpop.f32.mrb[0].mxu0
        %v6855 = vadd.f32 %v6566, %v6854
        %v6856 = vpop.f32.mrb[0].mxu0
        %v6857 = vpop.f32.mrb[0].mxu0
        %v6858 = vadd.f32 %v6569, %v6857
        %v6859 = vpop.f32.mrb[0].mxu0
        %6860 = vmatprep.mubr.bf16.mxu0 %v5700
        %6861 = vmatmul.mubr.bf16.gmra.mrb[0].mxu0 %v5699
        %v6862 = vpop.f32.mrb[0].mxu0
        %v6863 = vadd.f32 %v6574, %v6862
        %v6864 = vpop.f32.mrb[0].mxu0
        %v6865 = vpop.f32.mrb[0].mxu0
        %v6866 = vadd.f32 %v6577, %v6865
        %v6867 = vpop.f32.mrb[0].mxu0
        %6868 = vmatprep.mubr.bf16.mxu0 %v5709
        %6869 = vmatmul.mubr.bf16.gmra.mrb[0].mxu0 %v5708
        %v6870 = vpop.f32.mrb[0].mxu0
        %v6871 = vadd.f32 %v6582, %v6870
        %v6872 = vpop.f32.mrb[0].mxu0
        %v6873 = vpop.f32.mrb[0].mxu0
        %v6874 = vadd.f32 %v6585, %v6873
        %v6875 = vpop.f32.mrb[0].mxu0
        %6876 = vmatprep.mubr.bf16.mxu0 %v5718
        %6877 = vmatmul.mubr.bf16.gmra.mrb[0].mxu0 %v5717
        %v6878 = vpop.f32.mrb[0].mxu0
        %v6879 = vadd.f32 %v6590, %v6878
        %v6880 = vpop.f32.mrb[0].mxu0
        %v6881 = vpop.f32.mrb[0].mxu0
        %v6882 = vadd.f32 %v6593, %v6881
        %v6883 = vpop.f32.mrb[0].mxu0
        %6884 = vmatprep.mubr.bf16.mxu0 %v5727
        %6885 = vmatmul.mubr.bf16.gmra.mrb[0].mxu0 %v5726
        %v6886 = vpop.f32.mrb[0].mxu0
        %v6887 = vadd.f32 %v6598, %v6886
        %v6888 = vpop.f32.mrb[0].mxu0
        %v6889 = vpop.f32.mrb[0].mxu0
        %v6890 = vadd.f32 %v6601, %v6889
        %v6891 = vpop.f32.mrb[0].mxu0
        %6892 = vmatprep.mubr.bf16.mxu0 %v5736
        %6893 = vmatmul.mubr.bf16.gmra.mrb[0].mxu0 %v5735
        %v6894 = vpop.f32.mrb[0].mxu0
        %v6895 = vadd.f32 %v6606, %v6894
        %v6896 = vpop.f32.mrb[0].mxu0
        %v6897 = vpop.f32.mrb[0].mxu0
        %v6898 = vadd.f32 %v6609, %v6897
        %v6899 = vpop.f32.mrb[0].mxu0
        %6900 = vmatprep.mubr.bf16.mxu0 %v5745
        %6901 = vmatmul.mubr.bf16.gmra.mrb[0].mxu0 %v5744
        %v6902 = vpop.f32.mrb[0].mxu0
        %v6903 = vadd.f32 %v6614, %v6902
        %v6904 = vpop.f32.mrb[0].mxu0
        %v6905 = vpop.f32.mrb[0].mxu0
        %v6906 = vadd.f32 %v6617, %v6905
        %v6907 = vpop.f32.mrb[0].mxu0
        %6908 = vmatprep.mubr.bf16.mxu0 %v5754
        %6909 = vmatmul.mubr.bf16.gmra.mrb[0].mxu0 %v5753
        %v6910 = vpop.f32.mrb[0].mxu0
        %v6911 = vadd.f32 %v6622, %v6910
        %v6912 = vpop.f32.mrb[0].mxu0
        %v6913 = vpop.f32.mrb[0].mxu0
        %v6914 = vadd.f32 %v6625, %v6913
        %v6915 = vpop.f32.mrb[0].mxu0
        %6916 = vmatprep.mubr.bf16.mxu0 %v5763
        %6917 = vmatmul.mubr.bf16.gmra.mrb[0].mxu0 %v5762
        %v6918 = vpop.f32.mrb[0].mxu0
        %v6919 = vadd.f32 %v6630, %v6918
        %v6920 = vpop.f32.mrb[0].mxu0
        %v6921 = vpop.f32.mrb[0].mxu0
        %v6922 = vadd.f32 %v6633, %v6921
        %v6923 = vpop.f32.mrb[0].mxu0
        %6924 = vmatprep.mubr.bf16.mxu0 %v5772
        %6925 = vmatmul.mubr.bf16.gmra.mrb[0].mxu0 %v5771
        %v6926 = vpop.f32.mrb[0].mxu0
        %v6927 = vadd.f32 %v6638, %v6926
        %v6928 = vpop.f32.mrb[0].mxu0
        %v6929 = vpop.f32.mrb[0].mxu0
        %v6930 = vadd.f32 %v6641, %v6929
        %v6931 = vpop.f32.mrb[0].mxu0
        %6932 = vmatprep.mubr.bf16.mxu0 %v5781
        %6933 = vmatmul.mubr.bf16.gmra.mrb[0].mxu0 %v5780
        %v6934 = vpop.f32.mrb[0].mxu0
        %v6935 = vadd.f32 %v6646, %v6934
        %v6936 = vpop.f32.mrb[0].mxu0
        %v6937 = vpop.f32.mrb[0].mxu0
        %v6938 = vadd.f32 %v6649, %v6937
        %v6939 = vpop.f32.mrb[0].mxu0
        %6940 = vdwg.mxu0
        %6941 = vmatprep.subr.bf16.mxu0 0
        %6942 = vmatpush1.bf16.msra.mxu0 %v6251
        %6943 = vmatprep.subr.bf16.mxu0 0
        %6944 = vmatpush1.bf16.msra.mxu0 %v6252
        %6945 = vmatprep.subr.bf16.mxu0 0
        %6946 = vmatpush1.bf16.msra.mxu0 %v6253
        %6947 = vmatprep.subr.bf16.mxu0 0
        %6948 = vmatpush1.bf16.msra.mxu0 %v6254
        %6949 = vmatprep.subr.bf16.mxu0 0
        %6950 = vmatpush1.bf16.msra.mxu0 %v6255
        %6951 = vmatprep.subr.bf16.mxu0 0
        %6952 = vmatpush1.bf16.msra.mxu0 %v6256
        %6953 = vmatprep.subr.bf16.mxu0 0
        %6954 = vmatpush1.bf16.msra.mxu0 %v6257
        %6955 = vmatprep.subr.bf16.mxu0 0
        %6956 = vmatpush1.bf16.msra.mxu0 %v6258
        %6957 = vmatprep.subr.bf16.mxu0 0
        %6958 = vmatpush1.bf16.msra.mxu0 %v6259
        %6959 = vmatprep.subr.bf16.mxu0 0
        %6960 = vmatpush1.bf16.msra.mxu0 %v6260
        %6961 = vmatprep.subr.bf16.mxu0 0
        %6962 = vmatpush1.bf16.msra.mxu0 %v6261
        %6963 = vmatprep.subr.bf16.mxu0 0
        %6964 = vmatpush1.bf16.msra.mxu0 %v6262
        %6965 = vmatprep.subr.bf16.mxu0 0
        %6966 = vmatpush1.bf16.msra.mxu0 %v6263
        %6967 = vmatprep.subr.bf16.mxu0 0
        %6968 = vmatpush1.bf16.msra.mxu0 %v6264
        %6969 = vmatprep.subr.bf16.mxu0 0
        %6970 = vmatpush1.bf16.msra.mxu0 %v6265
        %6971 = vmatprep.subr.bf16.mxu0 0
        %6972 = vmatpush1.bf16.msra.mxu0 %v6266
        %6973 = vmatprep.mubr.bf16.mxu0 %v5504
        %6974 = vmatmul.mubr.bf16.gmra.mrb[0].mxu0 %v5503
        %v6975 = vpop.f32.mrb[0].mxu0
        %v6976 = vadd.f32 %v6687, %v6975
        %v6977 = vpop.f32.mrb[0].mxu0
        %v6978 = vpop.f32.mrb[0].mxu0
        %v6979 = vadd.f32 %v6690, %v6978
        %v6980 = vpop.f32.mrb[0].mxu0
        %6981 = vmatprep.mubr.bf16.mxu0 %v5513
        %6982 = vmatmul.mubr.bf16.gmra.mrb[0].mxu0 %v5512
        %v6983 = vpop.f32.mrb[0].mxu0
        %v6984 = vadd.f32 %v6695, %v6983
        %v6985 = vpop.f32.mrb[0].mxu0
        %v6986 = vpop.f32.mrb[0].mxu0
        %v6987 = vadd.f32 %v6698, %v6986
        %v6988 = vpop.f32.mrb[0].mxu0
        %6989 = vmatprep.mubr.bf16.mxu0 %v5522
        %6990 = vmatmul.mubr.bf16.gmra.mrb[0].mxu0 %v5521
        %v6991 = vpop.f32.mrb[0].mxu0
        %v6992 = vadd.f32 %v6703, %v6991
        %v6993 = vpop.f32.mrb[0].mxu0
        %v6994 = vpop.f32.mrb[0].mxu0
        %v6995 = vadd.f32 %v6706, %v6994
        %v6996 = vpop.f32.mrb[0].mxu0
        %6997 = vmatprep.mubr.bf16.mxu0 %v5531
        %6998 = vmatmul.mubr.bf16.gmra.mrb[0].mxu0 %v5530
        %v6999 = vpop.f32.mrb[0].mxu0
        %v7000 = vadd.f32 %v6711, %v6999
        %v7001 = vpop.f32.mrb[0].mxu0
        %v7002 = vpop.f32.mrb[0].mxu0
        %v7003 = vadd.f32 %v6714, %v7002
        %v7004 = vpop.f32.mrb[0].mxu0
        %7005 = vmatprep.mubr.bf16.mxu0 %v5540
        %7006 = vmatmul.mubr.bf16.gmra.mrb[0].mxu0 %v5539
        %v7007 = vpop.f32.mrb[0].mxu0
        %v7008 = vadd.f32 %v6719, %v7007
        %v7009 = vpop.f32.mrb[0].mxu0
        %v7010 = vpop.f32.mrb[0].mxu0
        %v7011 = vadd.f32 %v6722, %v7010
        %v7012 = vpop.f32.mrb[0].mxu0
        %7013 = vmatprep.mubr.bf16.mxu0 %v5549
        %7014 = vmatmul.mubr.bf16.gmra.mrb[0].mxu0 %v5548
        %v7015 = vpop.f32.mrb[0].mxu0
        %v7016 = vadd.f32 %v6727, %v7015
        %v7017 = vpop.f32.mrb[0].mxu0
        %v7018 = vpop.f32.mrb[0].mxu0
        %v7019 = vadd.f32 %v6730, %v7018
        %v7020 = vpop.f32.mrb[0].mxu0
        %7021 = vmatprep.mubr.bf16.mxu0 %v5558
        %7022 = vmatmul.mubr.bf16.gmra.mrb[0].mxu0 %v5557
        %v7023 = vpop.f32.mrb[0].mxu0
        %v7024 = vadd.f32 %v6735, %v7023
        %v7025 = vpop.f32.mrb[0].mxu0
        %v7026 = vpop.f32.mrb[0].mxu0
        %v7027 = vadd.f32 %v6738, %v7026
        %v7028 = vpop.f32.mrb[0].mxu0
        %7029 = vmatprep.mubr.bf16.mxu0 %v5567
        %7030 = vmatmul.mubr.bf16.gmra.mrb[0].mxu0 %v5566
        %v7031 = vpop.f32.mrb[0].mxu0
        %v7032 = vadd.f32 %v6743, %v7031
        %v7033 = vpop.f32.mrb[0].mxu0
        %v7034 = vpop.f32.mrb[0].mxu0
        %v7035 = vadd.f32 %v6746, %v7034
        %v7036 = vpop.f32.mrb[0].mxu0
        %7037 = vmatprep.mubr.bf16.mxu0 %v5576
        %7038 = vmatmul.mubr.bf16.gmra.mrb[0].mxu0 %v5575
        %v7039 = vpop.f32.mrb[0].mxu0
        %v7040 = vadd.f32 %v6751, %v7039
        %v7041 = vpop.f32.mrb[0].mxu0
        %v7042 = vpop.f32.mrb[0].mxu0
        %v7043 = vadd.f32 %v6754, %v7042
        %v7044 = vpop.f32.mrb[0].mxu0
        %7045 = vmatprep.mubr.bf16.mxu0 %v5585
        %7046 = vmatmul.mubr.bf16.gmra.mrb[0].mxu0 %v5584
        %v7047 = vpop.f32.mrb[0].mxu0
        %v7048 = vadd.f32 %v6759, %v7047
        %v7049 = vpop.f32.mrb[0].mxu0
        %v7050 = vpop.f32.mrb[0].mxu0
        %v7051 = vadd.f32 %v6762, %v7050
        %v7052 = vpop.f32.mrb[0].mxu0
        %7053 = vmatprep.mubr.bf16.mxu0 %v5594
        %7054 = vmatmul.mubr.bf16.gmra.mrb[0].mxu0 %v5593
        %v7055 = vpop.f32.mrb[0].mxu0
        %v7056 = vadd.f32 %v6767, %v7055
        %v7057 = vpop.f32.mrb[0].mxu0
        %v7058 = vpop.f32.mrb[0].mxu0
        %v7059 = vadd.f32 %v6770, %v7058
        %v7060 = vpop.f32.mrb[0].mxu0
        %7061 = vmatprep.mubr.bf16.mxu0 %v5603
        %7062 = vmatmul.mubr.bf16.gmra.mrb[0].mxu0 %v5602
        %v7063 = vpop.f32.mrb[0].mxu0
        %v7064 = vadd.f32 %v6775, %v7063
        %v7065 = vpop.f32.mrb[0].mxu0
        %v7066 = vpop.f32.mrb[0].mxu0
        %v7067 = vadd.f32 %v6778, %v7066
        %v7068 = vpop.f32.mrb[0].mxu0
        %7069 = vmatprep.mubr.bf16.mxu0 %v5612
        %7070 = vmatmul.mubr.bf16.gmra.mrb[0].mxu0 %v5611
        %v7071 = vpop.f32.mrb[0].mxu0
        %v7072 = vadd.f32 %v6783, %v7071
        %v7073 = vpop.f32.mrb[0].mxu0
        %v7074 = vpop.f32.mrb[0].mxu0
        %v7075 = vadd.f32 %v6786, %v7074
        %v7076 = vpop.f32.mrb[0].mxu0
        %7077 = vmatprep.mubr.bf16.mxu0 %v5621
        %7078 = vmatmul.mubr.bf16.gmra.mrb[0].mxu0 %v5620
        %v7079 = vpop.f32.mrb[0].mxu0
        %v7080 = vadd.f32 %v6791, %v7079
        %v7081 = vpop.f32.mrb[0].mxu0
        %v7082 = vpop.f32.mrb[0].mxu0
        %v7083 = vadd.f32 %v6794, %v7082
        %v7084 = vpop.f32.mrb[0].mxu0
        %7085 = vmatprep.mubr.bf16.mxu0 %v5630
        %7086 = vmatmul.mubr.bf16.gmra.mrb[0].mxu0 %v5629
        %v7087 = vpop.f32.mrb[0].mxu0
        %v7088 = vadd.f32 %v6799, %v7087
        %v7089 = vpop.f32.mrb[0].mxu0
        %v7090 = vpop.f32.mrb[0].mxu0
        %v7091 = vadd.f32 %v6802, %v7090
        %v7092 = vpop.f32.mrb[0].mxu0
        %7093 = vmatprep.mubr.bf16.mxu0 %v5639
        %7094 = vmatmul.mubr.bf16.gmra.mrb[0].mxu0 %v5638
        %v7095 = vpop.f32.mrb[0].mxu0
        %v7096 = vadd.f32 %v6807, %v7095
        %v7097 = vpop.f32.mrb[0].mxu0
        %v7098 = vpop.f32.mrb[0].mxu0
        %v7099 = vadd.f32 %v6810, %v7098
        %v7100 = vpop.f32.mrb[0].mxu0
        %7101 = vmatprep.mubr.bf16.mxu0 %v5648
        %7102 = vmatmul.mubr.bf16.gmra.mrb[0].mxu0 %v5647
        %v7103 = vpop.f32.mrb[0].mxu0
        %v7104 = vadd.f32 %v6815, %v7103
        %v7105 = vpop.f32.mrb[0].mxu0
        %v7106 = vpop.f32.mrb[0].mxu0
        %v7107 = vadd.f32 %v6818, %v7106
        %v7108 = vpop.f32.mrb[0].mxu0
        %7109 = vmatprep.mubr.bf16.mxu0 %v5657
        %7110 = vmatmul.mubr.bf16.gmra.mrb[0].mxu0 %v5656
        %v7111 = vpop.f32.mrb[0].mxu0
        %v7112 = vadd.f32 %v6823, %v7111
        %v7113 = vpop.f32.mrb[0].mxu0
        %v7114 = vpop.f32.mrb[0].mxu0
        %v7115 = vadd.f32 %v6826, %v7114
        %v7116 = vpop.f32.mrb[0].mxu0
        %7117 = vmatprep.mubr.bf16.mxu0 %v5666
        %7118 = vmatmul.mubr.bf16.gmra.mrb[0].mxu0 %v5665
        %v7119 = vpop.f32.mrb[0].mxu0
        %v7120 = vadd.f32 %v6831, %v7119
        %v7121 = vpop.f32.mrb[0].mxu0
        %v7122 = vpop.f32.mrb[0].mxu0
        %v7123 = vadd.f32 %v6834, %v7122
        %v7124 = vpop.f32.mrb[0].mxu0
        %7125 = vmatprep.mubr.bf16.mxu0 %v5675
        %7126 = vmatmul.mubr.bf16.gmra.mrb[0].mxu0 %v5674
        %v7127 = vpop.f32.mrb[0].mxu0
        %v7128 = vadd.f32 %v6839, %v7127
        %v7129 = vpop.f32.mrb[0].mxu0
        %v7130 = vpop.f32.mrb[0].mxu0
        %v7131 = vadd.f32 %v6842, %v7130
        %v7132 = vpop.f32.mrb[0].mxu0
        %7133 = vmatprep.mubr.bf16.mxu0 %v5684
        %7134 = vmatmul.mubr.bf16.gmra.mrb[0].mxu0 %v5683
        %v7135 = vpop.f32.mrb[0].mxu0
        %v7136 = vadd.f32 %v6847, %v7135
        %v7137 = vpop.f32.mrb[0].mxu0
        %v7138 = vpop.f32.mrb[0].mxu0
        %v7139 = vadd.f32 %v6850, %v7138
        %v7140 = vpop.f32.mrb[0].mxu0
        %7141 = vmatprep.mubr.bf16.mxu0 %v5693
        %7142 = vmatmul.mubr.bf16.gmra.mrb[0].mxu0 %v5692
        %v7143 = vpop.f32.mrb[0].mxu0
        %v7144 = vadd.f32 %v6855, %v7143
        %v7145 = vpop.f32.mrb[0].mxu0
        %v7146 = vpop.f32.mrb[0].mxu0
        %v7147 = vadd.f32 %v6858, %v7146
        %v7148 = vpop.f32.mrb[0].mxu0
        %7149 = vmatprep.mubr.bf16.mxu0 %v5702
        %7150 = vmatmul.mubr.bf16.gmra.mrb[0].mxu0 %v5701
        %v7151 = vpop.f32.mrb[0].mxu0
        %v7152 = vadd.f32 %v6863, %v7151
        %v7153 = vpop.f32.mrb[0].mxu0
        %v7154 = vpop.f32.mrb[0].mxu0
        %v7155 = vadd.f32 %v6866, %v7154
        %v7156 = vpop.f32.mrb[0].mxu0
        %7157 = vmatprep.mubr.bf16.mxu0 %v5711
        %7158 = vmatmul.mubr.bf16.gmra.mrb[0].mxu0 %v5710
        %v7159 = vpop.f32.mrb[0].mxu0
        %v7160 = vadd.f32 %v6871, %v7159
        %v7161 = vpop.f32.mrb[0].mxu0
        %v7162 = vpop.f32.mrb[0].mxu0
        %v7163 = vadd.f32 %v6874, %v7162
        %v7164 = vpop.f32.mrb[0].mxu0
        %7165 = vmatprep.mubr.bf16.mxu0 %v5720
        %7166 = vmatmul.mubr.bf16.gmra.mrb[0].mxu0 %v5719
        %v7167 = vpop.f32.mrb[0].mxu0
        %v7168 = vadd.f32 %v6879, %v7167
        %v7169 = vpop.f32.mrb[0].mxu0
        %v7170 = vpop.f32.mrb[0].mxu0
        %v7171 = vadd.f32 %v6882, %v7170
        %v7172 = vpop.f32.mrb[0].mxu0
        %7173 = vmatprep.mubr.bf16.mxu0 %v5729
        %7174 = vmatmul.mubr.bf16.gmra.mrb[0].mxu0 %v5728
        %v7175 = vpop.f32.mrb[0].mxu0
        %v7176 = vadd.f32 %v6887, %v7175
        %v7177 = vpop.f32.mrb[0].mxu0
        %v7178 = vpop.f32.mrb[0].mxu0
        %v7179 = vadd.f32 %v6890, %v7178
        %v7180 = vpop.f32.mrb[0].mxu0
        %7181 = vmatprep.mubr.bf16.mxu0 %v5738
        %7182 = vmatmul.mubr.bf16.gmra.mrb[0].mxu0 %v5737
        %v7183 = vpop.f32.mrb[0].mxu0
        %v7184 = vadd.f32 %v6895, %v7183
        %v7185 = vpop.f32.mrb[0].mxu0
        %v7186 = vpop.f32.mrb[0].mxu0
        %v7187 = vadd.f32 %v6898, %v7186
        %v7188 = vpop.f32.mrb[0].mxu0
        %7189 = vmatprep.mubr.bf16.mxu0 %v5747
        %7190 = vmatmul.mubr.bf16.gmra.mrb[0].mxu0 %v5746
        %v7191 = vpop.f32.mrb[0].mxu0
        %v7192 = vadd.f32 %v6903, %v7191
        %v7193 = vpop.f32.mrb[0].mxu0
        %v7194 = vpop.f32.mrb[0].mxu0
        %v7195 = vadd.f32 %v6906, %v7194
        %v7196 = vpop.f32.mrb[0].mxu0
        %7197 = vmatprep.mubr.bf16.mxu0 %v5756
        %7198 = vmatmul.mubr.bf16.gmra.mrb[0].mxu0 %v5755
        %v7199 = vpop.f32.mrb[0].mxu0
        %v7200 = vadd.f32 %v6911, %v7199
        %v7201 = vpop.f32.mrb[0].mxu0
        %v7202 = vpop.f32.mrb[0].mxu0
        %v7203 = vadd.f32 %v6914, %v7202
        %v7204 = vpop.f32.mrb[0].mxu0
        %7205 = vmatprep.mubr.bf16.mxu0 %v5765
        %7206 = vmatmul.mubr.bf16.gmra.mrb[0].mxu0 %v5764
        %v7207 = vpop.f32.mrb[0].mxu0
        %v7208 = vadd.f32 %v6919, %v7207
        %v7209 = vpop.f32.mrb[0].mxu0
        %v7210 = vpop.f32.mrb[0].mxu0
        %v7211 = vadd.f32 %v6922, %v7210
        %v7212 = vpop.f32.mrb[0].mxu0
        %7213 = vmatprep.mubr.bf16.mxu0 %v5774
        %7214 = vmatmul.mubr.bf16.gmra.mrb[0].mxu0 %v5773
        %v7215 = vpop.f32.mrb[0].mxu0
        %v7216 = vadd.f32 %v6927, %v7215
        %v7217 = vpop.f32.mrb[0].mxu0
        %v7218 = vpop.f32.mrb[0].mxu0
        %v7219 = vadd.f32 %v6930, %v7218
        %v7220 = vpop.f32.mrb[0].mxu0
        %7221 = vmatprep.mubr.bf16.mxu0 %v5783
        %7222 = vmatmul.mubr.bf16.gmra.mrb[0].mxu0 %v5782
        %v7223 = vpop.f32.mrb[0].mxu0
        %v7224 = vadd.f32 %v6935, %v7223
        %v7225 = vpop.f32.mrb[0].mxu0
        %v7226 = vpop.f32.mrb[0].mxu0
        %v7227 = vadd.f32 %v6938, %v7226
        %v7228 = vpop.f32.mrb[0].mxu0
        %7229 = vdwg.mxu0
        %7230 = vmatprep.subr.bf16.mxu0 0
        %7231 = vmatpush1.bf16.msra.mxu0 %v6267
        %7232 = vmatprep.subr.bf16.mxu0 0
        %7233 = vmatpush1.bf16.msra.mxu0 %v6268
        %7234 = vmatprep.subr.bf16.mxu0 0
        %7235 = vmatpush1.bf16.msra.mxu0 %v6269
        %7236 = vmatprep.subr.bf16.mxu0 0
        %7237 = vmatpush1.bf16.msra.mxu0 %v6270
        %7238 = vmatprep.subr.bf16.mxu0 0
        %7239 = vmatpush1.bf16.msra.mxu0 %v6271
        %7240 = vmatprep.subr.bf16.mxu0 0
        %7241 = vmatpush1.bf16.msra.mxu0 %v6272
        %7242 = vmatprep.subr.bf16.mxu0 0
        %7243 = vmatpush1.bf16.msra.mxu0 %v6273
        %7244 = vmatprep.subr.bf16.mxu0 0
        %7245 = vmatpush1.bf16.msra.mxu0 %v6274
        %7246 = vmatprep.subr.bf16.mxu0 0
        %7247 = vmatpush1.bf16.msra.mxu0 %v6275
        %7248 = vmatprep.subr.bf16.mxu0 0
        %7249 = vmatpush1.bf16.msra.mxu0 %v6276
        %7250 = vmatprep.subr.bf16.mxu0 0
        %7251 = vmatpush1.bf16.msra.mxu0 %v6277
        %7252 = vmatprep.subr.bf16.mxu0 0
        %7253 = vmatpush1.bf16.msra.mxu0 %v6278
        %7254 = vmatprep.subr.bf16.mxu0 0
        %7255 = vmatpush1.bf16.msra.mxu0 %v6279
        %7256 = vmatprep.subr.bf16.mxu0 0
        %7257 = vmatpush1.bf16.msra.mxu0 %v6280
        %7258 = vmatprep.subr.bf16.mxu0 0
        %7259 = vmatpush1.bf16.msra.mxu0 %v6281
        %7260 = vmatprep.subr.bf16.mxu0 0
        %7261 = vmatpush1.bf16.msra.mxu0 %v6282
        %7262 = vmatprep.mubr.bf16.mxu0 %v5506
        %7263 = vmatmul.mubr.bf16.gmra.mrb[0].mxu0 %v5505
        %v7264 = vpop.f32.mrb[0].mxu0
        %v7265 = vadd.f32 %v6976, %v7264
        %v7266 = vpop.f32.mrb[0].mxu0
        %v7267 = vpop.f32.mrb[0].mxu0
        %v7268 = vadd.f32 %v6979, %v7267
        %v7269 = vpop.f32.mrb[0].mxu0
        %7270 = vmatprep.mubr.bf16.mxu0 %v5515
        %7271 = vmatmul.mubr.bf16.gmra.mrb[0].mxu0 %v5514
        %v7272 = vpop.f32.mrb[0].mxu0
        %v7273 = vadd.f32 %v6984, %v7272
        %v7274 = vpop.f32.mrb[0].mxu0
        %v7275 = vpop.f32.mrb[0].mxu0
        %v7276 = vadd.f32 %v6987, %v7275
        %v7277 = vpop.f32.mrb[0].mxu0
        %7278 = vmatprep.mubr.bf16.mxu0 %v5524
        %7279 = vmatmul.mubr.bf16.gmra.mrb[0].mxu0 %v5523
        %v7280 = vpop.f32.mrb[0].mxu0
        %v7281 = vadd.f32 %v6992, %v7280
        %v7282 = vpop.f32.mrb[0].mxu0
        %v7283 = vpop.f32.mrb[0].mxu0
        %v7284 = vadd.f32 %v6995, %v7283
        %v7285 = vpop.f32.mrb[0].mxu0
        %7286 = vmatprep.mubr.bf16.mxu0 %v5533
        %7287 = vmatmul.mubr.bf16.gmra.mrb[0].mxu0 %v5532
        %v7288 = vpop.f32.mrb[0].mxu0
        %v7289 = vadd.f32 %v7000, %v7288
        %v7290 = vpop.f32.mrb[0].mxu0
        %v7291 = vpop.f32.mrb[0].mxu0
        %v7292 = vadd.f32 %v7003, %v7291
        %v7293 = vpop.f32.mrb[0].mxu0
        %7294 = vmatprep.mubr.bf16.mxu0 %v5542
        %7295 = vmatmul.mubr.bf16.gmra.mrb[0].mxu0 %v5541
        %v7296 = vpop.f32.mrb[0].mxu0
        %v7297 = vadd.f32 %v7008, %v7296
        %v7298 = vpop.f32.mrb[0].mxu0
        %v7299 = vpop.f32.mrb[0].mxu0
        %v7300 = vadd.f32 %v7011, %v7299
        %v7301 = vpop.f32.mrb[0].mxu0
        %7302 = vmatprep.mubr.bf16.mxu0 %v5551
        %7303 = vmatmul.mubr.bf16.gmra.mrb[0].mxu0 %v5550
        %v7304 = vpop.f32.mrb[0].mxu0
        %v7305 = vadd.f32 %v7016, %v7304
        %v7306 = vpop.f32.mrb[0].mxu0
        %v7307 = vpop.f32.mrb[0].mxu0
        %v7308 = vadd.f32 %v7019, %v7307
        %v7309 = vpop.f32.mrb[0].mxu0
        %7310 = vmatprep.mubr.bf16.mxu0 %v5560
        %7311 = vmatmul.mubr.bf16.gmra.mrb[0].mxu0 %v5559
        %v7312 = vpop.f32.mrb[0].mxu0
        %v7313 = vadd.f32 %v7024, %v7312
        %v7314 = vpop.f32.mrb[0].mxu0
        %v7315 = vpop.f32.mrb[0].mxu0
        %v7316 = vadd.f32 %v7027, %v7315
        %v7317 = vpop.f32.mrb[0].mxu0
        %7318 = vmatprep.mubr.bf16.mxu0 %v5569
        %7319 = vmatmul.mubr.bf16.gmra.mrb[0].mxu0 %v5568
        %v7320 = vpop.f32.mrb[0].mxu0
        %v7321 = vadd.f32 %v7032, %v7320
        %v7322 = vpop.f32.mrb[0].mxu0
        %v7323 = vpop.f32.mrb[0].mxu0
        %v7324 = vadd.f32 %v7035, %v7323
        %v7325 = vpop.f32.mrb[0].mxu0
        %7326 = vmatprep.mubr.bf16.mxu0 %v5578
        %7327 = vmatmul.mubr.bf16.gmra.mrb[0].mxu0 %v5577
        %v7328 = vpop.f32.mrb[0].mxu0
        %v7329 = vadd.f32 %v7040, %v7328
        %v7330 = vpop.f32.mrb[0].mxu0
        %v7331 = vpop.f32.mrb[0].mxu0
        %v7332 = vadd.f32 %v7043, %v7331
        %v7333 = vpop.f32.mrb[0].mxu0
        %7334 = vmatprep.mubr.bf16.mxu0 %v5587
        %7335 = vmatmul.mubr.bf16.gmra.mrb[0].mxu0 %v5586
        %v7336 = vpop.f32.mrb[0].mxu0
        %v7337 = vadd.f32 %v7048, %v7336
        %v7338 = vpop.f32.mrb[0].mxu0
        %v7339 = vpop.f32.mrb[0].mxu0
        %v7340 = vadd.f32 %v7051, %v7339
        %v7341 = vpop.f32.mrb[0].mxu0
        %7342 = vmatprep.mubr.bf16.mxu0 %v5596
        %7343 = vmatmul.mubr.bf16.gmra.mrb[0].mxu0 %v5595
        %v7344 = vpop.f32.mrb[0].mxu0
        %v7345 = vadd.f32 %v7056, %v7344
        %v7346 = vpop.f32.mrb[0].mxu0
        %v7347 = vpop.f32.mrb[0].mxu0
        %v7348 = vadd.f32 %v7059, %v7347
        %v7349 = vpop.f32.mrb[0].mxu0
        %7350 = vmatprep.mubr.bf16.mxu0 %v5605
        %7351 = vmatmul.mubr.bf16.gmra.mrb[0].mxu0 %v5604
        %v7352 = vpop.f32.mrb[0].mxu0
        %v7353 = vadd.f32 %v7064, %v7352
        %v7354 = vpop.f32.mrb[0].mxu0
        %v7355 = vpop.f32.mrb[0].mxu0
        %v7356 = vadd.f32 %v7067, %v7355
        %v7357 = vpop.f32.mrb[0].mxu0
        %7358 = vmatprep.mubr.bf16.mxu0 %v5614
        %7359 = vmatmul.mubr.bf16.gmra.mrb[0].mxu0 %v5613
        %v7360 = vpop.f32.mrb[0].mxu0
        %v7361 = vadd.f32 %v7072, %v7360
        %v7362 = vpop.f32.mrb[0].mxu0
        %v7363 = vpop.f32.mrb[0].mxu0
        %v7364 = vadd.f32 %v7075, %v7363
        %v7365 = vpop.f32.mrb[0].mxu0
        %7366 = vmatprep.mubr.bf16.mxu0 %v5623
        %7367 = vmatmul.mubr.bf16.gmra.mrb[0].mxu0 %v5622
        %v7368 = vpop.f32.mrb[0].mxu0
        %v7369 = vadd.f32 %v7080, %v7368
        %v7370 = vpop.f32.mrb[0].mxu0
        %v7371 = vpop.f32.mrb[0].mxu0
        %v7372 = vadd.f32 %v7083, %v7371
        %v7373 = vpop.f32.mrb[0].mxu0
        %7374 = vmatprep.mubr.bf16.mxu0 %v5632
        %7375 = vmatmul.mubr.bf16.gmra.mrb[0].mxu0 %v5631
        %v7376 = vpop.f32.mrb[0].mxu0
        %v7377 = vadd.f32 %v7088, %v7376
        %v7378 = vpop.f32.mrb[0].mxu0
        %v7379 = vpop.f32.mrb[0].mxu0
        %v7380 = vadd.f32 %v7091, %v7379
        %v7381 = vpop.f32.mrb[0].mxu0
        %7382 = vmatprep.mubr.bf16.mxu0 %v5641
        %7383 = vmatmul.mubr.bf16.gmra.mrb[0].mxu0 %v5640
        %v7384 = vpop.f32.mrb[0].mxu0
        %v7385 = vadd.f32 %v7096, %v7384
        %v7386 = vpop.f32.mrb[0].mxu0
        %v7387 = vpop.f32.mrb[0].mxu0
        %v7388 = vadd.f32 %v7099, %v7387
        %v7389 = vpop.f32.mrb[0].mxu0
        %7390 = vmatprep.mubr.bf16.mxu0 %v5650
        %7391 = vmatmul.mubr.bf16.gmra.mrb[0].mxu0 %v5649
        %v7392 = vpop.f32.mrb[0].mxu0
        %v7393 = vadd.f32 %v7104, %v7392
        %v7394 = vpop.f32.mrb[0].mxu0
        %v7395 = vpop.f32.mrb[0].mxu0
        %v7396 = vadd.f32 %v7107, %v7395
        %v7397 = vpop.f32.mrb[0].mxu0
        %7398 = vmatprep.mubr.bf16.mxu0 %v5659
        %7399 = vmatmul.mubr.bf16.gmra.mrb[0].mxu0 %v5658
        %v7400 = vpop.f32.mrb[0].mxu0
        %v7401 = vadd.f32 %v7112, %v7400
        %v7402 = vpop.f32.mrb[0].mxu0
        %v7403 = vpop.f32.mrb[0].mxu0
        %v7404 = vadd.f32 %v7115, %v7403
        %v7405 = vpop.f32.mrb[0].mxu0
        %7406 = vmatprep.mubr.bf16.mxu0 %v5668
        %7407 = vmatmul.mubr.bf16.gmra.mrb[0].mxu0 %v5667
        %v7408 = vpop.f32.mrb[0].mxu0
        %v7409 = vadd.f32 %v7120, %v7408
        %v7410 = vpop.f32.mrb[0].mxu0
        %v7411 = vpop.f32.mrb[0].mxu0
        %v7412 = vadd.f32 %v7123, %v7411
        %v7413 = vpop.f32.mrb[0].mxu0
        %7414 = vmatprep.mubr.bf16.mxu0 %v5677
        %7415 = vmatmul.mubr.bf16.gmra.mrb[0].mxu0 %v5676
        %v7416 = vpop.f32.mrb[0].mxu0
        %v7417 = vadd.f32 %v7128, %v7416
        %v7418 = vpop.f32.mrb[0].mxu0
        %v7419 = vpop.f32.mrb[0].mxu0
        %v7420 = vadd.f32 %v7131, %v7419
        %v7421 = vpop.f32.mrb[0].mxu0
        %7422 = vmatprep.mubr.bf16.mxu0 %v5686
        %7423 = vmatmul.mubr.bf16.gmra.mrb[0].mxu0 %v5685
        %v7424 = vpop.f32.mrb[0].mxu0
        %v7425 = vadd.f32 %v7136, %v7424
        %v7426 = vpop.f32.mrb[0].mxu0
        %v7427 = vpop.f32.mrb[0].mxu0
        %v7428 = vadd.f32 %v7139, %v7427
        %v7429 = vpop.f32.mrb[0].mxu0
        %7430 = vmatprep.mubr.bf16.mxu0 %v5695
        %7431 = vmatmul.mubr.bf16.gmra.mrb[0].mxu0 %v5694
        %v7432 = vpop.f32.mrb[0].mxu0
        %v7433 = vadd.f32 %v7144, %v7432
        %v7434 = vpop.f32.mrb[0].mxu0
        %v7435 = vpop.f32.mrb[0].mxu0
        %v7436 = vadd.f32 %v7147, %v7435
        %v7437 = vpop.f32.mrb[0].mxu0
        %7438 = vmatprep.mubr.bf16.mxu0 %v5704
        %7439 = vmatmul.mubr.bf16.gmra.mrb[0].mxu0 %v5703
        %v7440 = vpop.f32.mrb[0].mxu0
        %v7441 = vadd.f32 %v7152, %v7440
        %v7442 = vpop.f32.mrb[0].mxu0
        %v7443 = vpop.f32.mrb[0].mxu0
        %v7444 = vadd.f32 %v7155, %v7443
        %v7445 = vpop.f32.mrb[0].mxu0
        %7446 = vmatprep.mubr.bf16.mxu0 %v5713
        %7447 = vmatmul.mubr.bf16.gmra.mrb[0].mxu0 %v5712
        %v7448 = vpop.f32.mrb[0].mxu0
        %v7449 = vadd.f32 %v7160, %v7448
        %v7450 = vpop.f32.mrb[0].mxu0
        %v7451 = vpop.f32.mrb[0].mxu0
        %v7452 = vadd.f32 %v7163, %v7451
        %v7453 = vpop.f32.mrb[0].mxu0
        %7454 = vmatprep.mubr.bf16.mxu0 %v5722
        %7455 = vmatmul.mubr.bf16.gmra.mrb[0].mxu0 %v5721
        %v7456 = vpop.f32.mrb[0].mxu0
        %v7457 = vadd.f32 %v7168, %v7456
        %v7458 = vpop.f32.mrb[0].mxu0
        %v7459 = vpop.f32.mrb[0].mxu0
        %v7460 = vadd.f32 %v7171, %v7459
        %v7461 = vpop.f32.mrb[0].mxu0
        %7462 = vmatprep.mubr.bf16.mxu0 %v5731
        %7463 = vmatmul.mubr.bf16.gmra.mrb[0].mxu0 %v5730
        %v7464 = vpop.f32.mrb[0].mxu0
        %v7465 = vadd.f32 %v7176, %v7464
        %v7466 = vpop.f32.mrb[0].mxu0
        %v7467 = vpop.f32.mrb[0].mxu0
        %v7468 = vadd.f32 %v7179, %v7467
        %v7469 = vpop.f32.mrb[0].mxu0
        %7470 = vmatprep.mubr.bf16.mxu0 %v5740
        %7471 = vmatmul.mubr.bf16.gmra.mrb[0].mxu0 %v5739
        %v7472 = vpop.f32.mrb[0].mxu0
        %v7473 = vadd.f32 %v7184, %v7472
        %v7474 = vpop.f32.mrb[0].mxu0
        %v7475 = vpop.f32.mrb[0].mxu0
        %v7476 = vadd.f32 %v7187, %v7475
        %v7477 = vpop.f32.mrb[0].mxu0
        %7478 = vmatprep.mubr.bf16.mxu0 %v5749
        %7479 = vmatmul.mubr.bf16.gmra.mrb[0].mxu0 %v5748
        %v7480 = vpop.f32.mrb[0].mxu0
        %v7481 = vadd.f32 %v7192, %v7480
        %v7482 = vpop.f32.mrb[0].mxu0
        %v7483 = vpop.f32.mrb[0].mxu0
        %v7484 = vadd.f32 %v7195, %v7483
        %v7485 = vpop.f32.mrb[0].mxu0
        %7486 = vmatprep.mubr.bf16.mxu0 %v5758
        %7487 = vmatmul.mubr.bf16.gmra.mrb[0].mxu0 %v5757
        %v7488 = vpop.f32.mrb[0].mxu0
        %v7489 = vadd.f32 %v7200, %v7488
        %v7490 = vpop.f32.mrb[0].mxu0
        %v7491 = vpop.f32.mrb[0].mxu0
        %v7492 = vadd.f32 %v7203, %v7491
        %v7493 = vpop.f32.mrb[0].mxu0
        %7494 = vmatprep.mubr.bf16.mxu0 %v5767
        %7495 = vmatmul.mubr.bf16.gmra.mrb[0].mxu0 %v5766
        %v7496 = vpop.f32.mrb[0].mxu0
        %v7497 = vadd.f32 %v7208, %v7496
        %v7498 = vpop.f32.mrb[0].mxu0
        %v7499 = vpop.f32.mrb[0].mxu0
        %v7500 = vadd.f32 %v7211, %v7499
        %v7501 = vpop.f32.mrb[0].mxu0
        %7502 = vmatprep.mubr.bf16.mxu0 %v5776
        %7503 = vmatmul.mubr.bf16.gmra.mrb[0].mxu0 %v5775
        %v7504 = vpop.f32.mrb[0].mxu0
        %v7505 = vadd.f32 %v7216, %v7504
        %v7506 = vpop.f32.mrb[0].mxu0
        %v7507 = vpop.f32.mrb[0].mxu0
        %v7508 = vadd.f32 %v7219, %v7507
        %v7509 = vpop.f32.mrb[0].mxu0
        %7510 = vmatprep.mubr.bf16.mxu0 %v5785
        %7511 = vmatmul.mubr.bf16.gmra.mrb[0].mxu0 %v5784
        %v7512 = vpop.f32.mrb[0].mxu0
        %v7513 = vadd.f32 %v7224, %v7512
        %v7514 = vpop.f32.mrb[0].mxu0
        %v7515 = vpop.f32.mrb[0].mxu0
        %v7516 = vadd.f32 %v7227, %v7515
        %v7517 = vpop.f32.mrb[0].mxu0
        %7518 = vdwg.mxu0
        %7519 = vmatprep.subr.bf16.mxu0 0
        %7520 = vmatpush1.bf16.msra.mxu0 %v6283
        %7521 = vmatprep.subr.bf16.mxu0 0
        %7522 = vmatpush1.bf16.msra.mxu0 %v6284
        %7523 = vmatprep.subr.bf16.mxu0 0
        %7524 = vmatpush1.bf16.msra.mxu0 %v6285
        %7525 = vmatprep.subr.bf16.mxu0 0
        %7526 = vmatpush1.bf16.msra.mxu0 %v6286
        %7527 = vmatprep.subr.bf16.mxu0 0
        %7528 = vmatpush1.bf16.msra.mxu0 %v6287
        %7529 = vmatprep.subr.bf16.mxu0 0
        %7530 = vmatpush1.bf16.msra.mxu0 %v6288
        %7531 = vmatprep.subr.bf16.mxu0 0
        %7532 = vmatpush1.bf16.msra.mxu0 %v6289
        %7533 = vmatprep.subr.bf16.mxu0 0
        %7534 = vmatpush1.bf16.msra.mxu0 %v6290
        %7535 = vmatprep.subr.bf16.mxu0 0
        %7536 = vmatpush1.bf16.msra.mxu0 0
        %7537 = vmatprep.subr.bf16.mxu0 0
        %7538 = vmatpush1.bf16.msra.mxu0 0
        %7539 = vmatprep.subr.bf16.mxu0 0
        %7540 = vmatpush1.bf16.msra.mxu0 0
        %7541 = vmatprep.subr.bf16.mxu0 0
        %7542 = vmatpush1.bf16.msra.mxu0 0
        %7543 = vmatprep.subr.bf16.mxu0 0
        %7544 = vmatpush1.bf16.msra.mxu0 0
        %7545 = vmatprep.subr.bf16.mxu0 0
        %7546 = vmatpush1.bf16.msra.mxu0 0
        %7547 = vmatprep.subr.bf16.mxu0 0
        %7548 = vmatpush1.bf16.msra.mxu0 0
        %7549 = vmatprep.subr.bf16.mxu0 0
        %7550 = vmatpush1.bf16.msra.mxu0 0
        %7551 = vmatprep.mubr.bf16.mxu0 0
        %7552 = vmatmul.mubr.bf16.gmra.mrb[0].mxu0 %v5507
        %v7553 = vpop.f32.mrb[0].mxu0
        %v7554 = vadd.f32 %v7265, %v7553
        %v7555 = vpop.f32.mrb[0].mxu0
        %v7556 = vpop.f32.mrb[0].mxu0
        %v7557 = vadd.f32 %v7268, %v7556
        %v7558 = vpop.f32.mrb[0].mxu0
        %7559 = vmatprep.mubr.bf16.mxu0 0
        %7560 = vmatmul.mubr.bf16.gmra.mrb[0].mxu0 %v5516
        %v7561 = vpop.f32.mrb[0].mxu0
        %v7562 = vadd.f32 %v7273, %v7561
        %v7563 = vpop.f32.mrb[0].mxu0
        %v7564 = vpop.f32.mrb[0].mxu0
        %v7565 = vadd.f32 %v7276, %v7564
        %v7566 = vpop.f32.mrb[0].mxu0
        %7567 = vmatprep.mubr.bf16.mxu0 0
        %7568 = vmatmul.mubr.bf16.gmra.mrb[0].mxu0 %v5525
        %v7569 = vpop.f32.mrb[0].mxu0
        %v7570 = vadd.f32 %v7281, %v7569
        %v7571 = vpop.f32.mrb[0].mxu0
        %v7572 = vpop.f32.mrb[0].mxu0
        %v7573 = vadd.f32 %v7284, %v7572
        %v7574 = vpop.f32.mrb[0].mxu0
        %7575 = vmatprep.mubr.bf16.mxu0 0
        %7576 = vmatmul.mubr.bf16.gmra.mrb[0].mxu0 %v5534
        %v7577 = vpop.f32.mrb[0].mxu0
        %v7578 = vadd.f32 %v7289, %v7577
        %v7579 = vpop.f32.mrb[0].mxu0
        %v7580 = vpop.f32.mrb[0].mxu0
        %v7581 = vadd.f32 %v7292, %v7580
        %v7582 = vpop.f32.mrb[0].mxu0
        %7583 = vmatprep.mubr.bf16.mxu0 0
        %7584 = vmatmul.mubr.bf16.gmra.mrb[0].mxu0 %v5543
        %v7585 = vpop.f32.mrb[0].mxu0
        %v7586 = vadd.f32 %v7297, %v7585
        %v7587 = vpop.f32.mrb[0].mxu0
        %v7588 = vpop.f32.mrb[0].mxu0
        %v7589 = vadd.f32 %v7300, %v7588
        %v7590 = vpop.f32.mrb[0].mxu0
        %7591 = vmatprep.mubr.bf16.mxu0 0
        %7592 = vmatmul.mubr.bf16.gmra.mrb[0].mxu0 %v5552
        %v7593 = vpop.f32.mrb[0].mxu0
        %v7594 = vadd.f32 %v7305, %v7593
        %v7595 = vpop.f32.mrb[0].mxu0
        %v7596 = vpop.f32.mrb[0].mxu0
        %v7597 = vadd.f32 %v7308, %v7596
        %v7598 = vpop.f32.mrb[0].mxu0
        %7599 = vmatprep.mubr.bf16.mxu0 0
        %7600 = vmatmul.mubr.bf16.gmra.mrb[0].mxu0 %v5561
        %v7601 = vpop.f32.mrb[0].mxu0
        %v7602 = vadd.f32 %v7313, %v7601
        %v7603 = vpop.f32.mrb[0].mxu0
        %v7604 = vpop.f32.mrb[0].mxu0
        %v7605 = vadd.f32 %v7316, %v7604
        %v7606 = vpop.f32.mrb[0].mxu0
        %7607 = vmatprep.mubr.bf16.mxu0 0
        %7608 = vmatmul.mubr.bf16.gmra.mrb[0].mxu0 %v5570
        %v7609 = vpop.f32.mrb[0].mxu0
        %v7610 = vadd.f32 %v7321, %v7609
        %v7611 = vpop.f32.mrb[0].mxu0
        %v7612 = vpop.f32.mrb[0].mxu0
        %v7613 = vadd.f32 %v7324, %v7612
        %v7614 = vpop.f32.mrb[0].mxu0
        %7615 = vmatprep.mubr.bf16.mxu0 0
        %7616 = vmatmul.mubr.bf16.gmra.mrb[0].mxu0 %v5579
        %v7617 = vpop.f32.mrb[0].mxu0
        %v7618 = vadd.f32 %v7329, %v7617
        %v7619 = vpop.f32.mrb[0].mxu0
        %v7620 = vpop.f32.mrb[0].mxu0
        %v7621 = vadd.f32 %v7332, %v7620
        %v7622 = vpop.f32.mrb[0].mxu0
        %7623 = vmatprep.mubr.bf16.mxu0 0
        %7624 = vmatmul.mubr.bf16.gmra.mrb[0].mxu0 %v5588
        %v7625 = vpop.f32.mrb[0].mxu0
        %v7626 = vadd.f32 %v7337, %v7625
        %v7627 = vpop.f32.mrb[0].mxu0
        %v7628 = vpop.f32.mrb[0].mxu0
        %v7629 = vadd.f32 %v7340, %v7628
        %v7630 = vpop.f32.mrb[0].mxu0
        %7631 = vmatprep.mubr.bf16.mxu0 0
        %7632 = vmatmul.mubr.bf16.gmra.mrb[0].mxu0 %v5597
        %v7633 = vpop.f32.mrb[0].mxu0
        %v7634 = vadd.f32 %v7345, %v7633
        %v7635 = vpop.f32.mrb[0].mxu0
        %v7636 = vpop.f32.mrb[0].mxu0
        %v7637 = vadd.f32 %v7348, %v7636
        %v7638 = vpop.f32.mrb[0].mxu0
        %7639 = vmatprep.mubr.bf16.mxu0 0
        %7640 = vmatmul.mubr.bf16.gmra.mrb[0].mxu0 %v5606
        %v7641 = vpop.f32.mrb[0].mxu0
        %v7642 = vadd.f32 %v7353, %v7641
        %v7643 = vpop.f32.mrb[0].mxu0
        %v7644 = vpop.f32.mrb[0].mxu0
        %v7645 = vadd.f32 %v7356, %v7644
        %v7646 = vpop.f32.mrb[0].mxu0
        %7647 = vmatprep.mubr.bf16.mxu0 0
        %7648 = vmatmul.mubr.bf16.gmra.mrb[0].mxu0 %v5615
        %v7649 = vpop.f32.mrb[0].mxu0
        %v7650 = vadd.f32 %v7361, %v7649
        %v7651 = vpop.f32.mrb[0].mxu0
        %v7652 = vpop.f32.mrb[0].mxu0
        %v7653 = vadd.f32 %v7364, %v7652
        %v7654 = vpop.f32.mrb[0].mxu0
        %7655 = vmatprep.mubr.bf16.mxu0 0
        %7656 = vmatmul.mubr.bf16.gmra.mrb[0].mxu0 %v5624
        %v7657 = vpop.f32.mrb[0].mxu0
        %v7658 = vadd.f32 %v7369, %v7657
        %v7659 = vpop.f32.mrb[0].mxu0
        %v7660 = vpop.f32.mrb[0].mxu0
        %v7661 = vadd.f32 %v7372, %v7660
        %v7662 = vpop.f32.mrb[0].mxu0
        %7663 = vmatprep.mubr.bf16.mxu0 0
        %7664 = vmatmul.mubr.bf16.gmra.mrb[0].mxu0 %v5633
        %v7665 = vpop.f32.mrb[0].mxu0
        %v7666 = vadd.f32 %v7377, %v7665
        %v7667 = vpop.f32.mrb[0].mxu0
        %v7668 = vpop.f32.mrb[0].mxu0
        %v7669 = vadd.f32 %v7380, %v7668
        %v7670 = vpop.f32.mrb[0].mxu0
        %7671 = vmatprep.mubr.bf16.mxu0 0
        %7672 = vmatmul.mubr.bf16.gmra.mrb[0].mxu0 %v5642
        %v7673 = vpop.f32.mrb[0].mxu0
        %v7674 = vadd.f32 %v7385, %v7673
        %v7675 = vpop.f32.mrb[0].mxu0
        %v7676 = vpop.f32.mrb[0].mxu0
        %v7677 = vadd.f32 %v7388, %v7676
        %v7678 = vpop.f32.mrb[0].mxu0
        %7679 = vmatprep.mubr.bf16.mxu0 0
        %7680 = vmatmul.mubr.bf16.gmra.mrb[0].mxu0 %v5651
        %v7681 = vpop.f32.mrb[0].mxu0
        %v7682 = vadd.f32 %v7393, %v7681
        %v7683 = vpop.f32.mrb[0].mxu0
        %v7684 = vpop.f32.mrb[0].mxu0
        %v7685 = vadd.f32 %v7396, %v7684
        %v7686 = vpop.f32.mrb[0].mxu0
        %7687 = vmatprep.mubr.bf16.mxu0 0
        %7688 = vmatmul.mubr.bf16.gmra.mrb[0].mxu0 %v5660
        %v7689 = vpop.f32.mrb[0].mxu0
        %v7690 = vadd.f32 %v7401, %v7689
        %v7691 = vpop.f32.mrb[0].mxu0
        %v7692 = vpop.f32.mrb[0].mxu0
        %v7693 = vadd.f32 %v7404, %v7692
        %v7694 = vpop.f32.mrb[0].mxu0
        %7695 = vmatprep.mubr.bf16.mxu0 0
        %7696 = vmatmul.mubr.bf16.gmra.mrb[0].mxu0 %v5669
        %v7697 = vpop.f32.mrb[0].mxu0
        %v7698 = vadd.f32 %v7409, %v7697
        %v7699 = vpop.f32.mrb[0].mxu0
        %v7700 = vpop.f32.mrb[0].mxu0
        %v7701 = vadd.f32 %v7412, %v7700
        %v7702 = vpop.f32.mrb[0].mxu0
        %7703 = vmatprep.mubr.bf16.mxu0 0
        %7704 = vmatmul.mubr.bf16.gmra.mrb[0].mxu0 %v5678
        %v7705 = vpop.f32.mrb[0].mxu0
        %v7706 = vadd.f32 %v7417, %v7705
        %v7707 = vpop.f32.mrb[0].mxu0
        %v7708 = vpop.f32.mrb[0].mxu0
        %v7709 = vadd.f32 %v7420, %v7708
        %v7710 = vpop.f32.mrb[0].mxu0
        %7711 = vmatprep.mubr.bf16.mxu0 0
        %7712 = vmatmul.mubr.bf16.gmra.mrb[0].mxu0 %v5687
        %v7713 = vpop.f32.mrb[0].mxu0
        %v7714 = vadd.f32 %v7425, %v7713
        %v7715 = vpop.f32.mrb[0].mxu0
        %v7716 = vpop.f32.mrb[0].mxu0
        %v7717 = vadd.f32 %v7428, %v7716
        %v7718 = vpop.f32.mrb[0].mxu0
        %7719 = vmatprep.mubr.bf16.mxu0 0
        %7720 = vmatmul.mubr.bf16.gmra.mrb[0].mxu0 %v5696
        %v7721 = vpop.f32.mrb[0].mxu0
        %v7722 = vadd.f32 %v7433, %v7721
        %v7723 = vpop.f32.mrb[0].mxu0
        %v7724 = vpop.f32.mrb[0].mxu0
        %v7725 = vadd.f32 %v7436, %v7724
        %v7726 = vpop.f32.mrb[0].mxu0
        %7727 = vmatprep.mubr.bf16.mxu0 0
        %7728 = vmatmul.mubr.bf16.gmra.mrb[0].mxu0 %v5705
        %v7729 = vpop.f32.mrb[0].mxu0
        %v7730 = vadd.f32 %v7441, %v7729
        %v7731 = vpop.f32.mrb[0].mxu0
        %v7732 = vpop.f32.mrb[0].mxu0
        %v7733 = vadd.f32 %v7444, %v7732
        %v7734 = vpop.f32.mrb[0].mxu0
        %7735 = vmatprep.mubr.bf16.mxu0 0
        %7736 = vmatmul.mubr.bf16.gmra.mrb[0].mxu0 %v5714
        %v7737 = vpop.f32.mrb[0].mxu0
        %v7738 = vadd.f32 %v7449, %v7737
        %v7739 = vpop.f32.mrb[0].mxu0
        %v7740 = vpop.f32.mrb[0].mxu0
        %v7741 = vadd.f32 %v7452, %v7740
        %v7742 = vpop.f32.mrb[0].mxu0
        %7743 = vmatprep.mubr.bf16.mxu0 0
        %7744 = vmatmul.mubr.bf16.gmra.mrb[0].mxu0 %v5723
        %v7745 = vpop.f32.mrb[0].mxu0
        %v7746 = vadd.f32 %v7457, %v7745
        %v7747 = vpop.f32.mrb[0].mxu0
        %v7748 = vpop.f32.mrb[0].mxu0
        %v7749 = vadd.f32 %v7460, %v7748
        %v7750 = vpop.f32.mrb[0].mxu0
        %7751 = vmatprep.mubr.bf16.mxu0 0
        %7752 = vmatmul.mubr.bf16.gmra.mrb[0].mxu0 %v5732
        %v7753 = vpop.f32.mrb[0].mxu0
        %v7754 = vadd.f32 %v7465, %v7753
        %v7755 = vpop.f32.mrb[0].mxu0
        %v7756 = vpop.f32.mrb[0].mxu0
        %v7757 = vadd.f32 %v7468, %v7756
        %v7758 = vpop.f32.mrb[0].mxu0
        %7759 = vmatprep.mubr.bf16.mxu0 0
        %7760 = vmatmul.mubr.bf16.gmra.mrb[0].mxu0 %v5741
        %v7761 = vpop.f32.mrb[0].mxu0
        %v7762 = vadd.f32 %v7473, %v7761
        %v7763 = vpop.f32.mrb[0].mxu0
        %v7764 = vpop.f32.mrb[0].mxu0
        %v7765 = vadd.f32 %v7476, %v7764
        %v7766 = vpop.f32.mrb[0].mxu0
        %7767 = vmatprep.mubr.bf16.mxu0 0
        %7768 = vmatmul.mubr.bf16.gmra.mrb[0].mxu0 %v5750
        %v7769 = vpop.f32.mrb[0].mxu0
        %v7770 = vadd.f32 %v7481, %v7769
        %v7771 = vpop.f32.mrb[0].mxu0
        %v7772 = vpop.f32.mrb[0].mxu0
        %v7773 = vadd.f32 %v7484, %v7772
        %v7774 = vpop.f32.mrb[0].mxu0
        %7775 = vmatprep.mubr.bf16.mxu0 0
        %7776 = vmatmul.mubr.bf16.gmra.mrb[0].mxu0 %v5759
        %v7777 = vpop.f32.mrb[0].mxu0
        %v7778 = vadd.f32 %v7489, %v7777
        %v7779 = vpop.f32.mrb[0].mxu0
        %v7780 = vpop.f32.mrb[0].mxu0
        %v7781 = vadd.f32 %v7492, %v7780
        %v7782 = vpop.f32.mrb[0].mxu0
        %7783 = vmatprep.mubr.bf16.mxu0 0
        %7784 = vmatmul.mubr.bf16.gmra.mrb[0].mxu0 %v5768
        %v7785 = vpop.f32.mrb[0].mxu0
        %v7786 = vadd.f32 %v7497, %v7785
        %v7787 = vpop.f32.mrb[0].mxu0
        %v7788 = vpop.f32.mrb[0].mxu0
        %v7789 = vadd.f32 %v7500, %v7788
        %v7790 = vpop.f32.mrb[0].mxu0
        %7791 = vmatprep.mubr.bf16.mxu0 0
        %7792 = vmatmul.mubr.bf16.gmra.mrb[0].mxu0 %v5777
        %v7793 = vpop.f32.mrb[0].mxu0
        %v7794 = vadd.f32 %v7505, %v7793
        %v7795 = vpop.f32.mrb[0].mxu0
        %v7796 = vpop.f32.mrb[0].mxu0
        %v7797 = vadd.f32 %v7508, %v7796
        %v7798 = vpop.f32.mrb[0].mxu0
        %7799 = vmatprep.mubr.bf16.mxu0 0
        %7800 = vmatmul.mubr.bf16.gmra.mrb[0].mxu0 %v5786
        %v7801 = vpop.f32.mrb[0].mxu0
        %v7802 = vadd.f32 %v7513, %v7801
        %v7803 = vpop.f32.mrb[0].mxu0
        %v7804 = vpop.f32.mrb[0].mxu0
        %v7805 = vadd.f32 %v7516, %v7804
        %v7806 = vpop.f32.mrb[0].mxu0
        %7807 = vdwg.mxu0
        %v7808 = vld [vmem:[%s5] sm:$0x1]
        %v7810 = vlaneseq
        %v7811 = vshrl.u32 %v7810, 7
        %v7812 = vsub.s32 0, %v7811
        %v7813 = vrot.slane %v7808, %v7812
        %v7815 = vmul.f32 %v7554, %v7813
        %v7816 = vmul.f32 %v7557, %v7813
        %v7817 = vmul.f32 %v7562, %v7813
        %v7818 = vmul.f32 %v7565, %v7813
        %v7819 = vmul.f32 %v7570, %v7813
        %v7820 = vmul.f32 %v7573, %v7813
        %v7821 = vmul.f32 %v7578, %v7813
        %v7822 = vmul.f32 %v7581, %v7813
        %v7823 = vmul.f32 %v7586, %v7813
        %v7824 = vmul.f32 %v7589, %v7813
        %v7825 = vmul.f32 %v7594, %v7813
        %v7826 = vmul.f32 %v7597, %v7813
        %v7827 = vmul.f32 %v7602, %v7813
        %v7828 = vmul.f32 %v7605, %v7813
        %v7829 = vmul.f32 %v7610, %v7813
        %v7830 = vmul.f32 %v7613, %v7813
        %v7831 = vmul.f32 %v7618, %v7813
        %v7832 = vmul.f32 %v7621, %v7813
        %v7833 = vmul.f32 %v7626, %v7813
        %v7834 = vmul.f32 %v7629, %v7813
        %v7835 = vmul.f32 %v7634, %v7813
        %v7836 = vmul.f32 %v7637, %v7813
        %v7837 = vmul.f32 %v7642, %v7813
        %v7838 = vmul.f32 %v7645, %v7813
        %v7839 = vmul.f32 %v7650, %v7813
        %v7840 = vmul.f32 %v7653, %v7813
        %v7841 = vmul.f32 %v7658, %v7813
        %v7842 = vmul.f32 %v7661, %v7813
        %v7843 = vmul.f32 %v7666, %v7813
        %v7844 = vmul.f32 %v7669, %v7813
        %v7845 = vmul.f32 %v7674, %v7813
        %v7846 = vmul.f32 %v7677, %v7813
        %v7847 = vmul.f32 %v7682, %v7813
        %v7848 = vmul.f32 %v7685, %v7813
        %v7849 = vmul.f32 %v7690, %v7813
        %v7850 = vmul.f32 %v7693, %v7813
        %v7851 = vmul.f32 %v7698, %v7813
        %v7852 = vmul.f32 %v7701, %v7813
        %v7853 = vmul.f32 %v7706, %v7813
        %v7854 = vmul.f32 %v7709, %v7813
        %v7855 = vmul.f32 %v7714, %v7813
        %v7856 = vmul.f32 %v7717, %v7813
        %v7857 = vmul.f32 %v7722, %v7813
        %v7858 = vmul.f32 %v7725, %v7813
        %v7859 = vmul.f32 %v7730, %v7813
        %v7860 = vmul.f32 %v7733, %v7813
        %v7861 = vmul.f32 %v7738, %v7813
        %v7862 = vmul.f32 %v7741, %v7813
        %v7863 = vmul.f32 %v7746, %v7813
        %v7864 = vmul.f32 %v7749, %v7813
        %v7865 = vmul.f32 %v7754, %v7813
        %v7866 = vmul.f32 %v7757, %v7813
        %v7867 = vmul.f32 %v7762, %v7813
        %v7868 = vmul.f32 %v7765, %v7813
        %v7869 = vmul.f32 %v7770, %v7813
        %v7870 = vmul.f32 %v7773, %v7813
        %v7871 = vmul.f32 %v7778, %v7813
        %v7872 = vmul.f32 %v7781, %v7813
        %v7873 = vmul.f32 %v7786, %v7813
        %v7874 = vmul.f32 %v7789, %v7813
        %v7875 = vmul.f32 %v7794, %v7813
        %v7876 = vmul.f32 %v7797, %v7813
        %v7877 = vmul.f32 %v7802, %v7813
        %v7878 = vmul.f32 %v7805, %v7813
        %v7879 = vld [vmem:[%s6] sm:$0x1]
        %v7881 = vlaneseq
        %v7882 = vshrl.u32 %v7881, 7
        %v7883 = vsub.s32 0, %v7882
        %v7884 = vrot.slane %v7879, %v7883
        %v7886 = vadd.f32 %v7815, %v7884
        %v7887 = vadd.f32 %v7816, %v7884
        %v7888 = vadd.f32 %v7817, %v7884
        %v7889 = vadd.f32 %v7818, %v7884
        %v7890 = vadd.f32 %v7819, %v7884
        %v7891 = vadd.f32 %v7820, %v7884
        %v7892 = vadd.f32 %v7821, %v7884
        %v7893 = vadd.f32 %v7822, %v7884
        %v7894 = vadd.f32 %v7823, %v7884
        %v7895 = vadd.f32 %v7824, %v7884
        %v7896 = vadd.f32 %v7825, %v7884
        %v7897 = vadd.f32 %v7826, %v7884
        %v7898 = vadd.f32 %v7827, %v7884
        %v7899 = vadd.f32 %v7828, %v7884
        %v7900 = vadd.f32 %v7829, %v7884
        %v7901 = vadd.f32 %v7830, %v7884
        %v7902 = vadd.f32 %v7831, %v7884
        %v7903 = vadd.f32 %v7832, %v7884
        %v7904 = vadd.f32 %v7833, %v7884
        %v7905 = vadd.f32 %v7834, %v7884
        %v7906 = vadd.f32 %v7835, %v7884
        %v7907 = vadd.f32 %v7836, %v7884
        %v7908 = vadd.f32 %v7837, %v7884
        %v7909 = vadd.f32 %v7838, %v7884
        %v7910 = vadd.f32 %v7839, %v7884
        %v7911 = vadd.f32 %v7840, %v7884
        %v7912 = vadd.f32 %v7841, %v7884
        %v7913 = vadd.f32 %v7842, %v7884
        %v7914 = vadd.f32 %v7843, %v7884
        %v7915 = vadd.f32 %v7844, %v7884
        %v7916 = vadd.f32 %v7845, %v7884
        %v7917 = vadd.f32 %v7846, %v7884
        %v7918 = vadd.f32 %v7847, %v7884
        %v7919 = vadd.f32 %v7848, %v7884
        %v7920 = vadd.f32 %v7849, %v7884
        %v7921 = vadd.f32 %v7850, %v7884
        %v7922 = vadd.f32 %v7851, %v7884
        %v7923 = vadd.f32 %v7852, %v7884
        %v7924 = vadd.f32 %v7853, %v7884
        %v7925 = vadd.f32 %v7854, %v7884
        %v7926 = vadd.f32 %v7855, %v7884
        %v7927 = vadd.f32 %v7856, %v7884
        %v7928 = vadd.f32 %v7857, %v7884
        %v7929 = vadd.f32 %v7858, %v7884
        %v7930 = vadd.f32 %v7859, %v7884
        %v7931 = vadd.f32 %v7860, %v7884
        %v7932 = vadd.f32 %v7861, %v7884
        %v7933 = vadd.f32 %v7862, %v7884
        %v7934 = vadd.f32 %v7863, %v7884
        %v7935 = vadd.f32 %v7864, %v7884
        %v7936 = vadd.f32 %v7865, %v7884
        %v7937 = vadd.f32 %v7866, %v7884
        %v7938 = vadd.f32 %v7867, %v7884
        %v7939 = vadd.f32 %v7868, %v7884
        %v7940 = vadd.f32 %v7869, %v7884
        %v7941 = vadd.f32 %v7870, %v7884
        %v7942 = vadd.f32 %v7871, %v7884
        %v7943 = vadd.f32 %v7872, %v7884
        %v7944 = vadd.f32 %v7873, %v7884
        %v7945 = vadd.f32 %v7874, %v7884
        %v7946 = vadd.f32 %v7875, %v7884
        %v7947 = vadd.f32 %v7876, %v7884
        %v7948 = vadd.f32 %v7877, %v7884
        %v7949 = vadd.f32 %v7878, %v7884
        %v7950 = vld [vmem:[%s288] sm:$0xff]
        %v7951 = vld [vmem:[%s288 + $0x8] sm:$0xff]
        %v7952 = vld [vmem:[%s288 + $0x10] sm:$0xff]
        %v7953 = vld [vmem:[%s288 + $0x18] sm:$0xff]
        %v7954 = vld [vmem:[%s288 + $0x20] sm:$0xff]
        %v7955 = vld [vmem:[%s288 + $0x28] sm:$0xff]
        %v7956 = vld [vmem:[%s288 + $0x30] sm:$0xff]
        %v7957 = vld [vmem:[%s288 + $0x38] sm:$0xff]
        %v7958 = vld [vmem:[%s288 + $0x40] sm:$0xff]
        %v7959 = vld [vmem:[%s288 + $0x48] sm:$0xff]
        %v7960 = vld [vmem:[%s288 + $0x50] sm:$0xff]
        %v7961 = vld [vmem:[%s288 + $0x58] sm:$0xff]
        %v7962 = vld [vmem:[%s288 + $0x60] sm:$0xff]
        %v7963 = vld [vmem:[%s288 + $0x68] sm:$0xff]
        %v7964 = vld [vmem:[%s288 + $0x70] sm:$0xff]
        %v7965 = vld [vmem:[%s288 + $0x78] sm:$0xff]
        %v7966 = vld [vmem:[%s288 + $0x80] sm:$0xff]
        %v7967 = vld [vmem:[%s288 + $0x88] sm:$0xff]
        %v7968 = vld [vmem:[%s288 + $0x90] sm:$0xff]
        %v7969 = vld [vmem:[%s288 + $0x98] sm:$0xff]
        %v7970 = vld [vmem:[%s288 + $0xa0] sm:$0xff]
        %v7971 = vld [vmem:[%s288 + $0xa8] sm:$0xff]
        %v7972 = vld [vmem:[%s288 + $0xb0] sm:$0xff]
        %v7973 = vld [vmem:[%s288 + $0xb8] sm:$0xff]
        %v7974 = vld [vmem:[%s288 + $0xc0] sm:$0xff]
        %v7975 = vld [vmem:[%s288 + $0xc8] sm:$0xff]
        %v7976 = vld [vmem:[%s288 + $0xd0] sm:$0xff]
        %v7977 = vld [vmem:[%s288 + $0xd8] sm:$0xff]
        %v7978 = vld [vmem:[%s288 + $0xe0] sm:$0xff]
        %v7979 = vld [vmem:[%s288 + $0xe8] sm:$0xff]
        %v7980 = vld [vmem:[%s288 + $0xf0] sm:$0xff]
        %v7981 = vld [vmem:[%s288 + $0xf8] sm:$0xff]
        %v7982 = vld [vmem:[%s288 + $0x100] sm:$0xff]
        %v7983 = vld [vmem:[%s288 + $0x108] sm:$0xff]
        %v7984 = vld [vmem:[%s288 + $0x110] sm:$0xff]
        %v7985 = vld [vmem:[%s288 + $0x118] sm:$0xff]
        %v7986 = vld [vmem:[%s288 + $0x120] sm:$0xff]
        %v7987 = vld [vmem:[%s288 + $0x128] sm:$0xff]
        %v7988 = vld [vmem:[%s288 + $0x130] sm:$0xff]
        %v7989 = vld [vmem:[%s288 + $0x138] sm:$0xff]
        %v7990 = vld [vmem:[%s288 + $0x140] sm:$0xff]
        %v7991 = vld [vmem:[%s288 + $0x148] sm:$0xff]
        %v7992 = vld [vmem:[%s288 + $0x150] sm:$0xff]
        %v7993 = vld [vmem:[%s288 + $0x158] sm:$0xff]
        %v7994 = vld [vmem:[%s288 + $0x160] sm:$0xff]
        %v7995 = vld [vmem:[%s288 + $0x168] sm:$0xff]
        %v7996 = vld [vmem:[%s288 + $0x170] sm:$0xff]
        %v7997 = vld [vmem:[%s288 + $0x178] sm:$0xff]
        %v7998 = vld [vmem:[%s288 + $0x180] sm:$0xff]
        %v7999 = vld [vmem:[%s288 + $0x188] sm:$0xff]
        %v8000 = vld [vmem:[%s288 + $0x190] sm:$0xff]
        %v8001 = vld [vmem:[%s288 + $0x198] sm:$0xff]
        %v8002 = vld [vmem:[%s288 + $0x1a0] sm:$0xff]
        %v8003 = vld [vmem:[%s288 + $0x1a8] sm:$0xff]
        %v8004 = vld [vmem:[%s288 + $0x1b0] sm:$0xff]
        %v8005 = vld [vmem:[%s288 + $0x1b8] sm:$0xff]
        %v8006 = vld [vmem:[%s288 + $0x1c0] sm:$0xff]
        %v8007 = vld [vmem:[%s288 + $0x1c8] sm:$0xff]
        %v8008 = vld [vmem:[%s288 + $0x1d0] sm:$0xff]
        %v8009 = vld [vmem:[%s288 + $0x1d8] sm:$0xff]
        %v8010 = vld [vmem:[%s288 + $0x1e0] sm:$0xff]
        %v8011 = vld [vmem:[%s288 + $0x1e8] sm:$0xff]
        %v8012 = vld [vmem:[%s288 + $0x1f0] sm:$0xff]
        %v8013 = vld [vmem:[%s288 + $0x1f8] sm:$0xff]
        %v8014 = vadd.f32 %v7886, %v7950
        %v8015 = vadd.f32 %v7887, %v7951
        %v8016 = vadd.f32 %v7888, %v7952
        %v8017 = vadd.f32 %v7889, %v7953
        %v8018 = vadd.f32 %v7890, %v7954
        %v8019 = vadd.f32 %v7891, %v7955
        %v8020 = vadd.f32 %v7892, %v7956
        %v8021 = vadd.f32 %v7893, %v7957
        %v8022 = vadd.f32 %v7894, %v7958
        %v8023 = vadd.f32 %v7895, %v7959
        %v8024 = vadd.f32 %v7896, %v7960
        %v8025 = vadd.f32 %v7897, %v7961
        %v8026 = vadd.f32 %v7898, %v7962
        %v8027 = vadd.f32 %v7899, %v7963
        %v8028 = vadd.f32 %v7900, %v7964
        %v8029 = vadd.f32 %v7901, %v7965
        %v8030 = vadd.f32 %v7902, %v7966
        %v8031 = vadd.f32 %v7903, %v7967
        %v8032 = vadd.f32 %v7904, %v7968
        %v8033 = vadd.f32 %v7905, %v7969
        %v8034 = vadd.f32 %v7906, %v7970
        %v8035 = vadd.f32 %v7907, %v7971
        %v8036 = vadd.f32 %v7908, %v7972
        %v8037 = vadd.f32 %v7909, %v7973
        %v8038 = vadd.f32 %v7910, %v7974
        %v8039 = vadd.f32 %v7911, %v7975
        %v8040 = vadd.f32 %v7912, %v7976
        %v8041 = vadd.f32 %v7913, %v7977
        %v8042 = vadd.f32 %v7914, %v7978
        %v8043 = vadd.f32 %v7915, %v7979
        %v8044 = vadd.f32 %v7916, %v7980
        %v8045 = vadd.f32 %v7917, %v7981
        %v8046 = vadd.f32 %v7918, %v7982
        %v8047 = vadd.f32 %v7919, %v7983
        %v8048 = vadd.f32 %v7920, %v7984
        %v8049 = vadd.f32 %v7921, %v7985
        %v8050 = vadd.f32 %v7922, %v7986
        %v8051 = vadd.f32 %v7923, %v7987
        %v8052 = vadd.f32 %v7924, %v7988
        %v8053 = vadd.f32 %v7925, %v7989
        %v8054 = vadd.f32 %v7926, %v7990
        %v8055 = vadd.f32 %v7927, %v7991
        %v8056 = vadd.f32 %v7928, %v7992
        %v8057 = vadd.f32 %v7929, %v7993
        %v8058 = vadd.f32 %v7930, %v7994
        %v8059 = vadd.f32 %v7931, %v7995
        %v8060 = vadd.f32 %v7932, %v7996
        %v8061 = vadd.f32 %v7933, %v7997
        %v8062 = vadd.f32 %v7934, %v7998
        %v8063 = vadd.f32 %v7935, %v7999
        %v8064 = vadd.f32 %v7936, %v8000
        %v8065 = vadd.f32 %v7937, %v8001
        %v8066 = vadd.f32 %v7938, %v8002
        %v8067 = vadd.f32 %v7939, %v8003
        %v8068 = vadd.f32 %v7940, %v8004
        %v8069 = vadd.f32 %v7941, %v8005
        %v8070 = vadd.f32 %v7942, %v8006
        %v8071 = vadd.f32 %v7943, %v8007
        %v8072 = vadd.f32 %v7944, %v8008
        %v8073 = vadd.f32 %v7945, %v8009
        %v8074 = vadd.f32 %v7946, %v8010
        %v8075 = vadd.f32 %v7947, %v8011
        %v8076 = vadd.f32 %v7948, %v8012
        %v8077 = vadd.f32 %v7949, %v8013
        %v8078 = vmax.f32 %v8014, 0.0
        %v8079 = vmax.f32 %v8015, 0.0
        %v8080 = vmax.f32 %v8016, 0.0
        %v8081 = vmax.f32 %v8017, 0.0
        %v8082 = vmax.f32 %v8018, 0.0
        %v8083 = vmax.f32 %v8019, 0.0
        %v8084 = vmax.f32 %v8020, 0.0
        %v8085 = vmax.f32 %v8021, 0.0
        %v8086 = vmax.f32 %v8022, 0.0
        %v8087 = vmax.f32 %v8023, 0.0
        %v8088 = vmax.f32 %v8024, 0.0
        %v8089 = vmax.f32 %v8025, 0.0
        %v8090 = vmax.f32 %v8026, 0.0
        %v8091 = vmax.f32 %v8027, 0.0
        %v8092 = vmax.f32 %v8028, 0.0
        %v8093 = vmax.f32 %v8029, 0.0
        %v8094 = vmax.f32 %v8030, 0.0
        %v8095 = vmax.f32 %v8031, 0.0
        %v8096 = vmax.f32 %v8032, 0.0
        %v8097 = vmax.f32 %v8033, 0.0
        %v8098 = vmax.f32 %v8034, 0.0
        %v8099 = vmax.f32 %v8035, 0.0
        %v8100 = vmax.f32 %v8036, 0.0
        %v8101 = vmax.f32 %v8037, 0.0
        %v8102 = vmax.f32 %v8038, 0.0
        %v8103 = vmax.f32 %v8039, 0.0
        %v8104 = vmax.f32 %v8040, 0.0
        %v8105 = vmax.f32 %v8041, 0.0
        %v8106 = vmax.f32 %v8042, 0.0
        %v8107 = vmax.f32 %v8043, 0.0
        %v8108 = vmax.f32 %v8044, 0.0
        %v8109 = vmax.f32 %v8045, 0.0
        %v8110 = vmax.f32 %v8046, 0.0
        %v8111 = vmax.f32 %v8047, 0.0
        %v8112 = vmax.f32 %v8048, 0.0
        %v8113 = vmax.f32 %v8049, 0.0
        %v8114 = vmax.f32 %v8050, 0.0
        %v8115 = vmax.f32 %v8051, 0.0
        %v8116 = vmax.f32 %v8052, 0.0
        %v8117 = vmax.f32 %v8053, 0.0
        %v8118 = vmax.f32 %v8054, 0.0
        %v8119 = vmax.f32 %v8055, 0.0
        %v8120 = vmax.f32 %v8056, 0.0
        %v8121 = vmax.f32 %v8057, 0.0
        %v8122 = vmax.f32 %v8058, 0.0
        %v8123 = vmax.f32 %v8059, 0.0
        %v8124 = vmax.f32 %v8060, 0.0
        %v8125 = vmax.f32 %v8061, 0.0
        %v8126 = vmax.f32 %v8062, 0.0
        %v8127 = vmax.f32 %v8063, 0.0
        %v8128 = vmax.f32 %v8064, 0.0
        %v8129 = vmax.f32 %v8065, 0.0
        %v8130 = vmax.f32 %v8066, 0.0
        %v8131 = vmax.f32 %v8067, 0.0
        %v8132 = vmax.f32 %v8068, 0.0
        %v8133 = vmax.f32 %v8069, 0.0
        %v8134 = vmax.f32 %v8070, 0.0
        %v8135 = vmax.f32 %v8071, 0.0
        %v8136 = vmax.f32 %v8072, 0.0
        %v8137 = vmax.f32 %v8073, 0.0
        %v8138 = vmax.f32 %v8074, 0.0
        %v8139 = vmax.f32 %v8075, 0.0
        %v8140 = vmax.f32 %v8076, 0.0
        %v8141 = vmax.f32 %v8077, 0.0
        %8142 = vst [vmem:[%s326] sm:$0xff] %v8078
        %8143 = vst [vmem:[%s326 + $0x8] sm:$0xff] %v8079
        %8144 = vst [vmem:[%s326 + $0x10] sm:$0xff] %v8080
        %8145 = vst [vmem:[%s326 + $0x18] sm:$0xff] %v8081
        %8146 = vst [vmem:[%s326 + $0x20] sm:$0xff] %v8082
        %8147 = vst [vmem:[%s326 + $0x28] sm:$0xff] %v8083
        %8148 = vst [vmem:[%s326 + $0x30] sm:$0xff] %v8084
        %8149 = vst [vmem:[%s326 + $0x38] sm:$0xff] %v8085
        %8150 = vst [vmem:[%s326 + $0x40] sm:$0xff] %v8086
        %8151 = vst [vmem:[%s326 + $0x48] sm:$0xff] %v8087
        %8152 = vst [vmem:[%s326 + $0x50] sm:$0xff] %v8088
        %8153 = vst [vmem:[%s326 + $0x58] sm:$0xff] %v8089
        %8154 = vst [vmem:[%s326 + $0x60] sm:$0xff] %v8090
        %8155 = vst [vmem:[%s326 + $0x68] sm:$0xff] %v8091
        %8156 = vst [vmem:[%s326 + $0x70] sm:$0xff] %v8092
        %8157 = vst [vmem:[%s326 + $0x78] sm:$0xff] %v8093
        %8158 = vst [vmem:[%s326 + $0x80] sm:$0xff] %v8094
        %8159 = vst [vmem:[%s326 + $0x88] sm:$0xff] %v8095
        %8160 = vst [vmem:[%s326 + $0x90] sm:$0xff] %v8096
        %8161 = vst [vmem:[%s326 + $0x98] sm:$0xff] %v8097
        %8162 = vst [vmem:[%s326 + $0xa0] sm:$0xff] %v8098
        %8163 = vst [vmem:[%s326 + $0xa8] sm:$0xff] %v8099
        %8164 = vst [vmem:[%s326 + $0xb0] sm:$0xff] %v8100
        %8165 = vst [vmem:[%s326 + $0xb8] sm:$0xff] %v8101
        %8166 = vst [vmem:[%s326 + $0xc0] sm:$0xff] %v8102
        %8167 = vst [vmem:[%s326 + $0xc8] sm:$0xff] %v8103
        %8168 = vst [vmem:[%s326 + $0xd0] sm:$0xff] %v8104
        %8169 = vst [vmem:[%s326 + $0xd8] sm:$0xff] %v8105
        %8170 = vst [vmem:[%s326 + $0xe0] sm:$0xff] %v8106
        %8171 = vst [vmem:[%s326 + $0xe8] sm:$0xff] %v8107
        %8172 = vst [vmem:[%s326 + $0xf0] sm:$0xff] %v8108
        %8173 = vst [vmem:[%s326 + $0xf8] sm:$0xff] %v8109
        %8174 = vst [vmem:[%s326 + $0x100] sm:$0xff] %v8110
        %8175 = vst [vmem:[%s326 + $0x108] sm:$0xff] %v8111
        %8176 = vst [vmem:[%s326 + $0x110] sm:$0xff] %v8112
        %8177 = vst [vmem:[%s326 + $0x118] sm:$0xff] %v8113
        %8178 = vst [vmem:[%s326 + $0x120] sm:$0xff] %v8114
        %8179 = vst [vmem:[%s326 + $0x128] sm:$0xff] %v8115
        %8180 = vst [vmem:[%s326 + $0x130] sm:$0xff] %v8116
        %8181 = vst [vmem:[%s326 + $0x138] sm:$0xff] %v8117
        %8182 = vst [vmem:[%s326 + $0x140] sm:$0xff] %v8118
        %8183 = vst [vmem:[%s326 + $0x148] sm:$0xff] %v8119
        %8184 = vst [vmem:[%s326 + $0x150] sm:$0xff] %v8120
        %8185 = vst [vmem:[%s326 + $0x158] sm:$0xff] %v8121
        %8186 = vst [vmem:[%s326 + $0x160] sm:$0xff] %v8122
        %8187 = vst [vmem:[%s326 + $0x168] sm:$0xff] %v8123
        %8188 = vst [vmem:[%s326 + $0x170] sm:$0xff] %v8124
        %8189 = vst [vmem:[%s326 + $0x178] sm:$0xff] %v8125
        %8190 = vst [vmem:[%s326 + $0x180] sm:$0xff] %v8126
        %8191 = vst [vmem:[%s326 + $0x188] sm:$0xff] %v8127
        %8192 = vst [vmem:[%s326 + $0x190] sm:$0xff] %v8128
        %8193 = vst [vmem:[%s326 + $0x198] sm:$0xff] %v8129
        %8194 = vst [vmem:[%s326 + $0x1a0] sm:$0xff] %v8130
        %8195 = vst [vmem:[%s326 + $0x1a8] sm:$0xff] %v8131
        %8196 = vst [vmem:[%s326 + $0x1b0] sm:$0xff] %v8132
        %8197 = vst [vmem:[%s326 + $0x1b8] sm:$0xff] %v8133
        %8198 = vst [vmem:[%s326 + $0x1c0] sm:$0xff] %v8134
        %8199 = vst [vmem:[%s326 + $0x1c8] sm:$0xff] %v8135
        %8200 = vst [vmem:[%s326 + $0x1d0] sm:$0xff] %v8136
        %8201 = vst [vmem:[%s326 + $0x1d8] sm:$0xff] %v8137
        %8202 = vst [vmem:[%s326 + $0x1e0] sm:$0xff] %v8138
        %8203 = vst [vmem:[%s326 + $0x1e8] sm:$0xff] %v8139
        %8204 = vst [vmem:[%s326 + $0x1f0] sm:$0xff] %v8140
        %8205 = vst [vmem:[%s326 + $0x1f8] sm:$0xff] %v8141
        %s8206 = sand.u32 %s185, 1
        %s8207 = scalar_lea.sflag [#allocation8], %s8206
        %s8208 = sand.u32 %s185, 1
        %s8209 = smul.addr %s8208, 512
        %s8210 = scalar_lea.vmem [#allocation12], %s8209
        // Predicated region
        $region61: #{tpu_custom_call.1} parent=47 // pred_check
          %p8211 = pneg %p195
        $region62: #{tpu_custom_call.1} parent=47 // pred_check_branch
          %8213 = sbr.rel (%p8211) target = $region64
        $region63: #{tpu_custom_call.1} parent=47 // pred_region
          %s8214 = smul.u32 2, %s25
          %s8216 = ssub.s32 8192, 8192
          %8217 = vsyncadd %s8207, %s8216
          %s8218 = smul.addr %s8214, 32
          %s8219 = smul.addr %s8218, 128
          %s8220 = scalar_lea.hbm %s7, %s8219
          %s8221 = sshll.u32 %s8210, 4
          %s8222 = int_to_ptr.vmem [resolvable:$true] %s8221
          %8227 = dma.vmem_to_hbm [thread:$0]  %s8222, 8192, %s8220, %s8207, 128, 128, 8
        $region64: #{tpu_custom_call.1} parent=47 // pred_fallthru
          _
      $region48: #{tpu_custom_call.1} parent=5 // pred_fallthru
        _
      %p8228 = scmp.le.s32.totalorder 2, %s20
      // Predicated region
      $region65: #{tpu_custom_call.1} parent=5 // pred_check
        %p8229 = pneg %p8228
      $region66: #{tpu_custom_call.1} parent=5 // pred_check_branch
        %8231 = sbr.rel (%p8229) target = $region68
      $region67: #{tpu_custom_call.1} parent=5 // pred_region
        %s8232 = ssub.s32 %s20, 2
        // Predicated region
        $region69: #{tpu_custom_call.1} parent=67 // pred_check
          %p8233 = pneg %p201
        $region70: #{tpu_custom_call.1} parent=67 // pred_check_branch
          %8235 = sbr.rel (%p8233) target = $region72
        $region71: #{tpu_custom_call.1} parent=67 // pred_region
          %s8236 = sand.u32 %s186, 1
          %s8237 = scalar_lea.sflag [#allocation8], %s8236
          %s8238 = sand.u32 %s186, 1
          %s8239 = smul.addr %s8238, 512
          %s8240 = scalar_lea.vmem [#allocation12], %s8239
          %8241 = dma.done %s8237, 8192
        $region72: #{tpu_custom_call.1} parent=67 // pred_fallthru
          _
      $region68: #{tpu_custom_call.1} parent=5 // pred_fallthru
        _
    $region6: #{tpu_custom_call.1} parent=1 // loop_footer
      %s24 = sadd.s32 1, %s20
    $region7: #{tpu_custom_call.1} parent=1 // loop_footer_branch
      %19 = sbr.rel target = $region3
    $region8: #{tpu_custom_call.1} parent=1 // loop_exit
      _
    %8242 = vsyncpa [#allocation7], 1
    %s8243 = scalar_lea.sflag [#allocation7], 1
    %8244 = vsyncpa %s8243, 1
    %8245 = vsyncpa [#allocation10], 1
    %8246 = vsyncpa [#allocation8], 1
    %s8247 = scalar_lea.sflag [#allocation8], 1
    %8248 = vsyncpa %s8247, 1

</llo_original>
